<compile_context>
chip_gen: v6e
topology: v6e:2x2x1
jax: 0.10.0
libtpu: 0.0.40
codegen_flags: <defaults>
</compile_context>

<pallas_src>
import functools

import jax
import jax.numpy as jnp
from jax import lax
from jax.experimental import pallas as pl
from jax.experimental.pallas import tpu as pltpu


# ----------------------------- kernel helpers --------------------------------

def _layernorm(v, gamma, beta, eps=1e-5):
    # keep elementwise math in f32 (v5e has no bf16 VPU)
    mu = jnp.mean(v, axis=-1, keepdims=True)
    var = jnp.mean((v - mu) ** 2, axis=-1, keepdims=True)
    return (v - mu) * lax.rsqrt(var + eps) * gamma + beta


def _mha(q2, kv2, wqkv_ref, bqkv_ref, wo_ref, bo, *, n_heads, d_head, rows, seq, cd):
    """Multi-head attention over a whole flattened row-block at once.

    q2   : (M, D) query input,      M = rows*seq   (f32 or bf16)
    kv2  : (M, D) key/value input                   (f32)
    wqkv_ref : (3, n_heads, D, d_head) bf16 VMEM ref  -- pre-blocked Wq/Wk/Wv
    bqkv_ref : (3, n_heads, 1, d_head) f32  VMEM ref
    wo_ref   : (n_heads, d_head, D)    bf16 VMEM ref  -- pre-blocked output proj
    bo       : (1, D) f32
    """
    q2c = q2.astype(cd)
    kv2c = kv2.astype(cd)
    scale = 1.0 / (d_head ** 0.5)

    # Per-head projections straight from the pre-blocked weights: no lane-subdividing
    # slices / einshape relayouts.  Head axis is assembled by a major-dim concat.
    qs, ks, vs = [], [], []
    for h in range(n_heads):
        qh = jnp.dot(q2c, wqkv_ref[0, h], preferred_element_type=jnp.float32) + bqkv_ref[0, h]
        kh = jnp.dot(kv2c, wqkv_ref[1, h], preferred_element_type=jnp.float32) + bqkv_ref[1, h]
        vh = jnp.dot(kv2c, wqkv_ref[2, h], preferred_element_type=jnp.float32) + bqkv_ref[2, h]
        qs.append(qh * scale)            # fold 1/sqrt(d_head) into Q once
        ks.append(kh)
        vs.append(vh)

    g = n_heads * rows
    qg = jnp.concatenate(qs, axis=0).reshape(g, seq, d_head).astype(cd)
    kg = jnp.concatenate(ks, axis=0).reshape(g, seq, d_head).astype(cd)
    vg = jnp.concatenate(vs, axis=0).reshape(g, seq, d_head).astype(cd)

    # One batched contraction over (n_heads * rows) for scores and PV.
    s = jnp.einsum('gqe,gke->gqk', qg, kg, preferred_element_type=jnp.float32)

    # PyTorch nn.Softmax(dim=1): normalize over the QUERY axis (axis=1 here).
    m = jnp.max(s, axis=1, keepdims=True)
    p = jnp.exp(s - m)
    w_att = p / jnp.sum(p, axis=1, keepdims=True)        # exact reciprocal

    o = jnp.einsum('gqk,gke->gqe', w_att.astype(cd), vg,
                   preferred_element_type=jnp.float32)   # (g, S, d_head) f32

    # Output projection as a sum over heads -- no concat / relayout back to D.
    o2 = o.reshape(g * seq, d_head)
    mrows = rows * seq
    out = bo
    for h in range(n_heads):
        oh = o2[h * mrows:(h + 1) * mrows]               # (M, d_head), major-dim slice
        out = out + jnp.dot(oh.astype(cd), wo_ref[h], preferred_element_type=jnp.float32)
    return out


# --------------------------------- kernel ------------------------------------

def decoder_block_kernel(x_ref, enc_ref,
                         wqkv1_ref, bqkv1_ref, wo1_ref, bo1_ref,   # masked self-attn
                         wqkv2_ref, bqkv2_ref, wo2_ref, bo2_ref,   # cross-attn
                         ln_ref,                                   # (6,1,D): g1,b1,g2,b2,g3,b3
                         wf1_ref, bf1_ref, wf2_ref, bf2_ref,       # feedforward
                         o_ref,
                         *, n_heads, d_head, rows, seq):
    cd = wqkv1_ref.dtype                    # compute dtype for MXU inputs (bf16)

    # Hoist every small parameter load once (JAX does not CSE broadcast_in_dim).
    g1, be1, g2, be2, g3, be3 = (ln_ref[i] for i in range(6))
    bo1 = bo1_ref[...]
    bo2 = bo2_ref[...]
    wf1 = wf1_ref[...]
    bf1 = bf1_ref[...]
    wf2 = wf2_ref[...]
    bf2 = bf2_ref[...]

    x2 = x_ref[...]                         # (M, D) f32  -- block_b rows, flattened
    enc2 = enc_ref[...]                     # (M, D) bf16 -- only the cross-MHA query

    mha = functools.partial(_mha, n_heads=n_heads, d_head=d_head,
                            rows=rows, seq=seq, cd=cd)

    # dropout1..4 are identity in eval mode.
    # masked MHA: q = k = v = x
    h1 = _layernorm(x2 + mha(x2, x2, wqkv1_ref, bqkv1_ref, wo1_ref, bo1), g1, be1)
    # cross MHA: query = encoder_output, key = value = h1
    h2 = _layernorm(h1 + mha(enc2, h1, wqkv2_ref, bqkv2_ref, wo2_ref, bo2), g2, be2)
    # feedforward: fc1 -> relu -> (dropout) -> fc2
    ff = jnp.maximum(jnp.dot(h2.astype(cd), wf1, preferred_element_type=jnp.float32) + bf1, 0.0)
    ff = jnp.dot(ff.astype(cd), wf2, preferred_element_type=jnp.float32) + bf2

    # TODO(synk): when D < 128 a lane-dense (rows, S*D) output layout would avoid
    # masked vst on the store path; skipped to keep the store reshape-free.
    o_ref[...] = _layernorm(h2 + ff, g3, be3)


# -------------------------------- wrapper -------------------------------------

def _device_kind():
    try:
        return jax.devices()[0].device_kind.lower()
    except Exception:
        return ""


def _pick_block_b(B, S):
    """Rows (batch items) per grid step.

    v5e/v6e have a single TensorCore: the grid is a serial loop, so extra steps are
    pure per-step overhead and shrink the matmul M-dim -> take the whole batch.
    v7x has two TensorCores: exactly two 'parallel' steps fills both.
    """
    kind = _device_kind()
    two_tc = ("v7" in kind) or ("7x" in kind)
    if S % 8 != 0:
        return B                       # keep full-array blocks if S breaks (8, .) tiling
    bb = max(1, B // 2) if (two_tc and B >= 2) else B
    while B % bb:
        bb -= 1
    # cap rows per step so activation slabs stay comfortably inside VMEM
    while bb > 1 and bb * S > 4096:
        bb = max(1, bb // 2)
        while B % bb:
            bb -= 1
    return bb


def _padded_bytes(shape, dtype):
    itemsize = jnp.dtype(dtype).itemsize
    s = list(shape)
    if len(s) >= 1:
        s[-1] = -(-s[-1] // 128) * 128
    if len(s) >= 2:
        s[-2] = -(-s[-2] // 8) * 8
    n = 1
    for d in s:
        n *= int(d)
    return n * itemsize


def _vmem_limit_bytes(block_b, S, D, H, n_heads, weight_dtype):
    """Explicit VMEM budget.  Raises (instead of silently clamping) if it does not fit."""
    dh = D // n_heads
    m = block_b * S
    # Replicated parameter blocks.  They are requested single-buffered (pl.Buffered(1));
    # budget 2x anyway so the limit also covers the double-buffered fallback path.
    w = 0
    w += 2 * _padded_bytes((3, n_heads, D, dh), weight_dtype)
    w += 2 * _padded_bytes((3, n_heads, 1, dh), jnp.float32)
    w += 2 * _padded_bytes((n_heads, dh, D), weight_dtype)
    w += 3 * _padded_bytes((1, D), jnp.float32)
    w += _padded_bytes((6, 1, D), jnp.float32)
    w += _padded_bytes((D, H), weight_dtype) + _padded_bytes((1, H), jnp.float32)
    w += _padded_bytes((H, D), weight_dtype)
    w *= 2
    # Double-buffered activation blocks: x (f32) + enc (bf16) + out (f32).
    acts = 2 * (2 * _padded_bytes((m, D), jnp.float32) + _padded_bytes((m, D), jnp.bfloat16))
    # Live intermediates: Q/K/V/attention outputs, score matrices, FFN hidden.
    live = 8 * _padded_bytes((m, D), jnp.float32)
    live += 4 * _padded_bytes((n_heads * block_b, S, S), jnp.float32)
    live += 2 * _padded_bytes((m, H), jnp.float32)
    est = w + acts + live + (2 << 20)

    kind = _device_kind()
    cap = (48 if ("v7" in kind or "7x" in kind) else 100) * 1024 * 1024
    if est > cap:
        # TODO(synk): for very large D/H, tile wf1/wf2 over d_hidden with an extra
        # 'arbitrary' grid axis + f32 accumulator instead of holding them whole in VMEM.
        raise ValueError(
            f"DecoderBlock kernel wants ~{est >> 20} MiB of VMEM (budget {cap >> 20} MiB). "
            "Reduce block_b, or tile the feedforward weights over d_hidden "
            "(extra 'arbitrary' grid axis + f32 accumulator).")
    return int(min(max(est, 32 * 1024 * 1024), cap))


def _block_heads(W, b, n_heads, weight_dtype):
    """Pre-block per-head attention weights in the wrapper (one-time layout transform).

    W: (4, D, D) [Wq, Wk, Wv, Wo] stored as (in, out); b: (4, 1, D).
    Returns wqkv (3, n_heads, D, dh) bf16, bqkv (3, n_heads, 1, dh) f32,
            wo (n_heads, dh, D) bf16, bo (1, D) f32.
    """
    D = W.shape[-1]
    dh = D // n_heads
    wqkv = jnp.stack(
        [W[i].reshape(D, n_heads, dh).transpose(1, 0, 2) for i in range(3)]
    ).astype(weight_dtype)
    bqkv = jnp.stack([b[i].reshape(n_heads, 1, dh) for i in range(3)]).astype(jnp.float32)
    wo = W[3].reshape(n_heads, dh, D).astype(weight_dtype)
    bo = b[3].astype(jnp.float32)
    return wqkv, bqkv, wo, bo


def decoder_block(x, enc, params, n_heads, *, block_b=None, weight_dtype=jnp.bfloat16):
    B, S, D = x.shape
    assert D % n_heads == 0
    d_head = D // n_heads
    H = params["wf1"].shape[1]

    if block_b is None:
        block_b = _pick_block_b(B, S)
    assert B % block_b == 0
    assert block_b == B or (block_b * S) % 8 == 0, "partial batch blocks need S % 8 == 0"

    wqkv1, bqkv1, wo1, bo1 = _block_heads(params["w1"], params["b1"], n_heads, weight_dtype)
    wqkv2, bqkv2, wo2, bo2 = _block_heads(params["w2"], params["b2"], n_heads, weight_dtype)
    wf1 = params["wf1"].astype(weight_dtype)
    wf2 = params["wf2"].astype(weight_dtype)

    # Flatten (B, S, D) -> (B*S, D) in the wrapper: the kernel's matmul M-dim is
    # block_b*S and no per-row unroll / in-kernel block reshape is needed.
    x2 = x.reshape(B * S, D)
    # enc feeds only the cross-MHA query projection (never a residual path) -> bf16 DMA.
    enc2 = enc.reshape(B * S, D).astype(weight_dtype)

    kernel = functools.partial(decoder_block_kernel, n_heads=n_heads, d_head=d_head,
                               rows=block_b, seq=S)
    vmem_limit = _vmem_limit_bytes(block_b, S, D, H, n_heads, weight_dtype)
    m_blk = block_b * S
    row_spec = pl.BlockSpec((m_blk, D), lambda i: (i, 0))

    operands = (x2, enc2,
                wqkv1, bqkv1, wo1, bo1,
                wqkv2, bqkv2, wo2, bo2,
                params["ln"], wf1, params["bf1"], wf2, params["bf2"])

    def run(single_buffer_weights):
        def rep(arr):
            # Whole-array parameter block, constant index -> fetched once.  Single-
            # buffered so its VMEM footprint is 1x (v7x has only 64 MiB of VMEM).
            kwargs = {}
            if single_buffer_weights:
                kwargs["pipeline_mode"] = pl.Buffered(1)
            n = len(arr.shape)
            return pl.BlockSpec(arr.shape, lambda i, _n=n: (0,) * _n, **kwargs)

        in_specs = [row_spec, row_spec] + [rep(a) for a in operands[2:]]
        return pl.pallas_call(
            kernel,
            out_shape=jax.ShapeDtypeStruct((B * S, D), jnp.float32),
            grid=(B // block_b,),
            in_specs=in_specs,
            out_specs=row_spec,
            compiler_params=pltpu.CompilerParams(
                dimension_semantics=("parallel",),
                vmem_limit_bytes=vmem_limit,
            ),
        )(*operands)

    try:
        out2 = run(single_buffer_weights=True)
    except Exception:
        # pipeline_mode=pl.Buffered(1) unsupported on this jax version: fall back to the
        # default (double-buffered but still never re-fetched) weight blocks.
        out2 = run(single_buffer_weights=False)

    return out2.reshape(B, S, D)


# --------------------------- pure-JAX reference --------------------------------

def decoder_block_ref(x, enc, params, n_heads):
    def ln(v, g, b, eps=1e-5):
        mu = v.mean(-1, keepdims=True)
        var = ((v - mu) ** 2).mean(-1, keepdims=True)
        return (v - mu) / jnp.sqrt(var + eps) * g + b

    def mha(q_in, kv_in, W, Bi):
        D = q_in.shape[-1]
        dh = D // n_heads
        Q = q_in @ W[0] + Bi[0]
        K = kv_in @ W[1] + Bi[1]
        V = kv_in @ W[2] + Bi[2]
        outs = []
        for h in range(n_heads):
            sl = slice(h * dh, (h + 1) * dh)
            s = jnp.einsum('bqd,bkd->bqk', Q[..., sl], K[..., sl]) / dh ** 0.5
            w = jax.nn.softmax(s, axis=1)        # torch Softmax(dim=1)
            outs.append(jnp.einsum('bqk,bkd->bqd', w, V[..., sl]))
        return jnp.concatenate(outs, -1) @ W[3] + Bi[3]

    L = params["ln"]
    h1 = ln(x + mha(x, x, params["w1"], params["b1"]), L[0], L[1])
    h2 = ln(h1 + mha(enc, h1, params["w2"], params["b2"]), L[2], L[3])
    ff = jnp.maximum(h2 @ params["wf1"] + params["bf1"], 0.0) @ params["wf2"] + params["bf2"]
    return ln(h2 + ff, L[4], L[5])


# ---------------------------------- main ---------------------------------------

def make_params(key, d_model, d_hidden):
    ks = jax.random.split(key, 12)
    scale = 0.05
    w1 = scale * jax.random.normal(ks[0], (4, d_model, d_model), jnp.float32)
    b1 = scale * jax.random.normal(ks[1], (4, 1, d_model), jnp.float32)
    w2 = scale * jax.random.normal(ks[2], (4, d_model, d_model), jnp.float32)
    b2 = scale * jax.random.normal(ks[3], (4, 1, d_model), jnp.float32)
    # layernorm params: gamma=1, beta=0 (PyTorch default init), stacked g1,b1,g2,b2,g3,b3
    ln = jnp.stack([jnp.ones((1, d_model)), jnp.zeros((1, d_model))] * 3).astype(jnp.float32)
    wf1 = scale * jax.random.normal(ks[4], (d_model, d_hidden), jnp.float32)
    bf1 = scale * jax.random.normal(ks[5], (1, d_hidden), jnp.float32)
    wf2 = scale * jax.random.normal(ks[6], (d_hidden, d_model), jnp.float32)
    bf2 = scale * jax.random.normal(ks[7], (1, d_model), jnp.float32)
    return dict(w1=w1, b1=b1, w2=w2, b2=b2, ln=ln, wf1=wf1, bf1=bf1, wf2=wf2, bf2=bf2)


if __name__ == "__main__":
    B, S, D, H, n_heads = 2, 8, 32, 32, 4

    key = jax.random.PRNGKey(0)
    kx, ke, kp = jax.random.split(key, 3)
    x = jax.random.normal(kx, (B, S, D), jnp.float32)
    enc = jax.random.normal(ke, (B, S, D), jnp.float32)
    params = make_params(kp, D, H)

    out = decoder_block(x, enc, params, n_heads)
    out = jax.block_until_ready(out)

    ref = decoder_block_ref(x, enc, params, n_heads)
    assert out.shape == (B, S, D)
    # bf16 MXU inputs are the only numerics delta (exact softmax reciprocal now).
    max_err = float(jnp.max(jnp.abs(out - ref)))
    assert jnp.allclose(out, ref, atol=1e-2, rtol=1e-2), f"mismatch, max |err|={max_err}"

    print("KERNEL_OK")
</pallas_src>

<mosaic_0001>
module attributes {stable_mosaic.version = 11 : i64} {
  func.func @decoder_block_kernel(%arg0: i32, %arg1: memref<16x32xf32, #tpu.memory_space<vmem>>, %arg2: memref<16x32xbf16, #tpu.memory_space<vmem>>, %arg3: memref<3x4x32x8xbf16, #tpu.memory_space<vmem>>, %arg4: memref<3x4x1x8xf32, #tpu.memory_space<vmem>>, %arg5: memref<4x8x32xbf16, #tpu.memory_space<vmem>>, %arg6: memref<1x32xf32, #tpu.memory_space<vmem>>, %arg7: memref<3x4x32x8xbf16, #tpu.memory_space<vmem>>, %arg8: memref<3x4x1x8xf32, #tpu.memory_space<vmem>>, %arg9: memref<4x8x32xbf16, #tpu.memory_space<vmem>>, %arg10: memref<1x32xf32, #tpu.memory_space<vmem>>, %arg11: memref<6x1x32xf32, #tpu.memory_space<vmem>>, %arg12: memref<32x32xbf16, #tpu.memory_space<vmem>>, %arg13: memref<1x32xf32, #tpu.memory_space<vmem>>, %arg14: memref<32x32xbf16, #tpu.memory_space<vmem>>, %arg15: memref<1x32xf32, #tpu.memory_space<vmem>>, %arg16: memref<16x32xf32, #tpu.memory_space<vmem>>) attributes {dimension_semantics = [#tpu.dimension_semantics<parallel>], iteration_bounds = array<i64: 1>, scalar_prefetch = 0 : i64, scratch_operands = 0 : i64, tpu.core_type = #tpu.core_type<tc>, window_params = [{transform_indices = @transform_0, window_bounds = array<i64: 16, 32>}, {transform_indices = @transform_1, window_bounds = array<i64: 16, 32>}, {pipeline_mode = #tpu.pipeline_mode<synchronous>, transform_indices = @transform_2, window_bounds = array<i64: 3, 4, 32, 8>}, {pipeline_mode = #tpu.pipeline_mode<synchronous>, transform_indices = @transform_3, window_bounds = array<i64: 3, 4, 1, 8>}, {pipeline_mode = #tpu.pipeline_mode<synchronous>, transform_indices = @transform_4, window_bounds = array<i64: 4, 8, 32>}, {pipeline_mode = #tpu.pipeline_mode<synchronous>, transform_indices = @transform_5, window_bounds = array<i64: 1, 32>}, {pipeline_mode = #tpu.pipeline_mode<synchronous>, transform_indices = @transform_6, window_bounds = array<i64: 3, 4, 32, 8>}, {pipeline_mode = #tpu.pipeline_mode<synchronous>, transform_indices = @transform_7, window_bounds = array<i64: 3, 4, 1, 8>}, {pipeline_mode = #tpu.pipeline_mode<synchronous>, transform_indices = @transform_8, window_bounds = array<i64: 4, 8, 32>}, {pipeline_mode = #tpu.pipeline_mode<synchronous>, transform_indices = @transform_9, window_bounds = array<i64: 1, 32>}, {pipeline_mode = #tpu.pipeline_mode<synchronous>, transform_indices = @transform_10, window_bounds = array<i64: 6, 1, 32>}, {pipeline_mode = #tpu.pipeline_mode<synchronous>, transform_indices = @transform_11, window_bounds = array<i64: 32, 32>}, {pipeline_mode = #tpu.pipeline_mode<synchronous>, transform_indices = @transform_12, window_bounds = array<i64: 1, 32>}, {pipeline_mode = #tpu.pipeline_mode<synchronous>, transform_indices = @transform_13, window_bounds = array<i64: 32, 32>}, {pipeline_mode = #tpu.pipeline_mode<synchronous>, transform_indices = @transform_14, window_bounds = array<i64: 1, 32>}, {transform_indices = @transform_15, window_bounds = array<i64: 16, 32>}]} {
    %c0 = arith.constant 0 : index
    %c0_0 = arith.constant 0 : index
    %c0_1 = arith.constant 0 : index
    %0 = vector.load %arg11[%c0, %c0_0, %c0_1] : memref<6x1x32xf32, #tpu.memory_space<vmem>>, vector<1x1x32xf32>
    %1 = vector.shape_cast %0 : vector<1x1x32xf32> to vector<1x32xf32>
    %c1 = arith.constant 1 : index
    %c0_2 = arith.constant 0 : index
    %c0_3 = arith.constant 0 : index
    %2 = vector.load %arg11[%c1, %c0_2, %c0_3] : memref<6x1x32xf32, #tpu.memory_space<vmem>>, vector<1x1x32xf32>
    %3 = vector.shape_cast %2 : vector<1x1x32xf32> to vector<1x32xf32>
    %c2 = arith.constant 2 : index
    %c0_4 = arith.constant 0 : index
    %c0_5 = arith.constant 0 : index
    %4 = vector.load %arg11[%c2, %c0_4, %c0_5] : memref<6x1x32xf32, #tpu.memory_space<vmem>>, vector<1x1x32xf32>
    %5 = vector.shape_cast %4 : vector<1x1x32xf32> to vector<1x32xf32>
    %c3 = arith.constant 3 : index
    %c0_6 = arith.constant 0 : index
    %c0_7 = arith.constant 0 : index
    %6 = vector.load %arg11[%c3, %c0_6, %c0_7] : memref<6x1x32xf32, #tpu.memory_space<vmem>>, vector<1x1x32xf32>
    %7 = vector.shape_cast %6 : vector<1x1x32xf32> to vector<1x32xf32>
    %c4 = arith.constant 4 : index
    %c0_8 = arith.constant 0 : index
    %c0_9 = arith.constant 0 : index
    %8 = vector.load %arg11[%c4, %c0_8, %c0_9] : memref<6x1x32xf32, #tpu.memory_space<vmem>>, vector<1x1x32xf32>
    %9 = vector.shape_cast %8 : vector<1x1x32xf32> to vector<1x32xf32>
    %c5 = arith.constant 5 : index
    %c0_10 = arith.constant 0 : index
    %c0_11 = arith.constant 0 : index
    %10 = vector.load %arg11[%c5, %c0_10, %c0_11] : memref<6x1x32xf32, #tpu.memory_space<vmem>>, vector<1x1x32xf32>
    %11 = vector.shape_cast %10 : vector<1x1x32xf32> to vector<1x32xf32>
    %c0_12 = arith.constant 0 : index
    %c0_13 = arith.constant 0 : index
    %12 = vector.load %arg6[%c0_12, %c0_13] : memref<1x32xf32, #tpu.memory_space<vmem>>, vector<1x32xf32>
    %c0_14 = arith.constant 0 : index
    %c0_15 = arith.constant 0 : index
    %13 = vector.load %arg10[%c0_14, %c0_15] : memref<1x32xf32, #tpu.memory_space<vmem>>, vector<1x32xf32>
    %c0_16 = arith.constant 0 : index
    %c0_17 = arith.constant 0 : index
    %14 = vector.load %arg12[%c0_16, %c0_17] : memref<32x32xbf16, #tpu.memory_space<vmem>>, vector<32x32xbf16>
    %c0_18 = arith.constant 0 : index
    %c0_19 = arith.constant 0 : index
    %15 = vector.load %arg13[%c0_18, %c0_19] : memref<1x32xf32, #tpu.memory_space<vmem>>, vector<1x32xf32>
    %c0_20 = arith.constant 0 : index
    %c0_21 = arith.constant 0 : index
    %16 = vector.load %arg14[%c0_20, %c0_21] : memref<32x32xbf16, #tpu.memory_space<vmem>>, vector<32x32xbf16>
    %c0_22 = arith.constant 0 : index
    %c0_23 = arith.constant 0 : index
    %17 = vector.load %arg15[%c0_22, %c0_23] : memref<1x32xf32, #tpu.memory_space<vmem>>, vector<1x32xf32>
    %c0_24 = arith.constant 0 : index
    %c0_25 = arith.constant 0 : index
    %18 = vector.load %arg1[%c0_24, %c0_25] : memref<16x32xf32, #tpu.memory_space<vmem>>, vector<16x32xf32>
    %c0_26 = arith.constant 0 : index
    %c0_27 = arith.constant 0 : index
    %19 = vector.load %arg2[%c0_26, %c0_27] : memref<16x32xbf16, #tpu.memory_space<vmem>>, vector<16x32xbf16>
    %20 = arith.truncf %18 : vector<16x32xf32> to vector<16x32xbf16>
    %21 = arith.truncf %18 : vector<16x32xf32> to vector<16x32xbf16>
    %c0_28 = arith.constant 0 : index
    %c0_29 = arith.constant 0 : index
    %c0_30 = arith.constant 0 : index
    %c0_31 = arith.constant 0 : index
    %22 = vector.load %arg3[%c0_28, %c0_29, %c0_30, %c0_31] : memref<3x4x32x8xbf16, #tpu.memory_space<vmem>>, vector<1x1x32x8xbf16>
    %23 = vector.shape_cast %22 : vector<1x1x32x8xbf16> to vector<32x8xbf16>
    %cst = arith.constant dense<0.000000e+00> : vector<16x8xf32>
    %24 = tpu.matmul %20, %23, %cst {dimension_numbers = #tpu.dot_dimension_numbers<[1], [0], [0], [1], [0, 0, 1, 1], [], []>} : vector<16x32xbf16>, vector<32x8xbf16>, vector<16x8xf32> -> vector<16x8xf32>
    %c0_32 = arith.constant 0 : index
    %c0_33 = arith.constant 0 : index
    %c0_34 = arith.constant 0 : index
    %c0_35 = arith.constant 0 : index
    %25 = vector.load %arg4[%c0_32, %c0_33, %c0_34, %c0_35] : memref<3x4x1x8xf32, #tpu.memory_space<vmem>>, vector<1x1x1x8xf32>
    %26 = vector.shape_cast %25 : vector<1x1x1x8xf32> to vector<1x8xf32>
    %27 = vector.broadcast %26 : vector<1x8xf32> to vector<16x8xf32>
    %28 = arith.addf %24, %27 : vector<16x8xf32>
    %c1_36 = arith.constant 1 : index
    %c0_37 = arith.constant 0 : index
    %c0_38 = arith.constant 0 : index
    %c0_39 = arith.constant 0 : index
    %29 = vector.load %arg3[%c1_36, %c0_37, %c0_38, %c0_39] : memref<3x4x32x8xbf16, #tpu.memory_space<vmem>>, vector<1x1x32x8xbf16>
    %30 = vector.shape_cast %29 : vector<1x1x32x8xbf16> to vector<32x8xbf16>
    %cst_40 = arith.constant dense<0.000000e+00> : vector<16x8xf32>
    %31 = tpu.matmul %21, %30, %cst_40 {dimension_numbers = #tpu.dot_dimension_numbers<[1], [0], [0], [1], [0, 0, 1, 1], [], []>} : vector<16x32xbf16>, vector<32x8xbf16>, vector<16x8xf32> -> vector<16x8xf32>
    %c1_41 = arith.constant 1 : index
    %c0_42 = arith.constant 0 : index
    %c0_43 = arith.constant 0 : index
    %c0_44 = arith.constant 0 : index
    %32 = vector.load %arg4[%c1_41, %c0_42, %c0_43, %c0_44] : memref<3x4x1x8xf32, #tpu.memory_space<vmem>>, vector<1x1x1x8xf32>
    %33 = vector.shape_cast %32 : vector<1x1x1x8xf32> to vector<1x8xf32>
    %34 = vector.broadcast %33 : vector<1x8xf32> to vector<16x8xf32>
    %35 = arith.addf %31, %34 : vector<16x8xf32>
    %c2_45 = arith.constant 2 : index
    %c0_46 = arith.constant 0 : index
    %c0_47 = arith.constant 0 : index
    %c0_48 = arith.constant 0 : index
    %36 = vector.load %arg3[%c2_45, %c0_46, %c0_47, %c0_48] : memref<3x4x32x8xbf16, #tpu.memory_space<vmem>>, vector<1x1x32x8xbf16>
    %37 = vector.shape_cast %36 : vector<1x1x32x8xbf16> to vector<32x8xbf16>
    %cst_49 = arith.constant dense<0.000000e+00> : vector<16x8xf32>
    %38 = tpu.matmul %21, %37, %cst_49 {dimension_numbers = #tpu.dot_dimension_numbers<[1], [0], [0], [1], [0, 0, 1, 1], [], []>} : vector<16x32xbf16>, vector<32x8xbf16>, vector<16x8xf32> -> vector<16x8xf32>
    %c2_50 = arith.constant 2 : index
    %c0_51 = arith.constant 0 : index
    %c0_52 = arith.constant 0 : index
    %c0_53 = arith.constant 0 : index
    %39 = vector.load %arg4[%c2_50, %c0_51, %c0_52, %c0_53] : memref<3x4x1x8xf32, #tpu.memory_space<vmem>>, vector<1x1x1x8xf32>
    %40 = vector.shape_cast %39 : vector<1x1x1x8xf32> to vector<1x8xf32>
    %41 = vector.broadcast %40 : vector<1x8xf32> to vector<16x8xf32>
    %42 = arith.addf %38, %41 : vector<16x8xf32>
    %cst_54 = arith.constant 0.353553385 : f32
    %43 = vector.broadcast %cst_54 : f32 to vector<16x8xf32>
    %44 = arith.mulf %28, %43 : vector<16x8xf32>
    %c0_55 = arith.constant 0 : index
    %c1_56 = arith.constant 1 : index
    %c0_57 = arith.constant 0 : index
    %c0_58 = arith.constant 0 : index
    %45 = vector.load %arg3[%c0_55, %c1_56, %c0_57, %c0_58] : memref<3x4x32x8xbf16, #tpu.memory_space<vmem>>, vector<1x1x32x8xbf16>
    %46 = vector.shape_cast %45 : vector<1x1x32x8xbf16> to vector<32x8xbf16>
    %cst_59 = arith.constant dense<0.000000e+00> : vector<16x8xf32>
    %47 = tpu.matmul %20, %46, %cst_59 {dimension_numbers = #tpu.dot_dimension_numbers<[1], [0], [0], [1], [0, 0, 1, 1], [], []>} : vector<16x32xbf16>, vector<32x8xbf16>, vector<16x8xf32> -> vector<16x8xf32>
    %c0_60 = arith.constant 0 : index
    %c1_61 = arith.constant 1 : index
    %c0_62 = arith.constant 0 : index
    %c0_63 = arith.constant 0 : index
    %48 = vector.load %arg4[%c0_60, %c1_61, %c0_62, %c0_63] : memref<3x4x1x8xf32, #tpu.memory_space<vmem>>, vector<1x1x1x8xf32>
    %49 = vector.shape_cast %48 : vector<1x1x1x8xf32> to vector<1x8xf32>
    %50 = vector.broadcast %49 : vector<1x8xf32> to vector<16x8xf32>
    %51 = arith.addf %47, %50 : vector<16x8xf32>
    %c1_64 = arith.constant 1 : index
    %c1_65 = arith.constant 1 : index
    %c0_66 = arith.constant 0 : index
    %c0_67 = arith.constant 0 : index
    %52 = vector.load %arg3[%c1_64, %c1_65, %c0_66, %c0_67] : memref<3x4x32x8xbf16, #tpu.memory_space<vmem>>, vector<1x1x32x8xbf16>
    %53 = vector.shape_cast %52 : vector<1x1x32x8xbf16> to vector<32x8xbf16>
    %cst_68 = arith.constant dense<0.000000e+00> : vector<16x8xf32>
    %54 = tpu.matmul %21, %53, %cst_68 {dimension_numbers = #tpu.dot_dimension_numbers<[1], [0], [0], [1], [0, 0, 1, 1], [], []>} : vector<16x32xbf16>, vector<32x8xbf16>, vector<16x8xf32> -> vector<16x8xf32>
    %c1_69 = arith.constant 1 : index
    %c1_70 = arith.constant 1 : index
    %c0_71 = arith.constant 0 : index
    %c0_72 = arith.constant 0 : index
    %55 = vector.load %arg4[%c1_69, %c1_70, %c0_71, %c0_72] : memref<3x4x1x8xf32, #tpu.memory_space<vmem>>, vector<1x1x1x8xf32>
    %56 = vector.shape_cast %55 : vector<1x1x1x8xf32> to vector<1x8xf32>
    %57 = vector.broadcast %56 : vector<1x8xf32> to vector<16x8xf32>
    %58 = arith.addf %54, %57 : vector<16x8xf32>
    %c2_73 = arith.constant 2 : index
    %c1_74 = arith.constant 1 : index
    %c0_75 = arith.constant 0 : index
    %c0_76 = arith.constant 0 : index
    %59 = vector.load %arg3[%c2_73, %c1_74, %c0_75, %c0_76] : memref<3x4x32x8xbf16, #tpu.memory_space<vmem>>, vector<1x1x32x8xbf16>
    %60 = vector.shape_cast %59 : vector<1x1x32x8xbf16> to vector<32x8xbf16>
    %cst_77 = arith.constant dense<0.000000e+00> : vector<16x8xf32>
    %61 = tpu.matmul %21, %60, %cst_77 {dimension_numbers = #tpu.dot_dimension_numbers<[1], [0], [0], [1], [0, 0, 1, 1], [], []>} : vector<16x32xbf16>, vector<32x8xbf16>, vector<16x8xf32> -> vector<16x8xf32>
    %c2_78 = arith.constant 2 : index
    %c1_79 = arith.constant 1 : index
    %c0_80 = arith.constant 0 : index
    %c0_81 = arith.constant 0 : index
    %62 = vector.load %arg4[%c2_78, %c1_79, %c0_80, %c0_81] : memref<3x4x1x8xf32, #tpu.memory_space<vmem>>, vector<1x1x1x8xf32>
    %63 = vector.shape_cast %62 : vector<1x1x1x8xf32> to vector<1x8xf32>
    %64 = vector.broadcast %63 : vector<1x8xf32> to vector<16x8xf32>
    %65 = arith.addf %61, %64 : vector<16x8xf32>
    %cst_82 = arith.constant 0.353553385 : f32
    %66 = vector.broadcast %cst_82 : f32 to vector<16x8xf32>
    %67 = arith.mulf %51, %66 : vector<16x8xf32>
    %c0_83 = arith.constant 0 : index
    %c2_84 = arith.constant 2 : index
    %c0_85 = arith.constant 0 : index
    %c0_86 = arith.constant 0 : index
    %68 = vector.load %arg3[%c0_83, %c2_84, %c0_85, %c0_86] : memref<3x4x32x8xbf16, #tpu.memory_space<vmem>>, vector<1x1x32x8xbf16>
    %69 = vector.shape_cast %68 : vector<1x1x32x8xbf16> to vector<32x8xbf16>
    %cst_87 = arith.constant dense<0.000000e+00> : vector<16x8xf32>
    %70 = tpu.matmul %20, %69, %cst_87 {dimension_numbers = #tpu.dot_dimension_numbers<[1], [0], [0], [1], [0, 0, 1, 1], [], []>} : vector<16x32xbf16>, vector<32x8xbf16>, vector<16x8xf32> -> vector<16x8xf32>
    %c0_88 = arith.constant 0 : index
    %c2_89 = arith.constant 2 : index
    %c0_90 = arith.constant 0 : index
    %c0_91 = arith.constant 0 : index
    %71 = vector.load %arg4[%c0_88, %c2_89, %c0_90, %c0_91] : memref<3x4x1x8xf32, #tpu.memory_space<vmem>>, vector<1x1x1x8xf32>
    %72 = vector.shape_cast %71 : vector<1x1x1x8xf32> to vector<1x8xf32>
    %73 = vector.broadcast %72 : vector<1x8xf32> to vector<16x8xf32>
    %74 = arith.addf %70, %73 : vector<16x8xf32>
    %c1_92 = arith.constant 1 : index
    %c2_93 = arith.constant 2 : index
    %c0_94 = arith.constant 0 : index
    %c0_95 = arith.constant 0 : index
    %75 = vector.load %arg3[%c1_92, %c2_93, %c0_94, %c0_95] : memref<3x4x32x8xbf16, #tpu.memory_space<vmem>>, vector<1x1x32x8xbf16>
    %76 = vector.shape_cast %75 : vector<1x1x32x8xbf16> to vector<32x8xbf16>
    %cst_96 = arith.constant dense<0.000000e+00> : vector<16x8xf32>
    %77 = tpu.matmul %21, %76, %cst_96 {dimension_numbers = #tpu.dot_dimension_numbers<[1], [0], [0], [1], [0, 0, 1, 1], [], []>} : vector<16x32xbf16>, vector<32x8xbf16>, vector<16x8xf32> -> vector<16x8xf32>
    %c1_97 = arith.constant 1 : index
    %c2_98 = arith.constant 2 : index
    %c0_99 = arith.constant 0 : index
    %c0_100 = arith.constant 0 : index
    %78 = vector.load %arg4[%c1_97, %c2_98, %c0_99, %c0_100] : memref<3x4x1x8xf32, #tpu.memory_space<vmem>>, vector<1x1x1x8xf32>
    %79 = vector.shape_cast %78 : vector<1x1x1x8xf32> to vector<1x8xf32>
    %80 = vector.broadcast %79 : vector<1x8xf32> to vector<16x8xf32>
    %81 = arith.addf %77, %80 : vector<16x8xf32>
    %c2_101 = arith.constant 2 : index
    %c2_102 = arith.constant 2 : index
    %c0_103 = arith.constant 0 : index
    %c0_104 = arith.constant 0 : index
    %82 = vector.load %arg3[%c2_101, %c2_102, %c0_103, %c0_104] : memref<3x4x32x8xbf16, #tpu.memory_space<vmem>>, vector<1x1x32x8xbf16>
    %83 = vector.shape_cast %82 : vector<1x1x32x8xbf16> to vector<32x8xbf16>
    %cst_105 = arith.constant dense<0.000000e+00> : vector<16x8xf32>
    %84 = tpu.matmul %21, %83, %cst_105 {dimension_numbers = #tpu.dot_dimension_numbers<[1], [0], [0], [1], [0, 0, 1, 1], [], []>} : vector<16x32xbf16>, vector<32x8xbf16>, vector<16x8xf32> -> vector<16x8xf32>
    %c2_106 = arith.constant 2 : index
    %c2_107 = arith.constant 2 : index
    %c0_108 = arith.constant 0 : index
    %c0_109 = arith.constant 0 : index
    %85 = vector.load %arg4[%c2_106, %c2_107, %c0_108, %c0_109] : memref<3x4x1x8xf32, #tpu.memory_space<vmem>>, vector<1x1x1x8xf32>
    %86 = vector.shape_cast %85 : vector<1x1x1x8xf32> to vector<1x8xf32>
    %87 = vector.broadcast %86 : vector<1x8xf32> to vector<16x8xf32>
    %88 = arith.addf %84, %87 : vector<16x8xf32>
    %cst_110 = arith.constant 0.353553385 : f32
    %89 = vector.broadcast %cst_110 : f32 to vector<16x8xf32>
    %90 = arith.mulf %74, %89 : vector<16x8xf32>
    %c0_111 = arith.constant 0 : index
    %c3_112 = arith.constant 3 : index
    %c0_113 = arith.constant 0 : index
    %c0_114 = arith.constant 0 : index
    %91 = vector.load %arg3[%c0_111, %c3_112, %c0_113, %c0_114] : memref<3x4x32x8xbf16, #tpu.memory_space<vmem>>, vector<1x1x32x8xbf16>
    %92 = vector.shape_cast %91 : vector<1x1x32x8xbf16> to vector<32x8xbf16>
    %cst_115 = arith.constant dense<0.000000e+00> : vector<16x8xf32>
    %93 = tpu.matmul %20, %92, %cst_115 {dimension_numbers = #tpu.dot_dimension_numbers<[1], [0], [0], [1], [0, 0, 1, 1], [], []>} : vector<16x32xbf16>, vector<32x8xbf16>, vector<16x8xf32> -> vector<16x8xf32>
    %c0_116 = arith.constant 0 : index
    %c3_117 = arith.constant 3 : index
    %c0_118 = arith.constant 0 : index
    %c0_119 = arith.constant 0 : index
    %94 = vector.load %arg4[%c0_116, %c3_117, %c0_118, %c0_119] : memref<3x4x1x8xf32, #tpu.memory_space<vmem>>, vector<1x1x1x8xf32>
    %95 = vector.shape_cast %94 : vector<1x1x1x8xf32> to vector<1x8xf32>
    %96 = vector.broadcast %95 : vector<1x8xf32> to vector<16x8xf32>
    %97 = arith.addf %93, %96 : vector<16x8xf32>
    %c1_120 = arith.constant 1 : index
    %c3_121 = arith.constant 3 : index
    %c0_122 = arith.constant 0 : index
    %c0_123 = arith.constant 0 : index
    %98 = vector.load %arg3[%c1_120, %c3_121, %c0_122, %c0_123] : memref<3x4x32x8xbf16, #tpu.memory_space<vmem>>, vector<1x1x32x8xbf16>
    %99 = vector.shape_cast %98 : vector<1x1x32x8xbf16> to vector<32x8xbf16>
    %cst_124 = arith.constant dense<0.000000e+00> : vector<16x8xf32>
    %100 = tpu.matmul %21, %99, %cst_124 {dimension_numbers = #tpu.dot_dimension_numbers<[1], [0], [0], [1], [0, 0, 1, 1], [], []>} : vector<16x32xbf16>, vector<32x8xbf16>, vector<16x8xf32> -> vector<16x8xf32>
    %c1_125 = arith.constant 1 : index
    %c3_126 = arith.constant 3 : index
    %c0_127 = arith.constant 0 : index
    %c0_128 = arith.constant 0 : index
    %101 = vector.load %arg4[%c1_125, %c3_126, %c0_127, %c0_128] : memref<3x4x1x8xf32, #tpu.memory_space<vmem>>, vector<1x1x1x8xf32>
    %102 = vector.shape_cast %101 : vector<1x1x1x8xf32> to vector<1x8xf32>
    %103 = vector.broadcast %102 : vector<1x8xf32> to vector<16x8xf32>
    %104 = arith.addf %100, %103 : vector<16x8xf32>
    %c2_129 = arith.constant 2 : index
    %c3_130 = arith.constant 3 : index
    %c0_131 = arith.constant 0 : index
    %c0_132 = arith.constant 0 : index
    %105 = vector.load %arg3[%c2_129, %c3_130, %c0_131, %c0_132] : memref<3x4x32x8xbf16, #tpu.memory_space<vmem>>, vector<1x1x32x8xbf16>
    %106 = vector.shape_cast %105 : vector<1x1x32x8xbf16> to vector<32x8xbf16>
    %cst_133 = arith.constant dense<0.000000e+00> : vector<16x8xf32>
    %107 = tpu.matmul %21, %106, %cst_133 {dimension_numbers = #tpu.dot_dimension_numbers<[1], [0], [0], [1], [0, 0, 1, 1], [], []>} : vector<16x32xbf16>, vector<32x8xbf16>, vector<16x8xf32> -> vector<16x8xf32>
    %c2_134 = arith.constant 2 : index
    %c3_135 = arith.constant 3 : index
    %c0_136 = arith.constant 0 : index
    %c0_137 = arith.constant 0 : index
    %108 = vector.load %arg4[%c2_134, %c3_135, %c0_136, %c0_137] : memref<3x4x1x8xf32, #tpu.memory_space<vmem>>, vector<1x1x1x8xf32>
    %109 = vector.shape_cast %108 : vector<1x1x1x8xf32> to vector<1x8xf32>
    %110 = vector.broadcast %109 : vector<1x8xf32> to vector<16x8xf32>
    %111 = arith.addf %107, %110 : vector<16x8xf32>
    %cst_138 = arith.constant 0.353553385 : f32
    %112 = vector.broadcast %cst_138 : f32 to vector<16x8xf32>
    %113 = arith.mulf %97, %112 : vector<16x8xf32>
    %114 = tpu.concatenate %44, %67, %90, %113 in 0 : vector<16x8xf32>, vector<16x8xf32>, vector<16x8xf32>, vector<16x8xf32> -> vector<64x8xf32>
    %115 = vector.shape_cast %114 : vector<64x8xf32> to vector<8x8x8xf32>
    %116 = arith.truncf %115 : vector<8x8x8xf32> to vector<8x8x8xbf16>
    %117 = tpu.concatenate %35, %58, %81, %104 in 0 : vector<16x8xf32>, vector<16x8xf32>, vector<16x8xf32>, vector<16x8xf32> -> vector<64x8xf32>
    %118 = vector.shape_cast %117 : vector<64x8xf32> to vector<8x8x8xf32>
    %119 = arith.truncf %118 : vector<8x8x8xf32> to vector<8x8x8xbf16>
    %120 = tpu.concatenate %42, %65, %88, %111 in 0 : vector<16x8xf32>, vector<16x8xf32>, vector<16x8xf32>, vector<16x8xf32> -> vector<64x8xf32>
    %121 = vector.shape_cast %120 : vector<64x8xf32> to vector<8x8x8xf32>
    %122 = arith.truncf %121 : vector<8x8x8xf32> to vector<8x8x8xbf16>
    "tpu.trace_start"() <{level = 10 : i32, message = "gqe,gke->gqk"}> : () -> ()
    %cst_139 = arith.constant dense<0.000000e+00> : vector<8x8x8xf32>
    %123 = tpu.matmul %116, %119, %cst_139 {dimension_numbers = #tpu.dot_dimension_numbers<[2], [2], [1], [1], [0, 0, 0, 1, 1, 1], [0], [0]>} : vector<8x8x8xbf16>, vector<8x8x8xbf16>, vector<8x8x8xf32> -> vector<8x8x8xf32>
    "tpu.trace_stop"() : () -> ()
    %cst_140 = arith.constant dense<0xFF800000> : vector<8x8xf32>
    %124 = vector.multi_reduction <maximumf>, %123, %cst_140 [1] : vector<8x8x8xf32> to vector<8x8xf32>
    %125 = vector.shape_cast %124 : vector<8x8xf32> to vector<8x1x8xf32>
    %126 = vector.broadcast %125 : vector<8x1x8xf32> to vector<8x8x8xf32>
    %127 = arith.subf %123, %126 : vector<8x8x8xf32>
    %128 = math.exp %127 : vector<8x8x8xf32>
    %cst_141 = arith.constant dense<0.000000e+00> : vector<8x8xf32>
    %129 = vector.multi_reduction <add>, %128, %cst_141 [1] : vector<8x8x8xf32> to vector<8x8xf32>
    %130 = vector.shape_cast %129 : vector<8x8xf32> to vector<8x1x8xf32>
    %131 = vector.broadcast %130 : vector<8x1x8xf32> to vector<8x8x8xf32>
    %132 = arith.divf %128, %131 : vector<8x8x8xf32>
    %133 = arith.truncf %132 : vector<8x8x8xf32> to vector<8x8x8xbf16>
    "tpu.trace_start"() <{level = 10 : i32, message = "gqk,gke->gqe"}> : () -> ()
    %cst_142 = arith.constant dense<0.000000e+00> : vector<8x8x8xf32>
    %134 = tpu.matmul %133, %122, %cst_142 {dimension_numbers = #tpu.dot_dimension_numbers<[2], [1], [1], [2], [0, 0, 0, 1, 1, 2], [0], [0]>} : vector<8x8x8xbf16>, vector<8x8x8xbf16>, vector<8x8x8xf32> -> vector<8x8x8xf32>
    "tpu.trace_stop"() : () -> ()
    %135 = vector.shape_cast %134 : vector<8x8x8xf32> to vector<64x8xf32>
    %136 = vector.extract_strided_slice %135 {offsets = [0, 0], sizes = [16, 8], strides = [1, 1]} : vector<64x8xf32> to vector<16x8xf32>
    %137 = arith.truncf %136 : vector<16x8xf32> to vector<16x8xbf16>
    %c0_143 = arith.constant 0 : index
    %c0_144 = arith.constant 0 : index
    %c0_145 = arith.constant 0 : index
    %138 = vector.load %arg5[%c0_143, %c0_144, %c0_145] : memref<4x8x32xbf16, #tpu.memory_space<vmem>>, vector<1x8x32xbf16>
    %139 = vector.shape_cast %138 : vector<1x8x32xbf16> to vector<8x32xbf16>
    %cst_146 = arith.constant dense<0.000000e+00> : vector<16x32xf32>
    %140 = tpu.matmul %137, %139, %cst_146 {dimension_numbers = #tpu.dot_dimension_numbers<[1], [0], [0], [1], [0, 0, 1, 1], [], []>} : vector<16x8xbf16>, vector<8x32xbf16>, vector<16x32xf32> -> vector<16x32xf32>
    %141 = vector.broadcast %12 : vector<1x32xf32> to vector<16x32xf32>
    %142 = arith.addf %141, %140 : vector<16x32xf32>
    %143 = vector.extract_strided_slice %135 {offsets = [16, 0], sizes = [16, 8], strides = [1, 1]} : vector<64x8xf32> to vector<16x8xf32>
    %144 = arith.truncf %143 : vector<16x8xf32> to vector<16x8xbf16>
    %c1_147 = arith.constant 1 : index
    %c0_148 = arith.constant 0 : index
    %c0_149 = arith.constant 0 : index
    %145 = vector.load %arg5[%c1_147, %c0_148, %c0_149] : memref<4x8x32xbf16, #tpu.memory_space<vmem>>, vector<1x8x32xbf16>
    %146 = vector.shape_cast %145 : vector<1x8x32xbf16> to vector<8x32xbf16>
    %cst_150 = arith.constant dense<0.000000e+00> : vector<16x32xf32>
    %147 = tpu.matmul %144, %146, %cst_150 {dimension_numbers = #tpu.dot_dimension_numbers<[1], [0], [0], [1], [0, 0, 1, 1], [], []>} : vector<16x8xbf16>, vector<8x32xbf16>, vector<16x32xf32> -> vector<16x32xf32>
    %148 = arith.addf %142, %147 : vector<16x32xf32>
    %149 = vector.extract_strided_slice %135 {offsets = [32, 0], sizes = [16, 8], strides = [1, 1]} : vector<64x8xf32> to vector<16x8xf32>
    %150 = arith.truncf %149 : vector<16x8xf32> to vector<16x8xbf16>
    %c2_151 = arith.constant 2 : index
    %c0_152 = arith.constant 0 : index
    %c0_153 = arith.constant 0 : index
    %151 = vector.load %arg5[%c2_151, %c0_152, %c0_153] : memref<4x8x32xbf16, #tpu.memory_space<vmem>>, vector<1x8x32xbf16>
    %152 = vector.shape_cast %151 : vector<1x8x32xbf16> to vector<8x32xbf16>
    %cst_154 = arith.constant dense<0.000000e+00> : vector<16x32xf32>
    %153 = tpu.matmul %150, %152, %cst_154 {dimension_numbers = #tpu.dot_dimension_numbers<[1], [0], [0], [1], [0, 0, 1, 1], [], []>} : vector<16x8xbf16>, vector<8x32xbf16>, vector<16x32xf32> -> vector<16x32xf32>
    %154 = arith.addf %148, %153 : vector<16x32xf32>
    %155 = vector.extract_strided_slice %135 {offsets = [48, 0], sizes = [16, 8], strides = [1, 1]} : vector<64x8xf32> to vector<16x8xf32>
    %156 = arith.truncf %155 : vector<16x8xf32> to vector<16x8xbf16>
    %c3_155 = arith.constant 3 : index
    %c0_156 = arith.constant 0 : index
    %c0_157 = arith.constant 0 : index
    %157 = vector.load %arg5[%c3_155, %c0_156, %c0_157] : memref<4x8x32xbf16, #tpu.memory_space<vmem>>, vector<1x8x32xbf16>
    %158 = vector.shape_cast %157 : vector<1x8x32xbf16> to vector<8x32xbf16>
    %cst_158 = arith.constant dense<0.000000e+00> : vector<16x32xf32>
    %159 = tpu.matmul %156, %158, %cst_158 {dimension_numbers = #tpu.dot_dimension_numbers<[1], [0], [0], [1], [0, 0, 1, 1], [], []>} : vector<16x8xbf16>, vector<8x32xbf16>, vector<16x32xf32> -> vector<16x32xf32>
    %160 = arith.addf %154, %159 : vector<16x32xf32>
    %161 = arith.addf %18, %160 : vector<16x32xf32>
    %cst_159 = arith.constant dense<0.000000e+00> : vector<16xf32>
    %162 = vector.multi_reduction <add>, %161, %cst_159 [1] : vector<16x32xf32> to vector<16xf32>
    %163 = vector.shape_cast %162 : vector<16xf32> to vector<16x1xf32>
    %cst_160 = arith.constant 3.200000e+01 : f32
    %164 = vector.broadcast %cst_160 : f32 to vector<16x1xf32>
    %165 = arith.divf %163, %164 : vector<16x1xf32>
    %166 = vector.broadcast %165 : vector<16x1xf32> to vector<16x32xf32>
    %167 = arith.subf %161, %166 : vector<16x32xf32>
    %168 = arith.mulf %167, %167 : vector<16x32xf32>
    %cst_161 = arith.constant dense<0.000000e+00> : vector<16xf32>
    %169 = vector.multi_reduction <add>, %168, %cst_161 [1] : vector<16x32xf32> to vector<16xf32>
    %170 = vector.shape_cast %169 : vector<16xf32> to vector<16x1xf32>
    %cst_162 = arith.constant 3.200000e+01 : f32
    %171 = vector.broadcast %cst_162 : f32 to vector<16x1xf32>
    %172 = arith.divf %170, %171 : vector<16x1xf32>
    %173 = vector.broadcast %165 : vector<16x1xf32> to vector<16x32xf32>
    %174 = arith.subf %161, %173 : vector<16x32xf32>
    %cst_163 = arith.constant 9.99999974E-6 : f32
    %175 = vector.broadcast %cst_163 : f32 to vector<16x1xf32>
    %176 = arith.addf %172, %175 : vector<16x1xf32>
    %177 = math.rsqrt %176 : vector<16x1xf32>
    %178 = vector.broadcast %177 : vector<16x1xf32> to vector<16x32xf32>
    %179 = arith.mulf %174, %178 : vector<16x32xf32>
    %180 = vector.broadcast %1 : vector<1x32xf32> to vector<16x32xf32>
    %181 = arith.mulf %179, %180 : vector<16x32xf32>
    %182 = vector.broadcast %3 : vector<1x32xf32> to vector<16x32xf32>
    %183 = arith.addf %181, %182 : vector<16x32xf32>
    %184 = arith.truncf %183 : vector<16x32xf32> to vector<16x32xbf16>
    %c0_164 = arith.constant 0 : index
    %c0_165 = arith.constant 0 : index
    %c0_166 = arith.constant 0 : index
    %c0_167 = arith.constant 0 : index
    %185 = vector.load %arg7[%c0_164, %c0_165, %c0_166, %c0_167] : memref<3x4x32x8xbf16, #tpu.memory_space<vmem>>, vector<1x1x32x8xbf16>
    %186 = vector.shape_cast %185 : vector<1x1x32x8xbf16> to vector<32x8xbf16>
    %cst_168 = arith.constant dense<0.000000e+00> : vector<16x8xf32>
    %187 = tpu.matmul %19, %186, %cst_168 {dimension_numbers = #tpu.dot_dimension_numbers<[1], [0], [0], [1], [0, 0, 1, 1], [], []>} : vector<16x32xbf16>, vector<32x8xbf16>, vector<16x8xf32> -> vector<16x8xf32>
    %c0_169 = arith.constant 0 : index
    %c0_170 = arith.constant 0 : index
    %c0_171 = arith.constant 0 : index
    %c0_172 = arith.constant 0 : index
    %188 = vector.load %arg8[%c0_169, %c0_170, %c0_171, %c0_172] : memref<3x4x1x8xf32, #tpu.memory_space<vmem>>, vector<1x1x1x8xf32>
    %189 = vector.shape_cast %188 : vector<1x1x1x8xf32> to vector<1x8xf32>
    %190 = vector.broadcast %189 : vector<1x8xf32> to vector<16x8xf32>
    %191 = arith.addf %187, %190 : vector<16x8xf32>
    %c1_173 = arith.constant 1 : index
    %c0_174 = arith.constant 0 : index
    %c0_175 = arith.constant 0 : index
    %c0_176 = arith.constant 0 : index
    %192 = vector.load %arg7[%c1_173, %c0_174, %c0_175, %c0_176] : memref<3x4x32x8xbf16, #tpu.memory_space<vmem>>, vector<1x1x32x8xbf16>
    %193 = vector.shape_cast %192 : vector<1x1x32x8xbf16> to vector<32x8xbf16>
    %cst_177 = arith.constant dense<0.000000e+00> : vector<16x8xf32>
    %194 = tpu.matmul %184, %193, %cst_177 {dimension_numbers = #tpu.dot_dimension_numbers<[1], [0], [0], [1], [0, 0, 1, 1], [], []>} : vector<16x32xbf16>, vector<32x8xbf16>, vector<16x8xf32> -> vector<16x8xf32>
    %c1_178 = arith.constant 1 : index
    %c0_179 = arith.constant 0 : index
    %c0_180 = arith.constant 0 : index
    %c0_181 = arith.constant 0 : index
    %195 = vector.load %arg8[%c1_178, %c0_179, %c0_180, %c0_181] : memref<3x4x1x8xf32, #tpu.memory_space<vmem>>, vector<1x1x1x8xf32>
    %196 = vector.shape_cast %195 : vector<1x1x1x8xf32> to vector<1x8xf32>
    %197 = vector.broadcast %196 : vector<1x8xf32> to vector<16x8xf32>
    %198 = arith.addf %194, %197 : vector<16x8xf32>
    %c2_182 = arith.constant 2 : index
    %c0_183 = arith.constant 0 : index
    %c0_184 = arith.constant 0 : index
    %c0_185 = arith.constant 0 : index
    %199 = vector.load %arg7[%c2_182, %c0_183, %c0_184, %c0_185] : memref<3x4x32x8xbf16, #tpu.memory_space<vmem>>, vector<1x1x32x8xbf16>
    %200 = vector.shape_cast %199 : vector<1x1x32x8xbf16> to vector<32x8xbf16>
    %cst_186 = arith.constant dense<0.000000e+00> : vector<16x8xf32>
    %201 = tpu.matmul %184, %200, %cst_186 {dimension_numbers = #tpu.dot_dimension_numbers<[1], [0], [0], [1], [0, 0, 1, 1], [], []>} : vector<16x32xbf16>, vector<32x8xbf16>, vector<16x8xf32> -> vector<16x8xf32>
    %c2_187 = arith.constant 2 : index
    %c0_188 = arith.constant 0 : index
    %c0_189 = arith.constant 0 : index
    %c0_190 = arith.constant 0 : index
    %202 = vector.load %arg8[%c2_187, %c0_188, %c0_189, %c0_190] : memref<3x4x1x8xf32, #tpu.memory_space<vmem>>, vector<1x1x1x8xf32>
    %203 = vector.shape_cast %202 : vector<1x1x1x8xf32> to vector<1x8xf32>
    %204 = vector.broadcast %203 : vector<1x8xf32> to vector<16x8xf32>
    %205 = arith.addf %201, %204 : vector<16x8xf32>
    %cst_191 = arith.constant 0.353553385 : f32
    %206 = vector.broadcast %cst_191 : f32 to vector<16x8xf32>
    %207 = arith.mulf %191, %206 : vector<16x8xf32>
    %c0_192 = arith.constant 0 : index
    %c1_193 = arith.constant 1 : index
    %c0_194 = arith.constant 0 : index
    %c0_195 = arith.constant 0 : index
    %208 = vector.load %arg7[%c0_192, %c1_193, %c0_194, %c0_195] : memref<3x4x32x8xbf16, #tpu.memory_space<vmem>>, vector<1x1x32x8xbf16>
    %209 = vector.shape_cast %208 : vector<1x1x32x8xbf16> to vector<32x8xbf16>
    %cst_196 = arith.constant dense<0.000000e+00> : vector<16x8xf32>
    %210 = tpu.matmul %19, %209, %cst_196 {dimension_numbers = #tpu.dot_dimension_numbers<[1], [0], [0], [1], [0, 0, 1, 1], [], []>} : vector<16x32xbf16>, vector<32x8xbf16>, vector<16x8xf32> -> vector<16x8xf32>
    %c0_197 = arith.constant 0 : index
    %c1_198 = arith.constant 1 : index
    %c0_199 = arith.constant 0 : index
    %c0_200 = arith.constant 0 : index
    %211 = vector.load %arg8[%c0_197, %c1_198, %c0_199, %c0_200] : memref<3x4x1x8xf32, #tpu.memory_space<vmem>>, vector<1x1x1x8xf32>
    %212 = vector.shape_cast %211 : vector<1x1x1x8xf32> to vector<1x8xf32>
    %213 = vector.broadcast %212 : vector<1x8xf32> to vector<16x8xf32>
    %214 = arith.addf %210, %213 : vector<16x8xf32>
    %c1_201 = arith.constant 1 : index
    %c1_202 = arith.constant 1 : index
    %c0_203 = arith.constant 0 : index
    %c0_204 = arith.constant 0 : index
    %215 = vector.load %arg7[%c1_201, %c1_202, %c0_203, %c0_204] : memref<3x4x32x8xbf16, #tpu.memory_space<vmem>>, vector<1x1x32x8xbf16>
    %216 = vector.shape_cast %215 : vector<1x1x32x8xbf16> to vector<32x8xbf16>
    %cst_205 = arith.constant dense<0.000000e+00> : vector<16x8xf32>
    %217 = tpu.matmul %184, %216, %cst_205 {dimension_numbers = #tpu.dot_dimension_numbers<[1], [0], [0], [1], [0, 0, 1, 1], [], []>} : vector<16x32xbf16>, vector<32x8xbf16>, vector<16x8xf32> -> vector<16x8xf32>
    %c1_206 = arith.constant 1 : index
    %c1_207 = arith.constant 1 : index
    %c0_208 = arith.constant 0 : index
    %c0_209 = arith.constant 0 : index
    %218 = vector.load %arg8[%c1_206, %c1_207, %c0_208, %c0_209] : memref<3x4x1x8xf32, #tpu.memory_space<vmem>>, vector<1x1x1x8xf32>
    %219 = vector.shape_cast %218 : vector<1x1x1x8xf32> to vector<1x8xf32>
    %220 = vector.broadcast %219 : vector<1x8xf32> to vector<16x8xf32>
    %221 = arith.addf %217, %220 : vector<16x8xf32>
    %c2_210 = arith.constant 2 : index
    %c1_211 = arith.constant 1 : index
    %c0_212 = arith.constant 0 : index
    %c0_213 = arith.constant 0 : index
    %222 = vector.load %arg7[%c2_210, %c1_211, %c0_212, %c0_213] : memref<3x4x32x8xbf16, #tpu.memory_space<vmem>>, vector<1x1x32x8xbf16>
    %223 = vector.shape_cast %222 : vector<1x1x32x8xbf16> to vector<32x8xbf16>
    %cst_214 = arith.constant dense<0.000000e+00> : vector<16x8xf32>
    %224 = tpu.matmul %184, %223, %cst_214 {dimension_numbers = #tpu.dot_dimension_numbers<[1], [0], [0], [1], [0, 0, 1, 1], [], []>} : vector<16x32xbf16>, vector<32x8xbf16>, vector<16x8xf32> -> vector<16x8xf32>
    %c2_215 = arith.constant 2 : index
    %c1_216 = arith.constant 1 : index
    %c0_217 = arith.constant 0 : index
    %c0_218 = arith.constant 0 : index
    %225 = vector.load %arg8[%c2_215, %c1_216, %c0_217, %c0_218] : memref<3x4x1x8xf32, #tpu.memory_space<vmem>>, vector<1x1x1x8xf32>
    %226 = vector.shape_cast %225 : vector<1x1x1x8xf32> to vector<1x8xf32>
    %227 = vector.broadcast %226 : vector<1x8xf32> to vector<16x8xf32>
    %228 = arith.addf %224, %227 : vector<16x8xf32>
    %cst_219 = arith.constant 0.353553385 : f32
    %229 = vector.broadcast %cst_219 : f32 to vector<16x8xf32>
    %230 = arith.mulf %214, %229 : vector<16x8xf32>
    %c0_220 = arith.constant 0 : index
    %c2_221 = arith.constant 2 : index
    %c0_222 = arith.constant 0 : index
    %c0_223 = arith.constant 0 : index
    %231 = vector.load %arg7[%c0_220, %c2_221, %c0_222, %c0_223] : memref<3x4x32x8xbf16, #tpu.memory_space<vmem>>, vector<1x1x32x8xbf16>
    %232 = vector.shape_cast %231 : vector<1x1x32x8xbf16> to vector<32x8xbf16>
    %cst_224 = arith.constant dense<0.000000e+00> : vector<16x8xf32>
    %233 = tpu.matmul %19, %232, %cst_224 {dimension_numbers = #tpu.dot_dimension_numbers<[1], [0], [0], [1], [0, 0, 1, 1], [], []>} : vector<16x32xbf16>, vector<32x8xbf16>, vector<16x8xf32> -> vector<16x8xf32>
    %c0_225 = arith.constant 0 : index
    %c2_226 = arith.constant 2 : index
    %c0_227 = arith.constant 0 : index
    %c0_228 = arith.constant 0 : index
    %234 = vector.load %arg8[%c0_225, %c2_226, %c0_227, %c0_228] : memref<3x4x1x8xf32, #tpu.memory_space<vmem>>, vector<1x1x1x8xf32>
    %235 = vector.shape_cast %234 : vector<1x1x1x8xf32> to vector<1x8xf32>
    %236 = vector.broadcast %235 : vector<1x8xf32> to vector<16x8xf32>
    %237 = arith.addf %233, %236 : vector<16x8xf32>
    %c1_229 = arith.constant 1 : index
    %c2_230 = arith.constant 2 : index
    %c0_231 = arith.constant 0 : index
    %c0_232 = arith.constant 0 : index
    %238 = vector.load %arg7[%c1_229, %c2_230, %c0_231, %c0_232] : memref<3x4x32x8xbf16, #tpu.memory_space<vmem>>, vector<1x1x32x8xbf16>
    %239 = vector.shape_cast %238 : vector<1x1x32x8xbf16> to vector<32x8xbf16>
    %cst_233 = arith.constant dense<0.000000e+00> : vector<16x8xf32>
    %240 = tpu.matmul %184, %239, %cst_233 {dimension_numbers = #tpu.dot_dimension_numbers<[1], [0], [0], [1], [0, 0, 1, 1], [], []>} : vector<16x32xbf16>, vector<32x8xbf16>, vector<16x8xf32> -> vector<16x8xf32>
    %c1_234 = arith.constant 1 : index
    %c2_235 = arith.constant 2 : index
    %c0_236 = arith.constant 0 : index
    %c0_237 = arith.constant 0 : index
    %241 = vector.load %arg8[%c1_234, %c2_235, %c0_236, %c0_237] : memref<3x4x1x8xf32, #tpu.memory_space<vmem>>, vector<1x1x1x8xf32>
    %242 = vector.shape_cast %241 : vector<1x1x1x8xf32> to vector<1x8xf32>
    %243 = vector.broadcast %242 : vector<1x8xf32> to vector<16x8xf32>
    %244 = arith.addf %240, %243 : vector<16x8xf32>
    %c2_238 = arith.constant 2 : index
    %c2_239 = arith.constant 2 : index
    %c0_240 = arith.constant 0 : index
    %c0_241 = arith.constant 0 : index
    %245 = vector.load %arg7[%c2_238, %c2_239, %c0_240, %c0_241] : memref<3x4x32x8xbf16, #tpu.memory_space<vmem>>, vector<1x1x32x8xbf16>
    %246 = vector.shape_cast %245 : vector<1x1x32x8xbf16> to vector<32x8xbf16>
    %cst_242 = arith.constant dense<0.000000e+00> : vector<16x8xf32>
    %247 = tpu.matmul %184, %246, %cst_242 {dimension_numbers = #tpu.dot_dimension_numbers<[1], [0], [0], [1], [0, 0, 1, 1], [], []>} : vector<16x32xbf16>, vector<32x8xbf16>, vector<16x8xf32> -> vector<16x8xf32>
    %c2_243 = arith.constant 2 : index
    %c2_244 = arith.constant 2 : index
    %c0_245 = arith.constant 0 : index
    %c0_246 = arith.constant 0 : index
    %248 = vector.load %arg8[%c2_243, %c2_244, %c0_245, %c0_246] : memref<3x4x1x8xf32, #tpu.memory_space<vmem>>, vector<1x1x1x8xf32>
    %249 = vector.shape_cast %248 : vector<1x1x1x8xf32> to vector<1x8xf32>
    %250 = vector.broadcast %249 : vector<1x8xf32> to vector<16x8xf32>
    %251 = arith.addf %247, %250 : vector<16x8xf32>
    %cst_247 = arith.constant 0.353553385 : f32
    %252 = vector.broadcast %cst_247 : f32 to vector<16x8xf32>
    %253 = arith.mulf %237, %252 : vector<16x8xf32>
    %c0_248 = arith.constant 0 : index
    %c3_249 = arith.constant 3 : index
    %c0_250 = arith.constant 0 : index
    %c0_251 = arith.constant 0 : index
    %254 = vector.load %arg7[%c0_248, %c3_249, %c0_250, %c0_251] : memref<3x4x32x8xbf16, #tpu.memory_space<vmem>>, vector<1x1x32x8xbf16>
    %255 = vector.shape_cast %254 : vector<1x1x32x8xbf16> to vector<32x8xbf16>
    %cst_252 = arith.constant dense<0.000000e+00> : vector<16x8xf32>
    %256 = tpu.matmul %19, %255, %cst_252 {dimension_numbers = #tpu.dot_dimension_numbers<[1], [0], [0], [1], [0, 0, 1, 1], [], []>} : vector<16x32xbf16>, vector<32x8xbf16>, vector<16x8xf32> -> vector<16x8xf32>
    %c0_253 = arith.constant 0 : index
    %c3_254 = arith.constant 3 : index
    %c0_255 = arith.constant 0 : index
    %c0_256 = arith.constant 0 : index
    %257 = vector.load %arg8[%c0_253, %c3_254, %c0_255, %c0_256] : memref<3x4x1x8xf32, #tpu.memory_space<vmem>>, vector<1x1x1x8xf32>
    %258 = vector.shape_cast %257 : vector<1x1x1x8xf32> to vector<1x8xf32>
    %259 = vector.broadcast %258 : vector<1x8xf32> to vector<16x8xf32>
    %260 = arith.addf %256, %259 : vector<16x8xf32>
    %c1_257 = arith.constant 1 : index
    %c3_258 = arith.constant 3 : index
    %c0_259 = arith.constant 0 : index
    %c0_260 = arith.constant 0 : index
    %261 = vector.load %arg7[%c1_257, %c3_258, %c0_259, %c0_260] : memref<3x4x32x8xbf16, #tpu.memory_space<vmem>>, vector<1x1x32x8xbf16>
    %262 = vector.shape_cast %261 : vector<1x1x32x8xbf16> to vector<32x8xbf16>
    %cst_261 = arith.constant dense<0.000000e+00> : vector<16x8xf32>
    %263 = tpu.matmul %184, %262, %cst_261 {dimension_numbers = #tpu.dot_dimension_numbers<[1], [0], [0], [1], [0, 0, 1, 1], [], []>} : vector<16x32xbf16>, vector<32x8xbf16>, vector<16x8xf32> -> vector<16x8xf32>
    %c1_262 = arith.constant 1 : index
    %c3_263 = arith.constant 3 : index
    %c0_264 = arith.constant 0 : index
    %c0_265 = arith.constant 0 : index
    %264 = vector.load %arg8[%c1_262, %c3_263, %c0_264, %c0_265] : memref<3x4x1x8xf32, #tpu.memory_space<vmem>>, vector<1x1x1x8xf32>
    %265 = vector.shape_cast %264 : vector<1x1x1x8xf32> to vector<1x8xf32>
    %266 = vector.broadcast %265 : vector<1x8xf32> to vector<16x8xf32>
    %267 = arith.addf %263, %266 : vector<16x8xf32>
    %c2_266 = arith.constant 2 : index
    %c3_267 = arith.constant 3 : index
    %c0_268 = arith.constant 0 : index
    %c0_269 = arith.constant 0 : index
    %268 = vector.load %arg7[%c2_266, %c3_267, %c0_268, %c0_269] : memref<3x4x32x8xbf16, #tpu.memory_space<vmem>>, vector<1x1x32x8xbf16>
    %269 = vector.shape_cast %268 : vector<1x1x32x8xbf16> to vector<32x8xbf16>
    %cst_270 = arith.constant dense<0.000000e+00> : vector<16x8xf32>
    %270 = tpu.matmul %184, %269, %cst_270 {dimension_numbers = #tpu.dot_dimension_numbers<[1], [0], [0], [1], [0, 0, 1, 1], [], []>} : vector<16x32xbf16>, vector<32x8xbf16>, vector<16x8xf32> -> vector<16x8xf32>
    %c2_271 = arith.constant 2 : index
    %c3_272 = arith.constant 3 : index
    %c0_273 = arith.constant 0 : index
    %c0_274 = arith.constant 0 : index
    %271 = vector.load %arg8[%c2_271, %c3_272, %c0_273, %c0_274] : memref<3x4x1x8xf32, #tpu.memory_space<vmem>>, vector<1x1x1x8xf32>
    %272 = vector.shape_cast %271 : vector<1x1x1x8xf32> to vector<1x8xf32>
    %273 = vector.broadcast %272 : vector<1x8xf32> to vector<16x8xf32>
    %274 = arith.addf %270, %273 : vector<16x8xf32>
    %cst_275 = arith.constant 0.353553385 : f32
    %275 = vector.broadcast %cst_275 : f32 to vector<16x8xf32>
    %276 = arith.mulf %260, %275 : vector<16x8xf32>
    %277 = tpu.concatenate %207, %230, %253, %276 in 0 : vector<16x8xf32>, vector<16x8xf32>, vector<16x8xf32>, vector<16x8xf32> -> vector<64x8xf32>
    %278 = vector.shape_cast %277 : vector<64x8xf32> to vector<8x8x8xf32>
    %279 = arith.truncf %278 : vector<8x8x8xf32> to vector<8x8x8xbf16>
    %280 = tpu.concatenate %198, %221, %244, %267 in 0 : vector<16x8xf32>, vector<16x8xf32>, vector<16x8xf32>, vector<16x8xf32> -> vector<64x8xf32>
    %281 = vector.shape_cast %280 : vector<64x8xf32> to vector<8x8x8xf32>
    %282 = arith.truncf %281 : vector<8x8x8xf32> to vector<8x8x8xbf16>
    %283 = tpu.concatenate %205, %228, %251, %274 in 0 : vector<16x8xf32>, vector<16x8xf32>, vector<16x8xf32>, vector<16x8xf32> -> vector<64x8xf32>
    %284 = vector.shape_cast %283 : vector<64x8xf32> to vector<8x8x8xf32>
    %285 = arith.truncf %284 : vector<8x8x8xf32> to vector<8x8x8xbf16>
    "tpu.trace_start"() <{level = 10 : i32, message = "gqe,gke->gqk"}> : () -> ()
    %cst_276 = arith.constant dense<0.000000e+00> : vector<8x8x8xf32>
    %286 = tpu.matmul %279, %282, %cst_276 {dimension_numbers = #tpu.dot_dimension_numbers<[2], [2], [1], [1], [0, 0, 0, 1, 1, 1], [0], [0]>} : vector<8x8x8xbf16>, vector<8x8x8xbf16>, vector<8x8x8xf32> -> vector<8x8x8xf32>
    "tpu.trace_stop"() : () -> ()
    %cst_277 = arith.constant dense<0xFF800000> : vector<8x8xf32>
    %287 = vector.multi_reduction <maximumf>, %286, %cst_277 [1] : vector<8x8x8xf32> to vector<8x8xf32>
    %288 = vector.shape_cast %287 : vector<8x8xf32> to vector<8x1x8xf32>
    %289 = vector.broadcast %288 : vector<8x1x8xf32> to vector<8x8x8xf32>
    %290 = arith.subf %286, %289 : vector<8x8x8xf32>
    %291 = math.exp %290 : vector<8x8x8xf32>
    %cst_278 = arith.constant dense<0.000000e+00> : vector<8x8xf32>
    %292 = vector.multi_reduction <add>, %291, %cst_278 [1] : vector<8x8x8xf32> to vector<8x8xf32>
    %293 = vector.shape_cast %292 : vector<8x8xf32> to vector<8x1x8xf32>
    %294 = vector.broadcast %293 : vector<8x1x8xf32> to vector<8x8x8xf32>
    %295 = arith.divf %291, %294 : vector<8x8x8xf32>
    %296 = arith.truncf %295 : vector<8x8x8xf32> to vector<8x8x8xbf16>
    "tpu.trace_start"() <{level = 10 : i32, message = "gqk,gke->gqe"}> : () -> ()
    %cst_279 = arith.constant dense<0.000000e+00> : vector<8x8x8xf32>
    %297 = tpu.matmul %296, %285, %cst_279 {dimension_numbers = #tpu.dot_dimension_numbers<[2], [1], [1], [2], [0, 0, 0, 1, 1, 2], [0], [0]>} : vector<8x8x8xbf16>, vector<8x8x8xbf16>, vector<8x8x8xf32> -> vector<8x8x8xf32>
    "tpu.trace_stop"() : () -> ()
    %298 = vector.shape_cast %297 : vector<8x8x8xf32> to vector<64x8xf32>
    %299 = vector.extract_strided_slice %298 {offsets = [0, 0], sizes = [16, 8], strides = [1, 1]} : vector<64x8xf32> to vector<16x8xf32>
    %300 = arith.truncf %299 : vector<16x8xf32> to vector<16x8xbf16>
    %c0_280 = arith.constant 0 : index
    %c0_281 = arith.constant 0 : index
    %c0_282 = arith.constant 0 : index
    %301 = vector.load %arg9[%c0_280, %c0_281, %c0_282] : memref<4x8x32xbf16, #tpu.memory_space<vmem>>, vector<1x8x32xbf16>
    %302 = vector.shape_cast %301 : vector<1x8x32xbf16> to vector<8x32xbf16>
    %cst_283 = arith.constant dense<0.000000e+00> : vector<16x32xf32>
    %303 = tpu.matmul %300, %302, %cst_283 {dimension_numbers = #tpu.dot_dimension_numbers<[1], [0], [0], [1], [0, 0, 1, 1], [], []>} : vector<16x8xbf16>, vector<8x32xbf16>, vector<16x32xf32> -> vector<16x32xf32>
    %304 = vector.broadcast %13 : vector<1x32xf32> to vector<16x32xf32>
    %305 = arith.addf %304, %303 : vector<16x32xf32>
    %306 = vector.extract_strided_slice %298 {offsets = [16, 0], sizes = [16, 8], strides = [1, 1]} : vector<64x8xf32> to vector<16x8xf32>
    %307 = arith.truncf %306 : vector<16x8xf32> to vector<16x8xbf16>
    %c1_284 = arith.constant 1 : index
    %c0_285 = arith.constant 0 : index
    %c0_286 = arith.constant 0 : index
    %308 = vector.load %arg9[%c1_284, %c0_285, %c0_286] : memref<4x8x32xbf16, #tpu.memory_space<vmem>>, vector<1x8x32xbf16>
    %309 = vector.shape_cast %308 : vector<1x8x32xbf16> to vector<8x32xbf16>
    %cst_287 = arith.constant dense<0.000000e+00> : vector<16x32xf32>
    %310 = tpu.matmul %307, %309, %cst_287 {dimension_numbers = #tpu.dot_dimension_numbers<[1], [0], [0], [1], [0, 0, 1, 1], [], []>} : vector<16x8xbf16>, vector<8x32xbf16>, vector<16x32xf32> -> vector<16x32xf32>
    %311 = arith.addf %305, %310 : vector<16x32xf32>
    %312 = vector.extract_strided_slice %298 {offsets = [32, 0], sizes = [16, 8], strides = [1, 1]} : vector<64x8xf32> to vector<16x8xf32>
    %313 = arith.truncf %312 : vector<16x8xf32> to vector<16x8xbf16>
    %c2_288 = arith.constant 2 : index
    %c0_289 = arith.constant 0 : index
    %c0_290 = arith.constant 0 : index
    %314 = vector.load %arg9[%c2_288, %c0_289, %c0_290] : memref<4x8x32xbf16, #tpu.memory_space<vmem>>, vector<1x8x32xbf16>
    %315 = vector.shape_cast %314 : vector<1x8x32xbf16> to vector<8x32xbf16>
    %cst_291 = arith.constant dense<0.000000e+00> : vector<16x32xf32>
    %316 = tpu.matmul %313, %315, %cst_291 {dimension_numbers = #tpu.dot_dimension_numbers<[1], [0], [0], [1], [0, 0, 1, 1], [], []>} : vector<16x8xbf16>, vector<8x32xbf16>, vector<16x32xf32> -> vector<16x32xf32>
    %317 = arith.addf %311, %316 : vector<16x32xf32>
    %318 = vector.extract_strided_slice %298 {offsets = [48, 0], sizes = [16, 8], strides = [1, 1]} : vector<64x8xf32> to vector<16x8xf32>
    %319 = arith.truncf %318 : vector<16x8xf32> to vector<16x8xbf16>
    %c3_292 = arith.constant 3 : index
    %c0_293 = arith.constant 0 : index
    %c0_294 = arith.constant 0 : index
    %320 = vector.load %arg9[%c3_292, %c0_293, %c0_294] : memref<4x8x32xbf16, #tpu.memory_space<vmem>>, vector<1x8x32xbf16>
    %321 = vector.shape_cast %320 : vector<1x8x32xbf16> to vector<8x32xbf16>
    %cst_295 = arith.constant dense<0.000000e+00> : vector<16x32xf32>
    %322 = tpu.matmul %319, %321, %cst_295 {dimension_numbers = #tpu.dot_dimension_numbers<[1], [0], [0], [1], [0, 0, 1, 1], [], []>} : vector<16x8xbf16>, vector<8x32xbf16>, vector<16x32xf32> -> vector<16x32xf32>
    %323 = arith.addf %317, %322 : vector<16x32xf32>
    %324 = arith.addf %183, %323 : vector<16x32xf32>
    %cst_296 = arith.constant dense<0.000000e+00> : vector<16xf32>
    %325 = vector.multi_reduction <add>, %324, %cst_296 [1] : vector<16x32xf32> to vector<16xf32>
    %326 = vector.shape_cast %325 : vector<16xf32> to vector<16x1xf32>
    %cst_297 = arith.constant 3.200000e+01 : f32
    %327 = vector.broadcast %cst_297 : f32 to vector<16x1xf32>
    %328 = arith.divf %326, %327 : vector<16x1xf32>
    %329 = vector.broadcast %328 : vector<16x1xf32> to vector<16x32xf32>
    %330 = arith.subf %324, %329 : vector<16x32xf32>
    %331 = arith.mulf %330, %330 : vector<16x32xf32>
    %cst_298 = arith.constant dense<0.000000e+00> : vector<16xf32>
    %332 = vector.multi_reduction <add>, %331, %cst_298 [1] : vector<16x32xf32> to vector<16xf32>
    %333 = vector.shape_cast %332 : vector<16xf32> to vector<16x1xf32>
    %cst_299 = arith.constant 3.200000e+01 : f32
    %334 = vector.broadcast %cst_299 : f32 to vector<16x1xf32>
    %335 = arith.divf %333, %334 : vector<16x1xf32>
    %336 = vector.broadcast %328 : vector<16x1xf32> to vector<16x32xf32>
    %337 = arith.subf %324, %336 : vector<16x32xf32>
    %cst_300 = arith.constant 9.99999974E-6 : f32
    %338 = vector.broadcast %cst_300 : f32 to vector<16x1xf32>
    %339 = arith.addf %335, %338 : vector<16x1xf32>
    %340 = math.rsqrt %339 : vector<16x1xf32>
    %341 = vector.broadcast %340 : vector<16x1xf32> to vector<16x32xf32>
    %342 = arith.mulf %337, %341 : vector<16x32xf32>
    %343 = vector.broadcast %5 : vector<1x32xf32> to vector<16x32xf32>
    %344 = arith.mulf %342, %343 : vector<16x32xf32>
    %345 = vector.broadcast %7 : vector<1x32xf32> to vector<16x32xf32>
    %346 = arith.addf %344, %345 : vector<16x32xf32>
    %347 = arith.truncf %346 : vector<16x32xf32> to vector<16x32xbf16>
    %cst_301 = arith.constant dense<0.000000e+00> : vector<16x32xf32>
    %348 = tpu.matmul %347, %14, %cst_301 {dimension_numbers = #tpu.dot_dimension_numbers<[1], [0], [0], [1], [0, 0, 1, 1], [], []>} : vector<16x32xbf16>, vector<32x32xbf16>, vector<16x32xf32> -> vector<16x32xf32>
    %349 = vector.broadcast %15 : vector<1x32xf32> to vector<16x32xf32>
    %350 = arith.addf %348, %349 : vector<16x32xf32>
    %cst_302 = arith.constant 0.000000e+00 : f32
    %351 = vector.broadcast %cst_302 : f32 to vector<16x32xf32>
    %352 = arith.maximumf %350, %351 : vector<16x32xf32>
    %353 = arith.truncf %352 : vector<16x32xf32> to vector<16x32xbf16>
    %cst_303 = arith.constant dense<0.000000e+00> : vector<16x32xf32>
    %354 = tpu.matmul %353, %16, %cst_303 {dimension_numbers = #tpu.dot_dimension_numbers<[1], [0], [0], [1], [0, 0, 1, 1], [], []>} : vector<16x32xbf16>, vector<32x32xbf16>, vector<16x32xf32> -> vector<16x32xf32>
    %355 = vector.broadcast %17 : vector<1x32xf32> to vector<16x32xf32>
    %356 = arith.addf %354, %355 : vector<16x32xf32>
    %357 = arith.addf %346, %356 : vector<16x32xf32>
    %cst_304 = arith.constant dense<0.000000e+00> : vector<16xf32>
    %358 = vector.multi_reduction <add>, %357, %cst_304 [1] : vector<16x32xf32> to vector<16xf32>
    %359 = vector.shape_cast %358 : vector<16xf32> to vector<16x1xf32>
    %cst_305 = arith.constant 3.200000e+01 : f32
    %360 = vector.broadcast %cst_305 : f32 to vector<16x1xf32>
    %361 = arith.divf %359, %360 : vector<16x1xf32>
    %362 = vector.broadcast %361 : vector<16x1xf32> to vector<16x32xf32>
    %363 = arith.subf %357, %362 : vector<16x32xf32>
    %364 = arith.mulf %363, %363 : vector<16x32xf32>
    %cst_306 = arith.constant dense<0.000000e+00> : vector<16xf32>
    %365 = vector.multi_reduction <add>, %364, %cst_306 [1] : vector<16x32xf32> to vector<16xf32>
    %366 = vector.shape_cast %365 : vector<16xf32> to vector<16x1xf32>
    %cst_307 = arith.constant 3.200000e+01 : f32
    %367 = vector.broadcast %cst_307 : f32 to vector<16x1xf32>
    %368 = arith.divf %366, %367 : vector<16x1xf32>
    %369 = vector.broadcast %361 : vector<16x1xf32> to vector<16x32xf32>
    %370 = arith.subf %357, %369 : vector<16x32xf32>
    %cst_308 = arith.constant 9.99999974E-6 : f32
    %371 = vector.broadcast %cst_308 : f32 to vector<16x1xf32>
    %372 = arith.addf %368, %371 : vector<16x1xf32>
    %373 = math.rsqrt %372 : vector<16x1xf32>
    %374 = vector.broadcast %373 : vector<16x1xf32> to vector<16x32xf32>
    %375 = arith.mulf %370, %374 : vector<16x32xf32>
    %376 = vector.broadcast %9 : vector<1x32xf32> to vector<16x32xf32>
    %377 = arith.mulf %375, %376 : vector<16x32xf32>
    %378 = vector.broadcast %11 : vector<1x32xf32> to vector<16x32xf32>
    %379 = arith.addf %377, %378 : vector<16x32xf32>
    %c0_309 = arith.constant 0 : index
    %c0_310 = arith.constant 0 : index
    %380 = vector.load %arg16[%c0_309, %c0_310] : memref<16x32xf32, #tpu.memory_space<vmem>>, vector<16x32xf32>
    tpu.vector_store %arg16[%c0_309, %c0_310], %379 {strides = array<i32>} : memref<16x32xf32, #tpu.memory_space<vmem>>, vector<16x32xf32>,
    return
  }
  func.func @transform_0(%arg0: i32) -> (i32, i32) {
    %c0_i32 = arith.constant 0 : i32
    %c0_i32_0 = arith.constant 0 : i32
    return %arg0, %c0_i32 : i32, i32
  }
  func.func @transform_1(%arg0: i32) -> (i32, i32) {
    %c0_i32 = arith.constant 0 : i32
    %c0_i32_0 = arith.constant 0 : i32
    return %arg0, %c0_i32 : i32, i32
  }
  func.func @transform_2(%arg0: i32) -> (i32, i32, i32, i32) {
    %c0_i32 = arith.constant 0 : i32
    %c0_i32_0 = arith.constant 0 : i32
    %c0_i32_1 = arith.constant 0 : i32
    %c0_i32_2 = arith.constant 0 : i32
    %c0_i32_3 = arith.constant 0 : i32
    return %c0_i32, %c0_i32_0, %c0_i32_1, %c0_i32_2 : i32, i32, i32, i32
  }
  func.func @transform_3(%arg0: i32) -> (i32, i32, i32, i32) {
    %c0_i32 = arith.constant 0 : i32
    %c0_i32_0 = arith.constant 0 : i32
    %c0_i32_1 = arith.constant 0 : i32
    %c0_i32_2 = arith.constant 0 : i32
    %c0_i32_3 = arith.constant 0 : i32
    return %c0_i32, %c0_i32_0, %c0_i32_1, %c0_i32_2 : i32, i32, i32, i32
  }
  func.func @transform_4(%arg0: i32) -> (i32, i32, i32) {
    %c0_i32 = arith.constant 0 : i32
    %c0_i32_0 = arith.constant 0 : i32
    %c0_i32_1 = arith.constant 0 : i32
    %c0_i32_2 = arith.constant 0 : i32
    return %c0_i32, %c0_i32_0, %c0_i32_1 : i32, i32, i32
  }
  func.func @transform_5(%arg0: i32) -> (i32, i32) {
    %c0_i32 = arith.constant 0 : i32
    %c0_i32_0 = arith.constant 0 : i32
    %c0_i32_1 = arith.constant 0 : i32
    return %c0_i32, %c0_i32_0 : i32, i32
  }
  func.func @transform_6(%arg0: i32) -> (i32, i32, i32, i32) {
    %c0_i32 = arith.constant 0 : i32
    %c0_i32_0 = arith.constant 0 : i32
    %c0_i32_1 = arith.constant 0 : i32
    %c0_i32_2 = arith.constant 0 : i32
    %c0_i32_3 = arith.constant 0 : i32
    return %c0_i32, %c0_i32_0, %c0_i32_1, %c0_i32_2 : i32, i32, i32, i32
  }
  func.func @transform_7(%arg0: i32) -> (i32, i32, i32, i32) {
    %c0_i32 = arith.constant 0 : i32
    %c0_i32_0 = arith.constant 0 : i32
    %c0_i32_1 = arith.constant 0 : i32
    %c0_i32_2 = arith.constant 0 : i32
    %c0_i32_3 = arith.constant 0 : i32
    return %c0_i32, %c0_i32_0, %c0_i32_1, %c0_i32_2 : i32, i32, i32, i32
  }
  func.func @transform_8(%arg0: i32) -> (i32, i32, i32) {
    %c0_i32 = arith.constant 0 : i32
    %c0_i32_0 = arith.constant 0 : i32
    %c0_i32_1 = arith.constant 0 : i32
    %c0_i32_2 = arith.constant 0 : i32
    return %c0_i32, %c0_i32_0, %c0_i32_1 : i32, i32, i32
  }
  func.func @transform_9(%arg0: i32) -> (i32, i32) {
    %c0_i32 = arith.constant 0 : i32
    %c0_i32_0 = arith.constant 0 : i32
    %c0_i32_1 = arith.constant 0 : i32
    return %c0_i32, %c0_i32_0 : i32, i32
  }
  func.func @transform_10(%arg0: i32) -> (i32, i32, i32) {
    %c0_i32 = arith.constant 0 : i32
    %c0_i32_0 = arith.constant 0 : i32
    %c0_i32_1 = arith.constant 0 : i32
    %c0_i32_2 = arith.constant 0 : i32
    return %c0_i32, %c0_i32_0, %c0_i32_1 : i32, i32, i32
  }
  func.func @transform_11(%arg0: i32) -> (i32, i32) {
    %c0_i32 = arith.constant 0 : i32
    %c0_i32_0 = arith.constant 0 : i32
    %c0_i32_1 = arith.constant 0 : i32
    return %c0_i32, %c0_i32_0 : i32, i32
  }
  func.func @transform_12(%arg0: i32) -> (i32, i32) {
    %c0_i32 = arith.constant 0 : i32
    %c0_i32_0 = arith.constant 0 : i32
    %c0_i32_1 = arith.constant 0 : i32
    return %c0_i32, %c0_i32_0 : i32, i32
  }
  func.func @transform_13(%arg0: i32) -> (i32, i32) {
    %c0_i32 = arith.constant 0 : i32
    %c0_i32_0 = arith.constant 0 : i32
    %c0_i32_1 = arith.constant 0 : i32
    return %c0_i32, %c0_i32_0 : i32, i32
  }
  func.func @transform_14(%arg0: i32) -> (i32, i32) {
    %c0_i32 = arith.constant 0 : i32
    %c0_i32_0 = arith.constant 0 : i32
    %c0_i32_1 = arith.constant 0 : i32
    return %c0_i32, %c0_i32_0 : i32, i32
  }
  func.func @transform_15(%arg0: i32) -> (i32, i32) {
    %c0_i32 = arith.constant 0 : i32
    %c0_i32_0 = arith.constant 0 : i32
    return %arg0, %c0_i32 : i32, i32
  }
}

module attributes {stable_mosaic.version = 11 : i64} {
  func.func @decoder_block_kernel(%arg0: i32, %arg1: memref<16x32xf32, #tpu.memory_space<vmem>>, %arg2: memref<16x32xbf16, #tpu.memory_space<vmem>>, %arg3: memref<3x4x32x8xbf16, #tpu.memory_space<vmem>>, %arg4: memref<3x4x1x8xf32, #tpu.memory_space<vmem>>, %arg5: memref<4x8x32xbf16, #tpu.memory_space<vmem>>, %arg6: memref<1x32xf32, #tpu.memory_space<vmem>>, %arg7: memref<3x4x32x8xbf16, #tpu.memory_space<vmem>>, %arg8: memref<3x4x1x8xf32, #tpu.memory_space<vmem>>, %arg9: memref<4x8x32xbf16, #tpu.memory_space<vmem>>, %arg10: memref<1x32xf32, #tpu.memory_space<vmem>>, %arg11: memref<6x1x32xf32, #tpu.memory_space<vmem>>, %arg12: memref<32x32xbf16, #tpu.memory_space<vmem>>, %arg13: memref<1x32xf32, #tpu.memory_space<vmem>>, %arg14: memref<32x32xbf16, #tpu.memory_space<vmem>>, %arg15: memref<1x32xf32, #tpu.memory_space<vmem>>, %arg16: memref<16x32xf32, #tpu.memory_space<vmem>>) attributes {dimension_semantics = [#tpu.dimension_semantics<parallel>], iteration_bounds = array<i64: 1>, scalar_prefetch = 0 : i64, scratch_operands = 0 : i64, tpu.core_type = #tpu.core_type<tc>, window_params = [{transform_indices = @transform_0, window_bounds = array<i64: 16, 32>}, {transform_indices = @transform_1, window_bounds = array<i64: 16, 32>}, {pipeline_mode = #tpu.pipeline_mode<synchronous>, transform_indices = @transform_2, window_bounds = array<i64: 3, 4, 32, 8>}, {pipeline_mode = #tpu.pipeline_mode<synchronous>, transform_indices = @transform_3, window_bounds = array<i64: 3, 4, 1, 8>}, {pipeline_mode = #tpu.pipeline_mode<synchronous>, transform_indices = @transform_4, window_bounds = array<i64: 4, 8, 32>}, {pipeline_mode = #tpu.pipeline_mode<synchronous>, transform_indices = @transform_5, window_bounds = array<i64: 1, 32>}, {pipeline_mode = #tpu.pipeline_mode<synchronous>, transform_indices = @transform_6, window_bounds = array<i64: 3, 4, 32, 8>}, {pipeline_mode = #tpu.pipeline_mode<synchronous>, transform_indices = @transform_7, window_bounds = array<i64: 3, 4, 1, 8>}, {pipeline_mode = #tpu.pipeline_mode<synchronous>, transform_indices = @transform_8, window_bounds = array<i64: 4, 8, 32>}, {pipeline_mode = #tpu.pipeline_mode<synchronous>, transform_indices = @transform_9, window_bounds = array<i64: 1, 32>}, {pipeline_mode = #tpu.pipeline_mode<synchronous>, transform_indices = @transform_10, window_bounds = array<i64: 6, 1, 32>}, {pipeline_mode = #tpu.pipeline_mode<synchronous>, transform_indices = @transform_11, window_bounds = array<i64: 32, 32>}, {pipeline_mode = #tpu.pipeline_mode<synchronous>, transform_indices = @transform_12, window_bounds = array<i64: 1, 32>}, {pipeline_mode = #tpu.pipeline_mode<synchronous>, transform_indices = @transform_13, window_bounds = array<i64: 32, 32>}, {pipeline_mode = #tpu.pipeline_mode<synchronous>, transform_indices = @transform_14, window_bounds = array<i64: 1, 32>}, {transform_indices = @transform_15, window_bounds = array<i64: 16, 32>}]} {
    %c0 = arith.constant 0 : index
    %c0_0 = arith.constant 0 : index
    %c0_1 = arith.constant 0 : index
    %0 = vector.load %arg11[%c0, %c0_0, %c0_1] : memref<6x1x32xf32, #tpu.memory_space<vmem>>, vector<1x1x32xf32>
    %1 = vector.shape_cast %0 : vector<1x1x32xf32> to vector<1x32xf32>
    %c1 = arith.constant 1 : index
    %c0_2 = arith.constant 0 : index
    %c0_3 = arith.constant 0 : index
    %2 = vector.load %arg11[%c1, %c0_2, %c0_3] : memref<6x1x32xf32, #tpu.memory_space<vmem>>, vector<1x1x32xf32>
    %3 = vector.shape_cast %2 : vector<1x1x32xf32> to vector<1x32xf32>
    %c2 = arith.constant 2 : index
    %c0_4 = arith.constant 0 : index
    %c0_5 = arith.constant 0 : index
    %4 = vector.load %arg11[%c2, %c0_4, %c0_5] : memref<6x1x32xf32, #tpu.memory_space<vmem>>, vector<1x1x32xf32>
    %5 = vector.shape_cast %4 : vector<1x1x32xf32> to vector<1x32xf32>
    %c3 = arith.constant 3 : index
    %c0_6 = arith.constant 0 : index
    %c0_7 = arith.constant 0 : index
    %6 = vector.load %arg11[%c3, %c0_6, %c0_7] : memref<6x1x32xf32, #tpu.memory_space<vmem>>, vector<1x1x32xf32>
    %7 = vector.shape_cast %6 : vector<1x1x32xf32> to vector<1x32xf32>
    %c4 = arith.constant 4 : index
    %c0_8 = arith.constant 0 : index
    %c0_9 = arith.constant 0 : index
    %8 = vector.load %arg11[%c4, %c0_8, %c0_9] : memref<6x1x32xf32, #tpu.memory_space<vmem>>, vector<1x1x32xf32>
    %9 = vector.shape_cast %8 : vector<1x1x32xf32> to vector<1x32xf32>
    %c5 = arith.constant 5 : index
    %c0_10 = arith.constant 0 : index
    %c0_11 = arith.constant 0 : index
    %10 = vector.load %arg11[%c5, %c0_10, %c0_11] : memref<6x1x32xf32, #tpu.memory_space<vmem>>, vector<1x1x32xf32>
    %11 = vector.shape_cast %10 : vector<1x1x32xf32> to vector<1x32xf32>
    %c0_12 = arith.constant 0 : index
    %c0_13 = arith.constant 0 : index
    %12 = vector.load %arg6[%c0_12, %c0_13] : memref<1x32xf32, #tpu.memory_space<vmem>>, vector<1x32xf32>
    %c0_14 = arith.constant 0 : index
    %c0_15 = arith.constant 0 : index
    %13 = vector.load %arg10[%c0_14, %c0_15] : memref<1x32xf32, #tpu.memory_space<vmem>>, vector<1x32xf32>
    %c0_16 = arith.constant 0 : index
    %c0_17 = arith.constant 0 : index
    %14 = vector.load %arg12[%c0_16, %c0_17] : memref<32x32xbf16, #tpu.memory_space<vmem>>, vector<32x32xbf16>
    %c0_18 = arith.constant 0 : index
    %c0_19 = arith.constant 0 : index
    %15 = vector.load %arg13[%c0_18, %c0_19] : memref<1x32xf32, #tpu.memory_space<vmem>>, vector<1x32xf32>
    %c0_20 = arith.constant 0 : index
    %c0_21 = arith.constant 0 : index
    %16 = vector.load %arg14[%c0_20, %c0_21] : memref<32x32xbf16, #tpu.memory_space<vmem>>, vector<32x32xbf16>
    %c0_22 = arith.constant 0 : index
    %c0_23 = arith.constant 0 : index
    %17 = vector.load %arg15[%c0_22, %c0_23] : memref<1x32xf32, #tpu.memory_space<vmem>>, vector<1x32xf32>
    %c0_24 = arith.constant 0 : index
    %c0_25 = arith.constant 0 : index
    %18 = vector.load %arg1[%c0_24, %c0_25] : memref<16x32xf32, #tpu.memory_space<vmem>>, vector<16x32xf32>
    %c0_26 = arith.constant 0 : index
    %c0_27 = arith.constant 0 : index
    %19 = vector.load %arg2[%c0_26, %c0_27] : memref<16x32xbf16, #tpu.memory_space<vmem>>, vector<16x32xbf16>
    %20 = arith.truncf %18 : vector<16x32xf32> to vector<16x32xbf16>
    %21 = arith.truncf %18 : vector<16x32xf32> to vector<16x32xbf16>
    %c0_28 = arith.constant 0 : index
    %c0_29 = arith.constant 0 : index
    %c0_30 = arith.constant 0 : index
    %c0_31 = arith.constant 0 : index
    %22 = vector.load %arg3[%c0_28, %c0_29, %c0_30, %c0_31] : memref<3x4x32x8xbf16, #tpu.memory_space<vmem>>, vector<1x1x32x8xbf16>
    %23 = vector.shape_cast %22 : vector<1x1x32x8xbf16> to vector<32x8xbf16>
    %cst = arith.constant dense<0.000000e+00> : vector<16x8xf32>
    %24 = tpu.matmul %20, %23, %cst {dimension_numbers = #tpu.dot_dimension_numbers<[1], [0], [0], [1], [0, 0, 1, 1], [], []>} : vector<16x32xbf16>, vector<32x8xbf16>, vector<16x8xf32> -> vector<16x8xf32>
    %c0_32 = arith.constant 0 : index
    %c0_33 = arith.constant 0 : index
    %c0_34 = arith.constant 0 : index
    %c0_35 = arith.constant 0 : index
    %25 = vector.load %arg4[%c0_32, %c0_33, %c0_34, %c0_35] : memref<3x4x1x8xf32, #tpu.memory_space<vmem>>, vector<1x1x1x8xf32>
    %26 = vector.shape_cast %25 : vector<1x1x1x8xf32> to vector<1x8xf32>
    %27 = vector.broadcast %26 : vector<1x8xf32> to vector<16x8xf32>
    %28 = arith.addf %24, %27 : vector<16x8xf32>
    %c1_36 = arith.constant 1 : index
    %c0_37 = arith.constant 0 : index
    %c0_38 = arith.constant 0 : index
    %c0_39 = arith.constant 0 : index
    %29 = vector.load %arg3[%c1_36, %c0_37, %c0_38, %c0_39] : memref<3x4x32x8xbf16, #tpu.memory_space<vmem>>, vector<1x1x32x8xbf16>
    %30 = vector.shape_cast %29 : vector<1x1x32x8xbf16> to vector<32x8xbf16>
    %cst_40 = arith.constant dense<0.000000e+00> : vector<16x8xf32>
    %31 = tpu.matmul %21, %30, %cst_40 {dimension_numbers = #tpu.dot_dimension_numbers<[1], [0], [0], [1], [0, 0, 1, 1], [], []>} : vector<16x32xbf16>, vector<32x8xbf16>, vector<16x8xf32> -> vector<16x8xf32>
    %c1_41 = arith.constant 1 : index
    %c0_42 = arith.constant 0 : index
    %c0_43 = arith.constant 0 : index
    %c0_44 = arith.constant 0 : index
    %32 = vector.load %arg4[%c1_41, %c0_42, %c0_43, %c0_44] : memref<3x4x1x8xf32, #tpu.memory_space<vmem>>, vector<1x1x1x8xf32>
    %33 = vector.shape_cast %32 : vector<1x1x1x8xf32> to vector<1x8xf32>
    %34 = vector.broadcast %33 : vector<1x8xf32> to vector<16x8xf32>
    %35 = arith.addf %31, %34 : vector<16x8xf32>
    %c2_45 = arith.constant 2 : index
    %c0_46 = arith.constant 0 : index
    %c0_47 = arith.constant 0 : index
    %c0_48 = arith.constant 0 : index
    %36 = vector.load %arg3[%c2_45, %c0_46, %c0_47, %c0_48] : memref<3x4x32x8xbf16, #tpu.memory_space<vmem>>, vector<1x1x32x8xbf16>
    %37 = vector.shape_cast %36 : vector<1x1x32x8xbf16> to vector<32x8xbf16>
    %cst_49 = arith.constant dense<0.000000e+00> : vector<16x8xf32>
    %38 = tpu.matmul %21, %37, %cst_49 {dimension_numbers = #tpu.dot_dimension_numbers<[1], [0], [0], [1], [0, 0, 1, 1], [], []>} : vector<16x32xbf16>, vector<32x8xbf16>, vector<16x8xf32> -> vector<16x8xf32>
    %c2_50 = arith.constant 2 : index
    %c0_51 = arith.constant 0 : index
    %c0_52 = arith.constant 0 : index
    %c0_53 = arith.constant 0 : index
    %39 = vector.load %arg4[%c2_50, %c0_51, %c0_52, %c0_53] : memref<3x4x1x8xf32, #tpu.memory_space<vmem>>, vector<1x1x1x8xf32>
    %40 = vector.shape_cast %39 : vector<1x1x1x8xf32> to vector<1x8xf32>
    %41 = vector.broadcast %40 : vector<1x8xf32> to vector<16x8xf32>
    %42 = arith.addf %38, %41 : vector<16x8xf32>
    %cst_54 = arith.constant 0.353553385 : f32
    %43 = vector.broadcast %cst_54 : f32 to vector<16x8xf32>
    %44 = arith.mulf %28, %43 : vector<16x8xf32>
    %c0_55 = arith.constant 0 : index
    %c1_56 = arith.constant 1 : index
    %c0_57 = arith.constant 0 : index
    %c0_58 = arith.constant 0 : index
    %45 = vector.load %arg3[%c0_55, %c1_56, %c0_57, %c0_58] : memref<3x4x32x8xbf16, #tpu.memory_space<vmem>>, vector<1x1x32x8xbf16>
    %46 = vector.shape_cast %45 : vector<1x1x32x8xbf16> to vector<32x8xbf16>
    %cst_59 = arith.constant dense<0.000000e+00> : vector<16x8xf32>
    %47 = tpu.matmul %20, %46, %cst_59 {dimension_numbers = #tpu.dot_dimension_numbers<[1], [0], [0], [1], [0, 0, 1, 1], [], []>} : vector<16x32xbf16>, vector<32x8xbf16>, vector<16x8xf32> -> vector<16x8xf32>
    %c0_60 = arith.constant 0 : index
    %c1_61 = arith.constant 1 : index
    %c0_62 = arith.constant 0 : index
    %c0_63 = arith.constant 0 : index
    %48 = vector.load %arg4[%c0_60, %c1_61, %c0_62, %c0_63] : memref<3x4x1x8xf32, #tpu.memory_space<vmem>>, vector<1x1x1x8xf32>
    %49 = vector.shape_cast %48 : vector<1x1x1x8xf32> to vector<1x8xf32>
    %50 = vector.broadcast %49 : vector<1x8xf32> to vector<16x8xf32>
    %51 = arith.addf %47, %50 : vector<16x8xf32>
    %c1_64 = arith.constant 1 : index
    %c1_65 = arith.constant 1 : index
    %c0_66 = arith.constant 0 : index
    %c0_67 = arith.constant 0 : index
    %52 = vector.load %arg3[%c1_64, %c1_65, %c0_66, %c0_67] : memref<3x4x32x8xbf16, #tpu.memory_space<vmem>>, vector<1x1x32x8xbf16>
    %53 = vector.shape_cast %52 : vector<1x1x32x8xbf16> to vector<32x8xbf16>
    %cst_68 = arith.constant dense<0.000000e+00> : vector<16x8xf32>
    %54 = tpu.matmul %21, %53, %cst_68 {dimension_numbers = #tpu.dot_dimension_numbers<[1], [0], [0], [1], [0, 0, 1, 1], [], []>} : vector<16x32xbf16>, vector<32x8xbf16>, vector<16x8xf32> -> vector<16x8xf32>
    %c1_69 = arith.constant 1 : index
    %c1_70 = arith.constant 1 : index
    %c0_71 = arith.constant 0 : index
    %c0_72 = arith.constant 0 : index
    %55 = vector.load %arg4[%c1_69, %c1_70, %c0_71, %c0_72] : memref<3x4x1x8xf32, #tpu.memory_space<vmem>>, vector<1x1x1x8xf32>
    %56 = vector.shape_cast %55 : vector<1x1x1x8xf32> to vector<1x8xf32>
    %57 = vector.broadcast %56 : vector<1x8xf32> to vector<16x8xf32>
    %58 = arith.addf %54, %57 : vector<16x8xf32>
    %c2_73 = arith.constant 2 : index
    %c1_74 = arith.constant 1 : index
    %c0_75 = arith.constant 0 : index
    %c0_76 = arith.constant 0 : index
    %59 = vector.load %arg3[%c2_73, %c1_74, %c0_75, %c0_76] : memref<3x4x32x8xbf16, #tpu.memory_space<vmem>>, vector<1x1x32x8xbf16>
    %60 = vector.shape_cast %59 : vector<1x1x32x8xbf16> to vector<32x8xbf16>
    %cst_77 = arith.constant dense<0.000000e+00> : vector<16x8xf32>
    %61 = tpu.matmul %21, %60, %cst_77 {dimension_numbers = #tpu.dot_dimension_numbers<[1], [0], [0], [1], [0, 0, 1, 1], [], []>} : vector<16x32xbf16>, vector<32x8xbf16>, vector<16x8xf32> -> vector<16x8xf32>
    %c2_78 = arith.constant 2 : index
    %c1_79 = arith.constant 1 : index
    %c0_80 = arith.constant 0 : index
    %c0_81 = arith.constant 0 : index
    %62 = vector.load %arg4[%c2_78, %c1_79, %c0_80, %c0_81] : memref<3x4x1x8xf32, #tpu.memory_space<vmem>>, vector<1x1x1x8xf32>
    %63 = vector.shape_cast %62 : vector<1x1x1x8xf32> to vector<1x8xf32>
    %64 = vector.broadcast %63 : vector<1x8xf32> to vector<16x8xf32>
    %65 = arith.addf %61, %64 : vector<16x8xf32>
    %cst_82 = arith.constant 0.353553385 : f32
    %66 = vector.broadcast %cst_82 : f32 to vector<16x8xf32>
    %67 = arith.mulf %51, %66 : vector<16x8xf32>
    %c0_83 = arith.constant 0 : index
    %c2_84 = arith.constant 2 : index
    %c0_85 = arith.constant 0 : index
    %c0_86 = arith.constant 0 : index
    %68 = vector.load %arg3[%c0_83, %c2_84, %c0_85, %c0_86] : memref<3x4x32x8xbf16, #tpu.memory_space<vmem>>, vector<1x1x32x8xbf16>
    %69 = vector.shape_cast %68 : vector<1x1x32x8xbf16> to vector<32x8xbf16>
    %cst_87 = arith.constant dense<0.000000e+00> : vector<16x8xf32>
    %70 = tpu.matmul %20, %69, %cst_87 {dimension_numbers = #tpu.dot_dimension_numbers<[1], [0], [0], [1], [0, 0, 1, 1], [], []>} : vector<16x32xbf16>, vector<32x8xbf16>, vector<16x8xf32> -> vector<16x8xf32>
    %c0_88 = arith.constant 0 : index
    %c2_89 = arith.constant 2 : index
    %c0_90 = arith.constant 0 : index
    %c0_91 = arith.constant 0 : index
    %71 = vector.load %arg4[%c0_88, %c2_89, %c0_90, %c0_91] : memref<3x4x1x8xf32, #tpu.memory_space<vmem>>, vector<1x1x1x8xf32>
    %72 = vector.shape_cast %71 : vector<1x1x1x8xf32> to vector<1x8xf32>
    %73 = vector.broadcast %72 : vector<1x8xf32> to vector<16x8xf32>
    %74 = arith.addf %70, %73 : vector<16x8xf32>
    %c1_92 = arith.constant 1 : index
    %c2_93 = arith.constant 2 : index
    %c0_94 = arith.constant 0 : index
    %c0_95 = arith.constant 0 : index
    %75 = vector.load %arg3[%c1_92, %c2_93, %c0_94, %c0_95] : memref<3x4x32x8xbf16, #tpu.memory_space<vmem>>, vector<1x1x32x8xbf16>
    %76 = vector.shape_cast %75 : vector<1x1x32x8xbf16> to vector<32x8xbf16>
    %cst_96 = arith.constant dense<0.000000e+00> : vector<16x8xf32>
    %77 = tpu.matmul %21, %76, %cst_96 {dimension_numbers = #tpu.dot_dimension_numbers<[1], [0], [0], [1], [0, 0, 1, 1], [], []>} : vector<16x32xbf16>, vector<32x8xbf16>, vector<16x8xf32> -> vector<16x8xf32>
    %c1_97 = arith.constant 1 : index
    %c2_98 = arith.constant 2 : index
    %c0_99 = arith.constant 0 : index
    %c0_100 = arith.constant 0 : index
    %78 = vector.load %arg4[%c1_97, %c2_98, %c0_99, %c0_100] : memref<3x4x1x8xf32, #tpu.memory_space<vmem>>, vector<1x1x1x8xf32>
    %79 = vector.shape_cast %78 : vector<1x1x1x8xf32> to vector<1x8xf32>
    %80 = vector.broadcast %79 : vector<1x8xf32> to vector<16x8xf32>
    %81 = arith.addf %77, %80 : vector<16x8xf32>
    %c2_101 = arith.constant 2 : index
    %c2_102 = arith.constant 2 : index
    %c0_103 = arith.constant 0 : index
    %c0_104 = arith.constant 0 : index
    %82 = vector.load %arg3[%c2_101, %c2_102, %c0_103, %c0_104] : memref<3x4x32x8xbf16, #tpu.memory_space<vmem>>, vector<1x1x32x8xbf16>
    %83 = vector.shape_cast %82 : vector<1x1x32x8xbf16> to vector<32x8xbf16>
    %cst_105 = arith.constant dense<0.000000e+00> : vector<16x8xf32>
    %84 = tpu.matmul %21, %83, %cst_105 {dimension_numbers = #tpu.dot_dimension_numbers<[1], [0], [0], [1], [0, 0, 1, 1], [], []>} : vector<16x32xbf16>, vector<32x8xbf16>, vector<16x8xf32> -> vector<16x8xf32>
    %c2_106 = arith.constant 2 : index
    %c2_107 = arith.constant 2 : index
    %c0_108 = arith.constant 0 : index
    %c0_109 = arith.constant 0 : index
    %85 = vector.load %arg4[%c2_106, %c2_107, %c0_108, %c0_109] : memref<3x4x1x8xf32, #tpu.memory_space<vmem>>, vector<1x1x1x8xf32>
    %86 = vector.shape_cast %85 : vector<1x1x1x8xf32> to vector<1x8xf32>
    %87 = vector.broadcast %86 : vector<1x8xf32> to vector<16x8xf32>
    %88 = arith.addf %84, %87 : vector<16x8xf32>
    %cst_110 = arith.constant 0.353553385 : f32
    %89 = vector.broadcast %cst_110 : f32 to vector<16x8xf32>
    %90 = arith.mulf %74, %89 : vector<16x8xf32>
    %c0_111 = arith.constant 0 : index
    %c3_112 = arith.constant 3 : index
    %c0_113 = arith.constant 0 : index
    %c0_114 = arith.constant 0 : index
    %91 = vector.load %arg3[%c0_111, %c3_112, %c0_113, %c0_114] : memref<3x4x32x8xbf16, #tpu.memory_space<vmem>>, vector<1x1x32x8xbf16>
    %92 = vector.shape_cast %91 : vector<1x1x32x8xbf16> to vector<32x8xbf16>
    %cst_115 = arith.constant dense<0.000000e+00> : vector<16x8xf32>
    %93 = tpu.matmul %20, %92, %cst_115 {dimension_numbers = #tpu.dot_dimension_numbers<[1], [0], [0], [1], [0, 0, 1, 1], [], []>} : vector<16x32xbf16>, vector<32x8xbf16>, vector<16x8xf32> -> vector<16x8xf32>
    %c0_116 = arith.constant 0 : index
    %c3_117 = arith.constant 3 : index
    %c0_118 = arith.constant 0 : index
    %c0_119 = arith.constant 0 : index
    %94 = vector.load %arg4[%c0_116, %c3_117, %c0_118, %c0_119] : memref<3x4x1x8xf32, #tpu.memory_space<vmem>>, vector<1x1x1x8xf32>
    %95 = vector.shape_cast %94 : vector<1x1x1x8xf32> to vector<1x8xf32>
    %96 = vector.broadcast %95 : vector<1x8xf32> to vector<16x8xf32>
    %97 = arith.addf %93, %96 : vector<16x8xf32>
    %c1_120 = arith.constant 1 : index
    %c3_121 = arith.constant 3 : index
    %c0_122 = arith.constant 0 : index
    %c0_123 = arith.constant 0 : index
    %98 = vector.load %arg3[%c1_120, %c3_121, %c0_122, %c0_123] : memref<3x4x32x8xbf16, #tpu.memory_space<vmem>>, vector<1x1x32x8xbf16>
    %99 = vector.shape_cast %98 : vector<1x1x32x8xbf16> to vector<32x8xbf16>
    %cst_124 = arith.constant dense<0.000000e+00> : vector<16x8xf32>
    %100 = tpu.matmul %21, %99, %cst_124 {dimension_numbers = #tpu.dot_dimension_numbers<[1], [0], [0], [1], [0, 0, 1, 1], [], []>} : vector<16x32xbf16>, vector<32x8xbf16>, vector<16x8xf32> -> vector<16x8xf32>
    %c1_125 = arith.constant 1 : index
    %c3_126 = arith.constant 3 : index
    %c0_127 = arith.constant 0 : index
    %c0_128 = arith.constant 0 : index
    %101 = vector.load %arg4[%c1_125, %c3_126, %c0_127, %c0_128] : memref<3x4x1x8xf32, #tpu.memory_space<vmem>>, vector<1x1x1x8xf32>
    %102 = vector.shape_cast %101 : vector<1x1x1x8xf32> to vector<1x8xf32>
    %103 = vector.broadcast %102 : vector<1x8xf32> to vector<16x8xf32>
    %104 = arith.addf %100, %103 : vector<16x8xf32>
    %c2_129 = arith.constant 2 : index
    %c3_130 = arith.constant 3 : index
    %c0_131 = arith.constant 0 : index
    %c0_132 = arith.constant 0 : index
    %105 = vector.load %arg3[%c2_129, %c3_130, %c0_131, %c0_132] : memref<3x4x32x8xbf16, #tpu.memory_space<vmem>>, vector<1x1x32x8xbf16>
    %106 = vector.shape_cast %105 : vector<1x1x32x8xbf16> to vector<32x8xbf16>
    %cst_133 = arith.constant dense<0.000000e+00> : vector<16x8xf32>
    %107 = tpu.matmul %21, %106, %cst_133 {dimension_numbers = #tpu.dot_dimension_numbers<[1], [0], [0], [1], [0, 0, 1, 1], [], []>} : vector<16x32xbf16>, vector<32x8xbf16>, vector<16x8xf32> -> vector<16x8xf32>
    %c2_134 = arith.constant 2 : index
    %c3_135 = arith.constant 3 : index
    %c0_136 = arith.constant 0 : index
    %c0_137 = arith.constant 0 : index
    %108 = vector.load %arg4[%c2_134, %c3_135, %c0_136, %c0_137] : memref<3x4x1x8xf32, #tpu.memory_space<vmem>>, vector<1x1x1x8xf32>
    %109 = vector.shape_cast %108 : vector<1x1x1x8xf32> to vector<1x8xf32>
    %110 = vector.broadcast %109 : vector<1x8xf32> to vector<16x8xf32>
    %111 = arith.addf %107, %110 : vector<16x8xf32>
    %cst_138 = arith.constant 0.353553385 : f32
    %112 = vector.broadcast %cst_138 : f32 to vector<16x8xf32>
    %113 = arith.mulf %97, %112 : vector<16x8xf32>
    %114 = tpu.concatenate %44, %67, %90, %113 in 0 : vector<16x8xf32>, vector<16x8xf32>, vector<16x8xf32>, vector<16x8xf32> -> vector<64x8xf32>
    %115 = vector.shape_cast %114 : vector<64x8xf32> to vector<8x8x8xf32>
    %116 = arith.truncf %115 : vector<8x8x8xf32> to vector<8x8x8xbf16>
    %117 = tpu.concatenate %35, %58, %81, %104 in 0 : vector<16x8xf32>, vector<16x8xf32>, vector<16x8xf32>, vector<16x8xf32> -> vector<64x8xf32>
    %118 = vector.shape_cast %117 : vector<64x8xf32> to vector<8x8x8xf32>
    %119 = arith.truncf %118 : vector<8x8x8xf32> to vector<8x8x8xbf16>
    %120 = tpu.concatenate %42, %65, %88, %111 in 0 : vector<16x8xf32>, vector<16x8xf32>, vector<16x8xf32>, vector<16x8xf32> -> vector<64x8xf32>
    %121 = vector.shape_cast %120 : vector<64x8xf32> to vector<8x8x8xf32>
    %122 = arith.truncf %121 : vector<8x8x8xf32> to vector<8x8x8xbf16>
    "tpu.trace_start"() <{level = 10 : i32, message = "gqe,gke->gqk"}> : () -> ()
    %cst_139 = arith.constant dense<0.000000e+00> : vector<8x8x8xf32>
    %123 = tpu.matmul %116, %119, %cst_139 {dimension_numbers = #tpu.dot_dimension_numbers<[2], [2], [1], [1], [0, 0, 0, 1, 1, 1], [0], [0]>} : vector<8x8x8xbf16>, vector<8x8x8xbf16>, vector<8x8x8xf32> -> vector<8x8x8xf32>
    "tpu.trace_stop"() : () -> ()
    %cst_140 = arith.constant dense<0xFF800000> : vector<8x8xf32>
    %124 = vector.multi_reduction <maximumf>, %123, %cst_140 [1] : vector<8x8x8xf32> to vector<8x8xf32>
    %125 = vector.shape_cast %124 : vector<8x8xf32> to vector<8x1x8xf32>
    %126 = vector.broadcast %125 : vector<8x1x8xf32> to vector<8x8x8xf32>
    %127 = arith.subf %123, %126 : vector<8x8x8xf32>
    %128 = math.exp %127 : vector<8x8x8xf32>
    %cst_141 = arith.constant dense<0.000000e+00> : vector<8x8xf32>
    %129 = vector.multi_reduction <add>, %128, %cst_141 [1] : vector<8x8x8xf32> to vector<8x8xf32>
    %130 = vector.shape_cast %129 : vector<8x8xf32> to vector<8x1x8xf32>
    %131 = vector.broadcast %130 : vector<8x1x8xf32> to vector<8x8x8xf32>
    %132 = arith.divf %128, %131 : vector<8x8x8xf32>
    %133 = arith.truncf %132 : vector<8x8x8xf32> to vector<8x8x8xbf16>
    "tpu.trace_start"() <{level = 10 : i32, message = "gqk,gke->gqe"}> : () -> ()
    %cst_142 = arith.constant dense<0.000000e+00> : vector<8x8x8xf32>
    %134 = tpu.matmul %133, %122, %cst_142 {dimension_numbers = #tpu.dot_dimension_numbers<[2], [1], [1], [2], [0, 0, 0, 1, 1, 2], [0], [0]>} : vector<8x8x8xbf16>, vector<8x8x8xbf16>, vector<8x8x8xf32> -> vector<8x8x8xf32>
    "tpu.trace_stop"() : () -> ()
    %135 = vector.shape_cast %134 : vector<8x8x8xf32> to vector<64x8xf32>
    %136 = vector.extract_strided_slice %135 {offsets = [0, 0], sizes = [16, 8], strides = [1, 1]} : vector<64x8xf32> to vector<16x8xf32>
    %137 = arith.truncf %136 : vector<16x8xf32> to vector<16x8xbf16>
    %c0_143 = arith.constant 0 : index
    %c0_144 = arith.constant 0 : index
    %c0_145 = arith.constant 0 : index
    %138 = vector.load %arg5[%c0_143, %c0_144, %c0_145] : memref<4x8x32xbf16, #tpu.memory_space<vmem>>, vector<1x8x32xbf16>
    %139 = vector.shape_cast %138 : vector<1x8x32xbf16> to vector<8x32xbf16>
    %cst_146 = arith.constant dense<0.000000e+00> : vector<16x32xf32>
    %140 = tpu.matmul %137, %139, %cst_146 {dimension_numbers = #tpu.dot_dimension_numbers<[1], [0], [0], [1], [0, 0, 1, 1], [], []>} : vector<16x8xbf16>, vector<8x32xbf16>, vector<16x32xf32> -> vector<16x32xf32>
    %141 = vector.broadcast %12 : vector<1x32xf32> to vector<16x32xf32>
    %142 = arith.addf %141, %140 : vector<16x32xf32>
    %143 = vector.extract_strided_slice %135 {offsets = [16, 0], sizes = [16, 8], strides = [1, 1]} : vector<64x8xf32> to vector<16x8xf32>
    %144 = arith.truncf %143 : vector<16x8xf32> to vector<16x8xbf16>
    %c1_147 = arith.constant 1 : index
    %c0_148 = arith.constant 0 : index
    %c0_149 = arith.constant 0 : index
    %145 = vector.load %arg5[%c1_147, %c0_148, %c0_149] : memref<4x8x32xbf16, #tpu.memory_space<vmem>>, vector<1x8x32xbf16>
    %146 = vector.shape_cast %145 : vector<1x8x32xbf16> to vector<8x32xbf16>
    %cst_150 = arith.constant dense<0.000000e+00> : vector<16x32xf32>
    %147 = tpu.matmul %144, %146, %cst_150 {dimension_numbers = #tpu.dot_dimension_numbers<[1], [0], [0], [1], [0, 0, 1, 1], [], []>} : vector<16x8xbf16>, vector<8x32xbf16>, vector<16x32xf32> -> vector<16x32xf32>
    %148 = arith.addf %142, %147 : vector<16x32xf32>
    %149 = vector.extract_strided_slice %135 {offsets = [32, 0], sizes = [16, 8], strides = [1, 1]} : vector<64x8xf32> to vector<16x8xf32>
    %150 = arith.truncf %149 : vector<16x8xf32> to vector<16x8xbf16>
    %c2_151 = arith.constant 2 : index
    %c0_152 = arith.constant 0 : index
    %c0_153 = arith.constant 0 : index
    %151 = vector.load %arg5[%c2_151, %c0_152, %c0_153] : memref<4x8x32xbf16, #tpu.memory_space<vmem>>, vector<1x8x32xbf16>
    %152 = vector.shape_cast %151 : vector<1x8x32xbf16> to vector<8x32xbf16>
    %cst_154 = arith.constant dense<0.000000e+00> : vector<16x32xf32>
    %153 = tpu.matmul %150, %152, %cst_154 {dimension_numbers = #tpu.dot_dimension_numbers<[1], [0], [0], [1], [0, 0, 1, 1], [], []>} : vector<16x8xbf16>, vector<8x32xbf16>, vector<16x32xf32> -> vector<16x32xf32>
    %154 = arith.addf %148, %153 : vector<16x32xf32>
    %155 = vector.extract_strided_slice %135 {offsets = [48, 0], sizes = [16, 8], strides = [1, 1]} : vector<64x8xf32> to vector<16x8xf32>
    %156 = arith.truncf %155 : vector<16x8xf32> to vector<16x8xbf16>
    %c3_155 = arith.constant 3 : index
    %c0_156 = arith.constant 0 : index
    %c0_157 = arith.constant 0 : index
    %157 = vector.load %arg5[%c3_155, %c0_156, %c0_157] : memref<4x8x32xbf16, #tpu.memory_space<vmem>>, vector<1x8x32xbf16>
    %158 = vector.shape_cast %157 : vector<1x8x32xbf16> to vector<8x32xbf16>
    %cst_158 = arith.constant dense<0.000000e+00> : vector<16x32xf32>
    %159 = tpu.matmul %156, %158, %cst_158 {dimension_numbers = #tpu.dot_dimension_numbers<[1], [0], [0], [1], [0, 0, 1, 1], [], []>} : vector<16x8xbf16>, vector<8x32xbf16>, vector<16x32xf32> -> vector<16x32xf32>
    %160 = arith.addf %154, %159 : vector<16x32xf32>
    %161 = arith.addf %18, %160 : vector<16x32xf32>
    %cst_159 = arith.constant dense<0.000000e+00> : vector<16xf32>
    %162 = vector.multi_reduction <add>, %161, %cst_159 [1] : vector<16x32xf32> to vector<16xf32>
    %163 = vector.shape_cast %162 : vector<16xf32> to vector<16x1xf32>
    %cst_160 = arith.constant 3.200000e+01 : f32
    %164 = vector.broadcast %cst_160 : f32 to vector<16x1xf32>
    %165 = arith.divf %163, %164 : vector<16x1xf32>
    %166 = vector.broadcast %165 : vector<16x1xf32> to vector<16x32xf32>
    %167 = arith.subf %161, %166 : vector<16x32xf32>
    %168 = arith.mulf %167, %167 : vector<16x32xf32>
    %cst_161 = arith.constant dense<0.000000e+00> : vector<16xf32>
    %169 = vector.multi_reduction <add>, %168, %cst_161 [1] : vector<16x32xf32> to vector<16xf32>
    %170 = vector.shape_cast %169 : vector<16xf32> to vector<16x1xf32>
    %cst_162 = arith.constant 3.200000e+01 : f32
    %171 = vector.broadcast %cst_162 : f32 to vector<16x1xf32>
    %172 = arith.divf %170, %171 : vector<16x1xf32>
    %173 = vector.broadcast %165 : vector<16x1xf32> to vector<16x32xf32>
    %174 = arith.subf %161, %173 : vector<16x32xf32>
    %cst_163 = arith.constant 9.99999974E-6 : f32
    %175 = vector.broadcast %cst_163 : f32 to vector<16x1xf32>
    %176 = arith.addf %172, %175 : vector<16x1xf32>
    %177 = math.rsqrt %176 : vector<16x1xf32>
    %178 = vector.broadcast %177 : vector<16x1xf32> to vector<16x32xf32>
    %179 = arith.mulf %174, %178 : vector<16x32xf32>
    %180 = vector.broadcast %1 : vector<1x32xf32> to vector<16x32xf32>
    %181 = arith.mulf %179, %180 : vector<16x32xf32>
    %182 = vector.broadcast %3 : vector<1x32xf32> to vector<16x32xf32>
    %183 = arith.addf %181, %182 : vector<16x32xf32>
    %184 = arith.truncf %183 : vector<16x32xf32> to vector<16x32xbf16>
    %c0_164 = arith.constant 0 : index
    %c0_165 = arith.constant 0 : index
    %c0_166 = arith.constant 0 : index
    %c0_167 = arith.constant 0 : index
    %185 = vector.load %arg7[%c0_164, %c0_165, %c0_166, %c0_167] : memref<3x4x32x8xbf16, #tpu.memory_space<vmem>>, vector<1x1x32x8xbf16>
    %186 = vector.shape_cast %185 : vector<1x1x32x8xbf16> to vector<32x8xbf16>
    %cst_168 = arith.constant dense<0.000000e+00> : vector<16x8xf32>
    %187 = tpu.matmul %19, %186, %cst_168 {dimension_numbers = #tpu.dot_dimension_numbers<[1], [0], [0], [1], [0, 0, 1, 1], [], []>} : vector<16x32xbf16>, vector<32x8xbf16>, vector<16x8xf32> -> vector<16x8xf32>
    %c0_169 = arith.constant 0 : index
    %c0_170 = arith.constant 0 : index
    %c0_171 = arith.constant 0 : index
    %c0_172 = arith.constant 0 : index
    %188 = vector.load %arg8[%c0_169, %c0_170, %c0_171, %c0_172] : memref<3x4x1x8xf32, #tpu.memory_space<vmem>>, vector<1x1x1x8xf32>
    %189 = vector.shape_cast %188 : vector<1x1x1x8xf32> to vector<1x8xf32>
    %190 = vector.broadcast %189 : vector<1x8xf32> to vector<16x8xf32>
    %191 = arith.addf %187, %190 : vector<16x8xf32>
    %c1_173 = arith.constant 1 : index
    %c0_174 = arith.constant 0 : index
    %c0_175 = arith.constant 0 : index
    %c0_176 = arith.constant 0 : index
    %192 = vector.load %arg7[%c1_173, %c0_174, %c0_175, %c0_176] : memref<3x4x32x8xbf16, #tpu.memory_space<vmem>>, vector<1x1x32x8xbf16>
    %193 = vector.shape_cast %192 : vector<1x1x32x8xbf16> to vector<32x8xbf16>
    %cst_177 = arith.constant dense<0.000000e+00> : vector<16x8xf32>
    %194 = tpu.matmul %184, %193, %cst_177 {dimension_numbers = #tpu.dot_dimension_numbers<[1], [0], [0], [1], [0, 0, 1, 1], [], []>} : vector<16x32xbf16>, vector<32x8xbf16>, vector<16x8xf32> -> vector<16x8xf32>
    %c1_178 = arith.constant 1 : index
    %c0_179 = arith.constant 0 : index
    %c0_180 = arith.constant 0 : index
    %c0_181 = arith.constant 0 : index
    %195 = vector.load %arg8[%c1_178, %c0_179, %c0_180, %c0_181] : memref<3x4x1x8xf32, #tpu.memory_space<vmem>>, vector<1x1x1x8xf32>
    %196 = vector.shape_cast %195 : vector<1x1x1x8xf32> to vector<1x8xf32>
    %197 = vector.broadcast %196 : vector<1x8xf32> to vector<16x8xf32>
    %198 = arith.addf %194, %197 : vector<16x8xf32>
    %c2_182 = arith.constant 2 : index
    %c0_183 = arith.constant 0 : index
    %c0_184 = arith.constant 0 : index
    %c0_185 = arith.constant 0 : index
    %199 = vector.load %arg7[%c2_182, %c0_183, %c0_184, %c0_185] : memref<3x4x32x8xbf16, #tpu.memory_space<vmem>>, vector<1x1x32x8xbf16>
    %200 = vector.shape_cast %199 : vector<1x1x32x8xbf16> to vector<32x8xbf16>
    %cst_186 = arith.constant dense<0.000000e+00> : vector<16x8xf32>
    %201 = tpu.matmul %184, %200, %cst_186 {dimension_numbers = #tpu.dot_dimension_numbers<[1], [0], [0], [1], [0, 0, 1, 1], [], []>} : vector<16x32xbf16>, vector<32x8xbf16>, vector<16x8xf32> -> vector<16x8xf32>
    %c2_187 = arith.constant 2 : index
    %c0_188 = arith.constant 0 : index
    %c0_189 = arith.constant 0 : index
    %c0_190 = arith.constant 0 : index
    %202 = vector.load %arg8[%c2_187, %c0_188, %c0_189, %c0_190] : memref<3x4x1x8xf32, #tpu.memory_space<vmem>>, vector<1x1x1x8xf32>
    %203 = vector.shape_cast %202 : vector<1x1x1x8xf32> to vector<1x8xf32>
    %204 = vector.broadcast %203 : vector<1x8xf32> to vector<16x8xf32>
    %205 = arith.addf %201, %204 : vector<16x8xf32>
    %cst_191 = arith.constant 0.353553385 : f32
    %206 = vector.broadcast %cst_191 : f32 to vector<16x8xf32>
    %207 = arith.mulf %191, %206 : vector<16x8xf32>
    %c0_192 = arith.constant 0 : index
    %c1_193 = arith.constant 1 : index
    %c0_194 = arith.constant 0 : index
    %c0_195 = arith.constant 0 : index
    %208 = vector.load %arg7[%c0_192, %c1_193, %c0_194, %c0_195] : memref<3x4x32x8xbf16, #tpu.memory_space<vmem>>, vector<1x1x32x8xbf16>
    %209 = vector.shape_cast %208 : vector<1x1x32x8xbf16> to vector<32x8xbf16>
    %cst_196 = arith.constant dense<0.000000e+00> : vector<16x8xf32>
    %210 = tpu.matmul %19, %209, %cst_196 {dimension_numbers = #tpu.dot_dimension_numbers<[1], [0], [0], [1], [0, 0, 1, 1], [], []>} : vector<16x32xbf16>, vector<32x8xbf16>, vector<16x8xf32> -> vector<16x8xf32>
    %c0_197 = arith.constant 0 : index
    %c1_198 = arith.constant 1 : index
    %c0_199 = arith.constant 0 : index
    %c0_200 = arith.constant 0 : index
    %211 = vector.load %arg8[%c0_197, %c1_198, %c0_199, %c0_200] : memref<3x4x1x8xf32, #tpu.memory_space<vmem>>, vector<1x1x1x8xf32>
    %212 = vector.shape_cast %211 : vector<1x1x1x8xf32> to vector<1x8xf32>
    %213 = vector.broadcast %212 : vector<1x8xf32> to vector<16x8xf32>
    %214 = arith.addf %210, %213 : vector<16x8xf32>
    %c1_201 = arith.constant 1 : index
    %c1_202 = arith.constant 1 : index
    %c0_203 = arith.constant 0 : index
    %c0_204 = arith.constant 0 : index
    %215 = vector.load %arg7[%c1_201, %c1_202, %c0_203, %c0_204] : memref<3x4x32x8xbf16, #tpu.memory_space<vmem>>, vector<1x1x32x8xbf16>
    %216 = vector.shape_cast %215 : vector<1x1x32x8xbf16> to vector<32x8xbf16>
    %cst_205 = arith.constant dense<0.000000e+00> : vector<16x8xf32>
    %217 = tpu.matmul %184, %216, %cst_205 {dimension_numbers = #tpu.dot_dimension_numbers<[1], [0], [0], [1], [0, 0, 1, 1], [], []>} : vector<16x32xbf16>, vector<32x8xbf16>, vector<16x8xf32> -> vector<16x8xf32>
    %c1_206 = arith.constant 1 : index
    %c1_207 = arith.constant 1 : index
    %c0_208 = arith.constant 0 : index
    %c0_209 = arith.constant 0 : index
    %218 = vector.load %arg8[%c1_206, %c1_207, %c0_208, %c0_209] : memref<3x4x1x8xf32, #tpu.memory_space<vmem>>, vector<1x1x1x8xf32>
    %219 = vector.shape_cast %218 : vector<1x1x1x8xf32> to vector<1x8xf32>
    %220 = vector.broadcast %219 : vector<1x8xf32> to vector<16x8xf32>
    %221 = arith.addf %217, %220 : vector<16x8xf32>
    %c2_210 = arith.constant 2 : index
    %c1_211 = arith.constant 1 : index
    %c0_212 = arith.constant 0 : index
    %c0_213 = arith.constant 0 : index
    %222 = vector.load %arg7[%c2_210, %c1_211, %c0_212, %c0_213] : memref<3x4x32x8xbf16, #tpu.memory_space<vmem>>, vector<1x1x32x8xbf16>
    %223 = vector.shape_cast %222 : vector<1x1x32x8xbf16> to vector<32x8xbf16>
    %cst_214 = arith.constant dense<0.000000e+00> : vector<16x8xf32>
    %224 = tpu.matmul %184, %223, %cst_214 {dimension_numbers = #tpu.dot_dimension_numbers<[1], [0], [0], [1], [0, 0, 1, 1], [], []>} : vector<16x32xbf16>, vector<32x8xbf16>, vector<16x8xf32> -> vector<16x8xf32>
    %c2_215 = arith.constant 2 : index
    %c1_216 = arith.constant 1 : index
    %c0_217 = arith.constant 0 : index
    %c0_218 = arith.constant 0 : index
    %225 = vector.load %arg8[%c2_215, %c1_216, %c0_217, %c0_218] : memref<3x4x1x8xf32, #tpu.memory_space<vmem>>, vector<1x1x1x8xf32>
    %226 = vector.shape_cast %225 : vector<1x1x1x8xf32> to vector<1x8xf32>
    %227 = vector.broadcast %226 : vector<1x8xf32> to vector<16x8xf32>
    %228 = arith.addf %224, %227 : vector<16x8xf32>
    %cst_219 = arith.constant 0.353553385 : f32
    %229 = vector.broadcast %cst_219 : f32 to vector<16x8xf32>
    %230 = arith.mulf %214, %229 : vector<16x8xf32>
    %c0_220 = arith.constant 0 : index
    %c2_221 = arith.constant 2 : index
    %c0_222 = arith.constant 0 : index
    %c0_223 = arith.constant 0 : index
    %231 = vector.load %arg7[%c0_220, %c2_221, %c0_222, %c0_223] : memref<3x4x32x8xbf16, #tpu.memory_space<vmem>>, vector<1x1x32x8xbf16>
    %232 = vector.shape_cast %231 : vector<1x1x32x8xbf16> to vector<32x8xbf16>
    %cst_224 = arith.constant dense<0.000000e+00> : vector<16x8xf32>
    %233 = tpu.matmul %19, %232, %cst_224 {dimension_numbers = #tpu.dot_dimension_numbers<[1], [0], [0], [1], [0, 0, 1, 1], [], []>} : vector<16x32xbf16>, vector<32x8xbf16>, vector<16x8xf32> -> vector<16x8xf32>
    %c0_225 = arith.constant 0 : index
    %c2_226 = arith.constant 2 : index
    %c0_227 = arith.constant 0 : index
    %c0_228 = arith.constant 0 : index
    %234 = vector.load %arg8[%c0_225, %c2_226, %c0_227, %c0_228] : memref<3x4x1x8xf32, #tpu.memory_space<vmem>>, vector<1x1x1x8xf32>
    %235 = vector.shape_cast %234 : vector<1x1x1x8xf32> to vector<1x8xf32>
    %236 = vector.broadcast %235 : vector<1x8xf32> to vector<16x8xf32>
    %237 = arith.addf %233, %236 : vector<16x8xf32>
    %c1_229 = arith.constant 1 : index
    %c2_230 = arith.constant 2 : index
    %c0_231 = arith.constant 0 : index
    %c0_232 = arith.constant 0 : index
    %238 = vector.load %arg7[%c1_229, %c2_230, %c0_231, %c0_232] : memref<3x4x32x8xbf16, #tpu.memory_space<vmem>>, vector<1x1x32x8xbf16>
    %239 = vector.shape_cast %238 : vector<1x1x32x8xbf16> to vector<32x8xbf16>
    %cst_233 = arith.constant dense<0.000000e+00> : vector<16x8xf32>
    %240 = tpu.matmul %184, %239, %cst_233 {dimension_numbers = #tpu.dot_dimension_numbers<[1], [0], [0], [1], [0, 0, 1, 1], [], []>} : vector<16x32xbf16>, vector<32x8xbf16>, vector<16x8xf32> -> vector<16x8xf32>
    %c1_234 = arith.constant 1 : index
    %c2_235 = arith.constant 2 : index
    %c0_236 = arith.constant 0 : index
    %c0_237 = arith.constant 0 : index
    %241 = vector.load %arg8[%c1_234, %c2_235, %c0_236, %c0_237] : memref<3x4x1x8xf32, #tpu.memory_space<vmem>>, vector<1x1x1x8xf32>
    %242 = vector.shape_cast %241 : vector<1x1x1x8xf32> to vector<1x8xf32>
    %243 = vector.broadcast %242 : vector<1x8xf32> to vector<16x8xf32>
    %244 = arith.addf %240, %243 : vector<16x8xf32>
    %c2_238 = arith.constant 2 : index
    %c2_239 = arith.constant 2 : index
    %c0_240 = arith.constant 0 : index
    %c0_241 = arith.constant 0 : index
    %245 = vector.load %arg7[%c2_238, %c2_239, %c0_240, %c0_241] : memref<3x4x32x8xbf16, #tpu.memory_space<vmem>>, vector<1x1x32x8xbf16>
    %246 = vector.shape_cast %245 : vector<1x1x32x8xbf16> to vector<32x8xbf16>
    %cst_242 = arith.constant dense<0.000000e+00> : vector<16x8xf32>
    %247 = tpu.matmul %184, %246, %cst_242 {dimension_numbers = #tpu.dot_dimension_numbers<[1], [0], [0], [1], [0, 0, 1, 1], [], []>} : vector<16x32xbf16>, vector<32x8xbf16>, vector<16x8xf32> -> vector<16x8xf32>
    %c2_243 = arith.constant 2 : index
    %c2_244 = arith.constant 2 : index
    %c0_245 = arith.constant 0 : index
    %c0_246 = arith.constant 0 : index
    %248 = vector.load %arg8[%c2_243, %c2_244, %c0_245, %c0_246] : memref<3x4x1x8xf32, #tpu.memory_space<vmem>>, vector<1x1x1x8xf32>
    %249 = vector.shape_cast %248 : vector<1x1x1x8xf32> to vector<1x8xf32>
    %250 = vector.broadcast %249 : vector<1x8xf32> to vector<16x8xf32>
    %251 = arith.addf %247, %250 : vector<16x8xf32>
    %cst_247 = arith.constant 0.353553385 : f32
    %252 = vector.broadcast %cst_247 : f32 to vector<16x8xf32>
    %253 = arith.mulf %237, %252 : vector<16x8xf32>
    %c0_248 = arith.constant 0 : index
    %c3_249 = arith.constant 3 : index
    %c0_250 = arith.constant 0 : index
    %c0_251 = arith.constant 0 : index
    %254 = vector.load %arg7[%c0_248, %c3_249, %c0_250, %c0_251] : memref<3x4x32x8xbf16, #tpu.memory_space<vmem>>, vector<1x1x32x8xbf16>
    %255 = vector.shape_cast %254 : vector<1x1x32x8xbf16> to vector<32x8xbf16>
    %cst_252 = arith.constant dense<0.000000e+00> : vector<16x8xf32>
    %256 = tpu.matmul %19, %255, %cst_252 {dimension_numbers = #tpu.dot_dimension_numbers<[1], [0], [0], [1], [0, 0, 1, 1], [], []>} : vector<16x32xbf16>, vector<32x8xbf16>, vector<16x8xf32> -> vector<16x8xf32>
    %c0_253 = arith.constant 0 : index
    %c3_254 = arith.constant 3 : index
    %c0_255 = arith.constant 0 : index
    %c0_256 = arith.constant 0 : index
    %257 = vector.load %arg8[%c0_253, %c3_254, %c0_255, %c0_256] : memref<3x4x1x8xf32, #tpu.memory_space<vmem>>, vector<1x1x1x8xf32>
    %258 = vector.shape_cast %257 : vector<1x1x1x8xf32> to vector<1x8xf32>
    %259 = vector.broadcast %258 : vector<1x8xf32> to vector<16x8xf32>
    %260 = arith.addf %256, %259 : vector<16x8xf32>
    %c1_257 = arith.constant 1 : index
    %c3_258 = arith.constant 3 : index
    %c0_259 = arith.constant 0 : index
    %c0_260 = arith.constant 0 : index
    %261 = vector.load %arg7[%c1_257, %c3_258, %c0_259, %c0_260] : memref<3x4x32x8xbf16, #tpu.memory_space<vmem>>, vector<1x1x32x8xbf16>
    %262 = vector.shape_cast %261 : vector<1x1x32x8xbf16> to vector<32x8xbf16>
    %cst_261 = arith.constant dense<0.000000e+00> : vector<16x8xf32>
    %263 = tpu.matmul %184, %262, %cst_261 {dimension_numbers = #tpu.dot_dimension_numbers<[1], [0], [0], [1], [0, 0, 1, 1], [], []>} : vector<16x32xbf16>, vector<32x8xbf16>, vector<16x8xf32> -> vector<16x8xf32>
    %c1_262 = arith.constant 1 : index
    %c3_263 = arith.constant 3 : index
    %c0_264 = arith.constant 0 : index
    %c0_265 = arith.constant 0 : index
    %264 = vector.load %arg8[%c1_262, %c3_263, %c0_264, %c0_265] : memref<3x4x1x8xf32, #tpu.memory_space<vmem>>, vector<1x1x1x8xf32>
    %265 = vector.shape_cast %264 : vector<1x1x1x8xf32> to vector<1x8xf32>
    %266 = vector.broadcast %265 : vector<1x8xf32> to vector<16x8xf32>
    %267 = arith.addf %263, %266 : vector<16x8xf32>
    %c2_266 = arith.constant 2 : index
    %c3_267 = arith.constant 3 : index
    %c0_268 = arith.constant 0 : index
    %c0_269 = arith.constant 0 : index
    %268 = vector.load %arg7[%c2_266, %c3_267, %c0_268, %c0_269] : memref<3x4x32x8xbf16, #tpu.memory_space<vmem>>, vector<1x1x32x8xbf16>
    %269 = vector.shape_cast %268 : vector<1x1x32x8xbf16> to vector<32x8xbf16>
    %cst_270 = arith.constant dense<0.000000e+00> : vector<16x8xf32>
    %270 = tpu.matmul %184, %269, %cst_270 {dimension_numbers = #tpu.dot_dimension_numbers<[1], [0], [0], [1], [0, 0, 1, 1], [], []>} : vector<16x32xbf16>, vector<32x8xbf16>, vector<16x8xf32> -> vector<16x8xf32>
    %c2_271 = arith.constant 2 : index
    %c3_272 = arith.constant 3 : index
    %c0_273 = arith.constant 0 : index
    %c0_274 = arith.constant 0 : index
    %271 = vector.load %arg8[%c2_271, %c3_272, %c0_273, %c0_274] : memref<3x4x1x8xf32, #tpu.memory_space<vmem>>, vector<1x1x1x8xf32>
    %272 = vector.shape_cast %271 : vector<1x1x1x8xf32> to vector<1x8xf32>
    %273 = vector.broadcast %272 : vector<1x8xf32> to vector<16x8xf32>
    %274 = arith.addf %270, %273 : vector<16x8xf32>
    %cst_275 = arith.constant 0.353553385 : f32
    %275 = vector.broadcast %cst_275 : f32 to vector<16x8xf32>
    %276 = arith.mulf %260, %275 : vector<16x8xf32>
    %277 = tpu.concatenate %207, %230, %253, %276 in 0 : vector<16x8xf32>, vector<16x8xf32>, vector<16x8xf32>, vector<16x8xf32> -> vector<64x8xf32>
    %278 = vector.shape_cast %277 : vector<64x8xf32> to vector<8x8x8xf32>
    %279 = arith.truncf %278 : vector<8x8x8xf32> to vector<8x8x8xbf16>
    %280 = tpu.concatenate %198, %221, %244, %267 in 0 : vector<16x8xf32>, vector<16x8xf32>, vector<16x8xf32>, vector<16x8xf32> -> vector<64x8xf32>
    %281 = vector.shape_cast %280 : vector<64x8xf32> to vector<8x8x8xf32>
    %282 = arith.truncf %281 : vector<8x8x8xf32> to vector<8x8x8xbf16>
    %283 = tpu.concatenate %205, %228, %251, %274 in 0 : vector<16x8xf32>, vector<16x8xf32>, vector<16x8xf32>, vector<16x8xf32> -> vector<64x8xf32>
    %284 = vector.shape_cast %283 : vector<64x8xf32> to vector<8x8x8xf32>
    %285 = arith.truncf %284 : vector<8x8x8xf32> to vector<8x8x8xbf16>
    "tpu.trace_start"() <{level = 10 : i32, message = "gqe,gke->gqk"}> : () -> ()
    %cst_276 = arith.constant dense<0.000000e+00> : vector<8x8x8xf32>
    %286 = tpu.matmul %279, %282, %cst_276 {dimension_numbers = #tpu.dot_dimension_numbers<[2], [2], [1], [1], [0, 0, 0, 1, 1, 1], [0], [0]>} : vector<8x8x8xbf16>, vector<8x8x8xbf16>, vector<8x8x8xf32> -> vector<8x8x8xf32>
    "tpu.trace_stop"() : () -> ()
    %cst_277 = arith.constant dense<0xFF800000> : vector<8x8xf32>
    %287 = vector.multi_reduction <maximumf>, %286, %cst_277 [1] : vector<8x8x8xf32> to vector<8x8xf32>
    %288 = vector.shape_cast %287 : vector<8x8xf32> to vector<8x1x8xf32>
    %289 = vector.broadcast %288 : vector<8x1x8xf32> to vector<8x8x8xf32>
    %290 = arith.subf %286, %289 : vector<8x8x8xf32>
    %291 = math.exp %290 : vector<8x8x8xf32>
    %cst_278 = arith.constant dense<0.000000e+00> : vector<8x8xf32>
    %292 = vector.multi_reduction <add>, %291, %cst_278 [1] : vector<8x8x8xf32> to vector<8x8xf32>
    %293 = vector.shape_cast %292 : vector<8x8xf32> to vector<8x1x8xf32>
    %294 = vector.broadcast %293 : vector<8x1x8xf32> to vector<8x8x8xf32>
    %295 = arith.divf %291, %294 : vector<8x8x8xf32>
    %296 = arith.truncf %295 : vector<8x8x8xf32> to vector<8x8x8xbf16>
    "tpu.trace_start"() <{level = 10 : i32, message = "gqk,gke->gqe"}> : () -> ()
    %cst_279 = arith.constant dense<0.000000e+00> : vector<8x8x8xf32>
    %297 = tpu.matmul %296, %285, %cst_279 {dimension_numbers = #tpu.dot_dimension_numbers<[2], [1], [1], [2], [0, 0, 0, 1, 1, 2], [0], [0]>} : vector<8x8x8xbf16>, vector<8x8x8xbf16>, vector<8x8x8xf32> -> vector<8x8x8xf32>
    "tpu.trace_stop"() : () -> ()
    %298 = vector.shape_cast %297 : vector<8x8x8xf32> to vector<64x8xf32>
    %299 = vector.extract_strided_slice %298 {offsets = [0, 0], sizes = [16, 8], strides = [1, 1]} : vector<64x8xf32> to vector<16x8xf32>
    %300 = arith.truncf %299 : vector<16x8xf32> to vector<16x8xbf16>
    %c0_280 = arith.constant 0 : index
    %c0_281 = arith.constant 0 : index
    %c0_282 = arith.constant 0 : index
    %301 = vector.load %arg9[%c0_280, %c0_281, %c0_282] : memref<4x8x32xbf16, #tpu.memory_space<vmem>>, vector<1x8x32xbf16>
    %302 = vector.shape_cast %301 : vector<1x8x32xbf16> to vector<8x32xbf16>
    %cst_283 = arith.constant dense<0.000000e+00> : vector<16x32xf32>
    %303 = tpu.matmul %300, %302, %cst_283 {dimension_numbers = #tpu.dot_dimension_numbers<[1], [0], [0], [1], [0, 0, 1, 1], [], []>} : vector<16x8xbf16>, vector<8x32xbf16>, vector<16x32xf32> -> vector<16x32xf32>
    %304 = vector.broadcast %13 : vector<1x32xf32> to vector<16x32xf32>
    %305 = arith.addf %304, %303 : vector<16x32xf32>
    %306 = vector.extract_strided_slice %298 {offsets = [16, 0], sizes = [16, 8], strides = [1, 1]} : vector<64x8xf32> to vector<16x8xf32>
    %307 = arith.truncf %306 : vector<16x8xf32> to vector<16x8xbf16>
    %c1_284 = arith.constant 1 : index
    %c0_285 = arith.constant 0 : index
    %c0_286 = arith.constant 0 : index
    %308 = vector.load %arg9[%c1_284, %c0_285, %c0_286] : memref<4x8x32xbf16, #tpu.memory_space<vmem>>, vector<1x8x32xbf16>
    %309 = vector.shape_cast %308 : vector<1x8x32xbf16> to vector<8x32xbf16>
    %cst_287 = arith.constant dense<0.000000e+00> : vector<16x32xf32>
    %310 = tpu.matmul %307, %309, %cst_287 {dimension_numbers = #tpu.dot_dimension_numbers<[1], [0], [0], [1], [0, 0, 1, 1], [], []>} : vector<16x8xbf16>, vector<8x32xbf16>, vector<16x32xf32> -> vector<16x32xf32>
    %311 = arith.addf %305, %310 : vector<16x32xf32>
    %312 = vector.extract_strided_slice %298 {offsets = [32, 0], sizes = [16, 8], strides = [1, 1]} : vector<64x8xf32> to vector<16x8xf32>
    %313 = arith.truncf %312 : vector<16x8xf32> to vector<16x8xbf16>
    %c2_288 = arith.constant 2 : index
    %c0_289 = arith.constant 0 : index
    %c0_290 = arith.constant 0 : index
    %314 = vector.load %arg9[%c2_288, %c0_289, %c0_290] : memref<4x8x32xbf16, #tpu.memory_space<vmem>>, vector<1x8x32xbf16>
    %315 = vector.shape_cast %314 : vector<1x8x32xbf16> to vector<8x32xbf16>
    %cst_291 = arith.constant dense<0.000000e+00> : vector<16x32xf32>
    %316 = tpu.matmul %313, %315, %cst_291 {dimension_numbers = #tpu.dot_dimension_numbers<[1], [0], [0], [1], [0, 0, 1, 1], [], []>} : vector<16x8xbf16>, vector<8x32xbf16>, vector<16x32xf32> -> vector<16x32xf32>
    %317 = arith.addf %311, %316 : vector<16x32xf32>
    %318 = vector.extract_strided_slice %298 {offsets = [48, 0], sizes = [16, 8], strides = [1, 1]} : vector<64x8xf32> to vector<16x8xf32>
    %319 = arith.truncf %318 : vector<16x8xf32> to vector<16x8xbf16>
    %c3_292 = arith.constant 3 : index
    %c0_293 = arith.constant 0 : index
    %c0_294 = arith.constant 0 : index
    %320 = vector.load %arg9[%c3_292, %c0_293, %c0_294] : memref<4x8x32xbf16, #tpu.memory_space<vmem>>, vector<1x8x32xbf16>
    %321 = vector.shape_cast %320 : vector<1x8x32xbf16> to vector<8x32xbf16>
    %cst_295 = arith.constant dense<0.000000e+00> : vector<16x32xf32>
    %322 = tpu.matmul %319, %321, %cst_295 {dimension_numbers = #tpu.dot_dimension_numbers<[1], [0], [0], [1], [0, 0, 1, 1], [], []>} : vector<16x8xbf16>, vector<8x32xbf16>, vector<16x32xf32> -> vector<16x32xf32>
    %323 = arith.addf %317, %322 : vector<16x32xf32>
    %324 = arith.addf %183, %323 : vector<16x32xf32>
    %cst_296 = arith.constant dense<0.000000e+00> : vector<16xf32>
    %325 = vector.multi_reduction <add>, %324, %cst_296 [1] : vector<16x32xf32> to vector<16xf32>
    %326 = vector.shape_cast %325 : vector<16xf32> to vector<16x1xf32>
    %cst_297 = arith.constant 3.200000e+01 : f32
    %327 = vector.broadcast %cst_297 : f32 to vector<16x1xf32>
    %328 = arith.divf %326, %327 : vector<16x1xf32>
    %329 = vector.broadcast %328 : vector<16x1xf32> to vector<16x32xf32>
    %330 = arith.subf %324, %329 : vector<16x32xf32>
    %331 = arith.mulf %330, %330 : vector<16x32xf32>
    %cst_298 = arith.constant dense<0.000000e+00> : vector<16xf32>
    %332 = vector.multi_reduction <add>, %331, %cst_298 [1] : vector<16x32xf32> to vector<16xf32>
    %333 = vector.shape_cast %332 : vector<16xf32> to vector<16x1xf32>
    %cst_299 = arith.constant 3.200000e+01 : f32
    %334 = vector.broadcast %cst_299 : f32 to vector<16x1xf32>
    %335 = arith.divf %333, %334 : vector<16x1xf32>
    %336 = vector.broadcast %328 : vector<16x1xf32> to vector<16x32xf32>
    %337 = arith.subf %324, %336 : vector<16x32xf32>
    %cst_300 = arith.constant 9.99999974E-6 : f32
    %338 = vector.broadcast %cst_300 : f32 to vector<16x1xf32>
    %339 = arith.addf %335, %338 : vector<16x1xf32>
    %340 = math.rsqrt %339 : vector<16x1xf32>
    %341 = vector.broadcast %340 : vector<16x1xf32> to vector<16x32xf32>
    %342 = arith.mulf %337, %341 : vector<16x32xf32>
    %343 = vector.broadcast %5 : vector<1x32xf32> to vector<16x32xf32>
    %344 = arith.mulf %342, %343 : vector<16x32xf32>
    %345 = vector.broadcast %7 : vector<1x32xf32> to vector<16x32xf32>
    %346 = arith.addf %344, %345 : vector<16x32xf32>
    %347 = arith.truncf %346 : vector<16x32xf32> to vector<16x32xbf16>
    %cst_301 = arith.constant dense<0.000000e+00> : vector<16x32xf32>
    %348 = tpu.matmul %347, %14, %cst_301 {dimension_numbers = #tpu.dot_dimension_numbers<[1], [0], [0], [1], [0, 0, 1, 1], [], []>} : vector<16x32xbf16>, vector<32x32xbf16>, vector<16x32xf32> -> vector<16x32xf32>
    %349 = vector.broadcast %15 : vector<1x32xf32> to vector<16x32xf32>
    %350 = arith.addf %348, %349 : vector<16x32xf32>
    %cst_302 = arith.constant 0.000000e+00 : f32
    %351 = vector.broadcast %cst_302 : f32 to vector<16x32xf32>
    %352 = arith.maximumf %350, %351 : vector<16x32xf32>
    %353 = arith.truncf %352 : vector<16x32xf32> to vector<16x32xbf16>
    %cst_303 = arith.constant dense<0.000000e+00> : vector<16x32xf32>
    %354 = tpu.matmul %353, %16, %cst_303 {dimension_numbers = #tpu.dot_dimension_numbers<[1], [0], [0], [1], [0, 0, 1, 1], [], []>} : vector<16x32xbf16>, vector<32x32xbf16>, vector<16x32xf32> -> vector<16x32xf32>
    %355 = vector.broadcast %17 : vector<1x32xf32> to vector<16x32xf32>
    %356 = arith.addf %354, %355 : vector<16x32xf32>
    %357 = arith.addf %346, %356 : vector<16x32xf32>
    %cst_304 = arith.constant dense<0.000000e+00> : vector<16xf32>
    %358 = vector.multi_reduction <add>, %357, %cst_304 [1] : vector<16x32xf32> to vector<16xf32>
    %359 = vector.shape_cast %358 : vector<16xf32> to vector<16x1xf32>
    %cst_305 = arith.constant 3.200000e+01 : f32
    %360 = vector.broadcast %cst_305 : f32 to vector<16x1xf32>
    %361 = arith.divf %359, %360 : vector<16x1xf32>
    %362 = vector.broadcast %361 : vector<16x1xf32> to vector<16x32xf32>
    %363 = arith.subf %357, %362 : vector<16x32xf32>
    %364 = arith.mulf %363, %363 : vector<16x32xf32>
    %cst_306 = arith.constant dense<0.000000e+00> : vector<16xf32>
    %365 = vector.multi_reduction <add>, %364, %cst_306 [1] : vector<16x32xf32> to vector<16xf32>
    %366 = vector.shape_cast %365 : vector<16xf32> to vector<16x1xf32>
    %cst_307 = arith.constant 3.200000e+01 : f32
    %367 = vector.broadcast %cst_307 : f32 to vector<16x1xf32>
    %368 = arith.divf %366, %367 : vector<16x1xf32>
    %369 = vector.broadcast %361 : vector<16x1xf32> to vector<16x32xf32>
    %370 = arith.subf %357, %369 : vector<16x32xf32>
    %cst_308 = arith.constant 9.99999974E-6 : f32
    %371 = vector.broadcast %cst_308 : f32 to vector<16x1xf32>
    %372 = arith.addf %368, %371 : vector<16x1xf32>
    %373 = math.rsqrt %372 : vector<16x1xf32>
    %374 = vector.broadcast %373 : vector<16x1xf32> to vector<16x32xf32>
    %375 = arith.mulf %370, %374 : vector<16x32xf32>
    %376 = vector.broadcast %9 : vector<1x32xf32> to vector<16x32xf32>
    %377 = arith.mulf %375, %376 : vector<16x32xf32>
    %378 = vector.broadcast %11 : vector<1x32xf32> to vector<16x32xf32>
    %379 = arith.addf %377, %378 : vector<16x32xf32>
    %c0_309 = arith.constant 0 : index
    %c0_310 = arith.constant 0 : index
    %380 = vector.load %arg16[%c0_309, %c0_310] : memref<16x32xf32, #tpu.memory_space<vmem>>, vector<16x32xf32>
    tpu.vector_store %arg16[%c0_309, %c0_310], %379 {strides = array<i32>} : memref<16x32xf32, #tpu.memory_space<vmem>>, vector<16x32xf32>,
    return
  }
  func.func @transform_0(%arg0: i32) -> (i32, i32) {
    %c0_i32 = arith.constant 0 : i32
    %c0_i32_0 = arith.constant 0 : i32
    return %arg0, %c0_i32 : i32, i32
  }
  func.func @transform_1(%arg0: i32) -> (i32, i32) {
    %c0_i32 = arith.constant 0 : i32
    %c0_i32_0 = arith.constant 0 : i32
    return %arg0, %c0_i32 : i32, i32
  }
  func.func @transform_2(%arg0: i32) -> (i32, i32, i32, i32) {
    %c0_i32 = arith.constant 0 : i32
    %c0_i32_0 = arith.constant 0 : i32
    %c0_i32_1 = arith.constant 0 : i32
    %c0_i32_2 = arith.constant 0 : i32
    %c0_i32_3 = arith.constant 0 : i32
    return %c0_i32, %c0_i32_0, %c0_i32_1, %c0_i32_2 : i32, i32, i32, i32
  }
  func.func @transform_3(%arg0: i32) -> (i32, i32, i32, i32) {
    %c0_i32 = arith.constant 0 : i32
    %c0_i32_0 = arith.constant 0 : i32
    %c0_i32_1 = arith.constant 0 : i32
    %c0_i32_2 = arith.constant 0 : i32
    %c0_i32_3 = arith.constant 0 : i32
    return %c0_i32, %c0_i32_0, %c0_i32_1, %c0_i32_2 : i32, i32, i32, i32
  }
  func.func @transform_4(%arg0: i32) -> (i32, i32, i32) {
    %c0_i32 = arith.constant 0 : i32
    %c0_i32_0 = arith.constant 0 : i32
    %c0_i32_1 = arith.constant 0 : i32
    %c0_i32_2 = arith.constant 0 : i32
    return %c0_i32, %c0_i32_0, %c0_i32_1 : i32, i32, i32
  }
  func.func @transform_5(%arg0: i32) -> (i32, i32) {
    %c0_i32 = arith.constant 0 : i32
    %c0_i32_0 = arith.constant 0 : i32
    %c0_i32_1 = arith.constant 0 : i32
    return %c0_i32, %c0_i32_0 : i32, i32
  }
  func.func @transform_6(%arg0: i32) -> (i32, i32, i32, i32) {
    %c0_i32 = arith.constant 0 : i32
    %c0_i32_0 = arith.constant 0 : i32
    %c0_i32_1 = arith.constant 0 : i32
    %c0_i32_2 = arith.constant 0 : i32
    %c0_i32_3 = arith.constant 0 : i32
    return %c0_i32, %c0_i32_0, %c0_i32_1, %c0_i32_2 : i32, i32, i32, i32
  }
  func.func @transform_7(%arg0: i32) -> (i32, i32, i32, i32) {
    %c0_i32 = arith.constant 0 : i32
    %c0_i32_0 = arith.constant 0 : i32
    %c0_i32_1 = arith.constant 0 : i32
    %c0_i32_2 = arith.constant 0 : i32
    %c0_i32_3 = arith.constant 0 : i32
    return %c0_i32, %c0_i32_0, %c0_i32_1, %c0_i32_2 : i32, i32, i32, i32
  }
  func.func @transform_8(%arg0: i32) -> (i32, i32, i32) {
    %c0_i32 = arith.constant 0 : i32
    %c0_i32_0 = arith.constant 0 : i32
    %c0_i32_1 = arith.constant 0 : i32
    %c0_i32_2 = arith.constant 0 : i32
    return %c0_i32, %c0_i32_0, %c0_i32_1 : i32, i32, i32
  }
  func.func @transform_9(%arg0: i32) -> (i32, i32) {
    %c0_i32 = arith.constant 0 : i32
    %c0_i32_0 = arith.constant 0 : i32
    %c0_i32_1 = arith.constant 0 : i32
    return %c0_i32, %c0_i32_0 : i32, i32
  }
  func.func @transform_10(%arg0: i32) -> (i32, i32, i32) {
    %c0_i32 = arith.constant 0 : i32
    %c0_i32_0 = arith.constant 0 : i32
    %c0_i32_1 = arith.constant 0 : i32
    %c0_i32_2 = arith.constant 0 : i32
    return %c0_i32, %c0_i32_0, %c0_i32_1 : i32, i32, i32
  }
  func.func @transform_11(%arg0: i32) -> (i32, i32) {
    %c0_i32 = arith.constant 0 : i32
    %c0_i32_0 = arith.constant 0 : i32
    %c0_i32_1 = arith.constant 0 : i32
    return %c0_i32, %c0_i32_0 : i32, i32
  }
  func.func @transform_12(%arg0: i32) -> (i32, i32) {
    %c0_i32 = arith.constant 0 : i32
    %c0_i32_0 = arith.constant 0 : i32
    %c0_i32_1 = arith.constant 0 : i32
    return %c0_i32, %c0_i32_0 : i32, i32
  }
  func.func @transform_13(%arg0: i32) -> (i32, i32) {
    %c0_i32 = arith.constant 0 : i32
    %c0_i32_0 = arith.constant 0 : i32
    %c0_i32_1 = arith.constant 0 : i32
    return %c0_i32, %c0_i32_0 : i32, i32
  }
  func.func @transform_14(%arg0: i32) -> (i32, i32) {
    %c0_i32 = arith.constant 0 : i32
    %c0_i32_0 = arith.constant 0 : i32
    %c0_i32_1 = arith.constant 0 : i32
    return %c0_i32, %c0_i32_0 : i32, i32
  }
  func.func @transform_15(%arg0: i32) -> (i32, i32) {
    %c0_i32 = arith.constant 0 : i32
    %c0_i32_0 = arith.constant 0 : i32
    return %arg0, %c0_i32 : i32, i32
  }
}

</mosaic_0001>

<llo_original>
// kernel: tpu_custom_call.1
$region0: #{tpu_custom_call.1}
  #allocation0 [shape = 'u32[]', space=smem, size = 0x4, offset = 0x4, fixed_abs, tag = 'smem constant byte address 0x4 - core index']
  #allocation1 [shape = 'u32[144,128]{1,0:T(1,128)}', space=vmem, size = 0x12000, scoped, tag = 'internal scratch']
  %s0 = inlined_call_operand.vmem [shape: f32[16,32], index: 0, kind: input, shape index: {}]
  %s1 = inlined_call_operand.vmem [shape: bf16[16,32], index: 1, kind: input, shape index: {}]
  %s2 = inlined_call_operand.vmem [shape: bf16[3,4,32,8], index: 2, kind: input, shape index: {}]
  %s3 = inlined_call_operand.vmem [shape: f32[3,4,1,8], index: 3, kind: input, shape index: {}]
  %s4 = inlined_call_operand.vmem [shape: bf16[4,8,32], index: 4, kind: input, shape index: {}]
  %s5 = inlined_call_operand.vmem [shape: f32[1,32], index: 5, kind: input, shape index: {}]
  %s6 = inlined_call_operand.vmem [shape: bf16[3,4,32,8], index: 6, kind: input, shape index: {}]
  %s7 = inlined_call_operand.vmem [shape: f32[3,4,1,8], index: 7, kind: input, shape index: {}]
  %s8 = inlined_call_operand.vmem [shape: bf16[4,8,32], index: 8, kind: input, shape index: {}]
  %s9 = inlined_call_operand.vmem [shape: f32[1,32], index: 9, kind: input, shape index: {}]
  %s10 = inlined_call_operand.vmem [shape: f32[6,1,32], index: 10, kind: input, shape index: {}]
  %s11 = inlined_call_operand.vmem [shape: bf16[32,32], index: 11, kind: input, shape index: {}]
  %s12 = inlined_call_operand.vmem [shape: f32[1,32], index: 12, kind: input, shape index: {}]
  %s13 = inlined_call_operand.vmem [shape: bf16[32,32], index: 13, kind: input, shape index: {}]
  %s14 = inlined_call_operand.vmem [shape: f32[1,32], index: 14, kind: input, shape index: {}]
  %s15 = inlined_call_operand.hbm [shape: f32[16,32], index: 15, kind: output, shape index: {}]
  %s16 = sld [smem:[#allocation0]]
  $region70: #{tpu_custom_call.1} parent=0
    _
  %s18 = ssub.s32 1, %s16
  %s19 = scalar_select 0, %s18, %s16
  $region1: #{tpu_custom_call.1} parent=0
    #allocation2 [shape = 'u8[8192]{0}', space=vmem, size = 0x2000, scoped, tag = 'output window, operand 0, single buffered']
    #allocation3 [shape = 's32[1]{0}', space=sflag, size = 0x4, scoped, tag = 'scoped memory for tpu_custom_call.1']
    %20 = vsyncpa [#allocation3], 0
    // Predicated region
    $region2: #{tpu_custom_call.1} parent=1 // pred_check
      _
    $region3: #{tpu_custom_call.1} parent=1 // pred_check_branch
      %22 = sbr.rel (0) target = $region5
    $region4: #{tpu_custom_call.1} parent=1 // pred_region
      _
    $region5: #{tpu_custom_call.1} parent=1 // pred_fallthru
      _
    // Predicated region
    $region6: #{tpu_custom_call.1} parent=1 // pred_check
      _
    $region7: #{tpu_custom_call.1} parent=1 // pred_check_branch
      %24 = sbr.rel (0) target = $region9
    $region8: #{tpu_custom_call.1} parent=1 // pred_region
      _
    $region9: #{tpu_custom_call.1} parent=1 // pred_fallthru
      _
    // Predicated region
    $region10: #{tpu_custom_call.1} parent=1 // pred_check
      _
    $region11: #{tpu_custom_call.1} parent=1 // pred_check_branch
      %26 = sbr.rel (0) target = $region13
    $region12: #{tpu_custom_call.1} parent=1 // pred_region
      _
    $region13: #{tpu_custom_call.1} parent=1 // pred_fallthru
      _
    // Predicated region
    $region14: #{tpu_custom_call.1} parent=1 // pred_check
      _
    $region15: #{tpu_custom_call.1} parent=1 // pred_check_branch
      %28 = sbr.rel (0) target = $region17
    $region16: #{tpu_custom_call.1} parent=1 // pred_region
      _
    $region17: #{tpu_custom_call.1} parent=1 // pred_fallthru
      _
    // Predicated region
    $region18: #{tpu_custom_call.1} parent=1 // pred_check
      _
    $region19: #{tpu_custom_call.1} parent=1 // pred_check_branch
      %30 = sbr.rel (0) target = $region21
    $region20: #{tpu_custom_call.1} parent=1 // pred_region
      _
    $region21: #{tpu_custom_call.1} parent=1 // pred_fallthru
      _
    // Predicated region
    $region22: #{tpu_custom_call.1} parent=1 // pred_check
      _
    $region23: #{tpu_custom_call.1} parent=1 // pred_check_branch
      %32 = sbr.rel (0) target = $region25
    $region24: #{tpu_custom_call.1} parent=1 // pred_region
      _
    $region25: #{tpu_custom_call.1} parent=1 // pred_fallthru
      _
    // Predicated region
    $region26: #{tpu_custom_call.1} parent=1 // pred_check
      _
    $region27: #{tpu_custom_call.1} parent=1 // pred_check_branch
      %34 = sbr.rel (0) target = $region29
    $region28: #{tpu_custom_call.1} parent=1 // pred_region
      _
    $region29: #{tpu_custom_call.1} parent=1 // pred_fallthru
      _
    // Predicated region
    $region30: #{tpu_custom_call.1} parent=1 // pred_check
      _
    $region31: #{tpu_custom_call.1} parent=1 // pred_check_branch
      %36 = sbr.rel (0) target = $region33
    $region32: #{tpu_custom_call.1} parent=1 // pred_region
      _
    $region33: #{tpu_custom_call.1} parent=1 // pred_fallthru
      _
    // Predicated region
    $region34: #{tpu_custom_call.1} parent=1 // pred_check
      _
    $region35: #{tpu_custom_call.1} parent=1 // pred_check_branch
      %38 = sbr.rel (0) target = $region37
    $region36: #{tpu_custom_call.1} parent=1 // pred_region
      _
    $region37: #{tpu_custom_call.1} parent=1 // pred_fallthru
      _
    // Predicated region
    $region38: #{tpu_custom_call.1} parent=1 // pred_check
      _
    $region39: #{tpu_custom_call.1} parent=1 // pred_check_branch
      %40 = sbr.rel (0) target = $region41
    $region40: #{tpu_custom_call.1} parent=1 // pred_region
      _
    $region41: #{tpu_custom_call.1} parent=1 // pred_fallthru
      _
    // Predicated region
    $region42: #{tpu_custom_call.1} parent=1 // pred_check
      _
    $region43: #{tpu_custom_call.1} parent=1 // pred_check_branch
      %42 = sbr.rel (0) target = $region45
    $region44: #{tpu_custom_call.1} parent=1 // pred_region
      _
    $region45: #{tpu_custom_call.1} parent=1 // pred_fallthru
      _
    // Predicated region
    $region46: #{tpu_custom_call.1} parent=1 // pred_check
      _
    $region47: #{tpu_custom_call.1} parent=1 // pred_check_branch
      %44 = sbr.rel (0) target = $region49
    $region48: #{tpu_custom_call.1} parent=1 // pred_region
      _
    $region49: #{tpu_custom_call.1} parent=1 // pred_fallthru
      _
    // Predicated region
    $region50: #{tpu_custom_call.1} parent=1 // pred_check
      _
    $region51: #{tpu_custom_call.1} parent=1 // pred_check_branch
      %46 = sbr.rel (0) target = $region53
    $region52: #{tpu_custom_call.1} parent=1 // pred_region
      _
    $region53: #{tpu_custom_call.1} parent=1 // pred_fallthru
      _
    // Predicated region
    $region54: #{tpu_custom_call.1} parent=1 // pred_check
      _
    $region55: #{tpu_custom_call.1} parent=1 // pred_check_branch
      %48 = sbr.rel (0) target = $region57
    $region56: #{tpu_custom_call.1} parent=1 // pred_region
      _
    $region57: #{tpu_custom_call.1} parent=1 // pred_fallthru
      _
    // Predicated region
    $region58: #{tpu_custom_call.1} parent=1 // pred_check
      _
    $region59: #{tpu_custom_call.1} parent=1 // pred_check_branch
      %50 = sbr.rel (0) target = $region61
    $region60: #{tpu_custom_call.1} parent=1 // pred_region
      _
    $region61: #{tpu_custom_call.1} parent=1 // pred_fallthru
      _
    %v52 = vld [vmem:[%s10] sm:$0x1]
    %s53 = scalar_lea.vmem %s10, 1
    %v54 = vld [vmem:[%s53] sm:$0x1]
    %s55 = scalar_lea.vmem %s10, 2
    %v56 = vld [vmem:[%s55] sm:$0x1]
    %s57 = scalar_lea.vmem %s10, 3
    %v58 = vld [vmem:[%s57] sm:$0x1]
    %s59 = scalar_lea.vmem %s10, 4
    %v60 = vld [vmem:[%s59] sm:$0x1]
    %s61 = scalar_lea.vmem %s10, 5
    %v62 = vld [vmem:[%s61] sm:$0x1]
    %v63 = vld [vmem:[%s5] sm:$0x1]
    %v64 = vld [vmem:[%s9] sm:$0x1]
    %v65 = vld [vmem:[%s11] sm:$0xf]
    %v66 = vld [vmem:[%s11 + $0x4] sm:$0xf]
    %v67 = vld [vmem:[%s11 + $0x8] sm:$0xf]
    %v68 = vld [vmem:[%s11 + $0xc] sm:$0xf]
    %v69 = vld [vmem:[%s12] sm:$0x1]
    %v70 = vld [vmem:[%s13] sm:$0xf]
    %v71 = vld [vmem:[%s13 + $0x4] sm:$0xf]
    %v72 = vld [vmem:[%s13 + $0x8] sm:$0xf]
    %v73 = vld [vmem:[%s13 + $0xc] sm:$0xf]
    %v74 = vld [vmem:[%s14] sm:$0x1]
    %v75 = vld [vmem:[%s0] sm:$0xff]
    %v76 = vld [vmem:[%s0 + $0x8] sm:$0xff]
    %v77 = vld [vmem:[%s1] sm:$0xf]
    %v78 = vld [vmem:[%s1 + $0x4] sm:$0xf]
    %v79 = vpack.c.bf16 %v76, %v75
    %v80 = vld [vmem:[%s2] sm:$0xf]
    %v81 = vld [vmem:[%s2 + $0x4] sm:$0xf]
    %v82 = vld [vmem:[%s2 + $0x8] sm:$0xf]
    %v83 = vld [vmem:[%s2 + $0xc] sm:$0xf]
    %v84 = vld [vmem:[%s3] sm:$0x1]
    %v86 = vlaneseq
    %v87 = vshrl.u32 %v86, 7
    %v88 = vsub.s32 0, %v87
    %v89 = vrot.slane %v84, %v88
    %v95 = vunpack.c.l.b16 %v80
    %v96 = vunpack.c.l.b16 %v81
    %v97 = vunpack.c.l.b16 %v82
    %v98 = vunpack.c.l.b16 %v83
    %v99 = vpack.c.b16 %v96, %v95
    %v100 = vpack.c.b16 %v98, %v97
    %vm103 = vcmask 261120
    %v105 = vsel %vm103, %v79, 0
    %107 = vmatprep.subr.bf16.mxu0 0
    %108 = vmatpush1.bf16.msra.mxu0 0
    %109 = vmatprep.subr.bf16.mxu0 0
    %110 = vmatpush1.bf16.msra.mxu0 0
    %111 = vmatprep.subr.bf16.mxu0 0
    %112 = vmatpush1.bf16.msra.mxu0 0
    %113 = vmatprep.subr.bf16.mxu0 0
    %114 = vmatpush1.bf16.msra.mxu0 0
    %115 = vmatprep.subr.bf16.mxu0 0
    %116 = vmatpush1.bf16.msra.mxu0 0
    %117 = vmatprep.subr.bf16.mxu0 0
    %118 = vmatpush1.bf16.msra.mxu0 0
    %119 = vmatprep.subr.bf16.mxu0 0
    %120 = vmatpush1.bf16.msra.mxu0 %v100
    %121 = vmatprep.subr.bf16.mxu0 0
    %122 = vmatpush1.bf16.msra.mxu0 %v99
    %123 = vmatprep.subr.bf16.mxu0 0
    %124 = vmatpush2.bf16.msra.mxu0 0
    %125 = vmatprep.subr.bf16.mxu0 0
    %126 = vmatpush2.bf16.msra.mxu0 0
    %127 = vmatprep.subr.bf16.mxu0 0
    %128 = vmatpush2.bf16.msra.mxu0 0
    %129 = vmatprep.subr.bf16.mxu0 0
    %130 = vmatpush2.bf16.msra.mxu0 0
    %131 = vmatprep.subr.bf16.mxu0 0
    %132 = vmatpush2.bf16.msra.mxu0 0
    %133 = vmatprep.subr.bf16.mxu0 0
    %134 = vmatpush2.bf16.msra.mxu0 0
    %135 = vmatprep.subr.bf16.mxu0 0
    %136 = vmatpush2.bf16.msra.mxu0 0
    %137 = vmatprep.subr.bf16.mxu0 0
    %138 = vmatpush2.bf16.msra.mxu0 0
    %139 = vmatprep.mubr.bf16.mxu0 0
    %140 = vmatmul.mubr.bf16.gmra.mxu0 %v105
    %v141 = vpop.f32.mrf.mxu0
    %v142 = vadd.f32 %v89, %v141
    %v143 = vpop.f32.mrf.mxu0
    %v144 = vpop.f32.mrf.mxu0
    %v145 = vadd.f32 %v89, %v144
    %v146 = vpop.f32.mrf.mxu0
    %147 = vdwg.mxu0
    %s148 = scalar_lea.vmem %s2, 64
    %v149 = vld [vmem:[%s148] sm:$0xf]
    %v150 = vld [vmem:[%s148 + $0x4] sm:$0xf]
    %v151 = vld [vmem:[%s148 + $0x8] sm:$0xf]
    %v152 = vld [vmem:[%s148 + $0xc] sm:$0xf]
    %s153 = scalar_lea.vmem %s3, 4
    %v154 = vld [vmem:[%s153] sm:$0x1]
    %v156 = vlaneseq
    %v157 = vshrl.u32 %v156, 7
    %v158 = vsub.s32 0, %v157
    %v159 = vrot.slane %v154, %v158
    %v165 = vunpack.c.l.b16 %v149
    %v166 = vunpack.c.l.b16 %v150
    %v167 = vunpack.c.l.b16 %v151
    %v168 = vunpack.c.l.b16 %v152
    %v169 = vpack.c.b16 %v166, %v165
    %v170 = vpack.c.b16 %v168, %v167
    %173 = vmatprep.subr.bf16.mxu0 0
    %174 = vmatpush1.bf16.msra.mxu0 0
    %175 = vmatprep.subr.bf16.mxu0 0
    %176 = vmatpush1.bf16.msra.mxu0 0
    %177 = vmatprep.subr.bf16.mxu0 0
    %178 = vmatpush1.bf16.msra.mxu0 0
    %179 = vmatprep.subr.bf16.mxu0 0
    %180 = vmatpush1.bf16.msra.mxu0 0
    %181 = vmatprep.subr.bf16.mxu0 0
    %182 = vmatpush1.bf16.msra.mxu0 0
    %183 = vmatprep.subr.bf16.mxu0 0
    %184 = vmatpush1.bf16.msra.mxu0 0
    %185 = vmatprep.subr.bf16.mxu0 0
    %186 = vmatpush1.bf16.msra.mxu0 %v170
    %187 = vmatprep.subr.bf16.mxu0 0
    %188 = vmatpush1.bf16.msra.mxu0 %v169
    %189 = vmatprep.subr.bf16.mxu0 0
    %190 = vmatpush2.bf16.msra.mxu0 0
    %191 = vmatprep.subr.bf16.mxu0 0
    %192 = vmatpush2.bf16.msra.mxu0 0
    %193 = vmatprep.subr.bf16.mxu0 0
    %194 = vmatpush2.bf16.msra.mxu0 0
    %195 = vmatprep.subr.bf16.mxu0 0
    %196 = vmatpush2.bf16.msra.mxu0 0
    %197 = vmatprep.subr.bf16.mxu0 0
    %198 = vmatpush2.bf16.msra.mxu0 0
    %199 = vmatprep.subr.bf16.mxu0 0
    %200 = vmatpush2.bf16.msra.mxu0 0
    %201 = vmatprep.subr.bf16.mxu0 0
    %202 = vmatpush2.bf16.msra.mxu0 0
    %203 = vmatprep.subr.bf16.mxu0 0
    %204 = vmatpush2.bf16.msra.mxu0 0
    %205 = vmatprep.mubr.bf16.mxu0 0
    %206 = vmatmul.mubr.bf16.gmra.mxu0 %v105
    %v207 = vpop.f32.mrf.mxu0
    %v208 = vadd.f32 %v159, %v207
    %v209 = vpop.f32.mrf.mxu0
    %v210 = vpop.f32.mrf.mxu0
    %v211 = vadd.f32 %v159, %v210
    %v212 = vpop.f32.mrf.mxu0
    %213 = vdwg.mxu0
    %s214 = scalar_lea.vmem %s2, 128
    %v215 = vld [vmem:[%s214] sm:$0xf]
    %v216 = vld [vmem:[%s214 + $0x4] sm:$0xf]
    %v217 = vld [vmem:[%s214 + $0x8] sm:$0xf]
    %v218 = vld [vmem:[%s214 + $0xc] sm:$0xf]
    %s219 = scalar_lea.vmem %s3, 8
    %v220 = vld [vmem:[%s219] sm:$0x1]
    %v222 = vlaneseq
    %v223 = vshrl.u32 %v222, 7
    %v224 = vsub.s32 0, %v223
    %v225 = vrot.slane %v220, %v224
    %v231 = vunpack.c.l.b16 %v215
    %v232 = vunpack.c.l.b16 %v216
    %v233 = vunpack.c.l.b16 %v217
    %v234 = vunpack.c.l.b16 %v218
    %v235 = vpack.c.b16 %v232, %v231
    %v236 = vpack.c.b16 %v234, %v233
    %239 = vmatprep.subr.bf16.mxu0 0
    %240 = vmatpush1.bf16.msra.mxu0 0
    %241 = vmatprep.subr.bf16.mxu0 0
    %242 = vmatpush1.bf16.msra.mxu0 0
    %243 = vmatprep.subr.bf16.mxu0 0
    %244 = vmatpush1.bf16.msra.mxu0 0
    %245 = vmatprep.subr.bf16.mxu0 0
    %246 = vmatpush1.bf16.msra.mxu0 0
    %247 = vmatprep.subr.bf16.mxu0 0
    %248 = vmatpush1.bf16.msra.mxu0 0
    %249 = vmatprep.subr.bf16.mxu0 0
    %250 = vmatpush1.bf16.msra.mxu0 0
    %251 = vmatprep.subr.bf16.mxu0 0
    %252 = vmatpush1.bf16.msra.mxu0 %v236
    %253 = vmatprep.subr.bf16.mxu0 0
    %254 = vmatpush1.bf16.msra.mxu0 %v235
    %255 = vmatprep.subr.bf16.mxu0 0
    %256 = vmatpush2.bf16.msra.mxu0 0
    %257 = vmatprep.subr.bf16.mxu0 0
    %258 = vmatpush2.bf16.msra.mxu0 0
    %259 = vmatprep.subr.bf16.mxu0 0
    %260 = vmatpush2.bf16.msra.mxu0 0
    %261 = vmatprep.subr.bf16.mxu0 0
    %262 = vmatpush2.bf16.msra.mxu0 0
    %263 = vmatprep.subr.bf16.mxu0 0
    %264 = vmatpush2.bf16.msra.mxu0 0
    %265 = vmatprep.subr.bf16.mxu0 0
    %266 = vmatpush2.bf16.msra.mxu0 0
    %267 = vmatprep.subr.bf16.mxu0 0
    %268 = vmatpush2.bf16.msra.mxu0 0
    %269 = vmatprep.subr.bf16.mxu0 0
    %270 = vmatpush2.bf16.msra.mxu0 0
    %271 = vmatprep.mubr.bf16.mxu0 0
    %272 = vmatmul.mubr.bf16.gmra.mxu0 %v105
    %v273 = vpop.f32.mrf.mxu0
    %v274 = vadd.f32 %v225, %v273
    %v275 = vpop.f32.mrf.mxu0
    %v276 = vpop.f32.mrf.mxu0
    %v277 = vadd.f32 %v225, %v276
    %v278 = vpop.f32.mrf.mxu0
    %279 = vdwg.mxu0
    %v280 = vmul.f32 %v142, 0.35355338
    %v281 = vmul.f32 %v145, 0.35355338
    %s282 = scalar_lea.vmem %s2, 16
    %v283 = vld [vmem:[%s282] sm:$0xf]
    %v284 = vld [vmem:[%s282 + $0x4] sm:$0xf]
    %v285 = vld [vmem:[%s282 + $0x8] sm:$0xf]
    %v286 = vld [vmem:[%s282 + $0xc] sm:$0xf]
    %s287 = scalar_lea.vmem %s3, 1
    %v288 = vld [vmem:[%s287] sm:$0x1]
    %v290 = vlaneseq
    %v291 = vshrl.u32 %v290, 7
    %v292 = vsub.s32 0, %v291
    %v293 = vrot.slane %v288, %v292
    %v299 = vunpack.c.l.b16 %v283
    %v300 = vunpack.c.l.b16 %v284
    %v301 = vunpack.c.l.b16 %v285
    %v302 = vunpack.c.l.b16 %v286
    %v303 = vpack.c.b16 %v300, %v299
    %v304 = vpack.c.b16 %v302, %v301
    %307 = vmatprep.subr.bf16.mxu0 0
    %308 = vmatpush1.bf16.msra.mxu0 0
    %309 = vmatprep.subr.bf16.mxu0 0
    %310 = vmatpush1.bf16.msra.mxu0 0
    %311 = vmatprep.subr.bf16.mxu0 0
    %312 = vmatpush1.bf16.msra.mxu0 0
    %313 = vmatprep.subr.bf16.mxu0 0
    %314 = vmatpush1.bf16.msra.mxu0 0
    %315 = vmatprep.subr.bf16.mxu0 0
    %316 = vmatpush1.bf16.msra.mxu0 0
    %317 = vmatprep.subr.bf16.mxu0 0
    %318 = vmatpush1.bf16.msra.mxu0 0
    %319 = vmatprep.subr.bf16.mxu0 0
    %320 = vmatpush1.bf16.msra.mxu0 %v304
    %321 = vmatprep.subr.bf16.mxu0 0
    %322 = vmatpush1.bf16.msra.mxu0 %v303
    %323 = vmatprep.subr.bf16.mxu0 0
    %324 = vmatpush2.bf16.msra.mxu0 0
    %325 = vmatprep.subr.bf16.mxu0 0
    %326 = vmatpush2.bf16.msra.mxu0 0
    %327 = vmatprep.subr.bf16.mxu0 0
    %328 = vmatpush2.bf16.msra.mxu0 0
    %329 = vmatprep.subr.bf16.mxu0 0
    %330 = vmatpush2.bf16.msra.mxu0 0
    %331 = vmatprep.subr.bf16.mxu0 0
    %332 = vmatpush2.bf16.msra.mxu0 0
    %333 = vmatprep.subr.bf16.mxu0 0
    %334 = vmatpush2.bf16.msra.mxu0 0
    %335 = vmatprep.subr.bf16.mxu0 0
    %336 = vmatpush2.bf16.msra.mxu0 0
    %337 = vmatprep.subr.bf16.mxu0 0
    %338 = vmatpush2.bf16.msra.mxu0 0
    %339 = vmatprep.mubr.bf16.mxu0 0
    %340 = vmatmul.mubr.bf16.gmra.mxu0 %v105
    %v341 = vpop.f32.mrf.mxu0
    %v342 = vadd.f32 %v293, %v341
    %v343 = vpop.f32.mrf.mxu0
    %v344 = vpop.f32.mrf.mxu0
    %v345 = vadd.f32 %v293, %v344
    %v346 = vpop.f32.mrf.mxu0
    %347 = vdwg.mxu0
    %s348 = scalar_lea.vmem %s2, 80
    %v349 = vld [vmem:[%s348] sm:$0xf]
    %v350 = vld [vmem:[%s348 + $0x4] sm:$0xf]
    %v351 = vld [vmem:[%s348 + $0x8] sm:$0xf]
    %v352 = vld [vmem:[%s348 + $0xc] sm:$0xf]
    %s353 = scalar_lea.vmem %s3, 5
    %v354 = vld [vmem:[%s353] sm:$0x1]
    %v356 = vlaneseq
    %v357 = vshrl.u32 %v356, 7
    %v358 = vsub.s32 0, %v357
    %v359 = vrot.slane %v354, %v358
    %v365 = vunpack.c.l.b16 %v349
    %v366 = vunpack.c.l.b16 %v350
    %v367 = vunpack.c.l.b16 %v351
    %v368 = vunpack.c.l.b16 %v352
    %v369 = vpack.c.b16 %v366, %v365
    %v370 = vpack.c.b16 %v368, %v367
    %373 = vmatprep.subr.bf16.mxu0 0
    %374 = vmatpush1.bf16.msra.mxu0 0
    %375 = vmatprep.subr.bf16.mxu0 0
    %376 = vmatpush1.bf16.msra.mxu0 0
    %377 = vmatprep.subr.bf16.mxu0 0
    %378 = vmatpush1.bf16.msra.mxu0 0
    %379 = vmatprep.subr.bf16.mxu0 0
    %380 = vmatpush1.bf16.msra.mxu0 0
    %381 = vmatprep.subr.bf16.mxu0 0
    %382 = vmatpush1.bf16.msra.mxu0 0
    %383 = vmatprep.subr.bf16.mxu0 0
    %384 = vmatpush1.bf16.msra.mxu0 0
    %385 = vmatprep.subr.bf16.mxu0 0
    %386 = vmatpush1.bf16.msra.mxu0 %v370
    %387 = vmatprep.subr.bf16.mxu0 0
    %388 = vmatpush1.bf16.msra.mxu0 %v369
    %389 = vmatprep.subr.bf16.mxu0 0
    %390 = vmatpush2.bf16.msra.mxu0 0
    %391 = vmatprep.subr.bf16.mxu0 0
    %392 = vmatpush2.bf16.msra.mxu0 0
    %393 = vmatprep.subr.bf16.mxu0 0
    %394 = vmatpush2.bf16.msra.mxu0 0
    %395 = vmatprep.subr.bf16.mxu0 0
    %396 = vmatpush2.bf16.msra.mxu0 0
    %397 = vmatprep.subr.bf16.mxu0 0
    %398 = vmatpush2.bf16.msra.mxu0 0
    %399 = vmatprep.subr.bf16.mxu0 0
    %400 = vmatpush2.bf16.msra.mxu0 0
    %401 = vmatprep.subr.bf16.mxu0 0
    %402 = vmatpush2.bf16.msra.mxu0 0
    %403 = vmatprep.subr.bf16.mxu0 0
    %404 = vmatpush2.bf16.msra.mxu0 0
    %405 = vmatprep.mubr.bf16.mxu0 0
    %406 = vmatmul.mubr.bf16.gmra.mxu0 %v105
    %v407 = vpop.f32.mrf.mxu0
    %v408 = vadd.f32 %v359, %v407
    %v409 = vpop.f32.mrf.mxu0
    %v410 = vpop.f32.mrf.mxu0
    %v411 = vadd.f32 %v359, %v410
    %v412 = vpop.f32.mrf.mxu0
    %413 = vdwg.mxu0
    %s414 = scalar_lea.vmem %s2, 144
    %v415 = vld [vmem:[%s414] sm:$0xf]
    %v416 = vld [vmem:[%s414 + $0x4] sm:$0xf]
    %v417 = vld [vmem:[%s414 + $0x8] sm:$0xf]
    %v418 = vld [vmem:[%s414 + $0xc] sm:$0xf]
    %s419 = scalar_lea.vmem %s3, 9
    %v420 = vld [vmem:[%s419] sm:$0x1]
    %v422 = vlaneseq
    %v423 = vshrl.u32 %v422, 7
    %v424 = vsub.s32 0, %v423
    %v425 = vrot.slane %v420, %v424
    %v431 = vunpack.c.l.b16 %v415
    %v432 = vunpack.c.l.b16 %v416
    %v433 = vunpack.c.l.b16 %v417
    %v434 = vunpack.c.l.b16 %v418
    %v435 = vpack.c.b16 %v432, %v431
    %v436 = vpack.c.b16 %v434, %v433
    %439 = vmatprep.subr.bf16.mxu0 0
    %440 = vmatpush1.bf16.msra.mxu0 0
    %441 = vmatprep.subr.bf16.mxu0 0
    %442 = vmatpush1.bf16.msra.mxu0 0
    %443 = vmatprep.subr.bf16.mxu0 0
    %444 = vmatpush1.bf16.msra.mxu0 0
    %445 = vmatprep.subr.bf16.mxu0 0
    %446 = vmatpush1.bf16.msra.mxu0 0
    %447 = vmatprep.subr.bf16.mxu0 0
    %448 = vmatpush1.bf16.msra.mxu0 0
    %449 = vmatprep.subr.bf16.mxu0 0
    %450 = vmatpush1.bf16.msra.mxu0 0
    %451 = vmatprep.subr.bf16.mxu0 0
    %452 = vmatpush1.bf16.msra.mxu0 %v436
    %453 = vmatprep.subr.bf16.mxu0 0
    %454 = vmatpush1.bf16.msra.mxu0 %v435
    %455 = vmatprep.subr.bf16.mxu0 0
    %456 = vmatpush2.bf16.msra.mxu0 0
    %457 = vmatprep.subr.bf16.mxu0 0
    %458 = vmatpush2.bf16.msra.mxu0 0
    %459 = vmatprep.subr.bf16.mxu0 0
    %460 = vmatpush2.bf16.msra.mxu0 0
    %461 = vmatprep.subr.bf16.mxu0 0
    %462 = vmatpush2.bf16.msra.mxu0 0
    %463 = vmatprep.subr.bf16.mxu0 0
    %464 = vmatpush2.bf16.msra.mxu0 0
    %465 = vmatprep.subr.bf16.mxu0 0
    %466 = vmatpush2.bf16.msra.mxu0 0
    %467 = vmatprep.subr.bf16.mxu0 0
    %468 = vmatpush2.bf16.msra.mxu0 0
    %469 = vmatprep.subr.bf16.mxu0 0
    %470 = vmatpush2.bf16.msra.mxu0 0
    %471 = vmatprep.mubr.bf16.mxu0 0
    %472 = vmatmul.mubr.bf16.gmra.mxu0 %v105
    %v473 = vpop.f32.mrf.mxu0
    %v474 = vadd.f32 %v425, %v473
    %v475 = vpop.f32.mrf.mxu0
    %v476 = vpop.f32.mrf.mxu0
    %v477 = vadd.f32 %v425, %v476
    %v478 = vpop.f32.mrf.mxu0
    %479 = vdwg.mxu0
    %v480 = vmul.f32 %v342, 0.35355338
    %v481 = vmul.f32 %v345, 0.35355338
    %s482 = scalar_lea.vmem %s2, 32
    %v483 = vld [vmem:[%s482] sm:$0xf]
    %v484 = vld [vmem:[%s482 + $0x4] sm:$0xf]
    %v485 = vld [vmem:[%s482 + $0x8] sm:$0xf]
    %v486 = vld [vmem:[%s482 + $0xc] sm:$0xf]
    %s487 = scalar_lea.vmem %s3, 2
    %v488 = vld [vmem:[%s487] sm:$0x1]
    %v490 = vlaneseq
    %v491 = vshrl.u32 %v490, 7
    %v492 = vsub.s32 0, %v491
    %v493 = vrot.slane %v488, %v492
    %v499 = vunpack.c.l.b16 %v483
    %v500 = vunpack.c.l.b16 %v484
    %v501 = vunpack.c.l.b16 %v485
    %v502 = vunpack.c.l.b16 %v486
    %v503 = vpack.c.b16 %v500, %v499
    %v504 = vpack.c.b16 %v502, %v501
    %507 = vmatprep.subr.bf16.mxu0 0
    %508 = vmatpush1.bf16.msra.mxu0 0
    %509 = vmatprep.subr.bf16.mxu0 0
    %510 = vmatpush1.bf16.msra.mxu0 0
    %511 = vmatprep.subr.bf16.mxu0 0
    %512 = vmatpush1.bf16.msra.mxu0 0
    %513 = vmatprep.subr.bf16.mxu0 0
    %514 = vmatpush1.bf16.msra.mxu0 0
    %515 = vmatprep.subr.bf16.mxu0 0
    %516 = vmatpush1.bf16.msra.mxu0 0
    %517 = vmatprep.subr.bf16.mxu0 0
    %518 = vmatpush1.bf16.msra.mxu0 0
    %519 = vmatprep.subr.bf16.mxu0 0
    %520 = vmatpush1.bf16.msra.mxu0 %v504
    %521 = vmatprep.subr.bf16.mxu0 0
    %522 = vmatpush1.bf16.msra.mxu0 %v503
    %523 = vmatprep.subr.bf16.mxu0 0
    %524 = vmatpush2.bf16.msra.mxu0 0
    %525 = vmatprep.subr.bf16.mxu0 0
    %526 = vmatpush2.bf16.msra.mxu0 0
    %527 = vmatprep.subr.bf16.mxu0 0
    %528 = vmatpush2.bf16.msra.mxu0 0
    %529 = vmatprep.subr.bf16.mxu0 0
    %530 = vmatpush2.bf16.msra.mxu0 0
    %531 = vmatprep.subr.bf16.mxu0 0
    %532 = vmatpush2.bf16.msra.mxu0 0
    %533 = vmatprep.subr.bf16.mxu0 0
    %534 = vmatpush2.bf16.msra.mxu0 0
    %535 = vmatprep.subr.bf16.mxu0 0
    %536 = vmatpush2.bf16.msra.mxu0 0
    %537 = vmatprep.subr.bf16.mxu0 0
    %538 = vmatpush2.bf16.msra.mxu0 0
    %539 = vmatprep.mubr.bf16.mxu0 0
    %540 = vmatmul.mubr.bf16.gmra.mxu0 %v105
    %v541 = vpop.f32.mrf.mxu0
    %v542 = vadd.f32 %v493, %v541
    %v543 = vpop.f32.mrf.mxu0
    %v544 = vpop.f32.mrf.mxu0
    %v545 = vadd.f32 %v493, %v544
    %v546 = vpop.f32.mrf.mxu0
    %547 = vdwg.mxu0
    %s548 = scalar_lea.vmem %s2, 96
    %v549 = vld [vmem:[%s548] sm:$0xf]
    %v550 = vld [vmem:[%s548 + $0x4] sm:$0xf]
    %v551 = vld [vmem:[%s548 + $0x8] sm:$0xf]
    %v552 = vld [vmem:[%s548 + $0xc] sm:$0xf]
    %s553 = scalar_lea.vmem %s3, 6
    %v554 = vld [vmem:[%s553] sm:$0x1]
    %v556 = vlaneseq
    %v557 = vshrl.u32 %v556, 7
    %v558 = vsub.s32 0, %v557
    %v559 = vrot.slane %v554, %v558
    %v565 = vunpack.c.l.b16 %v549
    %v566 = vunpack.c.l.b16 %v550
    %v567 = vunpack.c.l.b16 %v551
    %v568 = vunpack.c.l.b16 %v552
    %v569 = vpack.c.b16 %v566, %v565
    %v570 = vpack.c.b16 %v568, %v567
    %573 = vmatprep.subr.bf16.mxu0 0
    %574 = vmatpush1.bf16.msra.mxu0 0
    %575 = vmatprep.subr.bf16.mxu0 0
    %576 = vmatpush1.bf16.msra.mxu0 0
    %577 = vmatprep.subr.bf16.mxu0 0
    %578 = vmatpush1.bf16.msra.mxu0 0
    %579 = vmatprep.subr.bf16.mxu0 0
    %580 = vmatpush1.bf16.msra.mxu0 0
    %581 = vmatprep.subr.bf16.mxu0 0
    %582 = vmatpush1.bf16.msra.mxu0 0
    %583 = vmatprep.subr.bf16.mxu0 0
    %584 = vmatpush1.bf16.msra.mxu0 0
    %585 = vmatprep.subr.bf16.mxu0 0
    %586 = vmatpush1.bf16.msra.mxu0 %v570
    %587 = vmatprep.subr.bf16.mxu0 0
    %588 = vmatpush1.bf16.msra.mxu0 %v569
    %589 = vmatprep.subr.bf16.mxu0 0
    %590 = vmatpush2.bf16.msra.mxu0 0
    %591 = vmatprep.subr.bf16.mxu0 0
    %592 = vmatpush2.bf16.msra.mxu0 0
    %593 = vmatprep.subr.bf16.mxu0 0
    %594 = vmatpush2.bf16.msra.mxu0 0
    %595 = vmatprep.subr.bf16.mxu0 0
    %596 = vmatpush2.bf16.msra.mxu0 0
    %597 = vmatprep.subr.bf16.mxu0 0
    %598 = vmatpush2.bf16.msra.mxu0 0
    %599 = vmatprep.subr.bf16.mxu0 0
    %600 = vmatpush2.bf16.msra.mxu0 0
    %601 = vmatprep.subr.bf16.mxu0 0
    %602 = vmatpush2.bf16.msra.mxu0 0
    %603 = vmatprep.subr.bf16.mxu0 0
    %604 = vmatpush2.bf16.msra.mxu0 0
    %605 = vmatprep.mubr.bf16.mxu0 0
    %606 = vmatmul.mubr.bf16.gmra.mxu0 %v105
    %v607 = vpop.f32.mrf.mxu0
    %v608 = vadd.f32 %v559, %v607
    %v609 = vpop.f32.mrf.mxu0
    %v610 = vpop.f32.mrf.mxu0
    %v611 = vadd.f32 %v559, %v610
    %v612 = vpop.f32.mrf.mxu0
    %613 = vdwg.mxu0
    %s614 = scalar_lea.vmem %s2, 160
    %v615 = vld [vmem:[%s614] sm:$0xf]
    %v616 = vld [vmem:[%s614 + $0x4] sm:$0xf]
    %v617 = vld [vmem:[%s614 + $0x8] sm:$0xf]
    %v618 = vld [vmem:[%s614 + $0xc] sm:$0xf]
    %s619 = scalar_lea.vmem %s3, 10
    %v620 = vld [vmem:[%s619] sm:$0x1]
    %v622 = vlaneseq
    %v623 = vshrl.u32 %v622, 7
    %v624 = vsub.s32 0, %v623
    %v625 = vrot.slane %v620, %v624
    %v631 = vunpack.c.l.b16 %v615
    %v632 = vunpack.c.l.b16 %v616
    %v633 = vunpack.c.l.b16 %v617
    %v634 = vunpack.c.l.b16 %v618
    %v635 = vpack.c.b16 %v632, %v631
    %v636 = vpack.c.b16 %v634, %v633
    %639 = vmatprep.subr.bf16.mxu0 0
    %640 = vmatpush1.bf16.msra.mxu0 0
    %641 = vmatprep.subr.bf16.mxu0 0
    %642 = vmatpush1.bf16.msra.mxu0 0
    %643 = vmatprep.subr.bf16.mxu0 0
    %644 = vmatpush1.bf16.msra.mxu0 0
    %645 = vmatprep.subr.bf16.mxu0 0
    %646 = vmatpush1.bf16.msra.mxu0 0
    %647 = vmatprep.subr.bf16.mxu0 0
    %648 = vmatpush1.bf16.msra.mxu0 0
    %649 = vmatprep.subr.bf16.mxu0 0
    %650 = vmatpush1.bf16.msra.mxu0 0
    %651 = vmatprep.subr.bf16.mxu0 0
    %652 = vmatpush1.bf16.msra.mxu0 %v636
    %653 = vmatprep.subr.bf16.mxu0 0
    %654 = vmatpush1.bf16.msra.mxu0 %v635
    %655 = vmatprep.subr.bf16.mxu0 0
    %656 = vmatpush2.bf16.msra.mxu0 0
    %657 = vmatprep.subr.bf16.mxu0 0
    %658 = vmatpush2.bf16.msra.mxu0 0
    %659 = vmatprep.subr.bf16.mxu0 0
    %660 = vmatpush2.bf16.msra.mxu0 0
    %661 = vmatprep.subr.bf16.mxu0 0
    %662 = vmatpush2.bf16.msra.mxu0 0
    %663 = vmatprep.subr.bf16.mxu0 0
    %664 = vmatpush2.bf16.msra.mxu0 0
    %665 = vmatprep.subr.bf16.mxu0 0
    %666 = vmatpush2.bf16.msra.mxu0 0
    %667 = vmatprep.subr.bf16.mxu0 0
    %668 = vmatpush2.bf16.msra.mxu0 0
    %669 = vmatprep.subr.bf16.mxu0 0
    %670 = vmatpush2.bf16.msra.mxu0 0
    %671 = vmatprep.mubr.bf16.mxu0 0
    %672 = vmatmul.mubr.bf16.gmra.mxu0 %v105
    %v673 = vpop.f32.mrf.mxu0
    %v674 = vadd.f32 %v625, %v673
    %v675 = vpop.f32.mrf.mxu0
    %v676 = vpop.f32.mrf.mxu0
    %v677 = vadd.f32 %v625, %v676
    %v678 = vpop.f32.mrf.mxu0
    %679 = vdwg.mxu0
    %v680 = vmul.f32 %v542, 0.35355338
    %v681 = vmul.f32 %v545, 0.35355338
    %s682 = scalar_lea.vmem %s2, 48
    %v683 = vld [vmem:[%s682] sm:$0xf]
    %v684 = vld [vmem:[%s682 + $0x4] sm:$0xf]
    %v685 = vld [vmem:[%s682 + $0x8] sm:$0xf]
    %v686 = vld [vmem:[%s682 + $0xc] sm:$0xf]
    %s687 = scalar_lea.vmem %s3, 3
    %v688 = vld [vmem:[%s687] sm:$0x1]
    %v690 = vlaneseq
    %v691 = vshrl.u32 %v690, 7
    %v692 = vsub.s32 0, %v691
    %v693 = vrot.slane %v688, %v692
    %v699 = vunpack.c.l.b16 %v683
    %v700 = vunpack.c.l.b16 %v684
    %v701 = vunpack.c.l.b16 %v685
    %v702 = vunpack.c.l.b16 %v686
    %v703 = vpack.c.b16 %v700, %v699
    %v704 = vpack.c.b16 %v702, %v701
    %707 = vmatprep.subr.bf16.mxu0 0
    %708 = vmatpush1.bf16.msra.mxu0 0
    %709 = vmatprep.subr.bf16.mxu0 0
    %710 = vmatpush1.bf16.msra.mxu0 0
    %711 = vmatprep.subr.bf16.mxu0 0
    %712 = vmatpush1.bf16.msra.mxu0 0
    %713 = vmatprep.subr.bf16.mxu0 0
    %714 = vmatpush1.bf16.msra.mxu0 0
    %715 = vmatprep.subr.bf16.mxu0 0
    %716 = vmatpush1.bf16.msra.mxu0 0
    %717 = vmatprep.subr.bf16.mxu0 0
    %718 = vmatpush1.bf16.msra.mxu0 0
    %719 = vmatprep.subr.bf16.mxu0 0
    %720 = vmatpush1.bf16.msra.mxu0 %v704
    %721 = vmatprep.subr.bf16.mxu0 0
    %722 = vmatpush1.bf16.msra.mxu0 %v703
    %723 = vmatprep.subr.bf16.mxu0 0
    %724 = vmatpush2.bf16.msra.mxu0 0
    %725 = vmatprep.subr.bf16.mxu0 0
    %726 = vmatpush2.bf16.msra.mxu0 0
    %727 = vmatprep.subr.bf16.mxu0 0
    %728 = vmatpush2.bf16.msra.mxu0 0
    %729 = vmatprep.subr.bf16.mxu0 0
    %730 = vmatpush2.bf16.msra.mxu0 0
    %731 = vmatprep.subr.bf16.mxu0 0
    %732 = vmatpush2.bf16.msra.mxu0 0
    %733 = vmatprep.subr.bf16.mxu0 0
    %734 = vmatpush2.bf16.msra.mxu0 0
    %735 = vmatprep.subr.bf16.mxu0 0
    %736 = vmatpush2.bf16.msra.mxu0 0
    %737 = vmatprep.subr.bf16.mxu0 0
    %738 = vmatpush2.bf16.msra.mxu0 0
    %739 = vmatprep.mubr.bf16.mxu0 0
    %740 = vmatmul.mubr.bf16.gmra.mxu0 %v105
    %v741 = vpop.f32.mrf.mxu0
    %v742 = vadd.f32 %v693, %v741
    %v743 = vpop.f32.mrf.mxu0
    %v744 = vpop.f32.mrf.mxu0
    %v745 = vadd.f32 %v693, %v744
    %v746 = vpop.f32.mrf.mxu0
    %747 = vdwg.mxu0
    %s748 = scalar_lea.vmem %s2, 112
    %v749 = vld [vmem:[%s748] sm:$0xf]
    %v750 = vld [vmem:[%s748 + $0x4] sm:$0xf]
    %v751 = vld [vmem:[%s748 + $0x8] sm:$0xf]
    %v752 = vld [vmem:[%s748 + $0xc] sm:$0xf]
    %s753 = scalar_lea.vmem %s3, 7
    %v754 = vld [vmem:[%s753] sm:$0x1]
    %v756 = vlaneseq
    %v757 = vshrl.u32 %v756, 7
    %v758 = vsub.s32 0, %v757
    %v759 = vrot.slane %v754, %v758
    %v765 = vunpack.c.l.b16 %v749
    %v766 = vunpack.c.l.b16 %v750
    %v767 = vunpack.c.l.b16 %v751
    %v768 = vunpack.c.l.b16 %v752
    %v769 = vpack.c.b16 %v766, %v765
    %v770 = vpack.c.b16 %v768, %v767
    %773 = vmatprep.subr.bf16.mxu0 0
    %774 = vmatpush1.bf16.msra.mxu0 0
    %775 = vmatprep.subr.bf16.mxu0 0
    %776 = vmatpush1.bf16.msra.mxu0 0
    %777 = vmatprep.subr.bf16.mxu0 0
    %778 = vmatpush1.bf16.msra.mxu0 0
    %779 = vmatprep.subr.bf16.mxu0 0
    %780 = vmatpush1.bf16.msra.mxu0 0
    %781 = vmatprep.subr.bf16.mxu0 0
    %782 = vmatpush1.bf16.msra.mxu0 0
    %783 = vmatprep.subr.bf16.mxu0 0
    %784 = vmatpush1.bf16.msra.mxu0 0
    %785 = vmatprep.subr.bf16.mxu0 0
    %786 = vmatpush1.bf16.msra.mxu0 %v770
    %787 = vmatprep.subr.bf16.mxu0 0
    %788 = vmatpush1.bf16.msra.mxu0 %v769
    %789 = vmatprep.subr.bf16.mxu0 0
    %790 = vmatpush2.bf16.msra.mxu0 0
    %791 = vmatprep.subr.bf16.mxu0 0
    %792 = vmatpush2.bf16.msra.mxu0 0
    %793 = vmatprep.subr.bf16.mxu0 0
    %794 = vmatpush2.bf16.msra.mxu0 0
    %795 = vmatprep.subr.bf16.mxu0 0
    %796 = vmatpush2.bf16.msra.mxu0 0
    %797 = vmatprep.subr.bf16.mxu0 0
    %798 = vmatpush2.bf16.msra.mxu0 0
    %799 = vmatprep.subr.bf16.mxu0 0
    %800 = vmatpush2.bf16.msra.mxu0 0
    %801 = vmatprep.subr.bf16.mxu0 0
    %802 = vmatpush2.bf16.msra.mxu0 0
    %803 = vmatprep.subr.bf16.mxu0 0
    %804 = vmatpush2.bf16.msra.mxu0 0
    %805 = vmatprep.mubr.bf16.mxu0 0
    %806 = vmatmul.mubr.bf16.gmra.mxu0 %v105
    %v807 = vpop.f32.mrf.mxu0
    %v808 = vadd.f32 %v759, %v807
    %v809 = vpop.f32.mrf.mxu0
    %v810 = vpop.f32.mrf.mxu0
    %v811 = vadd.f32 %v759, %v810
    %v812 = vpop.f32.mrf.mxu0
    %813 = vdwg.mxu0
    %s814 = scalar_lea.vmem %s2, 176
    %v815 = vld [vmem:[%s814] sm:$0xf]
    %v816 = vld [vmem:[%s814 + $0x4] sm:$0xf]
    %v817 = vld [vmem:[%s814 + $0x8] sm:$0xf]
    %v818 = vld [vmem:[%s814 + $0xc] sm:$0xf]
    %s819 = scalar_lea.vmem %s3, 11
    %v820 = vld [vmem:[%s819] sm:$0x1]
    %v822 = vlaneseq
    %v823 = vshrl.u32 %v822, 7
    %v824 = vsub.s32 0, %v823
    %v825 = vrot.slane %v820, %v824
    %v831 = vunpack.c.l.b16 %v815
    %v832 = vunpack.c.l.b16 %v816
    %v833 = vunpack.c.l.b16 %v817
    %v834 = vunpack.c.l.b16 %v818
    %v835 = vpack.c.b16 %v832, %v831
    %v836 = vpack.c.b16 %v834, %v833
    %839 = vmatprep.subr.bf16.mxu0 0
    %840 = vmatpush1.bf16.msra.mxu0 0
    %841 = vmatprep.subr.bf16.mxu0 0
    %842 = vmatpush1.bf16.msra.mxu0 0
    %843 = vmatprep.subr.bf16.mxu0 0
    %844 = vmatpush1.bf16.msra.mxu0 0
    %845 = vmatprep.subr.bf16.mxu0 0
    %846 = vmatpush1.bf16.msra.mxu0 0
    %847 = vmatprep.subr.bf16.mxu0 0
    %848 = vmatpush1.bf16.msra.mxu0 0
    %849 = vmatprep.subr.bf16.mxu0 0
    %850 = vmatpush1.bf16.msra.mxu0 0
    %851 = vmatprep.subr.bf16.mxu0 0
    %852 = vmatpush1.bf16.msra.mxu0 %v836
    %853 = vmatprep.subr.bf16.mxu0 0
    %854 = vmatpush1.bf16.msra.mxu0 %v835
    %855 = vmatprep.subr.bf16.mxu0 0
    %856 = vmatpush2.bf16.msra.mxu0 0
    %857 = vmatprep.subr.bf16.mxu0 0
    %858 = vmatpush2.bf16.msra.mxu0 0
    %859 = vmatprep.subr.bf16.mxu0 0
    %860 = vmatpush2.bf16.msra.mxu0 0
    %861 = vmatprep.subr.bf16.mxu0 0
    %862 = vmatpush2.bf16.msra.mxu0 0
    %863 = vmatprep.subr.bf16.mxu0 0
    %864 = vmatpush2.bf16.msra.mxu0 0
    %865 = vmatprep.subr.bf16.mxu0 0
    %866 = vmatpush2.bf16.msra.mxu0 0
    %867 = vmatprep.subr.bf16.mxu0 0
    %868 = vmatpush2.bf16.msra.mxu0 0
    %869 = vmatprep.subr.bf16.mxu0 0
    %870 = vmatpush2.bf16.msra.mxu0 0
    %871 = vmatprep.mubr.bf16.mxu0 0
    %872 = vmatmul.mubr.bf16.gmra.mxu0 %v105
    %v873 = vpop.f32.mrf.mxu0
    %v874 = vadd.f32 %v825, %v873
    %v875 = vpop.f32.mrf.mxu0
    %v876 = vpop.f32.mrf.mxu0
    %v877 = vadd.f32 %v825, %v876
    %v878 = vpop.f32.mrf.mxu0
    %879 = vdwg.mxu0
    %v880 = vmul.f32 %v742, 0.35355338
    %v881 = vmul.f32 %v745, 0.35355338
    %v882 = vpack.c.bf16 %v280, %v280
    %v883 = vpack.c.bf16 %v281, %v281
    %v884 = vpack.c.bf16 %v480, %v480
    %v885 = vpack.c.bf16 %v481, %v481
    %v886 = vpack.c.bf16 %v680, %v680
    %v887 = vpack.c.bf16 %v681, %v681
    %v888 = vpack.c.bf16 %v880, %v880
    %v889 = vpack.c.bf16 %v881, %v881
    %v890 = vpack.c.bf16 %v208, %v208
    %v891 = vpack.c.bf16 %v211, %v211
    %v892 = vpack.c.bf16 %v408, %v408
    %v893 = vpack.c.bf16 %v411, %v411
    %v894 = vpack.c.bf16 %v608, %v608
    %v895 = vpack.c.bf16 %v611, %v611
    %v896 = vpack.c.bf16 %v808, %v808
    %v897 = vpack.c.bf16 %v811, %v811
    %v898 = vpack.c.bf16 %v274, %v274
    %v899 = vpack.c.bf16 %v277, %v277
    %v900 = vpack.c.bf16 %v474, %v474
    %v901 = vpack.c.bf16 %v477, %v477
    %v902 = vpack.c.bf16 %v674, %v674
    %v903 = vpack.c.bf16 %v677, %v677
    %v904 = vpack.c.bf16 %v874, %v874
    %v905 = vpack.c.bf16 %v877, %v877
    %vm906 = vcmask 64512
    %v908 = vsel %vm906, %v882, 0
    %v911 = vsel %vm906, %v890, 0
    %913 = vmatprep.subr.bf16.mxu0 0
    %914 = vmatpush1.bf16.xpose.msra.mxu0 0
    %915 = vmatprep.subr.bf16.mxu0 0
    %916 = vmatpush1.bf16.xpose.msra.mxu0 0
    %917 = vmatprep.subr.bf16.mxu0 0
    %918 = vmatpush1.bf16.xpose.msra.mxu0 0
    %919 = vmatprep.subr.bf16.mxu0 0
    %920 = vmatpush1.bf16.xpose.msra.mxu0 0
    %921 = vmatprep.subr.bf16.mxu0 0
    %922 = vmatpush1.bf16.xpose.msra.mxu0 0
    %923 = vmatprep.subr.bf16.mxu0 0
    %924 = vmatpush1.bf16.xpose.msra.mxu0 0
    %925 = vmatprep.subr.bf16.mxu0 0
    %926 = vmatpush1.bf16.xpose.msra.mxu0 0
    %927 = vmatprep.subr.bf16.mxu0 0
    %928 = vmatpush1.bf16.xpose.msra.mxu0 %v911
    %929 = vmatprep.subr.bf16.mxu0 0
    %930 = vmatpush2.bf16.xpose.msra.mxu0 0
    %931 = vmatprep.subr.bf16.mxu0 0
    %932 = vmatpush2.bf16.xpose.msra.mxu0 0
    %933 = vmatprep.subr.bf16.mxu0 0
    %934 = vmatpush2.bf16.xpose.msra.mxu0 0
    %935 = vmatprep.subr.bf16.mxu0 0
    %936 = vmatpush2.bf16.xpose.msra.mxu0 0
    %937 = vmatprep.subr.bf16.mxu0 0
    %938 = vmatpush2.bf16.xpose.msra.mxu0 0
    %939 = vmatprep.subr.bf16.mxu0 0
    %940 = vmatpush2.bf16.xpose.msra.mxu0 0
    %941 = vmatprep.subr.bf16.mxu0 0
    %942 = vmatpush2.bf16.xpose.msra.mxu0 0
    %943 = vmatprep.subr.bf16.mxu0 0
    %944 = vmatpush2.bf16.xpose.msra.mxu0 0
    %945 = vmatprep.mubr.bf16.mxu0 0
    %946 = vmatmul.mubr.bf16.gmra.mxu0 %v908
    %v947 = vpop.f32.mrf.mxu0
    %v948 = vadd.f32 0.0, %v947
    %v949 = vpop.f32.mrf.mxu0
    %v950 = vpop.f32.mrf.mxu0
    %v951 = vpop.f32.mrf.mxu0
    %952 = vdwg.mxu0
    %v954 = vsel %vm906, %v883, 0
    %v957 = vsel %vm906, %v891, 0
    %959 = vmatprep.subr.bf16.mxu0 0
    %960 = vmatpush1.bf16.xpose.msra.mxu0 0
    %961 = vmatprep.subr.bf16.mxu0 0
    %962 = vmatpush1.bf16.xpose.msra.mxu0 0
    %963 = vmatprep.subr.bf16.mxu0 0
    %964 = vmatpush1.bf16.xpose.msra.mxu0 0
    %965 = vmatprep.subr.bf16.mxu0 0
    %966 = vmatpush1.bf16.xpose.msra.mxu0 0
    %967 = vmatprep.subr.bf16.mxu0 0
    %968 = vmatpush1.bf16.xpose.msra.mxu0 0
    %969 = vmatprep.subr.bf16.mxu0 0
    %970 = vmatpush1.bf16.xpose.msra.mxu0 0
    %971 = vmatprep.subr.bf16.mxu0 0
    %972 = vmatpush1.bf16.xpose.msra.mxu0 0
    %973 = vmatprep.subr.bf16.mxu0 0
    %974 = vmatpush1.bf16.xpose.msra.mxu0 %v957
    %975 = vmatprep.subr.bf16.mxu0 0
    %976 = vmatpush2.bf16.xpose.msra.mxu0 0
    %977 = vmatprep.subr.bf16.mxu0 0
    %978 = vmatpush2.bf16.xpose.msra.mxu0 0
    %979 = vmatprep.subr.bf16.mxu0 0
    %980 = vmatpush2.bf16.xpose.msra.mxu0 0
    %981 = vmatprep.subr.bf16.mxu0 0
    %982 = vmatpush2.bf16.xpose.msra.mxu0 0
    %983 = vmatprep.subr.bf16.mxu0 0
    %984 = vmatpush2.bf16.xpose.msra.mxu0 0
    %985 = vmatprep.subr.bf16.mxu0 0
    %986 = vmatpush2.bf16.xpose.msra.mxu0 0
    %987 = vmatprep.subr.bf16.mxu0 0
    %988 = vmatpush2.bf16.xpose.msra.mxu0 0
    %989 = vmatprep.subr.bf16.mxu0 0
    %990 = vmatpush2.bf16.xpose.msra.mxu0 0
    %991 = vmatprep.mubr.bf16.mxu0 0
    %992 = vmatmul.mubr.bf16.gmra.mxu0 %v954
    %v993 = vpop.f32.mrf.mxu0
    %v994 = vadd.f32 0.0, %v993
    %v995 = vpop.f32.mrf.mxu0
    %v996 = vpop.f32.mrf.mxu0
    %v997 = vpop.f32.mrf.mxu0
    %998 = vdwg.mxu0
    %v1000 = vsel %vm906, %v884, 0
    %v1003 = vsel %vm906, %v892, 0
    %1005 = vmatprep.subr.bf16.mxu0 0
    %1006 = vmatpush1.bf16.xpose.msra.mxu0 0
    %1007 = vmatprep.subr.bf16.mxu0 0
    %1008 = vmatpush1.bf16.xpose.msra.mxu0 0
    %1009 = vmatprep.subr.bf16.mxu0 0
    %1010 = vmatpush1.bf16.xpose.msra.mxu0 0
    %1011 = vmatprep.subr.bf16.mxu0 0
    %1012 = vmatpush1.bf16.xpose.msra.mxu0 0
    %1013 = vmatprep.subr.bf16.mxu0 0
    %1014 = vmatpush1.bf16.xpose.msra.mxu0 0
    %1015 = vmatprep.subr.bf16.mxu0 0
    %1016 = vmatpush1.bf16.xpose.msra.mxu0 0
    %1017 = vmatprep.subr.bf16.mxu0 0
    %1018 = vmatpush1.bf16.xpose.msra.mxu0 0
    %1019 = vmatprep.subr.bf16.mxu0 0
    %1020 = vmatpush1.bf16.xpose.msra.mxu0 %v1003
    %1021 = vmatprep.subr.bf16.mxu0 0
    %1022 = vmatpush2.bf16.xpose.msra.mxu0 0
    %1023 = vmatprep.subr.bf16.mxu0 0
    %1024 = vmatpush2.bf16.xpose.msra.mxu0 0
    %1025 = vmatprep.subr.bf16.mxu0 0
    %1026 = vmatpush2.bf16.xpose.msra.mxu0 0
    %1027 = vmatprep.subr.bf16.mxu0 0
    %1028 = vmatpush2.bf16.xpose.msra.mxu0 0
    %1029 = vmatprep.subr.bf16.mxu0 0
    %1030 = vmatpush2.bf16.xpose.msra.mxu0 0
    %1031 = vmatprep.subr.bf16.mxu0 0
    %1032 = vmatpush2.bf16.xpose.msra.mxu0 0
    %1033 = vmatprep.subr.bf16.mxu0 0
    %1034 = vmatpush2.bf16.xpose.msra.mxu0 0
    %1035 = vmatprep.subr.bf16.mxu0 0
    %1036 = vmatpush2.bf16.xpose.msra.mxu0 0
    %1037 = vmatprep.mubr.bf16.mxu0 0
    %1038 = vmatmul.mubr.bf16.gmra.mxu0 %v1000
    %v1039 = vpop.f32.mrf.mxu0
    %v1040 = vadd.f32 0.0, %v1039
    %v1041 = vpop.f32.mrf.mxu0
    %v1042 = vpop.f32.mrf.mxu0
    %v1043 = vpop.f32.mrf.mxu0
    %1044 = vdwg.mxu0
    %v1046 = vsel %vm906, %v885, 0
    %v1049 = vsel %vm906, %v893, 0
    %1051 = vmatprep.subr.bf16.mxu0 0
    %1052 = vmatpush1.bf16.xpose.msra.mxu0 0
    %1053 = vmatprep.subr.bf16.mxu0 0
    %1054 = vmatpush1.bf16.xpose.msra.mxu0 0
    %1055 = vmatprep.subr.bf16.mxu0 0
    %1056 = vmatpush1.bf16.xpose.msra.mxu0 0
    %1057 = vmatprep.subr.bf16.mxu0 0
    %1058 = vmatpush1.bf16.xpose.msra.mxu0 0
    %1059 = vmatprep.subr.bf16.mxu0 0
    %1060 = vmatpush1.bf16.xpose.msra.mxu0 0
    %1061 = vmatprep.subr.bf16.mxu0 0
    %1062 = vmatpush1.bf16.xpose.msra.mxu0 0
    %1063 = vmatprep.subr.bf16.mxu0 0
    %1064 = vmatpush1.bf16.xpose.msra.mxu0 0
    %1065 = vmatprep.subr.bf16.mxu0 0
    %1066 = vmatpush1.bf16.xpose.msra.mxu0 %v1049
    %1067 = vmatprep.subr.bf16.mxu0 0
    %1068 = vmatpush2.bf16.xpose.msra.mxu0 0
    %1069 = vmatprep.subr.bf16.mxu0 0
    %1070 = vmatpush2.bf16.xpose.msra.mxu0 0
    %1071 = vmatprep.subr.bf16.mxu0 0
    %1072 = vmatpush2.bf16.xpose.msra.mxu0 0
    %1073 = vmatprep.subr.bf16.mxu0 0
    %1074 = vmatpush2.bf16.xpose.msra.mxu0 0
    %1075 = vmatprep.subr.bf16.mxu0 0
    %1076 = vmatpush2.bf16.xpose.msra.mxu0 0
    %1077 = vmatprep.subr.bf16.mxu0 0
    %1078 = vmatpush2.bf16.xpose.msra.mxu0 0
    %1079 = vmatprep.subr.bf16.mxu0 0
    %1080 = vmatpush2.bf16.xpose.msra.mxu0 0
    %1081 = vmatprep.subr.bf16.mxu0 0
    %1082 = vmatpush2.bf16.xpose.msra.mxu0 0
    %1083 = vmatprep.mubr.bf16.mxu0 0
    %1084 = vmatmul.mubr.bf16.gmra.mxu0 %v1046
    %v1085 = vpop.f32.mrf.mxu0
    %v1086 = vadd.f32 0.0, %v1085
    %v1087 = vpop.f32.mrf.mxu0
    %v1088 = vpop.f32.mrf.mxu0
    %v1089 = vpop.f32.mrf.mxu0
    %1090 = vdwg.mxu0
    %v1092 = vsel %vm906, %v886, 0
    %v1095 = vsel %vm906, %v894, 0
    %1097 = vmatprep.subr.bf16.mxu0 0
    %1098 = vmatpush1.bf16.xpose.msra.mxu0 0
    %1099 = vmatprep.subr.bf16.mxu0 0
    %1100 = vmatpush1.bf16.xpose.msra.mxu0 0
    %1101 = vmatprep.subr.bf16.mxu0 0
    %1102 = vmatpush1.bf16.xpose.msra.mxu0 0
    %1103 = vmatprep.subr.bf16.mxu0 0
    %1104 = vmatpush1.bf16.xpose.msra.mxu0 0
    %1105 = vmatprep.subr.bf16.mxu0 0
    %1106 = vmatpush1.bf16.xpose.msra.mxu0 0
    %1107 = vmatprep.subr.bf16.mxu0 0
    %1108 = vmatpush1.bf16.xpose.msra.mxu0 0
    %1109 = vmatprep.subr.bf16.mxu0 0
    %1110 = vmatpush1.bf16.xpose.msra.mxu0 0
    %1111 = vmatprep.subr.bf16.mxu0 0
    %1112 = vmatpush1.bf16.xpose.msra.mxu0 %v1095
    %1113 = vmatprep.subr.bf16.mxu0 0
    %1114 = vmatpush2.bf16.xpose.msra.mxu0 0
    %1115 = vmatprep.subr.bf16.mxu0 0
    %1116 = vmatpush2.bf16.xpose.msra.mxu0 0
    %1117 = vmatprep.subr.bf16.mxu0 0
    %1118 = vmatpush2.bf16.xpose.msra.mxu0 0
    %1119 = vmatprep.subr.bf16.mxu0 0
    %1120 = vmatpush2.bf16.xpose.msra.mxu0 0
    %1121 = vmatprep.subr.bf16.mxu0 0
    %1122 = vmatpush2.bf16.xpose.msra.mxu0 0
    %1123 = vmatprep.subr.bf16.mxu0 0
    %1124 = vmatpush2.bf16.xpose.msra.mxu0 0
    %1125 = vmatprep.subr.bf16.mxu0 0
    %1126 = vmatpush2.bf16.xpose.msra.mxu0 0
    %1127 = vmatprep.subr.bf16.mxu0 0
    %1128 = vmatpush2.bf16.xpose.msra.mxu0 0
    %1129 = vmatprep.mubr.bf16.mxu0 0
    %1130 = vmatmul.mubr.bf16.gmra.mxu0 %v1092
    %v1131 = vpop.f32.mrf.mxu0
    %v1132 = vadd.f32 0.0, %v1131
    %v1133 = vpop.f32.mrf.mxu0
    %v1134 = vpop.f32.mrf.mxu0
    %v1135 = vpop.f32.mrf.mxu0
    %1136 = vdwg.mxu0
    %v1138 = vsel %vm906, %v887, 0
    %v1141 = vsel %vm906, %v895, 0
    %1143 = vmatprep.subr.bf16.mxu0 0
    %1144 = vmatpush1.bf16.xpose.msra.mxu0 0
    %1145 = vmatprep.subr.bf16.mxu0 0
    %1146 = vmatpush1.bf16.xpose.msra.mxu0 0
    %1147 = vmatprep.subr.bf16.mxu0 0
    %1148 = vmatpush1.bf16.xpose.msra.mxu0 0
    %1149 = vmatprep.subr.bf16.mxu0 0
    %1150 = vmatpush1.bf16.xpose.msra.mxu0 0
    %1151 = vmatprep.subr.bf16.mxu0 0
    %1152 = vmatpush1.bf16.xpose.msra.mxu0 0
    %1153 = vmatprep.subr.bf16.mxu0 0
    %1154 = vmatpush1.bf16.xpose.msra.mxu0 0
    %1155 = vmatprep.subr.bf16.mxu0 0
    %1156 = vmatpush1.bf16.xpose.msra.mxu0 0
    %1157 = vmatprep.subr.bf16.mxu0 0
    %1158 = vmatpush1.bf16.xpose.msra.mxu0 %v1141
    %1159 = vmatprep.subr.bf16.mxu0 0
    %1160 = vmatpush2.bf16.xpose.msra.mxu0 0
    %1161 = vmatprep.subr.bf16.mxu0 0
    %1162 = vmatpush2.bf16.xpose.msra.mxu0 0
    %1163 = vmatprep.subr.bf16.mxu0 0
    %1164 = vmatpush2.bf16.xpose.msra.mxu0 0
    %1165 = vmatprep.subr.bf16.mxu0 0
    %1166 = vmatpush2.bf16.xpose.msra.mxu0 0
    %1167 = vmatprep.subr.bf16.mxu0 0
    %1168 = vmatpush2.bf16.xpose.msra.mxu0 0
    %1169 = vmatprep.subr.bf16.mxu0 0
    %1170 = vmatpush2.bf16.xpose.msra.mxu0 0
    %1171 = vmatprep.subr.bf16.mxu0 0
    %1172 = vmatpush2.bf16.xpose.msra.mxu0 0
    %1173 = vmatprep.subr.bf16.mxu0 0
    %1174 = vmatpush2.bf16.xpose.msra.mxu0 0
    %1175 = vmatprep.mubr.bf16.mxu0 0
    %1176 = vmatmul.mubr.bf16.gmra.mxu0 %v1138
    %v1177 = vpop.f32.mrf.mxu0
    %v1178 = vadd.f32 0.0, %v1177
    %v1179 = vpop.f32.mrf.mxu0
    %v1180 = vpop.f32.mrf.mxu0
    %v1181 = vpop.f32.mrf.mxu0
    %1182 = vdwg.mxu0
    %v1184 = vsel %vm906, %v888, 0
    %v1187 = vsel %vm906, %v896, 0
    %1189 = vmatprep.subr.bf16.mxu0 0
    %1190 = vmatpush1.bf16.xpose.msra.mxu0 0
    %1191 = vmatprep.subr.bf16.mxu0 0
    %1192 = vmatpush1.bf16.xpose.msra.mxu0 0
    %1193 = vmatprep.subr.bf16.mxu0 0
    %1194 = vmatpush1.bf16.xpose.msra.mxu0 0
    %1195 = vmatprep.subr.bf16.mxu0 0
    %1196 = vmatpush1.bf16.xpose.msra.mxu0 0
    %1197 = vmatprep.subr.bf16.mxu0 0
    %1198 = vmatpush1.bf16.xpose.msra.mxu0 0
    %1199 = vmatprep.subr.bf16.mxu0 0
    %1200 = vmatpush1.bf16.xpose.msra.mxu0 0
    %1201 = vmatprep.subr.bf16.mxu0 0
    %1202 = vmatpush1.bf16.xpose.msra.mxu0 0
    %1203 = vmatprep.subr.bf16.mxu0 0
    %1204 = vmatpush1.bf16.xpose.msra.mxu0 %v1187
    %1205 = vmatprep.subr.bf16.mxu0 0
    %1206 = vmatpush2.bf16.xpose.msra.mxu0 0
    %1207 = vmatprep.subr.bf16.mxu0 0
    %1208 = vmatpush2.bf16.xpose.msra.mxu0 0
    %1209 = vmatprep.subr.bf16.mxu0 0
    %1210 = vmatpush2.bf16.xpose.msra.mxu0 0
    %1211 = vmatprep.subr.bf16.mxu0 0
    %1212 = vmatpush2.bf16.xpose.msra.mxu0 0
    %1213 = vmatprep.subr.bf16.mxu0 0
    %1214 = vmatpush2.bf16.xpose.msra.mxu0 0
    %1215 = vmatprep.subr.bf16.mxu0 0
    %1216 = vmatpush2.bf16.xpose.msra.mxu0 0
    %1217 = vmatprep.subr.bf16.mxu0 0
    %1218 = vmatpush2.bf16.xpose.msra.mxu0 0
    %1219 = vmatprep.subr.bf16.mxu0 0
    %1220 = vmatpush2.bf16.xpose.msra.mxu0 0
    %1221 = vmatprep.mubr.bf16.mxu0 0
    %1222 = vmatmul.mubr.bf16.gmra.mxu0 %v1184
    %v1223 = vpop.f32.mrf.mxu0
    %v1224 = vadd.f32 0.0, %v1223
    %v1225 = vpop.f32.mrf.mxu0
    %v1226 = vpop.f32.mrf.mxu0
    %v1227 = vpop.f32.mrf.mxu0
    %1228 = vdwg.mxu0
    %v1230 = vsel %vm906, %v889, 0
    %v1233 = vsel %vm906, %v897, 0
    %1235 = vmatprep.subr.bf16.mxu0 0
    %1236 = vmatpush1.bf16.xpose.msra.mxu0 0
    %1237 = vmatprep.subr.bf16.mxu0 0
    %1238 = vmatpush1.bf16.xpose.msra.mxu0 0
    %1239 = vmatprep.subr.bf16.mxu0 0
    %1240 = vmatpush1.bf16.xpose.msra.mxu0 0
    %1241 = vmatprep.subr.bf16.mxu0 0
    %1242 = vmatpush1.bf16.xpose.msra.mxu0 0
    %1243 = vmatprep.subr.bf16.mxu0 0
    %1244 = vmatpush1.bf16.xpose.msra.mxu0 0
    %1245 = vmatprep.subr.bf16.mxu0 0
    %1246 = vmatpush1.bf16.xpose.msra.mxu0 0
    %1247 = vmatprep.subr.bf16.mxu0 0
    %1248 = vmatpush1.bf16.xpose.msra.mxu0 0
    %1249 = vmatprep.subr.bf16.mxu0 0
    %1250 = vmatpush1.bf16.xpose.msra.mxu0 %v1233
    %1251 = vmatprep.subr.bf16.mxu0 0
    %1252 = vmatpush2.bf16.xpose.msra.mxu0 0
    %1253 = vmatprep.subr.bf16.mxu0 0
    %1254 = vmatpush2.bf16.xpose.msra.mxu0 0
    %1255 = vmatprep.subr.bf16.mxu0 0
    %1256 = vmatpush2.bf16.xpose.msra.mxu0 0
    %1257 = vmatprep.subr.bf16.mxu0 0
    %1258 = vmatpush2.bf16.xpose.msra.mxu0 0
    %1259 = vmatprep.subr.bf16.mxu0 0
    %1260 = vmatpush2.bf16.xpose.msra.mxu0 0
    %1261 = vmatprep.subr.bf16.mxu0 0
    %1262 = vmatpush2.bf16.xpose.msra.mxu0 0
    %1263 = vmatprep.subr.bf16.mxu0 0
    %1264 = vmatpush2.bf16.xpose.msra.mxu0 0
    %1265 = vmatprep.subr.bf16.mxu0 0
    %1266 = vmatpush2.bf16.xpose.msra.mxu0 0
    %1267 = vmatprep.mubr.bf16.mxu0 0
    %1268 = vmatmul.mubr.bf16.gmra.mxu0 %v1230
    %v1269 = vpop.f32.mrf.mxu0
    %v1270 = vadd.f32 0.0, %v1269
    %v1271 = vpop.f32.mrf.mxu0
    %v1272 = vpop.f32.mrf.mxu0
    %v1273 = vpop.f32.mrf.mxu0
    %1274 = vdwg.mxu0
    %v1275 = vsel %vm906, %v948, -inf
    %v1276 = vrot.slane %v1275, 4
    %v1277 = vmax.f32 %v1275, %v1276
    %v1278 = vrot.slane %v1277, 2
    %v1279 = vmax.f32 %v1277, %v1278
    %v1280 = vrot.slane %v1279, 1
    %v1281 = vmax.f32 %v1279, %v1280
    %v1282 = vsel %vm906, %v994, -inf
    %v1283 = vrot.slane %v1282, 4
    %v1284 = vmax.f32 %v1282, %v1283
    %v1285 = vrot.slane %v1284, 2
    %v1286 = vmax.f32 %v1284, %v1285
    %v1287 = vrot.slane %v1286, 1
    %v1288 = vmax.f32 %v1286, %v1287
    %v1289 = vsel %vm906, %v1040, -inf
    %v1290 = vrot.slane %v1289, 4
    %v1291 = vmax.f32 %v1289, %v1290
    %v1292 = vrot.slane %v1291, 2
    %v1293 = vmax.f32 %v1291, %v1292
    %v1294 = vrot.slane %v1293, 1
    %v1295 = vmax.f32 %v1293, %v1294
    %v1296 = vsel %vm906, %v1086, -inf
    %v1297 = vrot.slane %v1296, 4
    %v1298 = vmax.f32 %v1296, %v1297
    %v1299 = vrot.slane %v1298, 2
    %v1300 = vmax.f32 %v1298, %v1299
    %v1301 = vrot.slane %v1300, 1
    %v1302 = vmax.f32 %v1300, %v1301
    %v1303 = vsel %vm906, %v1132, -inf
    %v1304 = vrot.slane %v1303, 4
    %v1305 = vmax.f32 %v1303, %v1304
    %v1306 = vrot.slane %v1305, 2
    %v1307 = vmax.f32 %v1305, %v1306
    %v1308 = vrot.slane %v1307, 1
    %v1309 = vmax.f32 %v1307, %v1308
    %v1310 = vsel %vm906, %v1178, -inf
    %v1311 = vrot.slane %v1310, 4
    %v1312 = vmax.f32 %v1310, %v1311
    %v1313 = vrot.slane %v1312, 2
    %v1314 = vmax.f32 %v1312, %v1313
    %v1315 = vrot.slane %v1314, 1
    %v1316 = vmax.f32 %v1314, %v1315
    %v1317 = vsel %vm906, %v1224, -inf
    %v1318 = vrot.slane %v1317, 4
    %v1319 = vmax.f32 %v1317, %v1318
    %v1320 = vrot.slane %v1319, 2
    %v1321 = vmax.f32 %v1319, %v1320
    %v1322 = vrot.slane %v1321, 1
    %v1323 = vmax.f32 %v1321, %v1322
    %v1324 = vsel %vm906, %v1270, -inf
    %v1325 = vrot.slane %v1324, 4
    %v1326 = vmax.f32 %v1324, %v1325
    %v1327 = vrot.slane %v1326, 2
    %v1328 = vmax.f32 %v1326, %v1327
    %v1329 = vrot.slane %v1328, 1
    %v1330 = vmax.f32 %v1328, %v1329
    %v1331 = vsub.f32 %v948, %v1281
    %v1332 = vsub.f32 %v994, %v1288
    %v1333 = vsub.f32 %v1040, %v1295
    %v1334 = vsub.f32 %v1086, %v1302
    %v1335 = vsub.f32 %v1132, %v1309
    %v1336 = vsub.f32 %v1178, %v1316
    %v1337 = vsub.f32 %v1224, %v1323
    %v1338 = vsub.f32 %v1270, %v1330
    %v1339 = vmul.f32 %v1331, 1.442695
    %v1340 = vpow.pop %v1339
    %v1341 = vmul.f32 %v1332, 1.442695
    %v1342 = vpow.pop %v1341
    %v1343 = vmul.f32 %v1333, 1.442695
    %v1344 = vpow.pop %v1343
    %v1345 = vmul.f32 %v1334, 1.442695
    %v1346 = vpow.pop %v1345
    %v1347 = vmul.f32 %v1335, 1.442695
    %v1348 = vpow.pop %v1347
    %v1349 = vmul.f32 %v1336, 1.442695
    %v1350 = vpow.pop %v1349
    %v1351 = vmul.f32 %v1337, 1.442695
    %v1352 = vpow.pop %v1351
    %v1353 = vmul.f32 %v1338, 1.442695
    %v1354 = vpow.pop %v1353
    %v1355 = vsel %vm906, %v1340, 0.0
    %v1356 = vrot.slane %v1355, 4
    %v1357 = vadd.f32 %v1355, %v1356
    %v1358 = vrot.slane %v1357, 2
    %v1359 = vadd.f32 %v1357, %v1358
    %v1360 = vrot.slane %v1359, 1
    %v1361 = vadd.f32 %v1359, %v1360
    %v1362 = vsel %vm906, %v1342, 0.0
    %v1363 = vrot.slane %v1362, 4
    %v1364 = vadd.f32 %v1362, %v1363
    %v1365 = vrot.slane %v1364, 2
    %v1366 = vadd.f32 %v1364, %v1365
    %v1367 = vrot.slane %v1366, 1
    %v1368 = vadd.f32 %v1366, %v1367
    %v1369 = vsel %vm906, %v1344, 0.0
    %v1370 = vrot.slane %v1369, 4
    %v1371 = vadd.f32 %v1369, %v1370
    %v1372 = vrot.slane %v1371, 2
    %v1373 = vadd.f32 %v1371, %v1372
    %v1374 = vrot.slane %v1373, 1
    %v1375 = vadd.f32 %v1373, %v1374
    %v1376 = vsel %vm906, %v1346, 0.0
    %v1377 = vrot.slane %v1376, 4
    %v1378 = vadd.f32 %v1376, %v1377
    %v1379 = vrot.slane %v1378, 2
    %v1380 = vadd.f32 %v1378, %v1379
    %v1381 = vrot.slane %v1380, 1
    %v1382 = vadd.f32 %v1380, %v1381
    %v1383 = vsel %vm906, %v1348, 0.0
    %v1384 = vrot.slane %v1383, 4
    %v1385 = vadd.f32 %v1383, %v1384
    %v1386 = vrot.slane %v1385, 2
    %v1387 = vadd.f32 %v1385, %v1386
    %v1388 = vrot.slane %v1387, 1
    %v1389 = vadd.f32 %v1387, %v1388
    %v1390 = vsel %vm906, %v1350, 0.0
    %v1391 = vrot.slane %v1390, 4
    %v1392 = vadd.f32 %v1390, %v1391
    %v1393 = vrot.slane %v1392, 2
    %v1394 = vadd.f32 %v1392, %v1393
    %v1395 = vrot.slane %v1394, 1
    %v1396 = vadd.f32 %v1394, %v1395
    %v1397 = vsel %vm906, %v1352, 0.0
    %v1398 = vrot.slane %v1397, 4
    %v1399 = vadd.f32 %v1397, %v1398
    %v1400 = vrot.slane %v1399, 2
    %v1401 = vadd.f32 %v1399, %v1400
    %v1402 = vrot.slane %v1401, 1
    %v1403 = vadd.f32 %v1401, %v1402
    %v1404 = vsel %vm906, %v1354, 0.0
    %v1405 = vrot.slane %v1404, 4
    %v1406 = vadd.f32 %v1404, %v1405
    %v1407 = vrot.slane %v1406, 2
    %v1408 = vadd.f32 %v1406, %v1407
    %v1409 = vrot.slane %v1408, 1
    %v1410 = vadd.f32 %v1408, %v1409
    %v1411 = vrcp.pop %v1361
    %v1412 = vmul.f32 %v1340, %v1411
    %v1413 = vrcp.pop %v1368
    %v1414 = vmul.f32 %v1342, %v1413
    %v1415 = vrcp.pop %v1375
    %v1416 = vmul.f32 %v1344, %v1415
    %v1417 = vrcp.pop %v1382
    %v1418 = vmul.f32 %v1346, %v1417
    %v1419 = vrcp.pop %v1389
    %v1420 = vmul.f32 %v1348, %v1419
    %v1421 = vrcp.pop %v1396
    %v1422 = vmul.f32 %v1350, %v1421
    %v1423 = vrcp.pop %v1403
    %v1424 = vmul.f32 %v1352, %v1423
    %v1425 = vrcp.pop %v1410
    %v1426 = vmul.f32 %v1354, %v1425
    %v1427 = vpack.c.bf16 %v1412, %v1412
    %v1428 = vpack.c.bf16 %v1414, %v1414
    %v1429 = vpack.c.bf16 %v1416, %v1416
    %v1430 = vpack.c.bf16 %v1418, %v1418
    %v1431 = vpack.c.bf16 %v1420, %v1420
    %v1432 = vpack.c.bf16 %v1422, %v1422
    %v1433 = vpack.c.bf16 %v1424, %v1424
    %v1434 = vpack.c.bf16 %v1426, %v1426
    %v1436 = vsel %vm906, %v1427, 0
    %vm1438 = vcmask 1043456
    %v1440 = vsel %vm1438, %v898, 0
    %1442 = vmatprep.subr.bf16.mxu0 0
    %1443 = vmatpush1.bf16.msra.mxu0 0
    %1444 = vmatprep.subr.bf16.mxu0 0
    %1445 = vmatpush1.bf16.msra.mxu0 0
    %1446 = vmatprep.subr.bf16.mxu0 0
    %1447 = vmatpush1.bf16.msra.mxu0 0
    %1448 = vmatprep.subr.bf16.mxu0 0
    %1449 = vmatpush1.bf16.msra.mxu0 0
    %1450 = vmatprep.subr.bf16.mxu0 0
    %1451 = vmatpush1.bf16.msra.mxu0 0
    %1452 = vmatprep.subr.bf16.mxu0 0
    %1453 = vmatpush1.bf16.msra.mxu0 0
    %1454 = vmatprep.subr.bf16.mxu0 0
    %1455 = vmatpush1.bf16.msra.mxu0 0
    %1456 = vmatprep.subr.bf16.mxu0 0
    %1457 = vmatpush1.bf16.msra.mxu0 %v1440
    %1458 = vmatprep.subr.bf16.mxu0 0
    %1459 = vmatpush2.bf16.msra.mxu0 0
    %1460 = vmatprep.subr.bf16.mxu0 0
    %1461 = vmatpush2.bf16.msra.mxu0 0
    %1462 = vmatprep.subr.bf16.mxu0 0
    %1463 = vmatpush2.bf16.msra.mxu0 0
    %1464 = vmatprep.subr.bf16.mxu0 0
    %1465 = vmatpush2.bf16.msra.mxu0 0
    %1466 = vmatprep.subr.bf16.mxu0 0
    %1467 = vmatpush2.bf16.msra.mxu0 0
    %1468 = vmatprep.subr.bf16.mxu0 0
    %1469 = vmatpush2.bf16.msra.mxu0 0
    %1470 = vmatprep.subr.bf16.mxu0 0
    %1471 = vmatpush2.bf16.msra.mxu0 0
    %1472 = vmatprep.subr.bf16.mxu0 0
    %1473 = vmatpush2.bf16.msra.mxu0 0
    %1474 = vmatprep.mubr.bf16.mxu0 0
    %1475 = vmatmul.mubr.bf16.gmra.mxu0 %v1436
    %v1476 = vpop.f32.mrf.mxu0
    %v1477 = vadd.f32 0.0, %v1476
    %v1478 = vpop.f32.mrf.mxu0
    %v1479 = vpop.f32.mrf.mxu0
    %v1480 = vpop.f32.mrf.mxu0
    %1481 = vdwg.mxu0
    %v1483 = vsel %vm906, %v1428, 0
    %v1486 = vsel %vm1438, %v899, 0
    %1488 = vmatprep.subr.bf16.mxu0 0
    %1489 = vmatpush1.bf16.msra.mxu0 0
    %1490 = vmatprep.subr.bf16.mxu0 0
    %1491 = vmatpush1.bf16.msra.mxu0 0
    %1492 = vmatprep.subr.bf16.mxu0 0
    %1493 = vmatpush1.bf16.msra.mxu0 0
    %1494 = vmatprep.subr.bf16.mxu0 0
    %1495 = vmatpush1.bf16.msra.mxu0 0
    %1496 = vmatprep.subr.bf16.mxu0 0
    %1497 = vmatpush1.bf16.msra.mxu0 0
    %1498 = vmatprep.subr.bf16.mxu0 0
    %1499 = vmatpush1.bf16.msra.mxu0 0
    %1500 = vmatprep.subr.bf16.mxu0 0
    %1501 = vmatpush1.bf16.msra.mxu0 0
    %1502 = vmatprep.subr.bf16.mxu0 0
    %1503 = vmatpush1.bf16.msra.mxu0 %v1486
    %1504 = vmatprep.subr.bf16.mxu0 0
    %1505 = vmatpush2.bf16.msra.mxu0 0
    %1506 = vmatprep.subr.bf16.mxu0 0
    %1507 = vmatpush2.bf16.msra.mxu0 0
    %1508 = vmatprep.subr.bf16.mxu0 0
    %1509 = vmatpush2.bf16.msra.mxu0 0
    %1510 = vmatprep.subr.bf16.mxu0 0
    %1511 = vmatpush2.bf16.msra.mxu0 0
    %1512 = vmatprep.subr.bf16.mxu0 0
    %1513 = vmatpush2.bf16.msra.mxu0 0
    %1514 = vmatprep.subr.bf16.mxu0 0
    %1515 = vmatpush2.bf16.msra.mxu0 0
    %1516 = vmatprep.subr.bf16.mxu0 0
    %1517 = vmatpush2.bf16.msra.mxu0 0
    %1518 = vmatprep.subr.bf16.mxu0 0
    %1519 = vmatpush2.bf16.msra.mxu0 0
    %1520 = vmatprep.mubr.bf16.mxu0 0
    %1521 = vmatmul.mubr.bf16.gmra.mxu0 %v1483
    %v1522 = vpop.f32.mrf.mxu0
    %v1523 = vadd.f32 0.0, %v1522
    %v1524 = vpop.f32.mrf.mxu0
    %v1525 = vpop.f32.mrf.mxu0
    %v1526 = vpop.f32.mrf.mxu0
    %1527 = vdwg.mxu0
    %v1529 = vsel %vm906, %v1429, 0
    %v1532 = vsel %vm1438, %v900, 0
    %1534 = vmatprep.subr.bf16.mxu0 0
    %1535 = vmatpush1.bf16.msra.mxu0 0
    %1536 = vmatprep.subr.bf16.mxu0 0
    %1537 = vmatpush1.bf16.msra.mxu0 0
    %1538 = vmatprep.subr.bf16.mxu0 0
    %1539 = vmatpush1.bf16.msra.mxu0 0
    %1540 = vmatprep.subr.bf16.mxu0 0
    %1541 = vmatpush1.bf16.msra.mxu0 0
    %1542 = vmatprep.subr.bf16.mxu0 0
    %1543 = vmatpush1.bf16.msra.mxu0 0
    %1544 = vmatprep.subr.bf16.mxu0 0
    %1545 = vmatpush1.bf16.msra.mxu0 0
    %1546 = vmatprep.subr.bf16.mxu0 0
    %1547 = vmatpush1.bf16.msra.mxu0 0
    %1548 = vmatprep.subr.bf16.mxu0 0
    %1549 = vmatpush1.bf16.msra.mxu0 %v1532
    %1550 = vmatprep.subr.bf16.mxu0 0
    %1551 = vmatpush2.bf16.msra.mxu0 0
    %1552 = vmatprep.subr.bf16.mxu0 0
    %1553 = vmatpush2.bf16.msra.mxu0 0
    %1554 = vmatprep.subr.bf16.mxu0 0
    %1555 = vmatpush2.bf16.msra.mxu0 0
    %1556 = vmatprep.subr.bf16.mxu0 0
    %1557 = vmatpush2.bf16.msra.mxu0 0
    %1558 = vmatprep.subr.bf16.mxu0 0
    %1559 = vmatpush2.bf16.msra.mxu0 0
    %1560 = vmatprep.subr.bf16.mxu0 0
    %1561 = vmatpush2.bf16.msra.mxu0 0
    %1562 = vmatprep.subr.bf16.mxu0 0
    %1563 = vmatpush2.bf16.msra.mxu0 0
    %1564 = vmatprep.subr.bf16.mxu0 0
    %1565 = vmatpush2.bf16.msra.mxu0 0
    %1566 = vmatprep.mubr.bf16.mxu0 0
    %1567 = vmatmul.mubr.bf16.gmra.mxu0 %v1529
    %v1568 = vpop.f32.mrf.mxu0
    %v1569 = vadd.f32 0.0, %v1568
    %v1570 = vpop.f32.mrf.mxu0
    %v1571 = vpop.f32.mrf.mxu0
    %v1572 = vpop.f32.mrf.mxu0
    %1573 = vdwg.mxu0
    %v1575 = vsel %vm906, %v1430, 0
    %v1578 = vsel %vm1438, %v901, 0
    %1580 = vmatprep.subr.bf16.mxu0 0
    %1581 = vmatpush1.bf16.msra.mxu0 0
    %1582 = vmatprep.subr.bf16.mxu0 0
    %1583 = vmatpush1.bf16.msra.mxu0 0
    %1584 = vmatprep.subr.bf16.mxu0 0
    %1585 = vmatpush1.bf16.msra.mxu0 0
    %1586 = vmatprep.subr.bf16.mxu0 0
    %1587 = vmatpush1.bf16.msra.mxu0 0
    %1588 = vmatprep.subr.bf16.mxu0 0
    %1589 = vmatpush1.bf16.msra.mxu0 0
    %1590 = vmatprep.subr.bf16.mxu0 0
    %1591 = vmatpush1.bf16.msra.mxu0 0
    %1592 = vmatprep.subr.bf16.mxu0 0
    %1593 = vmatpush1.bf16.msra.mxu0 0
    %1594 = vmatprep.subr.bf16.mxu0 0
    %1595 = vmatpush1.bf16.msra.mxu0 %v1578
    %1596 = vmatprep.subr.bf16.mxu0 0
    %1597 = vmatpush2.bf16.msra.mxu0 0
    %1598 = vmatprep.subr.bf16.mxu0 0
    %1599 = vmatpush2.bf16.msra.mxu0 0
    %1600 = vmatprep.subr.bf16.mxu0 0
    %1601 = vmatpush2.bf16.msra.mxu0 0
    %1602 = vmatprep.subr.bf16.mxu0 0
    %1603 = vmatpush2.bf16.msra.mxu0 0
    %1604 = vmatprep.subr.bf16.mxu0 0
    %1605 = vmatpush2.bf16.msra.mxu0 0
    %1606 = vmatprep.subr.bf16.mxu0 0
    %1607 = vmatpush2.bf16.msra.mxu0 0
    %1608 = vmatprep.subr.bf16.mxu0 0
    %1609 = vmatpush2.bf16.msra.mxu0 0
    %1610 = vmatprep.subr.bf16.mxu0 0
    %1611 = vmatpush2.bf16.msra.mxu0 0
    %1612 = vmatprep.mubr.bf16.mxu0 0
    %1613 = vmatmul.mubr.bf16.gmra.mxu0 %v1575
    %v1614 = vpop.f32.mrf.mxu0
    %v1615 = vadd.f32 0.0, %v1614
    %v1616 = vpop.f32.mrf.mxu0
    %v1617 = vpop.f32.mrf.mxu0
    %v1618 = vpop.f32.mrf.mxu0
    %1619 = vdwg.mxu0
    %v1621 = vsel %vm906, %v1431, 0
    %v1624 = vsel %vm1438, %v902, 0
    %1626 = vmatprep.subr.bf16.mxu0 0
    %1627 = vmatpush1.bf16.msra.mxu0 0
    %1628 = vmatprep.subr.bf16.mxu0 0
    %1629 = vmatpush1.bf16.msra.mxu0 0
    %1630 = vmatprep.subr.bf16.mxu0 0
    %1631 = vmatpush1.bf16.msra.mxu0 0
    %1632 = vmatprep.subr.bf16.mxu0 0
    %1633 = vmatpush1.bf16.msra.mxu0 0
    %1634 = vmatprep.subr.bf16.mxu0 0
    %1635 = vmatpush1.bf16.msra.mxu0 0
    %1636 = vmatprep.subr.bf16.mxu0 0
    %1637 = vmatpush1.bf16.msra.mxu0 0
    %1638 = vmatprep.subr.bf16.mxu0 0
    %1639 = vmatpush1.bf16.msra.mxu0 0
    %1640 = vmatprep.subr.bf16.mxu0 0
    %1641 = vmatpush1.bf16.msra.mxu0 %v1624
    %1642 = vmatprep.subr.bf16.mxu0 0
    %1643 = vmatpush2.bf16.msra.mxu0 0
    %1644 = vmatprep.subr.bf16.mxu0 0
    %1645 = vmatpush2.bf16.msra.mxu0 0
    %1646 = vmatprep.subr.bf16.mxu0 0
    %1647 = vmatpush2.bf16.msra.mxu0 0
    %1648 = vmatprep.subr.bf16.mxu0 0
    %1649 = vmatpush2.bf16.msra.mxu0 0
    %1650 = vmatprep.subr.bf16.mxu0 0
    %1651 = vmatpush2.bf16.msra.mxu0 0
    %1652 = vmatprep.subr.bf16.mxu0 0
    %1653 = vmatpush2.bf16.msra.mxu0 0
    %1654 = vmatprep.subr.bf16.mxu0 0
    %1655 = vmatpush2.bf16.msra.mxu0 0
    %1656 = vmatprep.subr.bf16.mxu0 0
    %1657 = vmatpush2.bf16.msra.mxu0 0
    %1658 = vmatprep.mubr.bf16.mxu0 0
    %1659 = vmatmul.mubr.bf16.gmra.mxu0 %v1621
    %v1660 = vpop.f32.mrf.mxu0
    %v1661 = vadd.f32 0.0, %v1660
    %v1662 = vpop.f32.mrf.mxu0
    %v1663 = vpop.f32.mrf.mxu0
    %v1664 = vpop.f32.mrf.mxu0
    %1665 = vdwg.mxu0
    %v1667 = vsel %vm906, %v1432, 0
    %v1670 = vsel %vm1438, %v903, 0
    %1672 = vmatprep.subr.bf16.mxu0 0
    %1673 = vmatpush1.bf16.msra.mxu0 0
    %1674 = vmatprep.subr.bf16.mxu0 0
    %1675 = vmatpush1.bf16.msra.mxu0 0
    %1676 = vmatprep.subr.bf16.mxu0 0
    %1677 = vmatpush1.bf16.msra.mxu0 0
    %1678 = vmatprep.subr.bf16.mxu0 0
    %1679 = vmatpush1.bf16.msra.mxu0 0
    %1680 = vmatprep.subr.bf16.mxu0 0
    %1681 = vmatpush1.bf16.msra.mxu0 0
    %1682 = vmatprep.subr.bf16.mxu0 0
    %1683 = vmatpush1.bf16.msra.mxu0 0
    %1684 = vmatprep.subr.bf16.mxu0 0
    %1685 = vmatpush1.bf16.msra.mxu0 0
    %1686 = vmatprep.subr.bf16.mxu0 0
    %1687 = vmatpush1.bf16.msra.mxu0 %v1670
    %1688 = vmatprep.subr.bf16.mxu0 0
    %1689 = vmatpush2.bf16.msra.mxu0 0
    %1690 = vmatprep.subr.bf16.mxu0 0
    %1691 = vmatpush2.bf16.msra.mxu0 0
    %1692 = vmatprep.subr.bf16.mxu0 0
    %1693 = vmatpush2.bf16.msra.mxu0 0
    %1694 = vmatprep.subr.bf16.mxu0 0
    %1695 = vmatpush2.bf16.msra.mxu0 0
    %1696 = vmatprep.subr.bf16.mxu0 0
    %1697 = vmatpush2.bf16.msra.mxu0 0
    %1698 = vmatprep.subr.bf16.mxu0 0
    %1699 = vmatpush2.bf16.msra.mxu0 0
    %1700 = vmatprep.subr.bf16.mxu0 0
    %1701 = vmatpush2.bf16.msra.mxu0 0
    %1702 = vmatprep.subr.bf16.mxu0 0
    %1703 = vmatpush2.bf16.msra.mxu0 0
    %1704 = vmatprep.mubr.bf16.mxu0 0
    %1705 = vmatmul.mubr.bf16.gmra.mxu0 %v1667
    %v1706 = vpop.f32.mrf.mxu0
    %v1707 = vadd.f32 0.0, %v1706
    %v1708 = vpop.f32.mrf.mxu0
    %v1709 = vpop.f32.mrf.mxu0
    %v1710 = vpop.f32.mrf.mxu0
    %1711 = vdwg.mxu0
    %v1713 = vsel %vm906, %v1433, 0
    %v1716 = vsel %vm1438, %v904, 0
    %1718 = vmatprep.subr.bf16.mxu0 0
    %1719 = vmatpush1.bf16.msra.mxu0 0
    %1720 = vmatprep.subr.bf16.mxu0 0
    %1721 = vmatpush1.bf16.msra.mxu0 0
    %1722 = vmatprep.subr.bf16.mxu0 0
    %1723 = vmatpush1.bf16.msra.mxu0 0
    %1724 = vmatprep.subr.bf16.mxu0 0
    %1725 = vmatpush1.bf16.msra.mxu0 0
    %1726 = vmatprep.subr.bf16.mxu0 0
    %1727 = vmatpush1.bf16.msra.mxu0 0
    %1728 = vmatprep.subr.bf16.mxu0 0
    %1729 = vmatpush1.bf16.msra.mxu0 0
    %1730 = vmatprep.subr.bf16.mxu0 0
    %1731 = vmatpush1.bf16.msra.mxu0 0
    %1732 = vmatprep.subr.bf16.mxu0 0
    %1733 = vmatpush1.bf16.msra.mxu0 %v1716
    %1734 = vmatprep.subr.bf16.mxu0 0
    %1735 = vmatpush2.bf16.msra.mxu0 0
    %1736 = vmatprep.subr.bf16.mxu0 0
    %1737 = vmatpush2.bf16.msra.mxu0 0
    %1738 = vmatprep.subr.bf16.mxu0 0
    %1739 = vmatpush2.bf16.msra.mxu0 0
    %1740 = vmatprep.subr.bf16.mxu0 0
    %1741 = vmatpush2.bf16.msra.mxu0 0
    %1742 = vmatprep.subr.bf16.mxu0 0
    %1743 = vmatpush2.bf16.msra.mxu0 0
    %1744 = vmatprep.subr.bf16.mxu0 0
    %1745 = vmatpush2.bf16.msra.mxu0 0
    %1746 = vmatprep.subr.bf16.mxu0 0
    %1747 = vmatpush2.bf16.msra.mxu0 0
    %1748 = vmatprep.subr.bf16.mxu0 0
    %1749 = vmatpush2.bf16.msra.mxu0 0
    %1750 = vmatprep.mubr.bf16.mxu0 0
    %1751 = vmatmul.mubr.bf16.gmra.mxu0 %v1713
    %v1752 = vpop.f32.mrf.mxu0
    %v1753 = vadd.f32 0.0, %v1752
    %v1754 = vpop.f32.mrf.mxu0
    %v1755 = vpop.f32.mrf.mxu0
    %v1756 = vpop.f32.mrf.mxu0
    %1757 = vdwg.mxu0
    %v1759 = vsel %vm906, %v1434, 0
    %v1762 = vsel %vm1438, %v905, 0
    %1764 = vmatprep.subr.bf16.mxu0 0
    %1765 = vmatpush1.bf16.msra.mxu0 0
    %1766 = vmatprep.subr.bf16.mxu0 0
    %1767 = vmatpush1.bf16.msra.mxu0 0
    %1768 = vmatprep.subr.bf16.mxu0 0
    %1769 = vmatpush1.bf16.msra.mxu0 0
    %1770 = vmatprep.subr.bf16.mxu0 0
    %1771 = vmatpush1.bf16.msra.mxu0 0
    %1772 = vmatprep.subr.bf16.mxu0 0
    %1773 = vmatpush1.bf16.msra.mxu0 0
    %1774 = vmatprep.subr.bf16.mxu0 0
    %1775 = vmatpush1.bf16.msra.mxu0 0
    %1776 = vmatprep.subr.bf16.mxu0 0
    %1777 = vmatpush1.bf16.msra.mxu0 0
    %1778 = vmatprep.subr.bf16.mxu0 0
    %1779 = vmatpush1.bf16.msra.mxu0 %v1762
    %1780 = vmatprep.subr.bf16.mxu0 0
    %1781 = vmatpush2.bf16.msra.mxu0 0
    %1782 = vmatprep.subr.bf16.mxu0 0
    %1783 = vmatpush2.bf16.msra.mxu0 0
    %1784 = vmatprep.subr.bf16.mxu0 0
    %1785 = vmatpush2.bf16.msra.mxu0 0
    %1786 = vmatprep.subr.bf16.mxu0 0
    %1787 = vmatpush2.bf16.msra.mxu0 0
    %1788 = vmatprep.subr.bf16.mxu0 0
    %1789 = vmatpush2.bf16.msra.mxu0 0
    %1790 = vmatprep.subr.bf16.mxu0 0
    %1791 = vmatpush2.bf16.msra.mxu0 0
    %1792 = vmatprep.subr.bf16.mxu0 0
    %1793 = vmatpush2.bf16.msra.mxu0 0
    %1794 = vmatprep.subr.bf16.mxu0 0
    %1795 = vmatpush2.bf16.msra.mxu0 0
    %1796 = vmatprep.mubr.bf16.mxu0 0
    %1797 = vmatmul.mubr.bf16.gmra.mxu0 %v1759
    %v1798 = vpop.f32.mrf.mxu0
    %v1799 = vadd.f32 0.0, %v1798
    %v1800 = vpop.f32.mrf.mxu0
    %v1801 = vpop.f32.mrf.mxu0
    %v1802 = vpop.f32.mrf.mxu0
    %1803 = vdwg.mxu0
    %v1804 = vpack.c.bf16 %v1523, %v1477
    %v1805 = vld [vmem:[%s4] sm:$0xf]
    %v1807 = vsel %vm906, %v1804, 0
    %v1810 = vsel %vm1438, %v1805, 0
    %1812 = vmatprep.subr.bf16.mxu0 0
    %1813 = vmatpush1.bf16.msra.mxu0 0
    %1814 = vmatprep.subr.bf16.mxu0 0
    %1815 = vmatpush1.bf16.msra.mxu0 0
    %1816 = vmatprep.subr.bf16.mxu0 0
    %1817 = vmatpush1.bf16.msra.mxu0 0
    %1818 = vmatprep.subr.bf16.mxu0 0
    %1819 = vmatpush1.bf16.msra.mxu0 0
    %1820 = vmatprep.subr.bf16.mxu0 0
    %1821 = vmatpush1.bf16.msra.mxu0 0
    %1822 = vmatprep.subr.bf16.mxu0 0
    %1823 = vmatpush1.bf16.msra.mxu0 0
    %1824 = vmatprep.subr.bf16.mxu0 0
    %1825 = vmatpush1.bf16.msra.mxu0 0
    %1826 = vmatprep.subr.bf16.mxu0 0
    %1827 = vmatpush1.bf16.msra.mxu0 %v1810
    %1828 = vmatprep.subr.bf16.mxu0 0
    %1829 = vmatpush2.bf16.msra.mxu0 0
    %1830 = vmatprep.subr.bf16.mxu0 0
    %1831 = vmatpush2.bf16.msra.mxu0 0
    %1832 = vmatprep.subr.bf16.mxu0 0
    %1833 = vmatpush2.bf16.msra.mxu0 0
    %1834 = vmatprep.subr.bf16.mxu0 0
    %1835 = vmatpush2.bf16.msra.mxu0 0
    %1836 = vmatprep.subr.bf16.mxu0 0
    %1837 = vmatpush2.bf16.msra.mxu0 0
    %1838 = vmatprep.subr.bf16.mxu0 0
    %1839 = vmatpush2.bf16.msra.mxu0 0
    %1840 = vmatprep.subr.bf16.mxu0 0
    %1841 = vmatpush2.bf16.msra.mxu0 0
    %1842 = vmatprep.subr.bf16.mxu0 0
    %1843 = vmatpush2.bf16.msra.mxu0 0
    %1844 = vmatprep.mubr.bf16.mxu0 0
    %1845 = vmatmul.mubr.bf16.gmra.mxu0 %v1807
    %v1846 = vpop.f32.mrf.mxu0
    %v1847 = vadd.f32 0.0, %v1846
    %v1848 = vpop.f32.mrf.mxu0
    %v1849 = vpop.f32.mrf.mxu0
    %v1850 = vadd.f32 0.0, %v1849
    %v1851 = vpop.f32.mrf.mxu0
    %1852 = vdwg.mxu0
    %v1854 = vlaneseq
    %v1855 = vshrl.u32 %v1854, 7
    %v1856 = vsub.s32 0, %v1855
    %v1857 = vrot.slane %v63, %v1856
    %v1859 = vadd.f32 %v1857, %v1847
    %v1860 = vadd.f32 %v1857, %v1850
    %v1861 = vpack.c.bf16 %v1615, %v1569
    %s1862 = scalar_lea.vmem %s4, 4
    %v1863 = vld [vmem:[%s1862] sm:$0xf]
    %v1865 = vsel %vm906, %v1861, 0
    %v1868 = vsel %vm1438, %v1863, 0
    %1870 = vmatprep.subr.bf16.mxu0 0
    %1871 = vmatpush1.bf16.msra.mxu0 0
    %1872 = vmatprep.subr.bf16.mxu0 0
    %1873 = vmatpush1.bf16.msra.mxu0 0
    %1874 = vmatprep.subr.bf16.mxu0 0
    %1875 = vmatpush1.bf16.msra.mxu0 0
    %1876 = vmatprep.subr.bf16.mxu0 0
    %1877 = vmatpush1.bf16.msra.mxu0 0
    %1878 = vmatprep.subr.bf16.mxu0 0
    %1879 = vmatpush1.bf16.msra.mxu0 0
    %1880 = vmatprep.subr.bf16.mxu0 0
    %1881 = vmatpush1.bf16.msra.mxu0 0
    %1882 = vmatprep.subr.bf16.mxu0 0
    %1883 = vmatpush1.bf16.msra.mxu0 0
    %1884 = vmatprep.subr.bf16.mxu0 0
    %1885 = vmatpush1.bf16.msra.mxu0 %v1868
    %1886 = vmatprep.subr.bf16.mxu0 0
    %1887 = vmatpush2.bf16.msra.mxu0 0
    %1888 = vmatprep.subr.bf16.mxu0 0
    %1889 = vmatpush2.bf16.msra.mxu0 0
    %1890 = vmatprep.subr.bf16.mxu0 0
    %1891 = vmatpush2.bf16.msra.mxu0 0
    %1892 = vmatprep.subr.bf16.mxu0 0
    %1893 = vmatpush2.bf16.msra.mxu0 0
    %1894 = vmatprep.subr.bf16.mxu0 0
    %1895 = vmatpush2.bf16.msra.mxu0 0
    %1896 = vmatprep.subr.bf16.mxu0 0
    %1897 = vmatpush2.bf16.msra.mxu0 0
    %1898 = vmatprep.subr.bf16.mxu0 0
    %1899 = vmatpush2.bf16.msra.mxu0 0
    %1900 = vmatprep.subr.bf16.mxu0 0
    %1901 = vmatpush2.bf16.msra.mxu0 0
    %1902 = vmatprep.mubr.bf16.mxu0 0
    %1903 = vmatmul.mubr.bf16.gmra.mxu0 %v1865
    %v1904 = vpop.f32.mrf.mxu0
    %v1905 = vadd.f32 0.0, %v1904
    %v1906 = vpop.f32.mrf.mxu0
    %v1907 = vpop.f32.mrf.mxu0
    %v1908 = vadd.f32 0.0, %v1907
    %v1909 = vpop.f32.mrf.mxu0
    %1910 = vdwg.mxu0
    %v1911 = vadd.f32 %v1859, %v1905
    %v1912 = vadd.f32 %v1860, %v1908
    %v1913 = vpack.c.bf16 %v1707, %v1661
    %s1914 = scalar_lea.vmem %s4, 8
    %v1915 = vld [vmem:[%s1914] sm:$0xf]
    %v1917 = vsel %vm906, %v1913, 0
    %v1920 = vsel %vm1438, %v1915, 0
    %1922 = vmatprep.subr.bf16.mxu0 0
    %1923 = vmatpush1.bf16.msra.mxu0 0
    %1924 = vmatprep.subr.bf16.mxu0 0
    %1925 = vmatpush1.bf16.msra.mxu0 0
    %1926 = vmatprep.subr.bf16.mxu0 0
    %1927 = vmatpush1.bf16.msra.mxu0 0
    %1928 = vmatprep.subr.bf16.mxu0 0
    %1929 = vmatpush1.bf16.msra.mxu0 0
    %1930 = vmatprep.subr.bf16.mxu0 0
    %1931 = vmatpush1.bf16.msra.mxu0 0
    %1932 = vmatprep.subr.bf16.mxu0 0
    %1933 = vmatpush1.bf16.msra.mxu0 0
    %1934 = vmatprep.subr.bf16.mxu0 0
    %1935 = vmatpush1.bf16.msra.mxu0 0
    %1936 = vmatprep.subr.bf16.mxu0 0
    %1937 = vmatpush1.bf16.msra.mxu0 %v1920
    %1938 = vmatprep.subr.bf16.mxu0 0
    %1939 = vmatpush2.bf16.msra.mxu0 0
    %1940 = vmatprep.subr.bf16.mxu0 0
    %1941 = vmatpush2.bf16.msra.mxu0 0
    %1942 = vmatprep.subr.bf16.mxu0 0
    %1943 = vmatpush2.bf16.msra.mxu0 0
    %1944 = vmatprep.subr.bf16.mxu0 0
    %1945 = vmatpush2.bf16.msra.mxu0 0
    %1946 = vmatprep.subr.bf16.mxu0 0
    %1947 = vmatpush2.bf16.msra.mxu0 0
    %1948 = vmatprep.subr.bf16.mxu0 0
    %1949 = vmatpush2.bf16.msra.mxu0 0
    %1950 = vmatprep.subr.bf16.mxu0 0
    %1951 = vmatpush2.bf16.msra.mxu0 0
    %1952 = vmatprep.subr.bf16.mxu0 0
    %1953 = vmatpush2.bf16.msra.mxu0 0
    %1954 = vmatprep.mubr.bf16.mxu0 0
    %1955 = vmatmul.mubr.bf16.gmra.mxu0 %v1917
    %v1956 = vpop.f32.mrf.mxu0
    %v1957 = vadd.f32 0.0, %v1956
    %v1958 = vpop.f32.mrf.mxu0
    %v1959 = vpop.f32.mrf.mxu0
    %v1960 = vadd.f32 0.0, %v1959
    %v1961 = vpop.f32.mrf.mxu0
    %1962 = vdwg.mxu0
    %v1963 = vadd.f32 %v1911, %v1957
    %v1964 = vadd.f32 %v1912, %v1960
    %v1965 = vpack.c.bf16 %v1799, %v1753
    %s1966 = scalar_lea.vmem %s4, 12
    %v1967 = vld [vmem:[%s1966] sm:$0xf]
    %v1969 = vsel %vm906, %v1965, 0
    %v1972 = vsel %vm1438, %v1967, 0
    %1974 = vmatprep.subr.bf16.mxu0 0
    %1975 = vmatpush1.bf16.msra.mxu0 0
    %1976 = vmatprep.subr.bf16.mxu0 0
    %1977 = vmatpush1.bf16.msra.mxu0 0
    %1978 = vmatprep.subr.bf16.mxu0 0
    %1979 = vmatpush1.bf16.msra.mxu0 0
    %1980 = vmatprep.subr.bf16.mxu0 0
    %1981 = vmatpush1.bf16.msra.mxu0 0
    %1982 = vmatprep.subr.bf16.mxu0 0
    %1983 = vmatpush1.bf16.msra.mxu0 0
    %1984 = vmatprep.subr.bf16.mxu0 0
    %1985 = vmatpush1.bf16.msra.mxu0 0
    %1986 = vmatprep.subr.bf16.mxu0 0
    %1987 = vmatpush1.bf16.msra.mxu0 0
    %1988 = vmatprep.subr.bf16.mxu0 0
    %1989 = vmatpush1.bf16.msra.mxu0 %v1972
    %1990 = vmatprep.subr.bf16.mxu0 0
    %1991 = vmatpush2.bf16.msra.mxu0 0
    %1992 = vmatprep.subr.bf16.mxu0 0
    %1993 = vmatpush2.bf16.msra.mxu0 0
    %1994 = vmatprep.subr.bf16.mxu0 0
    %1995 = vmatpush2.bf16.msra.mxu0 0
    %1996 = vmatprep.subr.bf16.mxu0 0
    %1997 = vmatpush2.bf16.msra.mxu0 0
    %1998 = vmatprep.subr.bf16.mxu0 0
    %1999 = vmatpush2.bf16.msra.mxu0 0
    %2000 = vmatprep.subr.bf16.mxu0 0
    %2001 = vmatpush2.bf16.msra.mxu0 0
    %2002 = vmatprep.subr.bf16.mxu0 0
    %2003 = vmatpush2.bf16.msra.mxu0 0
    %2004 = vmatprep.subr.bf16.mxu0 0
    %2005 = vmatpush2.bf16.msra.mxu0 0
    %2006 = vmatprep.mubr.bf16.mxu0 0
    %2007 = vmatmul.mubr.bf16.gmra.mxu0 %v1969
    %v2008 = vpop.f32.mrf.mxu0
    %v2009 = vadd.f32 0.0, %v2008
    %v2010 = vpop.f32.mrf.mxu0
    %v2011 = vpop.f32.mrf.mxu0
    %v2012 = vadd.f32 0.0, %v2011
    %v2013 = vpop.f32.mrf.mxu0
    %2014 = vdwg.mxu0
    %v2015 = vadd.f32 %v1963, %v2009
    %v2016 = vadd.f32 %v1964, %v2012
    %v2017 = vadd.f32 %v75, %v2015
    %v2018 = vadd.f32 %v76, %v2016
    %v2019 = vsel %vm103, %v2017, 0.0
    %2020 = vadd.xlane.f32.xlu0 %v2019
    %v2021 = vpop.xlane.xlu0 %2020
    %v2022 = vsel %vm103, %v2018, 0.0
    %2023 = vadd.xlane.f32.xlu0 %v2022
    %v2024 = vpop.xlane.xlu0 %2023
    %v2025 = vrcp.pop 32.0
    %v2026 = vmul.f32 %v2021, %v2025
    %v2027 = vmul.f32 %v2024, %v2025
    %v2028 = vsub.f32 %v2017, %v2026
    %v2029 = vsub.f32 %v2018, %v2027
    %v2030 = vmul.f32 %v2028, %v2028
    %v2031 = vmul.f32 %v2029, %v2029
    %v2032 = vsel %vm103, %v2030, 0.0
    %2033 = vadd.xlane.f32.xlu0 %v2032
    %v2034 = vpop.xlane.xlu0 %2033
    %v2035 = vsel %vm103, %v2031, 0.0
    %2036 = vadd.xlane.f32.xlu0 %v2035
    %v2037 = vpop.xlane.xlu0 %2036
    %v2038 = vmul.f32 %v2034, %v2025
    %v2039 = vmul.f32 %v2037, %v2025
    %v2040 = vadd.f32 %v2038, 1e-05
    %v2041 = vadd.f32 %v2039, 1e-05
    %v2042 = vrsqrt.pop %v2040
    %v2043 = vrsqrt.pop %v2041
    %v2044 = vmul.f32 %v2028, %v2042
    %v2045 = vmul.f32 %v2029, %v2043
    %v2047 = vlaneseq
    %v2048 = vshrl.u32 %v2047, 7
    %v2049 = vsub.s32 0, %v2048
    %v2050 = vrot.slane %v52, %v2049
    %v2052 = vmul.f32 %v2044, %v2050
    %v2053 = vmul.f32 %v2045, %v2050
    %v2055 = vlaneseq
    %v2056 = vshrl.u32 %v2055, 7
    %v2057 = vsub.s32 0, %v2056
    %v2058 = vrot.slane %v54, %v2057
    %v2060 = vadd.f32 %v2052, %v2058
    %v2061 = vadd.f32 %v2053, %v2058
    %v2062 = vpack.c.bf16 %v2061, %v2060
    %v2063 = vld [vmem:[%s6] sm:$0xf]
    %v2064 = vld [vmem:[%s6 + $0x4] sm:$0xf]
    %v2065 = vld [vmem:[%s6 + $0x8] sm:$0xf]
    %v2066 = vld [vmem:[%s6 + $0xc] sm:$0xf]
    %v2067 = vld [vmem:[%s7] sm:$0x1]
    %v2069 = vlaneseq
    %v2070 = vshrl.u32 %v2069, 7
    %v2071 = vsub.s32 0, %v2070
    %v2072 = vrot.slane %v2067, %v2071
    %v2076 = vunpack.c.l.b16 %v77
    %v2077 = vunpack.c.l.b16 %v78
    %v2078 = vpack.c.b16 %v2077, %v2076
    %v2083 = vunpack.c.l.b16 %v2063
    %v2084 = vunpack.c.l.b16 %v2064
    %v2085 = vunpack.c.l.b16 %v2065
    %v2086 = vunpack.c.l.b16 %v2066
    %v2087 = vpack.c.b16 %v2084, %v2083
    %v2088 = vpack.c.b16 %v2086, %v2085
    %v2092 = vsel %vm103, %v2078, 0
    %2094 = vmatprep.subr.bf16.mxu0 0
    %2095 = vmatpush1.bf16.msra.mxu0 0
    %2096 = vmatprep.subr.bf16.mxu0 0
    %2097 = vmatpush1.bf16.msra.mxu0 0
    %2098 = vmatprep.subr.bf16.mxu0 0
    %2099 = vmatpush1.bf16.msra.mxu0 0
    %2100 = vmatprep.subr.bf16.mxu0 0
    %2101 = vmatpush1.bf16.msra.mxu0 0
    %2102 = vmatprep.subr.bf16.mxu0 0
    %2103 = vmatpush1.bf16.msra.mxu0 0
    %2104 = vmatprep.subr.bf16.mxu0 0
    %2105 = vmatpush1.bf16.msra.mxu0 0
    %2106 = vmatprep.subr.bf16.mxu0 0
    %2107 = vmatpush1.bf16.msra.mxu0 %v2088
    %2108 = vmatprep.subr.bf16.mxu0 0
    %2109 = vmatpush1.bf16.msra.mxu0 %v2087
    %2110 = vmatprep.subr.bf16.mxu0 0
    %2111 = vmatpush2.bf16.msra.mxu0 0
    %2112 = vmatprep.subr.bf16.mxu0 0
    %2113 = vmatpush2.bf16.msra.mxu0 0
    %2114 = vmatprep.subr.bf16.mxu0 0
    %2115 = vmatpush2.bf16.msra.mxu0 0
    %2116 = vmatprep.subr.bf16.mxu0 0
    %2117 = vmatpush2.bf16.msra.mxu0 0
    %2118 = vmatprep.subr.bf16.mxu0 0
    %2119 = vmatpush2.bf16.msra.mxu0 0
    %2120 = vmatprep.subr.bf16.mxu0 0
    %2121 = vmatpush2.bf16.msra.mxu0 0
    %2122 = vmatprep.subr.bf16.mxu0 0
    %2123 = vmatpush2.bf16.msra.mxu0 0
    %2124 = vmatprep.subr.bf16.mxu0 0
    %2125 = vmatpush2.bf16.msra.mxu0 0
    %2126 = vmatprep.mubr.bf16.mxu0 0
    %2127 = vmatmul.mubr.bf16.gmra.mxu0 %v2092
    %v2128 = vpop.f32.mrf.mxu0
    %v2129 = vadd.f32 %v2072, %v2128
    %v2130 = vpop.f32.mrf.mxu0
    %v2131 = vpop.f32.mrf.mxu0
    %v2132 = vadd.f32 %v2072, %v2131
    %v2133 = vpop.f32.mrf.mxu0
    %2134 = vdwg.mxu0
    %s2135 = scalar_lea.vmem %s6, 64
    %v2136 = vld [vmem:[%s2135] sm:$0xf]
    %v2137 = vld [vmem:[%s2135 + $0x4] sm:$0xf]
    %v2138 = vld [vmem:[%s2135 + $0x8] sm:$0xf]
    %v2139 = vld [vmem:[%s2135 + $0xc] sm:$0xf]
    %s2140 = scalar_lea.vmem %s7, 4
    %v2141 = vld [vmem:[%s2140] sm:$0x1]
    %v2143 = vlaneseq
    %v2144 = vshrl.u32 %v2143, 7
    %v2145 = vsub.s32 0, %v2144
    %v2146 = vrot.slane %v2141, %v2145
    %v2152 = vunpack.c.l.b16 %v2136
    %v2153 = vunpack.c.l.b16 %v2137
    %v2154 = vunpack.c.l.b16 %v2138
    %v2155 = vunpack.c.l.b16 %v2139
    %v2156 = vpack.c.b16 %v2153, %v2152
    %v2157 = vpack.c.b16 %v2155, %v2154
    %v2161 = vsel %vm103, %v2062, 0
    %2163 = vmatprep.subr.bf16.mxu0 0
    %2164 = vmatpush1.bf16.msra.mxu0 0
    %2165 = vmatprep.subr.bf16.mxu0 0
    %2166 = vmatpush1.bf16.msra.mxu0 0
    %2167 = vmatprep.subr.bf16.mxu0 0
    %2168 = vmatpush1.bf16.msra.mxu0 0
    %2169 = vmatprep.subr.bf16.mxu0 0
    %2170 = vmatpush1.bf16.msra.mxu0 0
    %2171 = vmatprep.subr.bf16.mxu0 0
    %2172 = vmatpush1.bf16.msra.mxu0 0
    %2173 = vmatprep.subr.bf16.mxu0 0
    %2174 = vmatpush1.bf16.msra.mxu0 0
    %2175 = vmatprep.subr.bf16.mxu0 0
    %2176 = vmatpush1.bf16.msra.mxu0 %v2157
    %2177 = vmatprep.subr.bf16.mxu0 0
    %2178 = vmatpush1.bf16.msra.mxu0 %v2156
    %2179 = vmatprep.subr.bf16.mxu0 0
    %2180 = vmatpush2.bf16.msra.mxu0 0
    %2181 = vmatprep.subr.bf16.mxu0 0
    %2182 = vmatpush2.bf16.msra.mxu0 0
    %2183 = vmatprep.subr.bf16.mxu0 0
    %2184 = vmatpush2.bf16.msra.mxu0 0
    %2185 = vmatprep.subr.bf16.mxu0 0
    %2186 = vmatpush2.bf16.msra.mxu0 0
    %2187 = vmatprep.subr.bf16.mxu0 0
    %2188 = vmatpush2.bf16.msra.mxu0 0
    %2189 = vmatprep.subr.bf16.mxu0 0
    %2190 = vmatpush2.bf16.msra.mxu0 0
    %2191 = vmatprep.subr.bf16.mxu0 0
    %2192 = vmatpush2.bf16.msra.mxu0 0
    %2193 = vmatprep.subr.bf16.mxu0 0
    %2194 = vmatpush2.bf16.msra.mxu0 0
    %2195 = vmatprep.mubr.bf16.mxu0 0
    %2196 = vmatmul.mubr.bf16.gmra.mxu0 %v2161
    %v2197 = vpop.f32.mrf.mxu0
    %v2198 = vadd.f32 %v2146, %v2197
    %v2199 = vpop.f32.mrf.mxu0
    %v2200 = vpop.f32.mrf.mxu0
    %v2201 = vadd.f32 %v2146, %v2200
    %v2202 = vpop.f32.mrf.mxu0
    %2203 = vdwg.mxu0
    %s2204 = scalar_lea.vmem %s6, 128
    %v2205 = vld [vmem:[%s2204] sm:$0xf]
    %v2206 = vld [vmem:[%s2204 + $0x4] sm:$0xf]
    %v2207 = vld [vmem:[%s2204 + $0x8] sm:$0xf]
    %v2208 = vld [vmem:[%s2204 + $0xc] sm:$0xf]
    %s2209 = scalar_lea.vmem %s7, 8
    %v2210 = vld [vmem:[%s2209] sm:$0x1]
    %v2212 = vlaneseq
    %v2213 = vshrl.u32 %v2212, 7
    %v2214 = vsub.s32 0, %v2213
    %v2215 = vrot.slane %v2210, %v2214
    %v2221 = vunpack.c.l.b16 %v2205
    %v2222 = vunpack.c.l.b16 %v2206
    %v2223 = vunpack.c.l.b16 %v2207
    %v2224 = vunpack.c.l.b16 %v2208
    %v2225 = vpack.c.b16 %v2222, %v2221
    %v2226 = vpack.c.b16 %v2224, %v2223
    %2229 = vmatprep.subr.bf16.mxu0 0
    %2230 = vmatpush1.bf16.msra.mxu0 0
    %2231 = vmatprep.subr.bf16.mxu0 0
    %2232 = vmatpush1.bf16.msra.mxu0 0
    %2233 = vmatprep.subr.bf16.mxu0 0
    %2234 = vmatpush1.bf16.msra.mxu0 0
    %2235 = vmatprep.subr.bf16.mxu0 0
    %2236 = vmatpush1.bf16.msra.mxu0 0
    %2237 = vmatprep.subr.bf16.mxu0 0
    %2238 = vmatpush1.bf16.msra.mxu0 0
    %2239 = vmatprep.subr.bf16.mxu0 0
    %2240 = vmatpush1.bf16.msra.mxu0 0
    %2241 = vmatprep.subr.bf16.mxu0 0
    %2242 = vmatpush1.bf16.msra.mxu0 %v2226
    %2243 = vmatprep.subr.bf16.mxu0 0
    %2244 = vmatpush1.bf16.msra.mxu0 %v2225
    %2245 = vmatprep.subr.bf16.mxu0 0
    %2246 = vmatpush2.bf16.msra.mxu0 0
    %2247 = vmatprep.subr.bf16.mxu0 0
    %2248 = vmatpush2.bf16.msra.mxu0 0
    %2249 = vmatprep.subr.bf16.mxu0 0
    %2250 = vmatpush2.bf16.msra.mxu0 0
    %2251 = vmatprep.subr.bf16.mxu0 0
    %2252 = vmatpush2.bf16.msra.mxu0 0
    %2253 = vmatprep.subr.bf16.mxu0 0
    %2254 = vmatpush2.bf16.msra.mxu0 0
    %2255 = vmatprep.subr.bf16.mxu0 0
    %2256 = vmatpush2.bf16.msra.mxu0 0
    %2257 = vmatprep.subr.bf16.mxu0 0
    %2258 = vmatpush2.bf16.msra.mxu0 0
    %2259 = vmatprep.subr.bf16.mxu0 0
    %2260 = vmatpush2.bf16.msra.mxu0 0
    %2261 = vmatprep.mubr.bf16.mxu0 0
    %2262 = vmatmul.mubr.bf16.gmra.mxu0 %v2161
    %v2263 = vpop.f32.mrf.mxu0
    %v2264 = vadd.f32 %v2215, %v2263
    %v2265 = vpop.f32.mrf.mxu0
    %v2266 = vpop.f32.mrf.mxu0
    %v2267 = vadd.f32 %v2215, %v2266
    %v2268 = vpop.f32.mrf.mxu0
    %2269 = vdwg.mxu0
    %v2270 = vmul.f32 %v2129, 0.35355338
    %v2271 = vmul.f32 %v2132, 0.35355338
    %s2272 = scalar_lea.vmem %s6, 16
    %v2273 = vld [vmem:[%s2272] sm:$0xf]
    %v2274 = vld [vmem:[%s2272 + $0x4] sm:$0xf]
    %v2275 = vld [vmem:[%s2272 + $0x8] sm:$0xf]
    %v2276 = vld [vmem:[%s2272 + $0xc] sm:$0xf]
    %s2277 = scalar_lea.vmem %s7, 1
    %v2278 = vld [vmem:[%s2277] sm:$0x1]
    %v2280 = vlaneseq
    %v2281 = vshrl.u32 %v2280, 7
    %v2282 = vsub.s32 0, %v2281
    %v2283 = vrot.slane %v2278, %v2282
    %v2289 = vunpack.c.l.b16 %v2273
    %v2290 = vunpack.c.l.b16 %v2274
    %v2291 = vunpack.c.l.b16 %v2275
    %v2292 = vunpack.c.l.b16 %v2276
    %v2293 = vpack.c.b16 %v2290, %v2289
    %v2294 = vpack.c.b16 %v2292, %v2291
    %2297 = vmatprep.subr.bf16.mxu0 0
    %2298 = vmatpush1.bf16.msra.mxu0 0
    %2299 = vmatprep.subr.bf16.mxu0 0
    %2300 = vmatpush1.bf16.msra.mxu0 0
    %2301 = vmatprep.subr.bf16.mxu0 0
    %2302 = vmatpush1.bf16.msra.mxu0 0
    %2303 = vmatprep.subr.bf16.mxu0 0
    %2304 = vmatpush1.bf16.msra.mxu0 0
    %2305 = vmatprep.subr.bf16.mxu0 0
    %2306 = vmatpush1.bf16.msra.mxu0 0
    %2307 = vmatprep.subr.bf16.mxu0 0
    %2308 = vmatpush1.bf16.msra.mxu0 0
    %2309 = vmatprep.subr.bf16.mxu0 0
    %2310 = vmatpush1.bf16.msra.mxu0 %v2294
    %2311 = vmatprep.subr.bf16.mxu0 0
    %2312 = vmatpush1.bf16.msra.mxu0 %v2293
    %2313 = vmatprep.subr.bf16.mxu0 0
    %2314 = vmatpush2.bf16.msra.mxu0 0
    %2315 = vmatprep.subr.bf16.mxu0 0
    %2316 = vmatpush2.bf16.msra.mxu0 0
    %2317 = vmatprep.subr.bf16.mxu0 0
    %2318 = vmatpush2.bf16.msra.mxu0 0
    %2319 = vmatprep.subr.bf16.mxu0 0
    %2320 = vmatpush2.bf16.msra.mxu0 0
    %2321 = vmatprep.subr.bf16.mxu0 0
    %2322 = vmatpush2.bf16.msra.mxu0 0
    %2323 = vmatprep.subr.bf16.mxu0 0
    %2324 = vmatpush2.bf16.msra.mxu0 0
    %2325 = vmatprep.subr.bf16.mxu0 0
    %2326 = vmatpush2.bf16.msra.mxu0 0
    %2327 = vmatprep.subr.bf16.mxu0 0
    %2328 = vmatpush2.bf16.msra.mxu0 0
    %2329 = vmatprep.mubr.bf16.mxu0 0
    %2330 = vmatmul.mubr.bf16.gmra.mxu0 %v2092
    %v2331 = vpop.f32.mrf.mxu0
    %v2332 = vadd.f32 %v2283, %v2331
    %v2333 = vpop.f32.mrf.mxu0
    %v2334 = vpop.f32.mrf.mxu0
    %v2335 = vadd.f32 %v2283, %v2334
    %v2336 = vpop.f32.mrf.mxu0
    %2337 = vdwg.mxu0
    %s2338 = scalar_lea.vmem %s6, 80
    %v2339 = vld [vmem:[%s2338] sm:$0xf]
    %v2340 = vld [vmem:[%s2338 + $0x4] sm:$0xf]
    %v2341 = vld [vmem:[%s2338 + $0x8] sm:$0xf]
    %v2342 = vld [vmem:[%s2338 + $0xc] sm:$0xf]
    %s2343 = scalar_lea.vmem %s7, 5
    %v2344 = vld [vmem:[%s2343] sm:$0x1]
    %v2346 = vlaneseq
    %v2347 = vshrl.u32 %v2346, 7
    %v2348 = vsub.s32 0, %v2347
    %v2349 = vrot.slane %v2344, %v2348
    %v2355 = vunpack.c.l.b16 %v2339
    %v2356 = vunpack.c.l.b16 %v2340
    %v2357 = vunpack.c.l.b16 %v2341
    %v2358 = vunpack.c.l.b16 %v2342
    %v2359 = vpack.c.b16 %v2356, %v2355
    %v2360 = vpack.c.b16 %v2358, %v2357
    %2363 = vmatprep.subr.bf16.mxu0 0
    %2364 = vmatpush1.bf16.msra.mxu0 0
    %2365 = vmatprep.subr.bf16.mxu0 0
    %2366 = vmatpush1.bf16.msra.mxu0 0
    %2367 = vmatprep.subr.bf16.mxu0 0
    %2368 = vmatpush1.bf16.msra.mxu0 0
    %2369 = vmatprep.subr.bf16.mxu0 0
    %2370 = vmatpush1.bf16.msra.mxu0 0
    %2371 = vmatprep.subr.bf16.mxu0 0
    %2372 = vmatpush1.bf16.msra.mxu0 0
    %2373 = vmatprep.subr.bf16.mxu0 0
    %2374 = vmatpush1.bf16.msra.mxu0 0
    %2375 = vmatprep.subr.bf16.mxu0 0
    %2376 = vmatpush1.bf16.msra.mxu0 %v2360
    %2377 = vmatprep.subr.bf16.mxu0 0
    %2378 = vmatpush1.bf16.msra.mxu0 %v2359
    %2379 = vmatprep.subr.bf16.mxu0 0
    %2380 = vmatpush2.bf16.msra.mxu0 0
    %2381 = vmatprep.subr.bf16.mxu0 0
    %2382 = vmatpush2.bf16.msra.mxu0 0
    %2383 = vmatprep.subr.bf16.mxu0 0
    %2384 = vmatpush2.bf16.msra.mxu0 0
    %2385 = vmatprep.subr.bf16.mxu0 0
    %2386 = vmatpush2.bf16.msra.mxu0 0
    %2387 = vmatprep.subr.bf16.mxu0 0
    %2388 = vmatpush2.bf16.msra.mxu0 0
    %2389 = vmatprep.subr.bf16.mxu0 0
    %2390 = vmatpush2.bf16.msra.mxu0 0
    %2391 = vmatprep.subr.bf16.mxu0 0
    %2392 = vmatpush2.bf16.msra.mxu0 0
    %2393 = vmatprep.subr.bf16.mxu0 0
    %2394 = vmatpush2.bf16.msra.mxu0 0
    %2395 = vmatprep.mubr.bf16.mxu0 0
    %2396 = vmatmul.mubr.bf16.gmra.mxu0 %v2161
    %v2397 = vpop.f32.mrf.mxu0
    %v2398 = vadd.f32 %v2349, %v2397
    %v2399 = vpop.f32.mrf.mxu0
    %v2400 = vpop.f32.mrf.mxu0
    %v2401 = vadd.f32 %v2349, %v2400
    %v2402 = vpop.f32.mrf.mxu0
    %2403 = vdwg.mxu0
    %s2404 = scalar_lea.vmem %s6, 144
    %v2405 = vld [vmem:[%s2404] sm:$0xf]
    %v2406 = vld [vmem:[%s2404 + $0x4] sm:$0xf]
    %v2407 = vld [vmem:[%s2404 + $0x8] sm:$0xf]
    %v2408 = vld [vmem:[%s2404 + $0xc] sm:$0xf]
    %s2409 = scalar_lea.vmem %s7, 9
    %v2410 = vld [vmem:[%s2409] sm:$0x1]
    %v2412 = vlaneseq
    %v2413 = vshrl.u32 %v2412, 7
    %v2414 = vsub.s32 0, %v2413
    %v2415 = vrot.slane %v2410, %v2414
    %v2421 = vunpack.c.l.b16 %v2405
    %v2422 = vunpack.c.l.b16 %v2406
    %v2423 = vunpack.c.l.b16 %v2407
    %v2424 = vunpack.c.l.b16 %v2408
    %v2425 = vpack.c.b16 %v2422, %v2421
    %v2426 = vpack.c.b16 %v2424, %v2423
    %2429 = vmatprep.subr.bf16.mxu0 0
    %2430 = vmatpush1.bf16.msra.mxu0 0
    %2431 = vmatprep.subr.bf16.mxu0 0
    %2432 = vmatpush1.bf16.msra.mxu0 0
    %2433 = vmatprep.subr.bf16.mxu0 0
    %2434 = vmatpush1.bf16.msra.mxu0 0
    %2435 = vmatprep.subr.bf16.mxu0 0
    %2436 = vmatpush1.bf16.msra.mxu0 0
    %2437 = vmatprep.subr.bf16.mxu0 0
    %2438 = vmatpush1.bf16.msra.mxu0 0
    %2439 = vmatprep.subr.bf16.mxu0 0
    %2440 = vmatpush1.bf16.msra.mxu0 0
    %2441 = vmatprep.subr.bf16.mxu0 0
    %2442 = vmatpush1.bf16.msra.mxu0 %v2426
    %2443 = vmatprep.subr.bf16.mxu0 0
    %2444 = vmatpush1.bf16.msra.mxu0 %v2425
    %2445 = vmatprep.subr.bf16.mxu0 0
    %2446 = vmatpush2.bf16.msra.mxu0 0
    %2447 = vmatprep.subr.bf16.mxu0 0
    %2448 = vmatpush2.bf16.msra.mxu0 0
    %2449 = vmatprep.subr.bf16.mxu0 0
    %2450 = vmatpush2.bf16.msra.mxu0 0
    %2451 = vmatprep.subr.bf16.mxu0 0
    %2452 = vmatpush2.bf16.msra.mxu0 0
    %2453 = vmatprep.subr.bf16.mxu0 0
    %2454 = vmatpush2.bf16.msra.mxu0 0
    %2455 = vmatprep.subr.bf16.mxu0 0
    %2456 = vmatpush2.bf16.msra.mxu0 0
    %2457 = vmatprep.subr.bf16.mxu0 0
    %2458 = vmatpush2.bf16.msra.mxu0 0
    %2459 = vmatprep.subr.bf16.mxu0 0
    %2460 = vmatpush2.bf16.msra.mxu0 0
    %2461 = vmatprep.mubr.bf16.mxu0 0
    %2462 = vmatmul.mubr.bf16.gmra.mxu0 %v2161
    %v2463 = vpop.f32.mrf.mxu0
    %v2464 = vadd.f32 %v2415, %v2463
    %v2465 = vpop.f32.mrf.mxu0
    %v2466 = vpop.f32.mrf.mxu0
    %v2467 = vadd.f32 %v2415, %v2466
    %v2468 = vpop.f32.mrf.mxu0
    %2469 = vdwg.mxu0
    %v2470 = vmul.f32 %v2332, 0.35355338
    %v2471 = vmul.f32 %v2335, 0.35355338
    %s2472 = scalar_lea.vmem %s6, 32
    %v2473 = vld [vmem:[%s2472] sm:$0xf]
    %v2474 = vld [vmem:[%s2472 + $0x4] sm:$0xf]
    %v2475 = vld [vmem:[%s2472 + $0x8] sm:$0xf]
    %v2476 = vld [vmem:[%s2472 + $0xc] sm:$0xf]
    %s2477 = scalar_lea.vmem %s7, 2
    %v2478 = vld [vmem:[%s2477] sm:$0x1]
    %v2480 = vlaneseq
    %v2481 = vshrl.u32 %v2480, 7
    %v2482 = vsub.s32 0, %v2481
    %v2483 = vrot.slane %v2478, %v2482
    %v2489 = vunpack.c.l.b16 %v2473
    %v2490 = vunpack.c.l.b16 %v2474
    %v2491 = vunpack.c.l.b16 %v2475
    %v2492 = vunpack.c.l.b16 %v2476
    %v2493 = vpack.c.b16 %v2490, %v2489
    %v2494 = vpack.c.b16 %v2492, %v2491
    %2497 = vmatprep.subr.bf16.mxu0 0
    %2498 = vmatpush1.bf16.msra.mxu0 0
    %2499 = vmatprep.subr.bf16.mxu0 0
    %2500 = vmatpush1.bf16.msra.mxu0 0
    %2501 = vmatprep.subr.bf16.mxu0 0
    %2502 = vmatpush1.bf16.msra.mxu0 0
    %2503 = vmatprep.subr.bf16.mxu0 0
    %2504 = vmatpush1.bf16.msra.mxu0 0
    %2505 = vmatprep.subr.bf16.mxu0 0
    %2506 = vmatpush1.bf16.msra.mxu0 0
    %2507 = vmatprep.subr.bf16.mxu0 0
    %2508 = vmatpush1.bf16.msra.mxu0 0
    %2509 = vmatprep.subr.bf16.mxu0 0
    %2510 = vmatpush1.bf16.msra.mxu0 %v2494
    %2511 = vmatprep.subr.bf16.mxu0 0
    %2512 = vmatpush1.bf16.msra.mxu0 %v2493
    %2513 = vmatprep.subr.bf16.mxu0 0
    %2514 = vmatpush2.bf16.msra.mxu0 0
    %2515 = vmatprep.subr.bf16.mxu0 0
    %2516 = vmatpush2.bf16.msra.mxu0 0
    %2517 = vmatprep.subr.bf16.mxu0 0
    %2518 = vmatpush2.bf16.msra.mxu0 0
    %2519 = vmatprep.subr.bf16.mxu0 0
    %2520 = vmatpush2.bf16.msra.mxu0 0
    %2521 = vmatprep.subr.bf16.mxu0 0
    %2522 = vmatpush2.bf16.msra.mxu0 0
    %2523 = vmatprep.subr.bf16.mxu0 0
    %2524 = vmatpush2.bf16.msra.mxu0 0
    %2525 = vmatprep.subr.bf16.mxu0 0
    %2526 = vmatpush2.bf16.msra.mxu0 0
    %2527 = vmatprep.subr.bf16.mxu0 0
    %2528 = vmatpush2.bf16.msra.mxu0 0
    %2529 = vmatprep.mubr.bf16.mxu0 0
    %2530 = vmatmul.mubr.bf16.gmra.mxu0 %v2092
    %v2531 = vpop.f32.mrf.mxu0
    %v2532 = vadd.f32 %v2483, %v2531
    %v2533 = vpop.f32.mrf.mxu0
    %v2534 = vpop.f32.mrf.mxu0
    %v2535 = vadd.f32 %v2483, %v2534
    %v2536 = vpop.f32.mrf.mxu0
    %2537 = vdwg.mxu0
    %s2538 = scalar_lea.vmem %s6, 96
    %v2539 = vld [vmem:[%s2538] sm:$0xf]
    %v2540 = vld [vmem:[%s2538 + $0x4] sm:$0xf]
    %v2541 = vld [vmem:[%s2538 + $0x8] sm:$0xf]
    %v2542 = vld [vmem:[%s2538 + $0xc] sm:$0xf]
    %s2543 = scalar_lea.vmem %s7, 6
    %v2544 = vld [vmem:[%s2543] sm:$0x1]
    %v2546 = vlaneseq
    %v2547 = vshrl.u32 %v2546, 7
    %v2548 = vsub.s32 0, %v2547
    %v2549 = vrot.slane %v2544, %v2548
    %v2555 = vunpack.c.l.b16 %v2539
    %v2556 = vunpack.c.l.b16 %v2540
    %v2557 = vunpack.c.l.b16 %v2541
    %v2558 = vunpack.c.l.b16 %v2542
    %v2559 = vpack.c.b16 %v2556, %v2555
    %v2560 = vpack.c.b16 %v2558, %v2557
    %2563 = vmatprep.subr.bf16.mxu0 0
    %2564 = vmatpush1.bf16.msra.mxu0 0
    %2565 = vmatprep.subr.bf16.mxu0 0
    %2566 = vmatpush1.bf16.msra.mxu0 0
    %2567 = vmatprep.subr.bf16.mxu0 0
    %2568 = vmatpush1.bf16.msra.mxu0 0
    %2569 = vmatprep.subr.bf16.mxu0 0
    %2570 = vmatpush1.bf16.msra.mxu0 0
    %2571 = vmatprep.subr.bf16.mxu0 0
    %2572 = vmatpush1.bf16.msra.mxu0 0
    %2573 = vmatprep.subr.bf16.mxu0 0
    %2574 = vmatpush1.bf16.msra.mxu0 0
    %2575 = vmatprep.subr.bf16.mxu0 0
    %2576 = vmatpush1.bf16.msra.mxu0 %v2560
    %2577 = vmatprep.subr.bf16.mxu0 0
    %2578 = vmatpush1.bf16.msra.mxu0 %v2559
    %2579 = vmatprep.subr.bf16.mxu0 0
    %2580 = vmatpush2.bf16.msra.mxu0 0
    %2581 = vmatprep.subr.bf16.mxu0 0
    %2582 = vmatpush2.bf16.msra.mxu0 0
    %2583 = vmatprep.subr.bf16.mxu0 0
    %2584 = vmatpush2.bf16.msra.mxu0 0
    %2585 = vmatprep.subr.bf16.mxu0 0
    %2586 = vmatpush2.bf16.msra.mxu0 0
    %2587 = vmatprep.subr.bf16.mxu0 0
    %2588 = vmatpush2.bf16.msra.mxu0 0
    %2589 = vmatprep.subr.bf16.mxu0 0
    %2590 = vmatpush2.bf16.msra.mxu0 0
    %2591 = vmatprep.subr.bf16.mxu0 0
    %2592 = vmatpush2.bf16.msra.mxu0 0
    %2593 = vmatprep.subr.bf16.mxu0 0
    %2594 = vmatpush2.bf16.msra.mxu0 0
    %2595 = vmatprep.mubr.bf16.mxu0 0
    %2596 = vmatmul.mubr.bf16.gmra.mxu0 %v2161
    %v2597 = vpop.f32.mrf.mxu0
    %v2598 = vadd.f32 %v2549, %v2597
    %v2599 = vpop.f32.mrf.mxu0
    %v2600 = vpop.f32.mrf.mxu0
    %v2601 = vadd.f32 %v2549, %v2600
    %v2602 = vpop.f32.mrf.mxu0
    %2603 = vdwg.mxu0
    %s2604 = scalar_lea.vmem %s6, 160
    %v2605 = vld [vmem:[%s2604] sm:$0xf]
    %v2606 = vld [vmem:[%s2604 + $0x4] sm:$0xf]
    %v2607 = vld [vmem:[%s2604 + $0x8] sm:$0xf]
    %v2608 = vld [vmem:[%s2604 + $0xc] sm:$0xf]
    %s2609 = scalar_lea.vmem %s7, 10
    %v2610 = vld [vmem:[%s2609] sm:$0x1]
    %v2612 = vlaneseq
    %v2613 = vshrl.u32 %v2612, 7
    %v2614 = vsub.s32 0, %v2613
    %v2615 = vrot.slane %v2610, %v2614
    %v2621 = vunpack.c.l.b16 %v2605
    %v2622 = vunpack.c.l.b16 %v2606
    %v2623 = vunpack.c.l.b16 %v2607
    %v2624 = vunpack.c.l.b16 %v2608
    %v2625 = vpack.c.b16 %v2622, %v2621
    %v2626 = vpack.c.b16 %v2624, %v2623
    %2629 = vmatprep.subr.bf16.mxu0 0
    %2630 = vmatpush1.bf16.msra.mxu0 0
    %2631 = vmatprep.subr.bf16.mxu0 0
    %2632 = vmatpush1.bf16.msra.mxu0 0
    %2633 = vmatprep.subr.bf16.mxu0 0
    %2634 = vmatpush1.bf16.msra.mxu0 0
    %2635 = vmatprep.subr.bf16.mxu0 0
    %2636 = vmatpush1.bf16.msra.mxu0 0
    %2637 = vmatprep.subr.bf16.mxu0 0
    %2638 = vmatpush1.bf16.msra.mxu0 0
    %2639 = vmatprep.subr.bf16.mxu0 0
    %2640 = vmatpush1.bf16.msra.mxu0 0
    %2641 = vmatprep.subr.bf16.mxu0 0
    %2642 = vmatpush1.bf16.msra.mxu0 %v2626
    %2643 = vmatprep.subr.bf16.mxu0 0
    %2644 = vmatpush1.bf16.msra.mxu0 %v2625
    %2645 = vmatprep.subr.bf16.mxu0 0
    %2646 = vmatpush2.bf16.msra.mxu0 0
    %2647 = vmatprep.subr.bf16.mxu0 0
    %2648 = vmatpush2.bf16.msra.mxu0 0
    %2649 = vmatprep.subr.bf16.mxu0 0
    %2650 = vmatpush2.bf16.msra.mxu0 0
    %2651 = vmatprep.subr.bf16.mxu0 0
    %2652 = vmatpush2.bf16.msra.mxu0 0
    %2653 = vmatprep.subr.bf16.mxu0 0
    %2654 = vmatpush2.bf16.msra.mxu0 0
    %2655 = vmatprep.subr.bf16.mxu0 0
    %2656 = vmatpush2.bf16.msra.mxu0 0
    %2657 = vmatprep.subr.bf16.mxu0 0
    %2658 = vmatpush2.bf16.msra.mxu0 0
    %2659 = vmatprep.subr.bf16.mxu0 0
    %2660 = vmatpush2.bf16.msra.mxu0 0
    %2661 = vmatprep.mubr.bf16.mxu0 0
    %2662 = vmatmul.mubr.bf16.gmra.mxu0 %v2161
    %v2663 = vpop.f32.mrf.mxu0
    %v2664 = vadd.f32 %v2615, %v2663
    %v2665 = vpop.f32.mrf.mxu0
    %v2666 = vpop.f32.mrf.mxu0
    %v2667 = vadd.f32 %v2615, %v2666
    %v2668 = vpop.f32.mrf.mxu0
    %2669 = vdwg.mxu0
    %v2670 = vmul.f32 %v2532, 0.35355338
    %v2671 = vmul.f32 %v2535, 0.35355338
    %s2672 = scalar_lea.vmem %s6, 48
    %v2673 = vld [vmem:[%s2672] sm:$0xf]
    %v2674 = vld [vmem:[%s2672 + $0x4] sm:$0xf]
    %v2675 = vld [vmem:[%s2672 + $0x8] sm:$0xf]
    %v2676 = vld [vmem:[%s2672 + $0xc] sm:$0xf]
    %s2677 = scalar_lea.vmem %s7, 3
    %v2678 = vld [vmem:[%s2677] sm:$0x1]
    %v2680 = vlaneseq
    %v2681 = vshrl.u32 %v2680, 7
    %v2682 = vsub.s32 0, %v2681
    %v2683 = vrot.slane %v2678, %v2682
    %v2689 = vunpack.c.l.b16 %v2673
    %v2690 = vunpack.c.l.b16 %v2674
    %v2691 = vunpack.c.l.b16 %v2675
    %v2692 = vunpack.c.l.b16 %v2676
    %v2693 = vpack.c.b16 %v2690, %v2689
    %v2694 = vpack.c.b16 %v2692, %v2691
    %2697 = vmatprep.subr.bf16.mxu0 0
    %2698 = vmatpush1.bf16.msra.mxu0 0
    %2699 = vmatprep.subr.bf16.mxu0 0
    %2700 = vmatpush1.bf16.msra.mxu0 0
    %2701 = vmatprep.subr.bf16.mxu0 0
    %2702 = vmatpush1.bf16.msra.mxu0 0
    %2703 = vmatprep.subr.bf16.mxu0 0
    %2704 = vmatpush1.bf16.msra.mxu0 0
    %2705 = vmatprep.subr.bf16.mxu0 0
    %2706 = vmatpush1.bf16.msra.mxu0 0
    %2707 = vmatprep.subr.bf16.mxu0 0
    %2708 = vmatpush1.bf16.msra.mxu0 0
    %2709 = vmatprep.subr.bf16.mxu0 0
    %2710 = vmatpush1.bf16.msra.mxu0 %v2694
    %2711 = vmatprep.subr.bf16.mxu0 0
    %2712 = vmatpush1.bf16.msra.mxu0 %v2693
    %2713 = vmatprep.subr.bf16.mxu0 0
    %2714 = vmatpush2.bf16.msra.mxu0 0
    %2715 = vmatprep.subr.bf16.mxu0 0
    %2716 = vmatpush2.bf16.msra.mxu0 0
    %2717 = vmatprep.subr.bf16.mxu0 0
    %2718 = vmatpush2.bf16.msra.mxu0 0
    %2719 = vmatprep.subr.bf16.mxu0 0
    %2720 = vmatpush2.bf16.msra.mxu0 0
    %2721 = vmatprep.subr.bf16.mxu0 0
    %2722 = vmatpush2.bf16.msra.mxu0 0
    %2723 = vmatprep.subr.bf16.mxu0 0
    %2724 = vmatpush2.bf16.msra.mxu0 0
    %2725 = vmatprep.subr.bf16.mxu0 0
    %2726 = vmatpush2.bf16.msra.mxu0 0
    %2727 = vmatprep.subr.bf16.mxu0 0
    %2728 = vmatpush2.bf16.msra.mxu0 0
    %2729 = vmatprep.mubr.bf16.mxu0 0
    %2730 = vmatmul.mubr.bf16.gmra.mxu0 %v2092
    %v2731 = vpop.f32.mrf.mxu0
    %v2732 = vadd.f32 %v2683, %v2731
    %v2733 = vpop.f32.mrf.mxu0
    %v2734 = vpop.f32.mrf.mxu0
    %v2735 = vadd.f32 %v2683, %v2734
    %v2736 = vpop.f32.mrf.mxu0
    %2737 = vdwg.mxu0
    %s2738 = scalar_lea.vmem %s6, 112
    %v2739 = vld [vmem:[%s2738] sm:$0xf]
    %v2740 = vld [vmem:[%s2738 + $0x4] sm:$0xf]
    %v2741 = vld [vmem:[%s2738 + $0x8] sm:$0xf]
    %v2742 = vld [vmem:[%s2738 + $0xc] sm:$0xf]
    %s2743 = scalar_lea.vmem %s7, 7
    %v2744 = vld [vmem:[%s2743] sm:$0x1]
    %v2746 = vlaneseq
    %v2747 = vshrl.u32 %v2746, 7
    %v2748 = vsub.s32 0, %v2747
    %v2749 = vrot.slane %v2744, %v2748
    %v2755 = vunpack.c.l.b16 %v2739
    %v2756 = vunpack.c.l.b16 %v2740
    %v2757 = vunpack.c.l.b16 %v2741
    %v2758 = vunpack.c.l.b16 %v2742
    %v2759 = vpack.c.b16 %v2756, %v2755
    %v2760 = vpack.c.b16 %v2758, %v2757
    %2763 = vmatprep.subr.bf16.mxu0 0
    %2764 = vmatpush1.bf16.msra.mxu0 0
    %2765 = vmatprep.subr.bf16.mxu0 0
    %2766 = vmatpush1.bf16.msra.mxu0 0
    %2767 = vmatprep.subr.bf16.mxu0 0
    %2768 = vmatpush1.bf16.msra.mxu0 0
    %2769 = vmatprep.subr.bf16.mxu0 0
    %2770 = vmatpush1.bf16.msra.mxu0 0
    %2771 = vmatprep.subr.bf16.mxu0 0
    %2772 = vmatpush1.bf16.msra.mxu0 0
    %2773 = vmatprep.subr.bf16.mxu0 0
    %2774 = vmatpush1.bf16.msra.mxu0 0
    %2775 = vmatprep.subr.bf16.mxu0 0
    %2776 = vmatpush1.bf16.msra.mxu0 %v2760
    %2777 = vmatprep.subr.bf16.mxu0 0
    %2778 = vmatpush1.bf16.msra.mxu0 %v2759
    %2779 = vmatprep.subr.bf16.mxu0 0
    %2780 = vmatpush2.bf16.msra.mxu0 0
    %2781 = vmatprep.subr.bf16.mxu0 0
    %2782 = vmatpush2.bf16.msra.mxu0 0
    %2783 = vmatprep.subr.bf16.mxu0 0
    %2784 = vmatpush2.bf16.msra.mxu0 0
    %2785 = vmatprep.subr.bf16.mxu0 0
    %2786 = vmatpush2.bf16.msra.mxu0 0
    %2787 = vmatprep.subr.bf16.mxu0 0
    %2788 = vmatpush2.bf16.msra.mxu0 0
    %2789 = vmatprep.subr.bf16.mxu0 0
    %2790 = vmatpush2.bf16.msra.mxu0 0
    %2791 = vmatprep.subr.bf16.mxu0 0
    %2792 = vmatpush2.bf16.msra.mxu0 0
    %2793 = vmatprep.subr.bf16.mxu0 0
    %2794 = vmatpush2.bf16.msra.mxu0 0
    %2795 = vmatprep.mubr.bf16.mxu0 0
    %2796 = vmatmul.mubr.bf16.gmra.mxu0 %v2161
    %v2797 = vpop.f32.mrf.mxu0
    %v2798 = vadd.f32 %v2749, %v2797
    %v2799 = vpop.f32.mrf.mxu0
    %v2800 = vpop.f32.mrf.mxu0
    %v2801 = vadd.f32 %v2749, %v2800
    %v2802 = vpop.f32.mrf.mxu0
    %2803 = vdwg.mxu0
    %s2804 = scalar_lea.vmem %s6, 176
    %v2805 = vld [vmem:[%s2804] sm:$0xf]
    %v2806 = vld [vmem:[%s2804 + $0x4] sm:$0xf]
    %v2807 = vld [vmem:[%s2804 + $0x8] sm:$0xf]
    %v2808 = vld [vmem:[%s2804 + $0xc] sm:$0xf]
    %s2809 = scalar_lea.vmem %s7, 11
    %v2810 = vld [vmem:[%s2809] sm:$0x1]
    %v2812 = vlaneseq
    %v2813 = vshrl.u32 %v2812, 7
    %v2814 = vsub.s32 0, %v2813
    %v2815 = vrot.slane %v2810, %v2814
    %v2821 = vunpack.c.l.b16 %v2805
    %v2822 = vunpack.c.l.b16 %v2806
    %v2823 = vunpack.c.l.b16 %v2807
    %v2824 = vunpack.c.l.b16 %v2808
    %v2825 = vpack.c.b16 %v2822, %v2821
    %v2826 = vpack.c.b16 %v2824, %v2823
    %2829 = vmatprep.subr.bf16.mxu0 0
    %2830 = vmatpush1.bf16.msra.mxu0 0
    %2831 = vmatprep.subr.bf16.mxu0 0
    %2832 = vmatpush1.bf16.msra.mxu0 0
    %2833 = vmatprep.subr.bf16.mxu0 0
    %2834 = vmatpush1.bf16.msra.mxu0 0
    %2835 = vmatprep.subr.bf16.mxu0 0
    %2836 = vmatpush1.bf16.msra.mxu0 0
    %2837 = vmatprep.subr.bf16.mxu0 0
    %2838 = vmatpush1.bf16.msra.mxu0 0
    %2839 = vmatprep.subr.bf16.mxu0 0
    %2840 = vmatpush1.bf16.msra.mxu0 0
    %2841 = vmatprep.subr.bf16.mxu0 0
    %2842 = vmatpush1.bf16.msra.mxu0 %v2826
    %2843 = vmatprep.subr.bf16.mxu0 0
    %2844 = vmatpush1.bf16.msra.mxu0 %v2825
    %2845 = vmatprep.subr.bf16.mxu0 0
    %2846 = vmatpush2.bf16.msra.mxu0 0
    %2847 = vmatprep.subr.bf16.mxu0 0
    %2848 = vmatpush2.bf16.msra.mxu0 0
    %2849 = vmatprep.subr.bf16.mxu0 0
    %2850 = vmatpush2.bf16.msra.mxu0 0
    %2851 = vmatprep.subr.bf16.mxu0 0
    %2852 = vmatpush2.bf16.msra.mxu0 0
    %2853 = vmatprep.subr.bf16.mxu0 0
    %2854 = vmatpush2.bf16.msra.mxu0 0
    %2855 = vmatprep.subr.bf16.mxu0 0
    %2856 = vmatpush2.bf16.msra.mxu0 0
    %2857 = vmatprep.subr.bf16.mxu0 0
    %2858 = vmatpush2.bf16.msra.mxu0 0
    %2859 = vmatprep.subr.bf16.mxu0 0
    %2860 = vmatpush2.bf16.msra.mxu0 0
    %2861 = vmatprep.mubr.bf16.mxu0 0
    %2862 = vmatmul.mubr.bf16.gmra.mxu0 %v2161
    %v2863 = vpop.f32.mrf.mxu0
    %v2864 = vadd.f32 %v2815, %v2863
    %v2865 = vpop.f32.mrf.mxu0
    %v2866 = vpop.f32.mrf.mxu0
    %v2867 = vadd.f32 %v2815, %v2866
    %v2868 = vpop.f32.mrf.mxu0
    %2869 = vdwg.mxu0
    %v2870 = vmul.f32 %v2732, 0.35355338
    %v2871 = vmul.f32 %v2735, 0.35355338
    %v2872 = vpack.c.bf16 %v2270, %v2270
    %v2873 = vpack.c.bf16 %v2271, %v2271
    %v2874 = vpack.c.bf16 %v2470, %v2470
    %v2875 = vpack.c.bf16 %v2471, %v2471
    %v2876 = vpack.c.bf16 %v2670, %v2670
    %v2877 = vpack.c.bf16 %v2671, %v2671
    %v2878 = vpack.c.bf16 %v2870, %v2870
    %v2879 = vpack.c.bf16 %v2871, %v2871
    %v2880 = vpack.c.bf16 %v2198, %v2198
    %v2881 = vpack.c.bf16 %v2201, %v2201
    %v2882 = vpack.c.bf16 %v2398, %v2398
    %v2883 = vpack.c.bf16 %v2401, %v2401
    %v2884 = vpack.c.bf16 %v2598, %v2598
    %v2885 = vpack.c.bf16 %v2601, %v2601
    %v2886 = vpack.c.bf16 %v2798, %v2798
    %v2887 = vpack.c.bf16 %v2801, %v2801
    %v2888 = vpack.c.bf16 %v2264, %v2264
    %v2889 = vpack.c.bf16 %v2267, %v2267
    %v2890 = vpack.c.bf16 %v2464, %v2464
    %v2891 = vpack.c.bf16 %v2467, %v2467
    %v2892 = vpack.c.bf16 %v2664, %v2664
    %v2893 = vpack.c.bf16 %v2667, %v2667
    %v2894 = vpack.c.bf16 %v2864, %v2864
    %v2895 = vpack.c.bf16 %v2867, %v2867
    %v2897 = vsel %vm906, %v2872, 0
    %v2900 = vsel %vm906, %v2880, 0
    %2902 = vmatprep.subr.bf16.mxu0 0
    %2903 = vmatpush1.bf16.xpose.msra.mxu0 0
    %2904 = vmatprep.subr.bf16.mxu0 0
    %2905 = vmatpush1.bf16.xpose.msra.mxu0 0
    %2906 = vmatprep.subr.bf16.mxu0 0
    %2907 = vmatpush1.bf16.xpose.msra.mxu0 0
    %2908 = vmatprep.subr.bf16.mxu0 0
    %2909 = vmatpush1.bf16.xpose.msra.mxu0 0
    %2910 = vmatprep.subr.bf16.mxu0 0
    %2911 = vmatpush1.bf16.xpose.msra.mxu0 0
    %2912 = vmatprep.subr.bf16.mxu0 0
    %2913 = vmatpush1.bf16.xpose.msra.mxu0 0
    %2914 = vmatprep.subr.bf16.mxu0 0
    %2915 = vmatpush1.bf16.xpose.msra.mxu0 0
    %2916 = vmatprep.subr.bf16.mxu0 0
    %2917 = vmatpush1.bf16.xpose.msra.mxu0 %v2900
    %2918 = vmatprep.subr.bf16.mxu0 0
    %2919 = vmatpush2.bf16.xpose.msra.mxu0 0
    %2920 = vmatprep.subr.bf16.mxu0 0
    %2921 = vmatpush2.bf16.xpose.msra.mxu0 0
    %2922 = vmatprep.subr.bf16.mxu0 0
    %2923 = vmatpush2.bf16.xpose.msra.mxu0 0
    %2924 = vmatprep.subr.bf16.mxu0 0
    %2925 = vmatpush2.bf16.xpose.msra.mxu0 0
    %2926 = vmatprep.subr.bf16.mxu0 0
    %2927 = vmatpush2.bf16.xpose.msra.mxu0 0
    %2928 = vmatprep.subr.bf16.mxu0 0
    %2929 = vmatpush2.bf16.xpose.msra.mxu0 0
    %2930 = vmatprep.subr.bf16.mxu0 0
    %2931 = vmatpush2.bf16.xpose.msra.mxu0 0
    %2932 = vmatprep.subr.bf16.mxu0 0
    %2933 = vmatpush2.bf16.xpose.msra.mxu0 0
    %2934 = vmatprep.mubr.bf16.mxu0 0
    %2935 = vmatmul.mubr.bf16.gmra.mxu0 %v2897
    %v2936 = vpop.f32.mrf.mxu0
    %v2937 = vadd.f32 0.0, %v2936
    %v2938 = vpop.f32.mrf.mxu0
    %v2939 = vpop.f32.mrf.mxu0
    %v2940 = vpop.f32.mrf.mxu0
    %2941 = vdwg.mxu0
    %v2943 = vsel %vm906, %v2873, 0
    %v2946 = vsel %vm906, %v2881, 0
    %2948 = vmatprep.subr.bf16.mxu0 0
    %2949 = vmatpush1.bf16.xpose.msra.mxu0 0
    %2950 = vmatprep.subr.bf16.mxu0 0
    %2951 = vmatpush1.bf16.xpose.msra.mxu0 0
    %2952 = vmatprep.subr.bf16.mxu0 0
    %2953 = vmatpush1.bf16.xpose.msra.mxu0 0
    %2954 = vmatprep.subr.bf16.mxu0 0
    %2955 = vmatpush1.bf16.xpose.msra.mxu0 0
    %2956 = vmatprep.subr.bf16.mxu0 0
    %2957 = vmatpush1.bf16.xpose.msra.mxu0 0
    %2958 = vmatprep.subr.bf16.mxu0 0
    %2959 = vmatpush1.bf16.xpose.msra.mxu0 0
    %2960 = vmatprep.subr.bf16.mxu0 0
    %2961 = vmatpush1.bf16.xpose.msra.mxu0 0
    %2962 = vmatprep.subr.bf16.mxu0 0
    %2963 = vmatpush1.bf16.xpose.msra.mxu0 %v2946
    %2964 = vmatprep.subr.bf16.mxu0 0
    %2965 = vmatpush2.bf16.xpose.msra.mxu0 0
    %2966 = vmatprep.subr.bf16.mxu0 0
    %2967 = vmatpush2.bf16.xpose.msra.mxu0 0
    %2968 = vmatprep.subr.bf16.mxu0 0
    %2969 = vmatpush2.bf16.xpose.msra.mxu0 0
    %2970 = vmatprep.subr.bf16.mxu0 0
    %2971 = vmatpush2.bf16.xpose.msra.mxu0 0
    %2972 = vmatprep.subr.bf16.mxu0 0
    %2973 = vmatpush2.bf16.xpose.msra.mxu0 0
    %2974 = vmatprep.subr.bf16.mxu0 0
    %2975 = vmatpush2.bf16.xpose.msra.mxu0 0
    %2976 = vmatprep.subr.bf16.mxu0 0
    %2977 = vmatpush2.bf16.xpose.msra.mxu0 0
    %2978 = vmatprep.subr.bf16.mxu0 0
    %2979 = vmatpush2.bf16.xpose.msra.mxu0 0
    %2980 = vmatprep.mubr.bf16.mxu0 0
    %2981 = vmatmul.mubr.bf16.gmra.mxu0 %v2943
    %v2982 = vpop.f32.mrf.mxu0
    %v2983 = vadd.f32 0.0, %v2982
    %v2984 = vpop.f32.mrf.mxu0
    %v2985 = vpop.f32.mrf.mxu0
    %v2986 = vpop.f32.mrf.mxu0
    %2987 = vdwg.mxu0
    %v2989 = vsel %vm906, %v2874, 0
    %v2992 = vsel %vm906, %v2882, 0
    %2994 = vmatprep.subr.bf16.mxu0 0
    %2995 = vmatpush1.bf16.xpose.msra.mxu0 0
    %2996 = vmatprep.subr.bf16.mxu0 0
    %2997 = vmatpush1.bf16.xpose.msra.mxu0 0
    %2998 = vmatprep.subr.bf16.mxu0 0
    %2999 = vmatpush1.bf16.xpose.msra.mxu0 0
    %3000 = vmatprep.subr.bf16.mxu0 0
    %3001 = vmatpush1.bf16.xpose.msra.mxu0 0
    %3002 = vmatprep.subr.bf16.mxu0 0
    %3003 = vmatpush1.bf16.xpose.msra.mxu0 0
    %3004 = vmatprep.subr.bf16.mxu0 0
    %3005 = vmatpush1.bf16.xpose.msra.mxu0 0
    %3006 = vmatprep.subr.bf16.mxu0 0
    %3007 = vmatpush1.bf16.xpose.msra.mxu0 0
    %3008 = vmatprep.subr.bf16.mxu0 0
    %3009 = vmatpush1.bf16.xpose.msra.mxu0 %v2992
    %3010 = vmatprep.subr.bf16.mxu0 0
    %3011 = vmatpush2.bf16.xpose.msra.mxu0 0
    %3012 = vmatprep.subr.bf16.mxu0 0
    %3013 = vmatpush2.bf16.xpose.msra.mxu0 0
    %3014 = vmatprep.subr.bf16.mxu0 0
    %3015 = vmatpush2.bf16.xpose.msra.mxu0 0
    %3016 = vmatprep.subr.bf16.mxu0 0
    %3017 = vmatpush2.bf16.xpose.msra.mxu0 0
    %3018 = vmatprep.subr.bf16.mxu0 0
    %3019 = vmatpush2.bf16.xpose.msra.mxu0 0
    %3020 = vmatprep.subr.bf16.mxu0 0
    %3021 = vmatpush2.bf16.xpose.msra.mxu0 0
    %3022 = vmatprep.subr.bf16.mxu0 0
    %3023 = vmatpush2.bf16.xpose.msra.mxu0 0
    %3024 = vmatprep.subr.bf16.mxu0 0
    %3025 = vmatpush2.bf16.xpose.msra.mxu0 0
    %3026 = vmatprep.mubr.bf16.mxu0 0
    %3027 = vmatmul.mubr.bf16.gmra.mxu0 %v2989
    %v3028 = vpop.f32.mrf.mxu0
    %v3029 = vadd.f32 0.0, %v3028
    %v3030 = vpop.f32.mrf.mxu0
    %v3031 = vpop.f32.mrf.mxu0
    %v3032 = vpop.f32.mrf.mxu0
    %3033 = vdwg.mxu0
    %v3035 = vsel %vm906, %v2875, 0
    %v3038 = vsel %vm906, %v2883, 0
    %3040 = vmatprep.subr.bf16.mxu0 0
    %3041 = vmatpush1.bf16.xpose.msra.mxu0 0
    %3042 = vmatprep.subr.bf16.mxu0 0
    %3043 = vmatpush1.bf16.xpose.msra.mxu0 0
    %3044 = vmatprep.subr.bf16.mxu0 0
    %3045 = vmatpush1.bf16.xpose.msra.mxu0 0
    %3046 = vmatprep.subr.bf16.mxu0 0
    %3047 = vmatpush1.bf16.xpose.msra.mxu0 0
    %3048 = vmatprep.subr.bf16.mxu0 0
    %3049 = vmatpush1.bf16.xpose.msra.mxu0 0
    %3050 = vmatprep.subr.bf16.mxu0 0
    %3051 = vmatpush1.bf16.xpose.msra.mxu0 0
    %3052 = vmatprep.subr.bf16.mxu0 0
    %3053 = vmatpush1.bf16.xpose.msra.mxu0 0
    %3054 = vmatprep.subr.bf16.mxu0 0
    %3055 = vmatpush1.bf16.xpose.msra.mxu0 %v3038
    %3056 = vmatprep.subr.bf16.mxu0 0
    %3057 = vmatpush2.bf16.xpose.msra.mxu0 0
    %3058 = vmatprep.subr.bf16.mxu0 0
    %3059 = vmatpush2.bf16.xpose.msra.mxu0 0
    %3060 = vmatprep.subr.bf16.mxu0 0
    %3061 = vmatpush2.bf16.xpose.msra.mxu0 0
    %3062 = vmatprep.subr.bf16.mxu0 0
    %3063 = vmatpush2.bf16.xpose.msra.mxu0 0
    %3064 = vmatprep.subr.bf16.mxu0 0
    %3065 = vmatpush2.bf16.xpose.msra.mxu0 0
    %3066 = vmatprep.subr.bf16.mxu0 0
    %3067 = vmatpush2.bf16.xpose.msra.mxu0 0
    %3068 = vmatprep.subr.bf16.mxu0 0
    %3069 = vmatpush2.bf16.xpose.msra.mxu0 0
    %3070 = vmatprep.subr.bf16.mxu0 0
    %3071 = vmatpush2.bf16.xpose.msra.mxu0 0
    %3072 = vmatprep.mubr.bf16.mxu0 0
    %3073 = vmatmul.mubr.bf16.gmra.mxu0 %v3035
    %v3074 = vpop.f32.mrf.mxu0
    %v3075 = vadd.f32 0.0, %v3074
    %v3076 = vpop.f32.mrf.mxu0
    %v3077 = vpop.f32.mrf.mxu0
    %v3078 = vpop.f32.mrf.mxu0
    %3079 = vdwg.mxu0
    %v3081 = vsel %vm906, %v2876, 0
    %v3084 = vsel %vm906, %v2884, 0
    %3086 = vmatprep.subr.bf16.mxu0 0
    %3087 = vmatpush1.bf16.xpose.msra.mxu0 0
    %3088 = vmatprep.subr.bf16.mxu0 0
    %3089 = vmatpush1.bf16.xpose.msra.mxu0 0
    %3090 = vmatprep.subr.bf16.mxu0 0
    %3091 = vmatpush1.bf16.xpose.msra.mxu0 0
    %3092 = vmatprep.subr.bf16.mxu0 0
    %3093 = vmatpush1.bf16.xpose.msra.mxu0 0
    %3094 = vmatprep.subr.bf16.mxu0 0
    %3095 = vmatpush1.bf16.xpose.msra.mxu0 0
    %3096 = vmatprep.subr.bf16.mxu0 0
    %3097 = vmatpush1.bf16.xpose.msra.mxu0 0
    %3098 = vmatprep.subr.bf16.mxu0 0
    %3099 = vmatpush1.bf16.xpose.msra.mxu0 0
    %3100 = vmatprep.subr.bf16.mxu0 0
    %3101 = vmatpush1.bf16.xpose.msra.mxu0 %v3084
    %3102 = vmatprep.subr.bf16.mxu0 0
    %3103 = vmatpush2.bf16.xpose.msra.mxu0 0
    %3104 = vmatprep.subr.bf16.mxu0 0
    %3105 = vmatpush2.bf16.xpose.msra.mxu0 0
    %3106 = vmatprep.subr.bf16.mxu0 0
    %3107 = vmatpush2.bf16.xpose.msra.mxu0 0
    %3108 = vmatprep.subr.bf16.mxu0 0
    %3109 = vmatpush2.bf16.xpose.msra.mxu0 0
    %3110 = vmatprep.subr.bf16.mxu0 0
    %3111 = vmatpush2.bf16.xpose.msra.mxu0 0
    %3112 = vmatprep.subr.bf16.mxu0 0
    %3113 = vmatpush2.bf16.xpose.msra.mxu0 0
    %3114 = vmatprep.subr.bf16.mxu0 0
    %3115 = vmatpush2.bf16.xpose.msra.mxu0 0
    %3116 = vmatprep.subr.bf16.mxu0 0
    %3117 = vmatpush2.bf16.xpose.msra.mxu0 0
    %3118 = vmatprep.mubr.bf16.mxu0 0
    %3119 = vmatmul.mubr.bf16.gmra.mxu0 %v3081
    %v3120 = vpop.f32.mrf.mxu0
    %v3121 = vadd.f32 0.0, %v3120
    %v3122 = vpop.f32.mrf.mxu0
    %v3123 = vpop.f32.mrf.mxu0
    %v3124 = vpop.f32.mrf.mxu0
    %3125 = vdwg.mxu0
    %v3127 = vsel %vm906, %v2877, 0
    %v3130 = vsel %vm906, %v2885, 0
    %3132 = vmatprep.subr.bf16.mxu0 0
    %3133 = vmatpush1.bf16.xpose.msra.mxu0 0
    %3134 = vmatprep.subr.bf16.mxu0 0
    %3135 = vmatpush1.bf16.xpose.msra.mxu0 0
    %3136 = vmatprep.subr.bf16.mxu0 0
    %3137 = vmatpush1.bf16.xpose.msra.mxu0 0
    %3138 = vmatprep.subr.bf16.mxu0 0
    %3139 = vmatpush1.bf16.xpose.msra.mxu0 0
    %3140 = vmatprep.subr.bf16.mxu0 0
    %3141 = vmatpush1.bf16.xpose.msra.mxu0 0
    %3142 = vmatprep.subr.bf16.mxu0 0
    %3143 = vmatpush1.bf16.xpose.msra.mxu0 0
    %3144 = vmatprep.subr.bf16.mxu0 0
    %3145 = vmatpush1.bf16.xpose.msra.mxu0 0
    %3146 = vmatprep.subr.bf16.mxu0 0
    %3147 = vmatpush1.bf16.xpose.msra.mxu0 %v3130
    %3148 = vmatprep.subr.bf16.mxu0 0
    %3149 = vmatpush2.bf16.xpose.msra.mxu0 0
    %3150 = vmatprep.subr.bf16.mxu0 0
    %3151 = vmatpush2.bf16.xpose.msra.mxu0 0
    %3152 = vmatprep.subr.bf16.mxu0 0
    %3153 = vmatpush2.bf16.xpose.msra.mxu0 0
    %3154 = vmatprep.subr.bf16.mxu0 0
    %3155 = vmatpush2.bf16.xpose.msra.mxu0 0
    %3156 = vmatprep.subr.bf16.mxu0 0
    %3157 = vmatpush2.bf16.xpose.msra.mxu0 0
    %3158 = vmatprep.subr.bf16.mxu0 0
    %3159 = vmatpush2.bf16.xpose.msra.mxu0 0
    %3160 = vmatprep.subr.bf16.mxu0 0
    %3161 = vmatpush2.bf16.xpose.msra.mxu0 0
    %3162 = vmatprep.subr.bf16.mxu0 0
    %3163 = vmatpush2.bf16.xpose.msra.mxu0 0
    %3164 = vmatprep.mubr.bf16.mxu0 0
    %3165 = vmatmul.mubr.bf16.gmra.mxu0 %v3127
    %v3166 = vpop.f32.mrf.mxu0
    %v3167 = vadd.f32 0.0, %v3166
    %v3168 = vpop.f32.mrf.mxu0
    %v3169 = vpop.f32.mrf.mxu0
    %v3170 = vpop.f32.mrf.mxu0
    %3171 = vdwg.mxu0
    %v3173 = vsel %vm906, %v2878, 0
    %v3176 = vsel %vm906, %v2886, 0
    %3178 = vmatprep.subr.bf16.mxu0 0
    %3179 = vmatpush1.bf16.xpose.msra.mxu0 0
    %3180 = vmatprep.subr.bf16.mxu0 0
    %3181 = vmatpush1.bf16.xpose.msra.mxu0 0
    %3182 = vmatprep.subr.bf16.mxu0 0
    %3183 = vmatpush1.bf16.xpose.msra.mxu0 0
    %3184 = vmatprep.subr.bf16.mxu0 0
    %3185 = vmatpush1.bf16.xpose.msra.mxu0 0
    %3186 = vmatprep.subr.bf16.mxu0 0
    %3187 = vmatpush1.bf16.xpose.msra.mxu0 0
    %3188 = vmatprep.subr.bf16.mxu0 0
    %3189 = vmatpush1.bf16.xpose.msra.mxu0 0
    %3190 = vmatprep.subr.bf16.mxu0 0
    %3191 = vmatpush1.bf16.xpose.msra.mxu0 0
    %3192 = vmatprep.subr.bf16.mxu0 0
    %3193 = vmatpush1.bf16.xpose.msra.mxu0 %v3176
    %3194 = vmatprep.subr.bf16.mxu0 0
    %3195 = vmatpush2.bf16.xpose.msra.mxu0 0
    %3196 = vmatprep.subr.bf16.mxu0 0
    %3197 = vmatpush2.bf16.xpose.msra.mxu0 0
    %3198 = vmatprep.subr.bf16.mxu0 0
    %3199 = vmatpush2.bf16.xpose.msra.mxu0 0
    %3200 = vmatprep.subr.bf16.mxu0 0
    %3201 = vmatpush2.bf16.xpose.msra.mxu0 0
    %3202 = vmatprep.subr.bf16.mxu0 0
    %3203 = vmatpush2.bf16.xpose.msra.mxu0 0
    %3204 = vmatprep.subr.bf16.mxu0 0
    %3205 = vmatpush2.bf16.xpose.msra.mxu0 0
    %3206 = vmatprep.subr.bf16.mxu0 0
    %3207 = vmatpush2.bf16.xpose.msra.mxu0 0
    %3208 = vmatprep.subr.bf16.mxu0 0
    %3209 = vmatpush2.bf16.xpose.msra.mxu0 0
    %3210 = vmatprep.mubr.bf16.mxu0 0
    %3211 = vmatmul.mubr.bf16.gmra.mxu0 %v3173
    %v3212 = vpop.f32.mrf.mxu0
    %v3213 = vadd.f32 0.0, %v3212
    %v3214 = vpop.f32.mrf.mxu0
    %v3215 = vpop.f32.mrf.mxu0
    %v3216 = vpop.f32.mrf.mxu0
    %3217 = vdwg.mxu0
    %v3219 = vsel %vm906, %v2879, 0
    %v3222 = vsel %vm906, %v2887, 0
    %3224 = vmatprep.subr.bf16.mxu0 0
    %3225 = vmatpush1.bf16.xpose.msra.mxu0 0
    %3226 = vmatprep.subr.bf16.mxu0 0
    %3227 = vmatpush1.bf16.xpose.msra.mxu0 0
    %3228 = vmatprep.subr.bf16.mxu0 0
    %3229 = vmatpush1.bf16.xpose.msra.mxu0 0
    %3230 = vmatprep.subr.bf16.mxu0 0
    %3231 = vmatpush1.bf16.xpose.msra.mxu0 0
    %3232 = vmatprep.subr.bf16.mxu0 0
    %3233 = vmatpush1.bf16.xpose.msra.mxu0 0
    %3234 = vmatprep.subr.bf16.mxu0 0
    %3235 = vmatpush1.bf16.xpose.msra.mxu0 0
    %3236 = vmatprep.subr.bf16.mxu0 0
    %3237 = vmatpush1.bf16.xpose.msra.mxu0 0
    %3238 = vmatprep.subr.bf16.mxu0 0
    %3239 = vmatpush1.bf16.xpose.msra.mxu0 %v3222
    %3240 = vmatprep.subr.bf16.mxu0 0
    %3241 = vmatpush2.bf16.xpose.msra.mxu0 0
    %3242 = vmatprep.subr.bf16.mxu0 0
    %3243 = vmatpush2.bf16.xpose.msra.mxu0 0
    %3244 = vmatprep.subr.bf16.mxu0 0
    %3245 = vmatpush2.bf16.xpose.msra.mxu0 0
    %3246 = vmatprep.subr.bf16.mxu0 0
    %3247 = vmatpush2.bf16.xpose.msra.mxu0 0
    %3248 = vmatprep.subr.bf16.mxu0 0
    %3249 = vmatpush2.bf16.xpose.msra.mxu0 0
    %3250 = vmatprep.subr.bf16.mxu0 0
    %3251 = vmatpush2.bf16.xpose.msra.mxu0 0
    %3252 = vmatprep.subr.bf16.mxu0 0
    %3253 = vmatpush2.bf16.xpose.msra.mxu0 0
    %3254 = vmatprep.subr.bf16.mxu0 0
    %3255 = vmatpush2.bf16.xpose.msra.mxu0 0
    %3256 = vmatprep.mubr.bf16.mxu0 0
    %3257 = vmatmul.mubr.bf16.gmra.mxu0 %v3219
    %v3258 = vpop.f32.mrf.mxu0
    %v3259 = vadd.f32 0.0, %v3258
    %v3260 = vpop.f32.mrf.mxu0
    %v3261 = vpop.f32.mrf.mxu0
    %v3262 = vpop.f32.mrf.mxu0
    %3263 = vdwg.mxu0
    %v3264 = vsel %vm906, %v2937, -inf
    %v3265 = vrot.slane %v3264, 4
    %v3266 = vmax.f32 %v3264, %v3265
    %v3267 = vrot.slane %v3266, 2
    %v3268 = vmax.f32 %v3266, %v3267
    %v3269 = vrot.slane %v3268, 1
    %v3270 = vmax.f32 %v3268, %v3269
    %v3271 = vsel %vm906, %v2983, -inf
    %v3272 = vrot.slane %v3271, 4
    %v3273 = vmax.f32 %v3271, %v3272
    %v3274 = vrot.slane %v3273, 2
    %v3275 = vmax.f32 %v3273, %v3274
    %v3276 = vrot.slane %v3275, 1
    %v3277 = vmax.f32 %v3275, %v3276
    %v3278 = vsel %vm906, %v3029, -inf
    %v3279 = vrot.slane %v3278, 4
    %v3280 = vmax.f32 %v3278, %v3279
    %v3281 = vrot.slane %v3280, 2
    %v3282 = vmax.f32 %v3280, %v3281
    %v3283 = vrot.slane %v3282, 1
    %v3284 = vmax.f32 %v3282, %v3283
    %v3285 = vsel %vm906, %v3075, -inf
    %v3286 = vrot.slane %v3285, 4
    %v3287 = vmax.f32 %v3285, %v3286
    %v3288 = vrot.slane %v3287, 2
    %v3289 = vmax.f32 %v3287, %v3288
    %v3290 = vrot.slane %v3289, 1
    %v3291 = vmax.f32 %v3289, %v3290
    %v3292 = vsel %vm906, %v3121, -inf
    %v3293 = vrot.slane %v3292, 4
    %v3294 = vmax.f32 %v3292, %v3293
    %v3295 = vrot.slane %v3294, 2
    %v3296 = vmax.f32 %v3294, %v3295
    %v3297 = vrot.slane %v3296, 1
    %v3298 = vmax.f32 %v3296, %v3297
    %v3299 = vsel %vm906, %v3167, -inf
    %v3300 = vrot.slane %v3299, 4
    %v3301 = vmax.f32 %v3299, %v3300
    %v3302 = vrot.slane %v3301, 2
    %v3303 = vmax.f32 %v3301, %v3302
    %v3304 = vrot.slane %v3303, 1
    %v3305 = vmax.f32 %v3303, %v3304
    %v3306 = vsel %vm906, %v3213, -inf
    %v3307 = vrot.slane %v3306, 4
    %v3308 = vmax.f32 %v3306, %v3307
    %v3309 = vrot.slane %v3308, 2
    %v3310 = vmax.f32 %v3308, %v3309
    %v3311 = vrot.slane %v3310, 1
    %v3312 = vmax.f32 %v3310, %v3311
    %v3313 = vsel %vm906, %v3259, -inf
    %v3314 = vrot.slane %v3313, 4
    %v3315 = vmax.f32 %v3313, %v3314
    %v3316 = vrot.slane %v3315, 2
    %v3317 = vmax.f32 %v3315, %v3316
    %v3318 = vrot.slane %v3317, 1
    %v3319 = vmax.f32 %v3317, %v3318
    %v3320 = vsub.f32 %v2937, %v3270
    %v3321 = vsub.f32 %v2983, %v3277
    %v3322 = vsub.f32 %v3029, %v3284
    %v3323 = vsub.f32 %v3075, %v3291
    %v3324 = vsub.f32 %v3121, %v3298
    %v3325 = vsub.f32 %v3167, %v3305
    %v3326 = vsub.f32 %v3213, %v3312
    %v3327 = vsub.f32 %v3259, %v3319
    %v3328 = vmul.f32 %v3320, 1.442695
    %v3329 = vpow.pop %v3328
    %v3330 = vmul.f32 %v3321, 1.442695
    %v3331 = vpow.pop %v3330
    %v3332 = vmul.f32 %v3322, 1.442695
    %v3333 = vpow.pop %v3332
    %v3334 = vmul.f32 %v3323, 1.442695
    %v3335 = vpow.pop %v3334
    %v3336 = vmul.f32 %v3324, 1.442695
    %v3337 = vpow.pop %v3336
    %v3338 = vmul.f32 %v3325, 1.442695
    %v3339 = vpow.pop %v3338
    %v3340 = vmul.f32 %v3326, 1.442695
    %v3341 = vpow.pop %v3340
    %v3342 = vmul.f32 %v3327, 1.442695
    %v3343 = vpow.pop %v3342
    %v3344 = vsel %vm906, %v3329, 0.0
    %v3345 = vrot.slane %v3344, 4
    %v3346 = vadd.f32 %v3344, %v3345
    %v3347 = vrot.slane %v3346, 2
    %v3348 = vadd.f32 %v3346, %v3347
    %v3349 = vrot.slane %v3348, 1
    %v3350 = vadd.f32 %v3348, %v3349
    %v3351 = vsel %vm906, %v3331, 0.0
    %v3352 = vrot.slane %v3351, 4
    %v3353 = vadd.f32 %v3351, %v3352
    %v3354 = vrot.slane %v3353, 2
    %v3355 = vadd.f32 %v3353, %v3354
    %v3356 = vrot.slane %v3355, 1
    %v3357 = vadd.f32 %v3355, %v3356
    %v3358 = vsel %vm906, %v3333, 0.0
    %v3359 = vrot.slane %v3358, 4
    %v3360 = vadd.f32 %v3358, %v3359
    %v3361 = vrot.slane %v3360, 2
    %v3362 = vadd.f32 %v3360, %v3361
    %v3363 = vrot.slane %v3362, 1
    %v3364 = vadd.f32 %v3362, %v3363
    %v3365 = vsel %vm906, %v3335, 0.0
    %v3366 = vrot.slane %v3365, 4
    %v3367 = vadd.f32 %v3365, %v3366
    %v3368 = vrot.slane %v3367, 2
    %v3369 = vadd.f32 %v3367, %v3368
    %v3370 = vrot.slane %v3369, 1
    %v3371 = vadd.f32 %v3369, %v3370
    %v3372 = vsel %vm906, %v3337, 0.0
    %v3373 = vrot.slane %v3372, 4
    %v3374 = vadd.f32 %v3372, %v3373
    %v3375 = vrot.slane %v3374, 2
    %v3376 = vadd.f32 %v3374, %v3375
    %v3377 = vrot.slane %v3376, 1
    %v3378 = vadd.f32 %v3376, %v3377
    %v3379 = vsel %vm906, %v3339, 0.0
    %v3380 = vrot.slane %v3379, 4
    %v3381 = vadd.f32 %v3379, %v3380
    %v3382 = vrot.slane %v3381, 2
    %v3383 = vadd.f32 %v3381, %v3382
    %v3384 = vrot.slane %v3383, 1
    %v3385 = vadd.f32 %v3383, %v3384
    %v3386 = vsel %vm906, %v3341, 0.0
    %v3387 = vrot.slane %v3386, 4
    %v3388 = vadd.f32 %v3386, %v3387
    %v3389 = vrot.slane %v3388, 2
    %v3390 = vadd.f32 %v3388, %v3389
    %v3391 = vrot.slane %v3390, 1
    %v3392 = vadd.f32 %v3390, %v3391
    %v3393 = vsel %vm906, %v3343, 0.0
    %v3394 = vrot.slane %v3393, 4
    %v3395 = vadd.f32 %v3393, %v3394
    %v3396 = vrot.slane %v3395, 2
    %v3397 = vadd.f32 %v3395, %v3396
    %v3398 = vrot.slane %v3397, 1
    %v3399 = vadd.f32 %v3397, %v3398
    %v3400 = vrcp.pop %v3350
    %v3401 = vmul.f32 %v3329, %v3400
    %v3402 = vrcp.pop %v3357
    %v3403 = vmul.f32 %v3331, %v3402
    %v3404 = vrcp.pop %v3364
    %v3405 = vmul.f32 %v3333, %v3404
    %v3406 = vrcp.pop %v3371
    %v3407 = vmul.f32 %v3335, %v3406
    %v3408 = vrcp.pop %v3378
    %v3409 = vmul.f32 %v3337, %v3408
    %v3410 = vrcp.pop %v3385
    %v3411 = vmul.f32 %v3339, %v3410
    %v3412 = vrcp.pop %v3392
    %v3413 = vmul.f32 %v3341, %v3412
    %v3414 = vrcp.pop %v3399
    %v3415 = vmul.f32 %v3343, %v3414
    %v3416 = vpack.c.bf16 %v3401, %v3401
    %v3417 = vpack.c.bf16 %v3403, %v3403
    %v3418 = vpack.c.bf16 %v3405, %v3405
    %v3419 = vpack.c.bf16 %v3407, %v3407
    %v3420 = vpack.c.bf16 %v3409, %v3409
    %v3421 = vpack.c.bf16 %v3411, %v3411
    %v3422 = vpack.c.bf16 %v3413, %v3413
    %v3423 = vpack.c.bf16 %v3415, %v3415
    %v3425 = vsel %vm906, %v3416, 0
    %v3428 = vsel %vm1438, %v2888, 0
    %3430 = vmatprep.subr.bf16.mxu0 0
    %3431 = vmatpush1.bf16.msra.mxu0 0
    %3432 = vmatprep.subr.bf16.mxu0 0
    %3433 = vmatpush1.bf16.msra.mxu0 0
    %3434 = vmatprep.subr.bf16.mxu0 0
    %3435 = vmatpush1.bf16.msra.mxu0 0
    %3436 = vmatprep.subr.bf16.mxu0 0
    %3437 = vmatpush1.bf16.msra.mxu0 0
    %3438 = vmatprep.subr.bf16.mxu0 0
    %3439 = vmatpush1.bf16.msra.mxu0 0
    %3440 = vmatprep.subr.bf16.mxu0 0
    %3441 = vmatpush1.bf16.msra.mxu0 0
    %3442 = vmatprep.subr.bf16.mxu0 0
    %3443 = vmatpush1.bf16.msra.mxu0 0
    %3444 = vmatprep.subr.bf16.mxu0 0
    %3445 = vmatpush1.bf16.msra.mxu0 %v3428
    %3446 = vmatprep.subr.bf16.mxu0 0
    %3447 = vmatpush2.bf16.msra.mxu0 0
    %3448 = vmatprep.subr.bf16.mxu0 0
    %3449 = vmatpush2.bf16.msra.mxu0 0
    %3450 = vmatprep.subr.bf16.mxu0 0
    %3451 = vmatpush2.bf16.msra.mxu0 0
    %3452 = vmatprep.subr.bf16.mxu0 0
    %3453 = vmatpush2.bf16.msra.mxu0 0
    %3454 = vmatprep.subr.bf16.mxu0 0
    %3455 = vmatpush2.bf16.msra.mxu0 0
    %3456 = vmatprep.subr.bf16.mxu0 0
    %3457 = vmatpush2.bf16.msra.mxu0 0
    %3458 = vmatprep.subr.bf16.mxu0 0
    %3459 = vmatpush2.bf16.msra.mxu0 0
    %3460 = vmatprep.subr.bf16.mxu0 0
    %3461 = vmatpush2.bf16.msra.mxu0 0
    %3462 = vmatprep.mubr.bf16.mxu0 0
    %3463 = vmatmul.mubr.bf16.gmra.mxu0 %v3425
    %v3464 = vpop.f32.mrf.mxu0
    %v3465 = vadd.f32 0.0, %v3464
    %v3466 = vpop.f32.mrf.mxu0
    %v3467 = vpop.f32.mrf.mxu0
    %v3468 = vpop.f32.mrf.mxu0
    %3469 = vdwg.mxu0
    %v3471 = vsel %vm906, %v3417, 0
    %v3474 = vsel %vm1438, %v2889, 0
    %3476 = vmatprep.subr.bf16.mxu0 0
    %3477 = vmatpush1.bf16.msra.mxu0 0
    %3478 = vmatprep.subr.bf16.mxu0 0
    %3479 = vmatpush1.bf16.msra.mxu0 0
    %3480 = vmatprep.subr.bf16.mxu0 0
    %3481 = vmatpush1.bf16.msra.mxu0 0
    %3482 = vmatprep.subr.bf16.mxu0 0
    %3483 = vmatpush1.bf16.msra.mxu0 0
    %3484 = vmatprep.subr.bf16.mxu0 0
    %3485 = vmatpush1.bf16.msra.mxu0 0
    %3486 = vmatprep.subr.bf16.mxu0 0
    %3487 = vmatpush1.bf16.msra.mxu0 0
    %3488 = vmatprep.subr.bf16.mxu0 0
    %3489 = vmatpush1.bf16.msra.mxu0 0
    %3490 = vmatprep.subr.bf16.mxu0 0
    %3491 = vmatpush1.bf16.msra.mxu0 %v3474
    %3492 = vmatprep.subr.bf16.mxu0 0
    %3493 = vmatpush2.bf16.msra.mxu0 0
    %3494 = vmatprep.subr.bf16.mxu0 0
    %3495 = vmatpush2.bf16.msra.mxu0 0
    %3496 = vmatprep.subr.bf16.mxu0 0
    %3497 = vmatpush2.bf16.msra.mxu0 0
    %3498 = vmatprep.subr.bf16.mxu0 0
    %3499 = vmatpush2.bf16.msra.mxu0 0
    %3500 = vmatprep.subr.bf16.mxu0 0
    %3501 = vmatpush2.bf16.msra.mxu0 0
    %3502 = vmatprep.subr.bf16.mxu0 0
    %3503 = vmatpush2.bf16.msra.mxu0 0
    %3504 = vmatprep.subr.bf16.mxu0 0
    %3505 = vmatpush2.bf16.msra.mxu0 0
    %3506 = vmatprep.subr.bf16.mxu0 0
    %3507 = vmatpush2.bf16.msra.mxu0 0
    %3508 = vmatprep.mubr.bf16.mxu0 0
    %3509 = vmatmul.mubr.bf16.gmra.mxu0 %v3471
    %v3510 = vpop.f32.mrf.mxu0
    %v3511 = vadd.f32 0.0, %v3510
    %v3512 = vpop.f32.mrf.mxu0
    %v3513 = vpop.f32.mrf.mxu0
    %v3514 = vpop.f32.mrf.mxu0
    %3515 = vdwg.mxu0
    %v3517 = vsel %vm906, %v3418, 0
    %v3520 = vsel %vm1438, %v2890, 0
    %3522 = vmatprep.subr.bf16.mxu0 0
    %3523 = vmatpush1.bf16.msra.mxu0 0
    %3524 = vmatprep.subr.bf16.mxu0 0
    %3525 = vmatpush1.bf16.msra.mxu0 0
    %3526 = vmatprep.subr.bf16.mxu0 0
    %3527 = vmatpush1.bf16.msra.mxu0 0
    %3528 = vmatprep.subr.bf16.mxu0 0
    %3529 = vmatpush1.bf16.msra.mxu0 0
    %3530 = vmatprep.subr.bf16.mxu0 0
    %3531 = vmatpush1.bf16.msra.mxu0 0
    %3532 = vmatprep.subr.bf16.mxu0 0
    %3533 = vmatpush1.bf16.msra.mxu0 0
    %3534 = vmatprep.subr.bf16.mxu0 0
    %3535 = vmatpush1.bf16.msra.mxu0 0
    %3536 = vmatprep.subr.bf16.mxu0 0
    %3537 = vmatpush1.bf16.msra.mxu0 %v3520
    %3538 = vmatprep.subr.bf16.mxu0 0
    %3539 = vmatpush2.bf16.msra.mxu0 0
    %3540 = vmatprep.subr.bf16.mxu0 0
    %3541 = vmatpush2.bf16.msra.mxu0 0
    %3542 = vmatprep.subr.bf16.mxu0 0
    %3543 = vmatpush2.bf16.msra.mxu0 0
    %3544 = vmatprep.subr.bf16.mxu0 0
    %3545 = vmatpush2.bf16.msra.mxu0 0
    %3546 = vmatprep.subr.bf16.mxu0 0
    %3547 = vmatpush2.bf16.msra.mxu0 0
    %3548 = vmatprep.subr.bf16.mxu0 0
    %3549 = vmatpush2.bf16.msra.mxu0 0
    %3550 = vmatprep.subr.bf16.mxu0 0
    %3551 = vmatpush2.bf16.msra.mxu0 0
    %3552 = vmatprep.subr.bf16.mxu0 0
    %3553 = vmatpush2.bf16.msra.mxu0 0
    %3554 = vmatprep.mubr.bf16.mxu0 0
    %3555 = vmatmul.mubr.bf16.gmra.mxu0 %v3517
    %v3556 = vpop.f32.mrf.mxu0
    %v3557 = vadd.f32 0.0, %v3556
    %v3558 = vpop.f32.mrf.mxu0
    %v3559 = vpop.f32.mrf.mxu0
    %v3560 = vpop.f32.mrf.mxu0
    %3561 = vdwg.mxu0
    %v3563 = vsel %vm906, %v3419, 0
    %v3566 = vsel %vm1438, %v2891, 0
    %3568 = vmatprep.subr.bf16.mxu0 0
    %3569 = vmatpush1.bf16.msra.mxu0 0
    %3570 = vmatprep.subr.bf16.mxu0 0
    %3571 = vmatpush1.bf16.msra.mxu0 0
    %3572 = vmatprep.subr.bf16.mxu0 0
    %3573 = vmatpush1.bf16.msra.mxu0 0
    %3574 = vmatprep.subr.bf16.mxu0 0
    %3575 = vmatpush1.bf16.msra.mxu0 0
    %3576 = vmatprep.subr.bf16.mxu0 0
    %3577 = vmatpush1.bf16.msra.mxu0 0
    %3578 = vmatprep.subr.bf16.mxu0 0
    %3579 = vmatpush1.bf16.msra.mxu0 0
    %3580 = vmatprep.subr.bf16.mxu0 0
    %3581 = vmatpush1.bf16.msra.mxu0 0
    %3582 = vmatprep.subr.bf16.mxu0 0
    %3583 = vmatpush1.bf16.msra.mxu0 %v3566
    %3584 = vmatprep.subr.bf16.mxu0 0
    %3585 = vmatpush2.bf16.msra.mxu0 0
    %3586 = vmatprep.subr.bf16.mxu0 0
    %3587 = vmatpush2.bf16.msra.mxu0 0
    %3588 = vmatprep.subr.bf16.mxu0 0
    %3589 = vmatpush2.bf16.msra.mxu0 0
    %3590 = vmatprep.subr.bf16.mxu0 0
    %3591 = vmatpush2.bf16.msra.mxu0 0
    %3592 = vmatprep.subr.bf16.mxu0 0
    %3593 = vmatpush2.bf16.msra.mxu0 0
    %3594 = vmatprep.subr.bf16.mxu0 0
    %3595 = vmatpush2.bf16.msra.mxu0 0
    %3596 = vmatprep.subr.bf16.mxu0 0
    %3597 = vmatpush2.bf16.msra.mxu0 0
    %3598 = vmatprep.subr.bf16.mxu0 0
    %3599 = vmatpush2.bf16.msra.mxu0 0
    %3600 = vmatprep.mubr.bf16.mxu0 0
    %3601 = vmatmul.mubr.bf16.gmra.mxu0 %v3563
    %v3602 = vpop.f32.mrf.mxu0
    %v3603 = vadd.f32 0.0, %v3602
    %v3604 = vpop.f32.mrf.mxu0
    %v3605 = vpop.f32.mrf.mxu0
    %v3606 = vpop.f32.mrf.mxu0
    %3607 = vdwg.mxu0
    %v3609 = vsel %vm906, %v3420, 0
    %v3612 = vsel %vm1438, %v2892, 0
    %3614 = vmatprep.subr.bf16.mxu0 0
    %3615 = vmatpush1.bf16.msra.mxu0 0
    %3616 = vmatprep.subr.bf16.mxu0 0
    %3617 = vmatpush1.bf16.msra.mxu0 0
    %3618 = vmatprep.subr.bf16.mxu0 0
    %3619 = vmatpush1.bf16.msra.mxu0 0
    %3620 = vmatprep.subr.bf16.mxu0 0
    %3621 = vmatpush1.bf16.msra.mxu0 0
    %3622 = vmatprep.subr.bf16.mxu0 0
    %3623 = vmatpush1.bf16.msra.mxu0 0
    %3624 = vmatprep.subr.bf16.mxu0 0
    %3625 = vmatpush1.bf16.msra.mxu0 0
    %3626 = vmatprep.subr.bf16.mxu0 0
    %3627 = vmatpush1.bf16.msra.mxu0 0
    %3628 = vmatprep.subr.bf16.mxu0 0
    %3629 = vmatpush1.bf16.msra.mxu0 %v3612
    %3630 = vmatprep.subr.bf16.mxu0 0
    %3631 = vmatpush2.bf16.msra.mxu0 0
    %3632 = vmatprep.subr.bf16.mxu0 0
    %3633 = vmatpush2.bf16.msra.mxu0 0
    %3634 = vmatprep.subr.bf16.mxu0 0
    %3635 = vmatpush2.bf16.msra.mxu0 0
    %3636 = vmatprep.subr.bf16.mxu0 0
    %3637 = vmatpush2.bf16.msra.mxu0 0
    %3638 = vmatprep.subr.bf16.mxu0 0
    %3639 = vmatpush2.bf16.msra.mxu0 0
    %3640 = vmatprep.subr.bf16.mxu0 0
    %3641 = vmatpush2.bf16.msra.mxu0 0
    %3642 = vmatprep.subr.bf16.mxu0 0
    %3643 = vmatpush2.bf16.msra.mxu0 0
    %3644 = vmatprep.subr.bf16.mxu0 0
    %3645 = vmatpush2.bf16.msra.mxu0 0
    %3646 = vmatprep.mubr.bf16.mxu0 0
    %3647 = vmatmul.mubr.bf16.gmra.mxu0 %v3609
    %v3648 = vpop.f32.mrf.mxu0
    %v3649 = vadd.f32 0.0, %v3648
    %v3650 = vpop.f32.mrf.mxu0
    %v3651 = vpop.f32.mrf.mxu0
    %v3652 = vpop.f32.mrf.mxu0
    %3653 = vdwg.mxu0
    %v3655 = vsel %vm906, %v3421, 0
    %v3658 = vsel %vm1438, %v2893, 0
    %3660 = vmatprep.subr.bf16.mxu0 0
    %3661 = vmatpush1.bf16.msra.mxu0 0
    %3662 = vmatprep.subr.bf16.mxu0 0
    %3663 = vmatpush1.bf16.msra.mxu0 0
    %3664 = vmatprep.subr.bf16.mxu0 0
    %3665 = vmatpush1.bf16.msra.mxu0 0
    %3666 = vmatprep.subr.bf16.mxu0 0
    %3667 = vmatpush1.bf16.msra.mxu0 0
    %3668 = vmatprep.subr.bf16.mxu0 0
    %3669 = vmatpush1.bf16.msra.mxu0 0
    %3670 = vmatprep.subr.bf16.mxu0 0
    %3671 = vmatpush1.bf16.msra.mxu0 0
    %3672 = vmatprep.subr.bf16.mxu0 0
    %3673 = vmatpush1.bf16.msra.mxu0 0
    %3674 = vmatprep.subr.bf16.mxu0 0
    %3675 = vmatpush1.bf16.msra.mxu0 %v3658
    %3676 = vmatprep.subr.bf16.mxu0 0
    %3677 = vmatpush2.bf16.msra.mxu0 0
    %3678 = vmatprep.subr.bf16.mxu0 0
    %3679 = vmatpush2.bf16.msra.mxu0 0
    %3680 = vmatprep.subr.bf16.mxu0 0
    %3681 = vmatpush2.bf16.msra.mxu0 0
    %3682 = vmatprep.subr.bf16.mxu0 0
    %3683 = vmatpush2.bf16.msra.mxu0 0
    %3684 = vmatprep.subr.bf16.mxu0 0
    %3685 = vmatpush2.bf16.msra.mxu0 0
    %3686 = vmatprep.subr.bf16.mxu0 0
    %3687 = vmatpush2.bf16.msra.mxu0 0
    %3688 = vmatprep.subr.bf16.mxu0 0
    %3689 = vmatpush2.bf16.msra.mxu0 0
    %3690 = vmatprep.subr.bf16.mxu0 0
    %3691 = vmatpush2.bf16.msra.mxu0 0
    %3692 = vmatprep.mubr.bf16.mxu0 0
    %3693 = vmatmul.mubr.bf16.gmra.mxu0 %v3655
    %v3694 = vpop.f32.mrf.mxu0
    %v3695 = vadd.f32 0.0, %v3694
    %v3696 = vpop.f32.mrf.mxu0
    %v3697 = vpop.f32.mrf.mxu0
    %v3698 = vpop.f32.mrf.mxu0
    %3699 = vdwg.mxu0
    %v3701 = vsel %vm906, %v3422, 0
    %v3704 = vsel %vm1438, %v2894, 0
    %3706 = vmatprep.subr.bf16.mxu0 0
    %3707 = vmatpush1.bf16.msra.mxu0 0
    %3708 = vmatprep.subr.bf16.mxu0 0
    %3709 = vmatpush1.bf16.msra.mxu0 0
    %3710 = vmatprep.subr.bf16.mxu0 0
    %3711 = vmatpush1.bf16.msra.mxu0 0
    %3712 = vmatprep.subr.bf16.mxu0 0
    %3713 = vmatpush1.bf16.msra.mxu0 0
    %3714 = vmatprep.subr.bf16.mxu0 0
    %3715 = vmatpush1.bf16.msra.mxu0 0
    %3716 = vmatprep.subr.bf16.mxu0 0
    %3717 = vmatpush1.bf16.msra.mxu0 0
    %3718 = vmatprep.subr.bf16.mxu0 0
    %3719 = vmatpush1.bf16.msra.mxu0 0
    %3720 = vmatprep.subr.bf16.mxu0 0
    %3721 = vmatpush1.bf16.msra.mxu0 %v3704
    %3722 = vmatprep.subr.bf16.mxu0 0
    %3723 = vmatpush2.bf16.msra.mxu0 0
    %3724 = vmatprep.subr.bf16.mxu0 0
    %3725 = vmatpush2.bf16.msra.mxu0 0
    %3726 = vmatprep.subr.bf16.mxu0 0
    %3727 = vmatpush2.bf16.msra.mxu0 0
    %3728 = vmatprep.subr.bf16.mxu0 0
    %3729 = vmatpush2.bf16.msra.mxu0 0
    %3730 = vmatprep.subr.bf16.mxu0 0
    %3731 = vmatpush2.bf16.msra.mxu0 0
    %3732 = vmatprep.subr.bf16.mxu0 0
    %3733 = vmatpush2.bf16.msra.mxu0 0
    %3734 = vmatprep.subr.bf16.mxu0 0
    %3735 = vmatpush2.bf16.msra.mxu0 0
    %3736 = vmatprep.subr.bf16.mxu0 0
    %3737 = vmatpush2.bf16.msra.mxu0 0
    %3738 = vmatprep.mubr.bf16.mxu0 0
    %3739 = vmatmul.mubr.bf16.gmra.mxu0 %v3701
    %v3740 = vpop.f32.mrf.mxu0
    %v3741 = vadd.f32 0.0, %v3740
    %v3742 = vpop.f32.mrf.mxu0
    %v3743 = vpop.f32.mrf.mxu0
    %v3744 = vpop.f32.mrf.mxu0
    %3745 = vdwg.mxu0
    %v3747 = vsel %vm906, %v3423, 0
    %v3750 = vsel %vm1438, %v2895, 0
    %3752 = vmatprep.subr.bf16.mxu0 0
    %3753 = vmatpush1.bf16.msra.mxu0 0
    %3754 = vmatprep.subr.bf16.mxu0 0
    %3755 = vmatpush1.bf16.msra.mxu0 0
    %3756 = vmatprep.subr.bf16.mxu0 0
    %3757 = vmatpush1.bf16.msra.mxu0 0
    %3758 = vmatprep.subr.bf16.mxu0 0
    %3759 = vmatpush1.bf16.msra.mxu0 0
    %3760 = vmatprep.subr.bf16.mxu0 0
    %3761 = vmatpush1.bf16.msra.mxu0 0
    %3762 = vmatprep.subr.bf16.mxu0 0
    %3763 = vmatpush1.bf16.msra.mxu0 0
    %3764 = vmatprep.subr.bf16.mxu0 0
    %3765 = vmatpush1.bf16.msra.mxu0 0
    %3766 = vmatprep.subr.bf16.mxu0 0
    %3767 = vmatpush1.bf16.msra.mxu0 %v3750
    %3768 = vmatprep.subr.bf16.mxu0 0
    %3769 = vmatpush2.bf16.msra.mxu0 0
    %3770 = vmatprep.subr.bf16.mxu0 0
    %3771 = vmatpush2.bf16.msra.mxu0 0
    %3772 = vmatprep.subr.bf16.mxu0 0
    %3773 = vmatpush2.bf16.msra.mxu0 0
    %3774 = vmatprep.subr.bf16.mxu0 0
    %3775 = vmatpush2.bf16.msra.mxu0 0
    %3776 = vmatprep.subr.bf16.mxu0 0
    %3777 = vmatpush2.bf16.msra.mxu0 0
    %3778 = vmatprep.subr.bf16.mxu0 0
    %3779 = vmatpush2.bf16.msra.mxu0 0
    %3780 = vmatprep.subr.bf16.mxu0 0
    %3781 = vmatpush2.bf16.msra.mxu0 0
    %3782 = vmatprep.subr.bf16.mxu0 0
    %3783 = vmatpush2.bf16.msra.mxu0 0
    %3784 = vmatprep.mubr.bf16.mxu0 0
    %3785 = vmatmul.mubr.bf16.gmra.mxu0 %v3747
    %v3786 = vpop.f32.mrf.mxu0
    %v3787 = vadd.f32 0.0, %v3786
    %v3788 = vpop.f32.mrf.mxu0
    %v3789 = vpop.f32.mrf.mxu0
    %v3790 = vpop.f32.mrf.mxu0
    %3791 = vdwg.mxu0
    %v3792 = vpack.c.bf16 %v3511, %v3465
    %v3793 = vld [vmem:[%s8] sm:$0xf]
    %v3795 = vsel %vm906, %v3792, 0
    %v3798 = vsel %vm1438, %v3793, 0
    %3800 = vmatprep.subr.bf16.mxu0 0
    %3801 = vmatpush1.bf16.msra.mxu0 0
    %3802 = vmatprep.subr.bf16.mxu0 0
    %3803 = vmatpush1.bf16.msra.mxu0 0
    %3804 = vmatprep.subr.bf16.mxu0 0
    %3805 = vmatpush1.bf16.msra.mxu0 0
    %3806 = vmatprep.subr.bf16.mxu0 0
    %3807 = vmatpush1.bf16.msra.mxu0 0
    %3808 = vmatprep.subr.bf16.mxu0 0
    %3809 = vmatpush1.bf16.msra.mxu0 0
    %3810 = vmatprep.subr.bf16.mxu0 0
    %3811 = vmatpush1.bf16.msra.mxu0 0
    %3812 = vmatprep.subr.bf16.mxu0 0
    %3813 = vmatpush1.bf16.msra.mxu0 0
    %3814 = vmatprep.subr.bf16.mxu0 0
    %3815 = vmatpush1.bf16.msra.mxu0 %v3798
    %3816 = vmatprep.subr.bf16.mxu0 0
    %3817 = vmatpush2.bf16.msra.mxu0 0
    %3818 = vmatprep.subr.bf16.mxu0 0
    %3819 = vmatpush2.bf16.msra.mxu0 0
    %3820 = vmatprep.subr.bf16.mxu0 0
    %3821 = vmatpush2.bf16.msra.mxu0 0
    %3822 = vmatprep.subr.bf16.mxu0 0
    %3823 = vmatpush2.bf16.msra.mxu0 0
    %3824 = vmatprep.subr.bf16.mxu0 0
    %3825 = vmatpush2.bf16.msra.mxu0 0
    %3826 = vmatprep.subr.bf16.mxu0 0
    %3827 = vmatpush2.bf16.msra.mxu0 0
    %3828 = vmatprep.subr.bf16.mxu0 0
    %3829 = vmatpush2.bf16.msra.mxu0 0
    %3830 = vmatprep.subr.bf16.mxu0 0
    %3831 = vmatpush2.bf16.msra.mxu0 0
    %3832 = vmatprep.mubr.bf16.mxu0 0
    %3833 = vmatmul.mubr.bf16.gmra.mxu0 %v3795
    %v3834 = vpop.f32.mrf.mxu0
    %v3835 = vadd.f32 0.0, %v3834
    %v3836 = vpop.f32.mrf.mxu0
    %v3837 = vpop.f32.mrf.mxu0
    %v3838 = vadd.f32 0.0, %v3837
    %v3839 = vpop.f32.mrf.mxu0
    %3840 = vdwg.mxu0
    %v3842 = vlaneseq
    %v3843 = vshrl.u32 %v3842, 7
    %v3844 = vsub.s32 0, %v3843
    %v3845 = vrot.slane %v64, %v3844
    %v3847 = vadd.f32 %v3845, %v3835
    %v3848 = vadd.f32 %v3845, %v3838
    %v3849 = vpack.c.bf16 %v3603, %v3557
    %s3850 = scalar_lea.vmem %s8, 4
    %v3851 = vld [vmem:[%s3850] sm:$0xf]
    %v3853 = vsel %vm906, %v3849, 0
    %v3856 = vsel %vm1438, %v3851, 0
    %3858 = vmatprep.subr.bf16.mxu0 0
    %3859 = vmatpush1.bf16.msra.mxu0 0
    %3860 = vmatprep.subr.bf16.mxu0 0
    %3861 = vmatpush1.bf16.msra.mxu0 0
    %3862 = vmatprep.subr.bf16.mxu0 0
    %3863 = vmatpush1.bf16.msra.mxu0 0
    %3864 = vmatprep.subr.bf16.mxu0 0
    %3865 = vmatpush1.bf16.msra.mxu0 0
    %3866 = vmatprep.subr.bf16.mxu0 0
    %3867 = vmatpush1.bf16.msra.mxu0 0
    %3868 = vmatprep.subr.bf16.mxu0 0
    %3869 = vmatpush1.bf16.msra.mxu0 0
    %3870 = vmatprep.subr.bf16.mxu0 0
    %3871 = vmatpush1.bf16.msra.mxu0 0
    %3872 = vmatprep.subr.bf16.mxu0 0
    %3873 = vmatpush1.bf16.msra.mxu0 %v3856
    %3874 = vmatprep.subr.bf16.mxu0 0
    %3875 = vmatpush2.bf16.msra.mxu0 0
    %3876 = vmatprep.subr.bf16.mxu0 0
    %3877 = vmatpush2.bf16.msra.mxu0 0
    %3878 = vmatprep.subr.bf16.mxu0 0
    %3879 = vmatpush2.bf16.msra.mxu0 0
    %3880 = vmatprep.subr.bf16.mxu0 0
    %3881 = vmatpush2.bf16.msra.mxu0 0
    %3882 = vmatprep.subr.bf16.mxu0 0
    %3883 = vmatpush2.bf16.msra.mxu0 0
    %3884 = vmatprep.subr.bf16.mxu0 0
    %3885 = vmatpush2.bf16.msra.mxu0 0
    %3886 = vmatprep.subr.bf16.mxu0 0
    %3887 = vmatpush2.bf16.msra.mxu0 0
    %3888 = vmatprep.subr.bf16.mxu0 0
    %3889 = vmatpush2.bf16.msra.mxu0 0
    %3890 = vmatprep.mubr.bf16.mxu0 0
    %3891 = vmatmul.mubr.bf16.gmra.mxu0 %v3853
    %v3892 = vpop.f32.mrf.mxu0
    %v3893 = vadd.f32 0.0, %v3892
    %v3894 = vpop.f32.mrf.mxu0
    %v3895 = vpop.f32.mrf.mxu0
    %v3896 = vadd.f32 0.0, %v3895
    %v3897 = vpop.f32.mrf.mxu0
    %3898 = vdwg.mxu0
    %v3899 = vadd.f32 %v3847, %v3893
    %v3900 = vadd.f32 %v3848, %v3896
    %v3901 = vpack.c.bf16 %v3695, %v3649
    %s3902 = scalar_lea.vmem %s8, 8
    %v3903 = vld [vmem:[%s3902] sm:$0xf]
    %v3905 = vsel %vm906, %v3901, 0
    %v3908 = vsel %vm1438, %v3903, 0
    %3910 = vmatprep.subr.bf16.mxu0 0
    %3911 = vmatpush1.bf16.msra.mxu0 0
    %3912 = vmatprep.subr.bf16.mxu0 0
    %3913 = vmatpush1.bf16.msra.mxu0 0
    %3914 = vmatprep.subr.bf16.mxu0 0
    %3915 = vmatpush1.bf16.msra.mxu0 0
    %3916 = vmatprep.subr.bf16.mxu0 0
    %3917 = vmatpush1.bf16.msra.mxu0 0
    %3918 = vmatprep.subr.bf16.mxu0 0
    %3919 = vmatpush1.bf16.msra.mxu0 0
    %3920 = vmatprep.subr.bf16.mxu0 0
    %3921 = vmatpush1.bf16.msra.mxu0 0
    %3922 = vmatprep.subr.bf16.mxu0 0
    %3923 = vmatpush1.bf16.msra.mxu0 0
    %3924 = vmatprep.subr.bf16.mxu0 0
    %3925 = vmatpush1.bf16.msra.mxu0 %v3908
    %3926 = vmatprep.subr.bf16.mxu0 0
    %3927 = vmatpush2.bf16.msra.mxu0 0
    %3928 = vmatprep.subr.bf16.mxu0 0
    %3929 = vmatpush2.bf16.msra.mxu0 0
    %3930 = vmatprep.subr.bf16.mxu0 0
    %3931 = vmatpush2.bf16.msra.mxu0 0
    %3932 = vmatprep.subr.bf16.mxu0 0
    %3933 = vmatpush2.bf16.msra.mxu0 0
    %3934 = vmatprep.subr.bf16.mxu0 0
    %3935 = vmatpush2.bf16.msra.mxu0 0
    %3936 = vmatprep.subr.bf16.mxu0 0
    %3937 = vmatpush2.bf16.msra.mxu0 0
    %3938 = vmatprep.subr.bf16.mxu0 0
    %3939 = vmatpush2.bf16.msra.mxu0 0
    %3940 = vmatprep.subr.bf16.mxu0 0
    %3941 = vmatpush2.bf16.msra.mxu0 0
    %3942 = vmatprep.mubr.bf16.mxu0 0
    %3943 = vmatmul.mubr.bf16.gmra.mxu0 %v3905
    %v3944 = vpop.f32.mrf.mxu0
    %v3945 = vadd.f32 0.0, %v3944
    %v3946 = vpop.f32.mrf.mxu0
    %v3947 = vpop.f32.mrf.mxu0
    %v3948 = vadd.f32 0.0, %v3947
    %v3949 = vpop.f32.mrf.mxu0
    %3950 = vdwg.mxu0
    %v3951 = vadd.f32 %v3899, %v3945
    %v3952 = vadd.f32 %v3900, %v3948
    %v3953 = vpack.c.bf16 %v3787, %v3741
    %s3954 = scalar_lea.vmem %s8, 12
    %v3955 = vld [vmem:[%s3954] sm:$0xf]
    %v3957 = vsel %vm906, %v3953, 0
    %v3960 = vsel %vm1438, %v3955, 0
    %3962 = vmatprep.subr.bf16.mxu0 0
    %3963 = vmatpush1.bf16.msra.mxu0 0
    %3964 = vmatprep.subr.bf16.mxu0 0
    %3965 = vmatpush1.bf16.msra.mxu0 0
    %3966 = vmatprep.subr.bf16.mxu0 0
    %3967 = vmatpush1.bf16.msra.mxu0 0
    %3968 = vmatprep.subr.bf16.mxu0 0
    %3969 = vmatpush1.bf16.msra.mxu0 0
    %3970 = vmatprep.subr.bf16.mxu0 0
    %3971 = vmatpush1.bf16.msra.mxu0 0
    %3972 = vmatprep.subr.bf16.mxu0 0
    %3973 = vmatpush1.bf16.msra.mxu0 0
    %3974 = vmatprep.subr.bf16.mxu0 0
    %3975 = vmatpush1.bf16.msra.mxu0 0
    %3976 = vmatprep.subr.bf16.mxu0 0
    %3977 = vmatpush1.bf16.msra.mxu0 %v3960
    %3978 = vmatprep.subr.bf16.mxu0 0
    %3979 = vmatpush2.bf16.msra.mxu0 0
    %3980 = vmatprep.subr.bf16.mxu0 0
    %3981 = vmatpush2.bf16.msra.mxu0 0
    %3982 = vmatprep.subr.bf16.mxu0 0
    %3983 = vmatpush2.bf16.msra.mxu0 0
    %3984 = vmatprep.subr.bf16.mxu0 0
    %3985 = vmatpush2.bf16.msra.mxu0 0
    %3986 = vmatprep.subr.bf16.mxu0 0
    %3987 = vmatpush2.bf16.msra.mxu0 0
    %3988 = vmatprep.subr.bf16.mxu0 0
    %3989 = vmatpush2.bf16.msra.mxu0 0
    %3990 = vmatprep.subr.bf16.mxu0 0
    %3991 = vmatpush2.bf16.msra.mxu0 0
    %3992 = vmatprep.subr.bf16.mxu0 0
    %3993 = vmatpush2.bf16.msra.mxu0 0
    %3994 = vmatprep.mubr.bf16.mxu0 0
    %3995 = vmatmul.mubr.bf16.gmra.mxu0 %v3957
    %v3996 = vpop.f32.mrf.mxu0
    %v3997 = vadd.f32 0.0, %v3996
    %v3998 = vpop.f32.mrf.mxu0
    %v3999 = vpop.f32.mrf.mxu0
    %v4000 = vadd.f32 0.0, %v3999
    %v4001 = vpop.f32.mrf.mxu0
    %4002 = vdwg.mxu0
    %v4003 = vadd.f32 %v3951, %v3997
    %v4004 = vadd.f32 %v3952, %v4000
    %v4005 = vadd.f32 %v2060, %v4003
    %v4006 = vadd.f32 %v2061, %v4004
    %v4007 = vsel %vm103, %v4005, 0.0
    %4008 = vadd.xlane.f32.xlu0 %v4007
    %v4009 = vpop.xlane.xlu0 %4008
    %v4010 = vsel %vm103, %v4006, 0.0
    %4011 = vadd.xlane.f32.xlu0 %v4010
    %v4012 = vpop.xlane.xlu0 %4011
    %v4013 = vmul.f32 %v4009, %v2025
    %v4014 = vmul.f32 %v4012, %v2025
    %v4015 = vsub.f32 %v4005, %v4013
    %v4016 = vsub.f32 %v4006, %v4014
    %v4017 = vmul.f32 %v4015, %v4015
    %v4018 = vmul.f32 %v4016, %v4016
    %v4019 = vsel %vm103, %v4017, 0.0
    %4020 = vadd.xlane.f32.xlu0 %v4019
    %v4021 = vpop.xlane.xlu0 %4020
    %v4022 = vsel %vm103, %v4018, 0.0
    %4023 = vadd.xlane.f32.xlu0 %v4022
    %v4024 = vpop.xlane.xlu0 %4023
    %v4025 = vmul.f32 %v4021, %v2025
    %v4026 = vmul.f32 %v4024, %v2025
    %v4027 = vadd.f32 %v4025, 1e-05
    %v4028 = vadd.f32 %v4026, 1e-05
    %v4029 = vrsqrt.pop %v4027
    %v4030 = vrsqrt.pop %v4028
    %v4031 = vmul.f32 %v4015, %v4029
    %v4032 = vmul.f32 %v4016, %v4030
    %v4034 = vlaneseq
    %v4035 = vshrl.u32 %v4034, 7
    %v4036 = vsub.s32 0, %v4035
    %v4037 = vrot.slane %v56, %v4036
    %v4039 = vmul.f32 %v4031, %v4037
    %v4040 = vmul.f32 %v4032, %v4037
    %v4042 = vlaneseq
    %v4043 = vshrl.u32 %v4042, 7
    %v4044 = vsub.s32 0, %v4043
    %v4045 = vrot.slane %v58, %v4044
    %v4047 = vadd.f32 %v4039, %v4045
    %v4048 = vadd.f32 %v4040, %v4045
    %v4049 = vpack.c.bf16 %v4048, %v4047
    %v4051 = vlaneseq
    %v4052 = vshrl.u32 %v4051, 7
    %v4053 = vsub.s32 0, %v4052
    %v4054 = vrot.slane %v69, %v4053
    %v4060 = vunpack.c.l.b16 %v65
    %v4061 = vunpack.c.l.b16 %v66
    %v4062 = vunpack.c.l.b16 %v67
    %v4063 = vunpack.c.l.b16 %v68
    %v4064 = vpack.c.b16 %v4061, %v4060
    %v4065 = vpack.c.b16 %v4063, %v4062
    %v4069 = vsel %vm103, %v4049, 0
    %4071 = vmatprep.subr.bf16.mxu0 0
    %4072 = vmatpush1.bf16.msra.mxu0 0
    %4073 = vmatprep.subr.bf16.mxu0 0
    %4074 = vmatpush1.bf16.msra.mxu0 0
    %4075 = vmatprep.subr.bf16.mxu0 0
    %4076 = vmatpush1.bf16.msra.mxu0 0
    %4077 = vmatprep.subr.bf16.mxu0 0
    %4078 = vmatpush1.bf16.msra.mxu0 0
    %4079 = vmatprep.subr.bf16.mxu0 0
    %4080 = vmatpush1.bf16.msra.mxu0 0
    %4081 = vmatprep.subr.bf16.mxu0 0
    %4082 = vmatpush1.bf16.msra.mxu0 0
    %4083 = vmatprep.subr.bf16.mxu0 0
    %4084 = vmatpush1.bf16.msra.mxu0 %v4065
    %4085 = vmatprep.subr.bf16.mxu0 0
    %4086 = vmatpush1.bf16.msra.mxu0 %v4064
    %4087 = vmatprep.subr.bf16.mxu0 0
    %4088 = vmatpush2.bf16.msra.mxu0 0
    %4089 = vmatprep.subr.bf16.mxu0 0
    %4090 = vmatpush2.bf16.msra.mxu0 0
    %4091 = vmatprep.subr.bf16.mxu0 0
    %4092 = vmatpush2.bf16.msra.mxu0 0
    %4093 = vmatprep.subr.bf16.mxu0 0
    %4094 = vmatpush2.bf16.msra.mxu0 0
    %4095 = vmatprep.subr.bf16.mxu0 0
    %4096 = vmatpush2.bf16.msra.mxu0 0
    %4097 = vmatprep.subr.bf16.mxu0 0
    %4098 = vmatpush2.bf16.msra.mxu0 0
    %4099 = vmatprep.subr.bf16.mxu0 0
    %4100 = vmatpush2.bf16.msra.mxu0 0
    %4101 = vmatprep.subr.bf16.mxu0 0
    %4102 = vmatpush2.bf16.msra.mxu0 0
    %4103 = vmatprep.mubr.bf16.mxu0 0
    %4104 = vmatmul.mubr.bf16.gmra.mxu0 %v4069
    %v4105 = vpop.f32.mrf.mxu0
    %v4106 = vadd.f32 %v4054, %v4105
    %v4107 = vpop.f32.mrf.mxu0
    %v4108 = vpop.f32.mrf.mxu0
    %v4109 = vadd.f32 %v4054, %v4108
    %v4110 = vpop.f32.mrf.mxu0
    %4111 = vdwg.mxu0
    %v4112 = vmax.f32 %v4106, 0.0
    %v4113 = vmax.f32 %v4109, 0.0
    %v4114 = vpack.c.bf16 %v4113, %v4112
    %v4116 = vlaneseq
    %v4117 = vshrl.u32 %v4116, 7
    %v4118 = vsub.s32 0, %v4117
    %v4119 = vrot.slane %v74, %v4118
    %v4125 = vunpack.c.l.b16 %v70
    %v4126 = vunpack.c.l.b16 %v71
    %v4127 = vunpack.c.l.b16 %v72
    %v4128 = vunpack.c.l.b16 %v73
    %v4129 = vpack.c.b16 %v4126, %v4125
    %v4130 = vpack.c.b16 %v4128, %v4127
    %v4134 = vsel %vm103, %v4114, 0
    %4136 = vmatprep.subr.bf16.mxu0 0
    %4137 = vmatpush1.bf16.msra.mxu0 0
    %4138 = vmatprep.subr.bf16.mxu0 0
    %4139 = vmatpush1.bf16.msra.mxu0 0
    %4140 = vmatprep.subr.bf16.mxu0 0
    %4141 = vmatpush1.bf16.msra.mxu0 0
    %4142 = vmatprep.subr.bf16.mxu0 0
    %4143 = vmatpush1.bf16.msra.mxu0 0
    %4144 = vmatprep.subr.bf16.mxu0 0
    %4145 = vmatpush1.bf16.msra.mxu0 0
    %4146 = vmatprep.subr.bf16.mxu0 0
    %4147 = vmatpush1.bf16.msra.mxu0 0
    %4148 = vmatprep.subr.bf16.mxu0 0
    %4149 = vmatpush1.bf16.msra.mxu0 %v4130
    %4150 = vmatprep.subr.bf16.mxu0 0
    %4151 = vmatpush1.bf16.msra.mxu0 %v4129
    %4152 = vmatprep.subr.bf16.mxu0 0
    %4153 = vmatpush2.bf16.msra.mxu0 0
    %4154 = vmatprep.subr.bf16.mxu0 0
    %4155 = vmatpush2.bf16.msra.mxu0 0
    %4156 = vmatprep.subr.bf16.mxu0 0
    %4157 = vmatpush2.bf16.msra.mxu0 0
    %4158 = vmatprep.subr.bf16.mxu0 0
    %4159 = vmatpush2.bf16.msra.mxu0 0
    %4160 = vmatprep.subr.bf16.mxu0 0
    %4161 = vmatpush2.bf16.msra.mxu0 0
    %4162 = vmatprep.subr.bf16.mxu0 0
    %4163 = vmatpush2.bf16.msra.mxu0 0
    %4164 = vmatprep.subr.bf16.mxu0 0
    %4165 = vmatpush2.bf16.msra.mxu0 0
    %4166 = vmatprep.subr.bf16.mxu0 0
    %4167 = vmatpush2.bf16.msra.mxu0 0
    %4168 = vmatprep.mubr.bf16.mxu0 0
    %4169 = vmatmul.mubr.bf16.gmra.mxu0 %v4134
    %v4170 = vpop.f32.mrf.mxu0
    %v4171 = vadd.f32 %v4119, %v4170
    %v4172 = vpop.f32.mrf.mxu0
    %v4173 = vpop.f32.mrf.mxu0
    %v4174 = vadd.f32 %v4119, %v4173
    %v4175 = vpop.f32.mrf.mxu0
    %4176 = vdwg.mxu0
    %v4177 = vadd.f32 %v4047, %v4171
    %v4178 = vadd.f32 %v4048, %v4174
    %v4179 = vsel %vm103, %v4177, 0.0
    %4180 = vadd.xlane.f32.xlu0 %v4179
    %v4181 = vpop.xlane.xlu0 %4180
    %v4182 = vsel %vm103, %v4178, 0.0
    %4183 = vadd.xlane.f32.xlu0 %v4182
    %v4184 = vpop.xlane.xlu0 %4183
    %v4185 = vmul.f32 %v4181, %v2025
    %v4186 = vmul.f32 %v4184, %v2025
    %v4187 = vsub.f32 %v4177, %v4185
    %v4188 = vsub.f32 %v4178, %v4186
    %v4189 = vmul.f32 %v4187, %v4187
    %v4190 = vmul.f32 %v4188, %v4188
    %v4191 = vsel %vm103, %v4189, 0.0
    %4192 = vadd.xlane.f32.xlu0 %v4191
    %v4193 = vpop.xlane.xlu0 %4192
    %v4194 = vsel %vm103, %v4190, 0.0
    %4195 = vadd.xlane.f32.xlu0 %v4194
    %v4196 = vpop.xlane.xlu0 %4195
    %v4197 = vmul.f32 %v4193, %v2025
    %v4198 = vmul.f32 %v4196, %v2025
    %v4199 = vadd.f32 %v4197, 1e-05
    %v4200 = vadd.f32 %v4198, 1e-05
    %v4201 = vrsqrt.pop %v4199
    %v4202 = vrsqrt.pop %v4200
    %v4203 = vmul.f32 %v4187, %v4201
    %v4204 = vmul.f32 %v4188, %v4202
    %v4206 = vlaneseq
    %v4207 = vshrl.u32 %v4206, 7
    %v4208 = vsub.s32 0, %v4207
    %v4209 = vrot.slane %v60, %v4208
    %v4211 = vmul.f32 %v4203, %v4209
    %v4212 = vmul.f32 %v4204, %v4209
    %v4214 = vlaneseq
    %v4215 = vshrl.u32 %v4214, 7
    %v4216 = vsub.s32 0, %v4215
    %v4217 = vrot.slane %v62, %v4216
    %v4219 = vadd.f32 %v4211, %v4217
    %v4220 = vadd.f32 %v4212, %v4217
    %4221 = vst.msk [vmem:[#allocation2] sm:$0xff] %vm103, %v4219
    %4222 = vst.msk [vmem:[#allocation2 + $0x8] sm:$0xff] %vm103, %v4220
    // Predicated region
    $region62: #{tpu_custom_call.1} parent=1 // pred_check
      _
    $region63: #{tpu_custom_call.1} parent=1 // pred_check_branch
      %4224 = sbr.rel (0) target = $region65
    $region64: #{tpu_custom_call.1} parent=1 // pred_region
      %s4226 = ssub.s32 256, 256
      %4227 = vsyncadd [#allocation3], %s4226
      %s4228 = sshll.u32 [#allocation2], 4
      %s4229 = int_to_ptr.vmem [resolvable:$true] %s4228
      %4234 = dma.vmem_to_hbm [thread:$0]  %s4229, 256, %s15, [#allocation3], 128, 128, 8
    $region65: #{tpu_custom_call.1} parent=1 // pred_fallthru
      _
    // Predicated region
    $region66: #{tpu_custom_call.1} parent=1 // pred_check
      _
    $region67: #{tpu_custom_call.1} parent=1 // pred_check_branch
      %4236 = sbr.rel (0) target = $region69
    $region68: #{tpu_custom_call.1} parent=1 // pred_region
      %4237 = dma.done [#allocation3], 256
    $region69: #{tpu_custom_call.1} parent=1 // pred_fallthru
      _
    %4238 = vsyncpa [#allocation3], 1

// kernel: tpu_custom_call.1
$region0: #{tpu_custom_call.1}
  #allocation0 [shape = 'u32[]', space=smem, size = 0x4, offset = 0x4, fixed_abs, tag = 'smem constant byte address 0x4 - core index']
  #allocation1 [shape = 'u32[144,128]{1,0:T(1,128)}', space=vmem, size = 0x12000, scoped, tag = 'internal scratch']
  %s0 = inlined_call_operand.vmem [shape: f32[16,32], index: 0, kind: input, shape index: {}]
  %s1 = inlined_call_operand.vmem [shape: bf16[16,32], index: 1, kind: input, shape index: {}]
  %s2 = inlined_call_operand.vmem [shape: bf16[3,4,32,8], index: 2, kind: input, shape index: {}]
  %s3 = inlined_call_operand.vmem [shape: f32[3,4,1,8], index: 3, kind: input, shape index: {}]
  %s4 = inlined_call_operand.vmem [shape: bf16[4,8,32], index: 4, kind: input, shape index: {}]
  %s5 = inlined_call_operand.vmem [shape: f32[1,32], index: 5, kind: input, shape index: {}]
  %s6 = inlined_call_operand.vmem [shape: bf16[3,4,32,8], index: 6, kind: input, shape index: {}]
  %s7 = inlined_call_operand.vmem [shape: f32[3,4,1,8], index: 7, kind: input, shape index: {}]
  %s8 = inlined_call_operand.vmem [shape: bf16[4,8,32], index: 8, kind: input, shape index: {}]
  %s9 = inlined_call_operand.vmem [shape: f32[1,32], index: 9, kind: input, shape index: {}]
  %s10 = inlined_call_operand.vmem [shape: f32[6,1,32], index: 10, kind: input, shape index: {}]
  %s11 = inlined_call_operand.vmem [shape: bf16[32,32], index: 11, kind: input, shape index: {}]
  %s12 = inlined_call_operand.vmem [shape: f32[1,32], index: 12, kind: input, shape index: {}]
  %s13 = inlined_call_operand.vmem [shape: bf16[32,32], index: 13, kind: input, shape index: {}]
  %s14 = inlined_call_operand.vmem [shape: f32[1,32], index: 14, kind: input, shape index: {}]
  %s15 = inlined_call_operand.hbm [shape: f32[16,32], index: 15, kind: output, shape index: {}]
  %s16 = sld [smem:[#allocation0]]
  $region70: #{tpu_custom_call.1} parent=0
    _
  %s18 = ssub.s32 1, %s16
  %s19 = scalar_select 0, %s18, %s16
  $region1: #{tpu_custom_call.1} parent=0
    #allocation2 [shape = 'u8[8192]{0}', space=vmem, size = 0x2000, scoped, tag = 'output window, operand 0, single buffered']
    #allocation3 [shape = 's32[1]{0}', space=sflag, size = 0x4, scoped, tag = 'scoped memory for tpu_custom_call.1']
    %20 = vsyncpa [#allocation3], 0
    // Predicated region
    $region2: #{tpu_custom_call.1} parent=1 // pred_check
      _
    $region3: #{tpu_custom_call.1} parent=1 // pred_check_branch
      %22 = sbr.rel (0) target = $region5
    $region4: #{tpu_custom_call.1} parent=1 // pred_region
      _
    $region5: #{tpu_custom_call.1} parent=1 // pred_fallthru
      _
    // Predicated region
    $region6: #{tpu_custom_call.1} parent=1 // pred_check
      _
    $region7: #{tpu_custom_call.1} parent=1 // pred_check_branch
      %24 = sbr.rel (0) target = $region9
    $region8: #{tpu_custom_call.1} parent=1 // pred_region
      _
    $region9: #{tpu_custom_call.1} parent=1 // pred_fallthru
      _
    // Predicated region
    $region10: #{tpu_custom_call.1} parent=1 // pred_check
      _
    $region11: #{tpu_custom_call.1} parent=1 // pred_check_branch
      %26 = sbr.rel (0) target = $region13
    $region12: #{tpu_custom_call.1} parent=1 // pred_region
      _
    $region13: #{tpu_custom_call.1} parent=1 // pred_fallthru
      _
    // Predicated region
    $region14: #{tpu_custom_call.1} parent=1 // pred_check
      _
    $region15: #{tpu_custom_call.1} parent=1 // pred_check_branch
      %28 = sbr.rel (0) target = $region17
    $region16: #{tpu_custom_call.1} parent=1 // pred_region
      _
    $region17: #{tpu_custom_call.1} parent=1 // pred_fallthru
      _
    // Predicated region
    $region18: #{tpu_custom_call.1} parent=1 // pred_check
      _
    $region19: #{tpu_custom_call.1} parent=1 // pred_check_branch
      %30 = sbr.rel (0) target = $region21
    $region20: #{tpu_custom_call.1} parent=1 // pred_region
      _
    $region21: #{tpu_custom_call.1} parent=1 // pred_fallthru
      _
    // Predicated region
    $region22: #{tpu_custom_call.1} parent=1 // pred_check
      _
    $region23: #{tpu_custom_call.1} parent=1 // pred_check_branch
      %32 = sbr.rel (0) target = $region25
    $region24: #{tpu_custom_call.1} parent=1 // pred_region
      _
    $region25: #{tpu_custom_call.1} parent=1 // pred_fallthru
      _
    // Predicated region
    $region26: #{tpu_custom_call.1} parent=1 // pred_check
      _
    $region27: #{tpu_custom_call.1} parent=1 // pred_check_branch
      %34 = sbr.rel (0) target = $region29
    $region28: #{tpu_custom_call.1} parent=1 // pred_region
      _
    $region29: #{tpu_custom_call.1} parent=1 // pred_fallthru
      _
    // Predicated region
    $region30: #{tpu_custom_call.1} parent=1 // pred_check
      _
    $region31: #{tpu_custom_call.1} parent=1 // pred_check_branch
      %36 = sbr.rel (0) target = $region33
    $region32: #{tpu_custom_call.1} parent=1 // pred_region
      _
    $region33: #{tpu_custom_call.1} parent=1 // pred_fallthru
      _
    // Predicated region
    $region34: #{tpu_custom_call.1} parent=1 // pred_check
      _
    $region35: #{tpu_custom_call.1} parent=1 // pred_check_branch
      %38 = sbr.rel (0) target = $region37
    $region36: #{tpu_custom_call.1} parent=1 // pred_region
      _
    $region37: #{tpu_custom_call.1} parent=1 // pred_fallthru
      _
    // Predicated region
    $region38: #{tpu_custom_call.1} parent=1 // pred_check
      _
    $region39: #{tpu_custom_call.1} parent=1 // pred_check_branch
      %40 = sbr.rel (0) target = $region41
    $region40: #{tpu_custom_call.1} parent=1 // pred_region
      _
    $region41: #{tpu_custom_call.1} parent=1 // pred_fallthru
      _
    // Predicated region
    $region42: #{tpu_custom_call.1} parent=1 // pred_check
      _
    $region43: #{tpu_custom_call.1} parent=1 // pred_check_branch
      %42 = sbr.rel (0) target = $region45
    $region44: #{tpu_custom_call.1} parent=1 // pred_region
      _
    $region45: #{tpu_custom_call.1} parent=1 // pred_fallthru
      _
    // Predicated region
    $region46: #{tpu_custom_call.1} parent=1 // pred_check
      _
    $region47: #{tpu_custom_call.1} parent=1 // pred_check_branch
      %44 = sbr.rel (0) target = $region49
    $region48: #{tpu_custom_call.1} parent=1 // pred_region
      _
    $region49: #{tpu_custom_call.1} parent=1 // pred_fallthru
      _
    // Predicated region
    $region50: #{tpu_custom_call.1} parent=1 // pred_check
      _
    $region51: #{tpu_custom_call.1} parent=1 // pred_check_branch
      %46 = sbr.rel (0) target = $region53
    $region52: #{tpu_custom_call.1} parent=1 // pred_region
      _
    $region53: #{tpu_custom_call.1} parent=1 // pred_fallthru
      _
    // Predicated region
    $region54: #{tpu_custom_call.1} parent=1 // pred_check
      _
    $region55: #{tpu_custom_call.1} parent=1 // pred_check_branch
      %48 = sbr.rel (0) target = $region57
    $region56: #{tpu_custom_call.1} parent=1 // pred_region
      _
    $region57: #{tpu_custom_call.1} parent=1 // pred_fallthru
      _
    // Predicated region
    $region58: #{tpu_custom_call.1} parent=1 // pred_check
      _
    $region59: #{tpu_custom_call.1} parent=1 // pred_check_branch
      %50 = sbr.rel (0) target = $region61
    $region60: #{tpu_custom_call.1} parent=1 // pred_region
      _
    $region61: #{tpu_custom_call.1} parent=1 // pred_fallthru
      _
    %v52 = vld [vmem:[%s10] sm:$0x1]
    %s53 = scalar_lea.vmem %s10, 1
    %v54 = vld [vmem:[%s53] sm:$0x1]
    %s55 = scalar_lea.vmem %s10, 2
    %v56 = vld [vmem:[%s55] sm:$0x1]
    %s57 = scalar_lea.vmem %s10, 3
    %v58 = vld [vmem:[%s57] sm:$0x1]
    %s59 = scalar_lea.vmem %s10, 4
    %v60 = vld [vmem:[%s59] sm:$0x1]
    %s61 = scalar_lea.vmem %s10, 5
    %v62 = vld [vmem:[%s61] sm:$0x1]
    %v63 = vld [vmem:[%s5] sm:$0x1]
    %v64 = vld [vmem:[%s9] sm:$0x1]
    %v65 = vld [vmem:[%s11] sm:$0xf]
    %v66 = vld [vmem:[%s11 + $0x4] sm:$0xf]
    %v67 = vld [vmem:[%s11 + $0x8] sm:$0xf]
    %v68 = vld [vmem:[%s11 + $0xc] sm:$0xf]
    %v69 = vld [vmem:[%s12] sm:$0x1]
    %v70 = vld [vmem:[%s13] sm:$0xf]
    %v71 = vld [vmem:[%s13 + $0x4] sm:$0xf]
    %v72 = vld [vmem:[%s13 + $0x8] sm:$0xf]
    %v73 = vld [vmem:[%s13 + $0xc] sm:$0xf]
    %v74 = vld [vmem:[%s14] sm:$0x1]
    %v75 = vld [vmem:[%s0] sm:$0xff]
    %v76 = vld [vmem:[%s0 + $0x8] sm:$0xff]
    %v77 = vld [vmem:[%s1] sm:$0xf]
    %v78 = vld [vmem:[%s1 + $0x4] sm:$0xf]
    %v79 = vpack.c.bf16 %v76, %v75
    %v80 = vld [vmem:[%s2] sm:$0xf]
    %v81 = vld [vmem:[%s2 + $0x4] sm:$0xf]
    %v82 = vld [vmem:[%s2 + $0x8] sm:$0xf]
    %v83 = vld [vmem:[%s2 + $0xc] sm:$0xf]
    %v84 = vld [vmem:[%s3] sm:$0x1]
    %v86 = vlaneseq
    %v87 = vshrl.u32 %v86, 7
    %v88 = vsub.s32 0, %v87
    %v89 = vrot.slane %v84, %v88
    %v95 = vunpack.c.l.b16 %v80
    %v96 = vunpack.c.l.b16 %v81
    %v97 = vunpack.c.l.b16 %v82
    %v98 = vunpack.c.l.b16 %v83
    %v99 = vpack.c.b16 %v96, %v95
    %v100 = vpack.c.b16 %v98, %v97
    %vm103 = vcmask 261120
    %v105 = vsel %vm103, %v79, 0
    %107 = vmatprep.subr.bf16.mxu0 0
    %108 = vmatpush1.bf16.msra.mxu0 0
    %109 = vmatprep.subr.bf16.mxu0 0
    %110 = vmatpush1.bf16.msra.mxu0 0
    %111 = vmatprep.subr.bf16.mxu0 0
    %112 = vmatpush1.bf16.msra.mxu0 0
    %113 = vmatprep.subr.bf16.mxu0 0
    %114 = vmatpush1.bf16.msra.mxu0 0
    %115 = vmatprep.subr.bf16.mxu0 0
    %116 = vmatpush1.bf16.msra.mxu0 0
    %117 = vmatprep.subr.bf16.mxu0 0
    %118 = vmatpush1.bf16.msra.mxu0 0
    %119 = vmatprep.subr.bf16.mxu0 0
    %120 = vmatpush1.bf16.msra.mxu0 %v100
    %121 = vmatprep.subr.bf16.mxu0 0
    %122 = vmatpush1.bf16.msra.mxu0 %v99
    %123 = vmatprep.subr.bf16.mxu0 0
    %124 = vmatpush2.bf16.msra.mxu0 0
    %125 = vmatprep.subr.bf16.mxu0 0
    %126 = vmatpush2.bf16.msra.mxu0 0
    %127 = vmatprep.subr.bf16.mxu0 0
    %128 = vmatpush2.bf16.msra.mxu0 0
    %129 = vmatprep.subr.bf16.mxu0 0
    %130 = vmatpush2.bf16.msra.mxu0 0
    %131 = vmatprep.subr.bf16.mxu0 0
    %132 = vmatpush2.bf16.msra.mxu0 0
    %133 = vmatprep.subr.bf16.mxu0 0
    %134 = vmatpush2.bf16.msra.mxu0 0
    %135 = vmatprep.subr.bf16.mxu0 0
    %136 = vmatpush2.bf16.msra.mxu0 0
    %137 = vmatprep.subr.bf16.mxu0 0
    %138 = vmatpush2.bf16.msra.mxu0 0
    %139 = vmatprep.mubr.bf16.mxu0 0
    %140 = vmatmul.mubr.bf16.gmra.mxu0 %v105
    %v141 = vpop.f32.mrf.mxu0
    %v142 = vadd.f32 %v89, %v141
    %v143 = vpop.f32.mrf.mxu0
    %v144 = vpop.f32.mrf.mxu0
    %v145 = vadd.f32 %v89, %v144
    %v146 = vpop.f32.mrf.mxu0
    %147 = vdwg.mxu0
    %s148 = scalar_lea.vmem %s2, 64
    %v149 = vld [vmem:[%s148] sm:$0xf]
    %v150 = vld [vmem:[%s148 + $0x4] sm:$0xf]
    %v151 = vld [vmem:[%s148 + $0x8] sm:$0xf]
    %v152 = vld [vmem:[%s148 + $0xc] sm:$0xf]
    %s153 = scalar_lea.vmem %s3, 4
    %v154 = vld [vmem:[%s153] sm:$0x1]
    %v156 = vlaneseq
    %v157 = vshrl.u32 %v156, 7
    %v158 = vsub.s32 0, %v157
    %v159 = vrot.slane %v154, %v158
    %v165 = vunpack.c.l.b16 %v149
    %v166 = vunpack.c.l.b16 %v150
    %v167 = vunpack.c.l.b16 %v151
    %v168 = vunpack.c.l.b16 %v152
    %v169 = vpack.c.b16 %v166, %v165
    %v170 = vpack.c.b16 %v168, %v167
    %173 = vmatprep.subr.bf16.mxu0 0
    %174 = vmatpush1.bf16.msra.mxu0 0
    %175 = vmatprep.subr.bf16.mxu0 0
    %176 = vmatpush1.bf16.msra.mxu0 0
    %177 = vmatprep.subr.bf16.mxu0 0
    %178 = vmatpush1.bf16.msra.mxu0 0
    %179 = vmatprep.subr.bf16.mxu0 0
    %180 = vmatpush1.bf16.msra.mxu0 0
    %181 = vmatprep.subr.bf16.mxu0 0
    %182 = vmatpush1.bf16.msra.mxu0 0
    %183 = vmatprep.subr.bf16.mxu0 0
    %184 = vmatpush1.bf16.msra.mxu0 0
    %185 = vmatprep.subr.bf16.mxu0 0
    %186 = vmatpush1.bf16.msra.mxu0 %v170
    %187 = vmatprep.subr.bf16.mxu0 0
    %188 = vmatpush1.bf16.msra.mxu0 %v169
    %189 = vmatprep.subr.bf16.mxu0 0
    %190 = vmatpush2.bf16.msra.mxu0 0
    %191 = vmatprep.subr.bf16.mxu0 0
    %192 = vmatpush2.bf16.msra.mxu0 0
    %193 = vmatprep.subr.bf16.mxu0 0
    %194 = vmatpush2.bf16.msra.mxu0 0
    %195 = vmatprep.subr.bf16.mxu0 0
    %196 = vmatpush2.bf16.msra.mxu0 0
    %197 = vmatprep.subr.bf16.mxu0 0
    %198 = vmatpush2.bf16.msra.mxu0 0
    %199 = vmatprep.subr.bf16.mxu0 0
    %200 = vmatpush2.bf16.msra.mxu0 0
    %201 = vmatprep.subr.bf16.mxu0 0
    %202 = vmatpush2.bf16.msra.mxu0 0
    %203 = vmatprep.subr.bf16.mxu0 0
    %204 = vmatpush2.bf16.msra.mxu0 0
    %205 = vmatprep.mubr.bf16.mxu0 0
    %206 = vmatmul.mubr.bf16.gmra.mxu0 %v105
    %v207 = vpop.f32.mrf.mxu0
    %v208 = vadd.f32 %v159, %v207
    %v209 = vpop.f32.mrf.mxu0
    %v210 = vpop.f32.mrf.mxu0
    %v211 = vadd.f32 %v159, %v210
    %v212 = vpop.f32.mrf.mxu0
    %213 = vdwg.mxu0
    %s214 = scalar_lea.vmem %s2, 128
    %v215 = vld [vmem:[%s214] sm:$0xf]
    %v216 = vld [vmem:[%s214 + $0x4] sm:$0xf]
    %v217 = vld [vmem:[%s214 + $0x8] sm:$0xf]
    %v218 = vld [vmem:[%s214 + $0xc] sm:$0xf]
    %s219 = scalar_lea.vmem %s3, 8
    %v220 = vld [vmem:[%s219] sm:$0x1]
    %v222 = vlaneseq
    %v223 = vshrl.u32 %v222, 7
    %v224 = vsub.s32 0, %v223
    %v225 = vrot.slane %v220, %v224
    %v231 = vunpack.c.l.b16 %v215
    %v232 = vunpack.c.l.b16 %v216
    %v233 = vunpack.c.l.b16 %v217
    %v234 = vunpack.c.l.b16 %v218
    %v235 = vpack.c.b16 %v232, %v231
    %v236 = vpack.c.b16 %v234, %v233
    %239 = vmatprep.subr.bf16.mxu0 0
    %240 = vmatpush1.bf16.msra.mxu0 0
    %241 = vmatprep.subr.bf16.mxu0 0
    %242 = vmatpush1.bf16.msra.mxu0 0
    %243 = vmatprep.subr.bf16.mxu0 0
    %244 = vmatpush1.bf16.msra.mxu0 0
    %245 = vmatprep.subr.bf16.mxu0 0
    %246 = vmatpush1.bf16.msra.mxu0 0
    %247 = vmatprep.subr.bf16.mxu0 0
    %248 = vmatpush1.bf16.msra.mxu0 0
    %249 = vmatprep.subr.bf16.mxu0 0
    %250 = vmatpush1.bf16.msra.mxu0 0
    %251 = vmatprep.subr.bf16.mxu0 0
    %252 = vmatpush1.bf16.msra.mxu0 %v236
    %253 = vmatprep.subr.bf16.mxu0 0
    %254 = vmatpush1.bf16.msra.mxu0 %v235
    %255 = vmatprep.subr.bf16.mxu0 0
    %256 = vmatpush2.bf16.msra.mxu0 0
    %257 = vmatprep.subr.bf16.mxu0 0
    %258 = vmatpush2.bf16.msra.mxu0 0
    %259 = vmatprep.subr.bf16.mxu0 0
    %260 = vmatpush2.bf16.msra.mxu0 0
    %261 = vmatprep.subr.bf16.mxu0 0
    %262 = vmatpush2.bf16.msra.mxu0 0
    %263 = vmatprep.subr.bf16.mxu0 0
    %264 = vmatpush2.bf16.msra.mxu0 0
    %265 = vmatprep.subr.bf16.mxu0 0
    %266 = vmatpush2.bf16.msra.mxu0 0
    %267 = vmatprep.subr.bf16.mxu0 0
    %268 = vmatpush2.bf16.msra.mxu0 0
    %269 = vmatprep.subr.bf16.mxu0 0
    %270 = vmatpush2.bf16.msra.mxu0 0
    %271 = vmatprep.mubr.bf16.mxu0 0
    %272 = vmatmul.mubr.bf16.gmra.mxu0 %v105
    %v273 = vpop.f32.mrf.mxu0
    %v274 = vadd.f32 %v225, %v273
    %v275 = vpop.f32.mrf.mxu0
    %v276 = vpop.f32.mrf.mxu0
    %v277 = vadd.f32 %v225, %v276
    %v278 = vpop.f32.mrf.mxu0
    %279 = vdwg.mxu0
    %v280 = vmul.f32 %v142, 0.35355338
    %v281 = vmul.f32 %v145, 0.35355338
    %s282 = scalar_lea.vmem %s2, 16
    %v283 = vld [vmem:[%s282] sm:$0xf]
    %v284 = vld [vmem:[%s282 + $0x4] sm:$0xf]
    %v285 = vld [vmem:[%s282 + $0x8] sm:$0xf]
    %v286 = vld [vmem:[%s282 + $0xc] sm:$0xf]
    %s287 = scalar_lea.vmem %s3, 1
    %v288 = vld [vmem:[%s287] sm:$0x1]
    %v290 = vlaneseq
    %v291 = vshrl.u32 %v290, 7
    %v292 = vsub.s32 0, %v291
    %v293 = vrot.slane %v288, %v292
    %v299 = vunpack.c.l.b16 %v283
    %v300 = vunpack.c.l.b16 %v284
    %v301 = vunpack.c.l.b16 %v285
    %v302 = vunpack.c.l.b16 %v286
    %v303 = vpack.c.b16 %v300, %v299
    %v304 = vpack.c.b16 %v302, %v301
    %307 = vmatprep.subr.bf16.mxu0 0
    %308 = vmatpush1.bf16.msra.mxu0 0
    %309 = vmatprep.subr.bf16.mxu0 0
    %310 = vmatpush1.bf16.msra.mxu0 0
    %311 = vmatprep.subr.bf16.mxu0 0
    %312 = vmatpush1.bf16.msra.mxu0 0
    %313 = vmatprep.subr.bf16.mxu0 0
    %314 = vmatpush1.bf16.msra.mxu0 0
    %315 = vmatprep.subr.bf16.mxu0 0
    %316 = vmatpush1.bf16.msra.mxu0 0
    %317 = vmatprep.subr.bf16.mxu0 0
    %318 = vmatpush1.bf16.msra.mxu0 0
    %319 = vmatprep.subr.bf16.mxu0 0
    %320 = vmatpush1.bf16.msra.mxu0 %v304
    %321 = vmatprep.subr.bf16.mxu0 0
    %322 = vmatpush1.bf16.msra.mxu0 %v303
    %323 = vmatprep.subr.bf16.mxu0 0
    %324 = vmatpush2.bf16.msra.mxu0 0
    %325 = vmatprep.subr.bf16.mxu0 0
    %326 = vmatpush2.bf16.msra.mxu0 0
    %327 = vmatprep.subr.bf16.mxu0 0
    %328 = vmatpush2.bf16.msra.mxu0 0
    %329 = vmatprep.subr.bf16.mxu0 0
    %330 = vmatpush2.bf16.msra.mxu0 0
    %331 = vmatprep.subr.bf16.mxu0 0
    %332 = vmatpush2.bf16.msra.mxu0 0
    %333 = vmatprep.subr.bf16.mxu0 0
    %334 = vmatpush2.bf16.msra.mxu0 0
    %335 = vmatprep.subr.bf16.mxu0 0
    %336 = vmatpush2.bf16.msra.mxu0 0
    %337 = vmatprep.subr.bf16.mxu0 0
    %338 = vmatpush2.bf16.msra.mxu0 0
    %339 = vmatprep.mubr.bf16.mxu0 0
    %340 = vmatmul.mubr.bf16.gmra.mxu0 %v105
    %v341 = vpop.f32.mrf.mxu0
    %v342 = vadd.f32 %v293, %v341
    %v343 = vpop.f32.mrf.mxu0
    %v344 = vpop.f32.mrf.mxu0
    %v345 = vadd.f32 %v293, %v344
    %v346 = vpop.f32.mrf.mxu0
    %347 = vdwg.mxu0
    %s348 = scalar_lea.vmem %s2, 80
    %v349 = vld [vmem:[%s348] sm:$0xf]
    %v350 = vld [vmem:[%s348 + $0x4] sm:$0xf]
    %v351 = vld [vmem:[%s348 + $0x8] sm:$0xf]
    %v352 = vld [vmem:[%s348 + $0xc] sm:$0xf]
    %s353 = scalar_lea.vmem %s3, 5
    %v354 = vld [vmem:[%s353] sm:$0x1]
    %v356 = vlaneseq
    %v357 = vshrl.u32 %v356, 7
    %v358 = vsub.s32 0, %v357
    %v359 = vrot.slane %v354, %v358
    %v365 = vunpack.c.l.b16 %v349
    %v366 = vunpack.c.l.b16 %v350
    %v367 = vunpack.c.l.b16 %v351
    %v368 = vunpack.c.l.b16 %v352
    %v369 = vpack.c.b16 %v366, %v365
    %v370 = vpack.c.b16 %v368, %v367
    %373 = vmatprep.subr.bf16.mxu0 0
    %374 = vmatpush1.bf16.msra.mxu0 0
    %375 = vmatprep.subr.bf16.mxu0 0
    %376 = vmatpush1.bf16.msra.mxu0 0
    %377 = vmatprep.subr.bf16.mxu0 0
    %378 = vmatpush1.bf16.msra.mxu0 0
    %379 = vmatprep.subr.bf16.mxu0 0
    %380 = vmatpush1.bf16.msra.mxu0 0
    %381 = vmatprep.subr.bf16.mxu0 0
    %382 = vmatpush1.bf16.msra.mxu0 0
    %383 = vmatprep.subr.bf16.mxu0 0
    %384 = vmatpush1.bf16.msra.mxu0 0
    %385 = vmatprep.subr.bf16.mxu0 0
    %386 = vmatpush1.bf16.msra.mxu0 %v370
    %387 = vmatprep.subr.bf16.mxu0 0
    %388 = vmatpush1.bf16.msra.mxu0 %v369
    %389 = vmatprep.subr.bf16.mxu0 0
    %390 = vmatpush2.bf16.msra.mxu0 0
    %391 = vmatprep.subr.bf16.mxu0 0
    %392 = vmatpush2.bf16.msra.mxu0 0
    %393 = vmatprep.subr.bf16.mxu0 0
    %394 = vmatpush2.bf16.msra.mxu0 0
    %395 = vmatprep.subr.bf16.mxu0 0
    %396 = vmatpush2.bf16.msra.mxu0 0
    %397 = vmatprep.subr.bf16.mxu0 0
    %398 = vmatpush2.bf16.msra.mxu0 0
    %399 = vmatprep.subr.bf16.mxu0 0
    %400 = vmatpush2.bf16.msra.mxu0 0
    %401 = vmatprep.subr.bf16.mxu0 0
    %402 = vmatpush2.bf16.msra.mxu0 0
    %403 = vmatprep.subr.bf16.mxu0 0
    %404 = vmatpush2.bf16.msra.mxu0 0
    %405 = vmatprep.mubr.bf16.mxu0 0
    %406 = vmatmul.mubr.bf16.gmra.mxu0 %v105
    %v407 = vpop.f32.mrf.mxu0
    %v408 = vadd.f32 %v359, %v407
    %v409 = vpop.f32.mrf.mxu0
    %v410 = vpop.f32.mrf.mxu0
    %v411 = vadd.f32 %v359, %v410
    %v412 = vpop.f32.mrf.mxu0
    %413 = vdwg.mxu0
    %s414 = scalar_lea.vmem %s2, 144
    %v415 = vld [vmem:[%s414] sm:$0xf]
    %v416 = vld [vmem:[%s414 + $0x4] sm:$0xf]
    %v417 = vld [vmem:[%s414 + $0x8] sm:$0xf]
    %v418 = vld [vmem:[%s414 + $0xc] sm:$0xf]
    %s419 = scalar_lea.vmem %s3, 9
    %v420 = vld [vmem:[%s419] sm:$0x1]
    %v422 = vlaneseq
    %v423 = vshrl.u32 %v422, 7
    %v424 = vsub.s32 0, %v423
    %v425 = vrot.slane %v420, %v424
    %v431 = vunpack.c.l.b16 %v415
    %v432 = vunpack.c.l.b16 %v416
    %v433 = vunpack.c.l.b16 %v417
    %v434 = vunpack.c.l.b16 %v418
    %v435 = vpack.c.b16 %v432, %v431
    %v436 = vpack.c.b16 %v434, %v433
    %439 = vmatprep.subr.bf16.mxu0 0
    %440 = vmatpush1.bf16.msra.mxu0 0
    %441 = vmatprep.subr.bf16.mxu0 0
    %442 = vmatpush1.bf16.msra.mxu0 0
    %443 = vmatprep.subr.bf16.mxu0 0
    %444 = vmatpush1.bf16.msra.mxu0 0
    %445 = vmatprep.subr.bf16.mxu0 0
    %446 = vmatpush1.bf16.msra.mxu0 0
    %447 = vmatprep.subr.bf16.mxu0 0
    %448 = vmatpush1.bf16.msra.mxu0 0
    %449 = vmatprep.subr.bf16.mxu0 0
    %450 = vmatpush1.bf16.msra.mxu0 0
    %451 = vmatprep.subr.bf16.mxu0 0
    %452 = vmatpush1.bf16.msra.mxu0 %v436
    %453 = vmatprep.subr.bf16.mxu0 0
    %454 = vmatpush1.bf16.msra.mxu0 %v435
    %455 = vmatprep.subr.bf16.mxu0 0
    %456 = vmatpush2.bf16.msra.mxu0 0
    %457 = vmatprep.subr.bf16.mxu0 0
    %458 = vmatpush2.bf16.msra.mxu0 0
    %459 = vmatprep.subr.bf16.mxu0 0
    %460 = vmatpush2.bf16.msra.mxu0 0
    %461 = vmatprep.subr.bf16.mxu0 0
    %462 = vmatpush2.bf16.msra.mxu0 0
    %463 = vmatprep.subr.bf16.mxu0 0
    %464 = vmatpush2.bf16.msra.mxu0 0
    %465 = vmatprep.subr.bf16.mxu0 0
    %466 = vmatpush2.bf16.msra.mxu0 0
    %467 = vmatprep.subr.bf16.mxu0 0
    %468 = vmatpush2.bf16.msra.mxu0 0
    %469 = vmatprep.subr.bf16.mxu0 0
    %470 = vmatpush2.bf16.msra.mxu0 0
    %471 = vmatprep.mubr.bf16.mxu0 0
    %472 = vmatmul.mubr.bf16.gmra.mxu0 %v105
    %v473 = vpop.f32.mrf.mxu0
    %v474 = vadd.f32 %v425, %v473
    %v475 = vpop.f32.mrf.mxu0
    %v476 = vpop.f32.mrf.mxu0
    %v477 = vadd.f32 %v425, %v476
    %v478 = vpop.f32.mrf.mxu0
    %479 = vdwg.mxu0
    %v480 = vmul.f32 %v342, 0.35355338
    %v481 = vmul.f32 %v345, 0.35355338
    %s482 = scalar_lea.vmem %s2, 32
    %v483 = vld [vmem:[%s482] sm:$0xf]
    %v484 = vld [vmem:[%s482 + $0x4] sm:$0xf]
    %v485 = vld [vmem:[%s482 + $0x8] sm:$0xf]
    %v486 = vld [vmem:[%s482 + $0xc] sm:$0xf]
    %s487 = scalar_lea.vmem %s3, 2
    %v488 = vld [vmem:[%s487] sm:$0x1]
    %v490 = vlaneseq
    %v491 = vshrl.u32 %v490, 7
    %v492 = vsub.s32 0, %v491
    %v493 = vrot.slane %v488, %v492
    %v499 = vunpack.c.l.b16 %v483
    %v500 = vunpack.c.l.b16 %v484
    %v501 = vunpack.c.l.b16 %v485
    %v502 = vunpack.c.l.b16 %v486
    %v503 = vpack.c.b16 %v500, %v499
    %v504 = vpack.c.b16 %v502, %v501
    %507 = vmatprep.subr.bf16.mxu0 0
    %508 = vmatpush1.bf16.msra.mxu0 0
    %509 = vmatprep.subr.bf16.mxu0 0
    %510 = vmatpush1.bf16.msra.mxu0 0
    %511 = vmatprep.subr.bf16.mxu0 0
    %512 = vmatpush1.bf16.msra.mxu0 0
    %513 = vmatprep.subr.bf16.mxu0 0
    %514 = vmatpush1.bf16.msra.mxu0 0
    %515 = vmatprep.subr.bf16.mxu0 0
    %516 = vmatpush1.bf16.msra.mxu0 0
    %517 = vmatprep.subr.bf16.mxu0 0
    %518 = vmatpush1.bf16.msra.mxu0 0
    %519 = vmatprep.subr.bf16.mxu0 0
    %520 = vmatpush1.bf16.msra.mxu0 %v504
    %521 = vmatprep.subr.bf16.mxu0 0
    %522 = vmatpush1.bf16.msra.mxu0 %v503
    %523 = vmatprep.subr.bf16.mxu0 0
    %524 = vmatpush2.bf16.msra.mxu0 0
    %525 = vmatprep.subr.bf16.mxu0 0
    %526 = vmatpush2.bf16.msra.mxu0 0
    %527 = vmatprep.subr.bf16.mxu0 0
    %528 = vmatpush2.bf16.msra.mxu0 0
    %529 = vmatprep.subr.bf16.mxu0 0
    %530 = vmatpush2.bf16.msra.mxu0 0
    %531 = vmatprep.subr.bf16.mxu0 0
    %532 = vmatpush2.bf16.msra.mxu0 0
    %533 = vmatprep.subr.bf16.mxu0 0
    %534 = vmatpush2.bf16.msra.mxu0 0
    %535 = vmatprep.subr.bf16.mxu0 0
    %536 = vmatpush2.bf16.msra.mxu0 0
    %537 = vmatprep.subr.bf16.mxu0 0
    %538 = vmatpush2.bf16.msra.mxu0 0
    %539 = vmatprep.mubr.bf16.mxu0 0
    %540 = vmatmul.mubr.bf16.gmra.mxu0 %v105
    %v541 = vpop.f32.mrf.mxu0
    %v542 = vadd.f32 %v493, %v541
    %v543 = vpop.f32.mrf.mxu0
    %v544 = vpop.f32.mrf.mxu0
    %v545 = vadd.f32 %v493, %v544
    %v546 = vpop.f32.mrf.mxu0
    %547 = vdwg.mxu0
    %s548 = scalar_lea.vmem %s2, 96
    %v549 = vld [vmem:[%s548] sm:$0xf]
    %v550 = vld [vmem:[%s548 + $0x4] sm:$0xf]
    %v551 = vld [vmem:[%s548 + $0x8] sm:$0xf]
    %v552 = vld [vmem:[%s548 + $0xc] sm:$0xf]
    %s553 = scalar_lea.vmem %s3, 6
    %v554 = vld [vmem:[%s553] sm:$0x1]
    %v556 = vlaneseq
    %v557 = vshrl.u32 %v556, 7
    %v558 = vsub.s32 0, %v557
    %v559 = vrot.slane %v554, %v558
    %v565 = vunpack.c.l.b16 %v549
    %v566 = vunpack.c.l.b16 %v550
    %v567 = vunpack.c.l.b16 %v551
    %v568 = vunpack.c.l.b16 %v552
    %v569 = vpack.c.b16 %v566, %v565
    %v570 = vpack.c.b16 %v568, %v567
    %573 = vmatprep.subr.bf16.mxu0 0
    %574 = vmatpush1.bf16.msra.mxu0 0
    %575 = vmatprep.subr.bf16.mxu0 0
    %576 = vmatpush1.bf16.msra.mxu0 0
    %577 = vmatprep.subr.bf16.mxu0 0
    %578 = vmatpush1.bf16.msra.mxu0 0
    %579 = vmatprep.subr.bf16.mxu0 0
    %580 = vmatpush1.bf16.msra.mxu0 0
    %581 = vmatprep.subr.bf16.mxu0 0
    %582 = vmatpush1.bf16.msra.mxu0 0
    %583 = vmatprep.subr.bf16.mxu0 0
    %584 = vmatpush1.bf16.msra.mxu0 0
    %585 = vmatprep.subr.bf16.mxu0 0
    %586 = vmatpush1.bf16.msra.mxu0 %v570
    %587 = vmatprep.subr.bf16.mxu0 0
    %588 = vmatpush1.bf16.msra.mxu0 %v569
    %589 = vmatprep.subr.bf16.mxu0 0
    %590 = vmatpush2.bf16.msra.mxu0 0
    %591 = vmatprep.subr.bf16.mxu0 0
    %592 = vmatpush2.bf16.msra.mxu0 0
    %593 = vmatprep.subr.bf16.mxu0 0
    %594 = vmatpush2.bf16.msra.mxu0 0
    %595 = vmatprep.subr.bf16.mxu0 0
    %596 = vmatpush2.bf16.msra.mxu0 0
    %597 = vmatprep.subr.bf16.mxu0 0
    %598 = vmatpush2.bf16.msra.mxu0 0
    %599 = vmatprep.subr.bf16.mxu0 0
    %600 = vmatpush2.bf16.msra.mxu0 0
    %601 = vmatprep.subr.bf16.mxu0 0
    %602 = vmatpush2.bf16.msra.mxu0 0
    %603 = vmatprep.subr.bf16.mxu0 0
    %604 = vmatpush2.bf16.msra.mxu0 0
    %605 = vmatprep.mubr.bf16.mxu0 0
    %606 = vmatmul.mubr.bf16.gmra.mxu0 %v105
    %v607 = vpop.f32.mrf.mxu0
    %v608 = vadd.f32 %v559, %v607
    %v609 = vpop.f32.mrf.mxu0
    %v610 = vpop.f32.mrf.mxu0
    %v611 = vadd.f32 %v559, %v610
    %v612 = vpop.f32.mrf.mxu0
    %613 = vdwg.mxu0
    %s614 = scalar_lea.vmem %s2, 160
    %v615 = vld [vmem:[%s614] sm:$0xf]
    %v616 = vld [vmem:[%s614 + $0x4] sm:$0xf]
    %v617 = vld [vmem:[%s614 + $0x8] sm:$0xf]
    %v618 = vld [vmem:[%s614 + $0xc] sm:$0xf]
    %s619 = scalar_lea.vmem %s3, 10
    %v620 = vld [vmem:[%s619] sm:$0x1]
    %v622 = vlaneseq
    %v623 = vshrl.u32 %v622, 7
    %v624 = vsub.s32 0, %v623
    %v625 = vrot.slane %v620, %v624
    %v631 = vunpack.c.l.b16 %v615
    %v632 = vunpack.c.l.b16 %v616
    %v633 = vunpack.c.l.b16 %v617
    %v634 = vunpack.c.l.b16 %v618
    %v635 = vpack.c.b16 %v632, %v631
    %v636 = vpack.c.b16 %v634, %v633
    %639 = vmatprep.subr.bf16.mxu0 0
    %640 = vmatpush1.bf16.msra.mxu0 0
    %641 = vmatprep.subr.bf16.mxu0 0
    %642 = vmatpush1.bf16.msra.mxu0 0
    %643 = vmatprep.subr.bf16.mxu0 0
    %644 = vmatpush1.bf16.msra.mxu0 0
    %645 = vmatprep.subr.bf16.mxu0 0
    %646 = vmatpush1.bf16.msra.mxu0 0
    %647 = vmatprep.subr.bf16.mxu0 0
    %648 = vmatpush1.bf16.msra.mxu0 0
    %649 = vmatprep.subr.bf16.mxu0 0
    %650 = vmatpush1.bf16.msra.mxu0 0
    %651 = vmatprep.subr.bf16.mxu0 0
    %652 = vmatpush1.bf16.msra.mxu0 %v636
    %653 = vmatprep.subr.bf16.mxu0 0
    %654 = vmatpush1.bf16.msra.mxu0 %v635
    %655 = vmatprep.subr.bf16.mxu0 0
    %656 = vmatpush2.bf16.msra.mxu0 0
    %657 = vmatprep.subr.bf16.mxu0 0
    %658 = vmatpush2.bf16.msra.mxu0 0
    %659 = vmatprep.subr.bf16.mxu0 0
    %660 = vmatpush2.bf16.msra.mxu0 0
    %661 = vmatprep.subr.bf16.mxu0 0
    %662 = vmatpush2.bf16.msra.mxu0 0
    %663 = vmatprep.subr.bf16.mxu0 0
    %664 = vmatpush2.bf16.msra.mxu0 0
    %665 = vmatprep.subr.bf16.mxu0 0
    %666 = vmatpush2.bf16.msra.mxu0 0
    %667 = vmatprep.subr.bf16.mxu0 0
    %668 = vmatpush2.bf16.msra.mxu0 0
    %669 = vmatprep.subr.bf16.mxu0 0
    %670 = vmatpush2.bf16.msra.mxu0 0
    %671 = vmatprep.mubr.bf16.mxu0 0
    %672 = vmatmul.mubr.bf16.gmra.mxu0 %v105
    %v673 = vpop.f32.mrf.mxu0
    %v674 = vadd.f32 %v625, %v673
    %v675 = vpop.f32.mrf.mxu0
    %v676 = vpop.f32.mrf.mxu0
    %v677 = vadd.f32 %v625, %v676
    %v678 = vpop.f32.mrf.mxu0
    %679 = vdwg.mxu0
    %v680 = vmul.f32 %v542, 0.35355338
    %v681 = vmul.f32 %v545, 0.35355338
    %s682 = scalar_lea.vmem %s2, 48
    %v683 = vld [vmem:[%s682] sm:$0xf]
    %v684 = vld [vmem:[%s682 + $0x4] sm:$0xf]
    %v685 = vld [vmem:[%s682 + $0x8] sm:$0xf]
    %v686 = vld [vmem:[%s682 + $0xc] sm:$0xf]
    %s687 = scalar_lea.vmem %s3, 3
    %v688 = vld [vmem:[%s687] sm:$0x1]
    %v690 = vlaneseq
    %v691 = vshrl.u32 %v690, 7
    %v692 = vsub.s32 0, %v691
    %v693 = vrot.slane %v688, %v692
    %v699 = vunpack.c.l.b16 %v683
    %v700 = vunpack.c.l.b16 %v684
    %v701 = vunpack.c.l.b16 %v685
    %v702 = vunpack.c.l.b16 %v686
    %v703 = vpack.c.b16 %v700, %v699
    %v704 = vpack.c.b16 %v702, %v701
    %707 = vmatprep.subr.bf16.mxu0 0
    %708 = vmatpush1.bf16.msra.mxu0 0
    %709 = vmatprep.subr.bf16.mxu0 0
    %710 = vmatpush1.bf16.msra.mxu0 0
    %711 = vmatprep.subr.bf16.mxu0 0
    %712 = vmatpush1.bf16.msra.mxu0 0
    %713 = vmatprep.subr.bf16.mxu0 0
    %714 = vmatpush1.bf16.msra.mxu0 0
    %715 = vmatprep.subr.bf16.mxu0 0
    %716 = vmatpush1.bf16.msra.mxu0 0
    %717 = vmatprep.subr.bf16.mxu0 0
    %718 = vmatpush1.bf16.msra.mxu0 0
    %719 = vmatprep.subr.bf16.mxu0 0
    %720 = vmatpush1.bf16.msra.mxu0 %v704
    %721 = vmatprep.subr.bf16.mxu0 0
    %722 = vmatpush1.bf16.msra.mxu0 %v703
    %723 = vmatprep.subr.bf16.mxu0 0
    %724 = vmatpush2.bf16.msra.mxu0 0
    %725 = vmatprep.subr.bf16.mxu0 0
    %726 = vmatpush2.bf16.msra.mxu0 0
    %727 = vmatprep.subr.bf16.mxu0 0
    %728 = vmatpush2.bf16.msra.mxu0 0
    %729 = vmatprep.subr.bf16.mxu0 0
    %730 = vmatpush2.bf16.msra.mxu0 0
    %731 = vmatprep.subr.bf16.mxu0 0
    %732 = vmatpush2.bf16.msra.mxu0 0
    %733 = vmatprep.subr.bf16.mxu0 0
    %734 = vmatpush2.bf16.msra.mxu0 0
    %735 = vmatprep.subr.bf16.mxu0 0
    %736 = vmatpush2.bf16.msra.mxu0 0
    %737 = vmatprep.subr.bf16.mxu0 0
    %738 = vmatpush2.bf16.msra.mxu0 0
    %739 = vmatprep.mubr.bf16.mxu0 0
    %740 = vmatmul.mubr.bf16.gmra.mxu0 %v105
    %v741 = vpop.f32.mrf.mxu0
    %v742 = vadd.f32 %v693, %v741
    %v743 = vpop.f32.mrf.mxu0
    %v744 = vpop.f32.mrf.mxu0
    %v745 = vadd.f32 %v693, %v744
    %v746 = vpop.f32.mrf.mxu0
    %747 = vdwg.mxu0
    %s748 = scalar_lea.vmem %s2, 112
    %v749 = vld [vmem:[%s748] sm:$0xf]
    %v750 = vld [vmem:[%s748 + $0x4] sm:$0xf]
    %v751 = vld [vmem:[%s748 + $0x8] sm:$0xf]
    %v752 = vld [vmem:[%s748 + $0xc] sm:$0xf]
    %s753 = scalar_lea.vmem %s3, 7
    %v754 = vld [vmem:[%s753] sm:$0x1]
    %v756 = vlaneseq
    %v757 = vshrl.u32 %v756, 7
    %v758 = vsub.s32 0, %v757
    %v759 = vrot.slane %v754, %v758
    %v765 = vunpack.c.l.b16 %v749
    %v766 = vunpack.c.l.b16 %v750
    %v767 = vunpack.c.l.b16 %v751
    %v768 = vunpack.c.l.b16 %v752
    %v769 = vpack.c.b16 %v766, %v765
    %v770 = vpack.c.b16 %v768, %v767
    %773 = vmatprep.subr.bf16.mxu0 0
    %774 = vmatpush1.bf16.msra.mxu0 0
    %775 = vmatprep.subr.bf16.mxu0 0
    %776 = vmatpush1.bf16.msra.mxu0 0
    %777 = vmatprep.subr.bf16.mxu0 0
    %778 = vmatpush1.bf16.msra.mxu0 0
    %779 = vmatprep.subr.bf16.mxu0 0
    %780 = vmatpush1.bf16.msra.mxu0 0
    %781 = vmatprep.subr.bf16.mxu0 0
    %782 = vmatpush1.bf16.msra.mxu0 0
    %783 = vmatprep.subr.bf16.mxu0 0
    %784 = vmatpush1.bf16.msra.mxu0 0
    %785 = vmatprep.subr.bf16.mxu0 0
    %786 = vmatpush1.bf16.msra.mxu0 %v770
    %787 = vmatprep.subr.bf16.mxu0 0
    %788 = vmatpush1.bf16.msra.mxu0 %v769
    %789 = vmatprep.subr.bf16.mxu0 0
    %790 = vmatpush2.bf16.msra.mxu0 0
    %791 = vmatprep.subr.bf16.mxu0 0
    %792 = vmatpush2.bf16.msra.mxu0 0
    %793 = vmatprep.subr.bf16.mxu0 0
    %794 = vmatpush2.bf16.msra.mxu0 0
    %795 = vmatprep.subr.bf16.mxu0 0
    %796 = vmatpush2.bf16.msra.mxu0 0
    %797 = vmatprep.subr.bf16.mxu0 0
    %798 = vmatpush2.bf16.msra.mxu0 0
    %799 = vmatprep.subr.bf16.mxu0 0
    %800 = vmatpush2.bf16.msra.mxu0 0
    %801 = vmatprep.subr.bf16.mxu0 0
    %802 = vmatpush2.bf16.msra.mxu0 0
    %803 = vmatprep.subr.bf16.mxu0 0
    %804 = vmatpush2.bf16.msra.mxu0 0
    %805 = vmatprep.mubr.bf16.mxu0 0
    %806 = vmatmul.mubr.bf16.gmra.mxu0 %v105
    %v807 = vpop.f32.mrf.mxu0
    %v808 = vadd.f32 %v759, %v807
    %v809 = vpop.f32.mrf.mxu0
    %v810 = vpop.f32.mrf.mxu0
    %v811 = vadd.f32 %v759, %v810
    %v812 = vpop.f32.mrf.mxu0
    %813 = vdwg.mxu0
    %s814 = scalar_lea.vmem %s2, 176
    %v815 = vld [vmem:[%s814] sm:$0xf]
    %v816 = vld [vmem:[%s814 + $0x4] sm:$0xf]
    %v817 = vld [vmem:[%s814 + $0x8] sm:$0xf]
    %v818 = vld [vmem:[%s814 + $0xc] sm:$0xf]
    %s819 = scalar_lea.vmem %s3, 11
    %v820 = vld [vmem:[%s819] sm:$0x1]
    %v822 = vlaneseq
    %v823 = vshrl.u32 %v822, 7
    %v824 = vsub.s32 0, %v823
    %v825 = vrot.slane %v820, %v824
    %v831 = vunpack.c.l.b16 %v815
    %v832 = vunpack.c.l.b16 %v816
    %v833 = vunpack.c.l.b16 %v817
    %v834 = vunpack.c.l.b16 %v818
    %v835 = vpack.c.b16 %v832, %v831
    %v836 = vpack.c.b16 %v834, %v833
    %839 = vmatprep.subr.bf16.mxu0 0
    %840 = vmatpush1.bf16.msra.mxu0 0
    %841 = vmatprep.subr.bf16.mxu0 0
    %842 = vmatpush1.bf16.msra.mxu0 0
    %843 = vmatprep.subr.bf16.mxu0 0
    %844 = vmatpush1.bf16.msra.mxu0 0
    %845 = vmatprep.subr.bf16.mxu0 0
    %846 = vmatpush1.bf16.msra.mxu0 0
    %847 = vmatprep.subr.bf16.mxu0 0
    %848 = vmatpush1.bf16.msra.mxu0 0
    %849 = vmatprep.subr.bf16.mxu0 0
    %850 = vmatpush1.bf16.msra.mxu0 0
    %851 = vmatprep.subr.bf16.mxu0 0
    %852 = vmatpush1.bf16.msra.mxu0 %v836
    %853 = vmatprep.subr.bf16.mxu0 0
    %854 = vmatpush1.bf16.msra.mxu0 %v835
    %855 = vmatprep.subr.bf16.mxu0 0
    %856 = vmatpush2.bf16.msra.mxu0 0
    %857 = vmatprep.subr.bf16.mxu0 0
    %858 = vmatpush2.bf16.msra.mxu0 0
    %859 = vmatprep.subr.bf16.mxu0 0
    %860 = vmatpush2.bf16.msra.mxu0 0
    %861 = vmatprep.subr.bf16.mxu0 0
    %862 = vmatpush2.bf16.msra.mxu0 0
    %863 = vmatprep.subr.bf16.mxu0 0
    %864 = vmatpush2.bf16.msra.mxu0 0
    %865 = vmatprep.subr.bf16.mxu0 0
    %866 = vmatpush2.bf16.msra.mxu0 0
    %867 = vmatprep.subr.bf16.mxu0 0
    %868 = vmatpush2.bf16.msra.mxu0 0
    %869 = vmatprep.subr.bf16.mxu0 0
    %870 = vmatpush2.bf16.msra.mxu0 0
    %871 = vmatprep.mubr.bf16.mxu0 0
    %872 = vmatmul.mubr.bf16.gmra.mxu0 %v105
    %v873 = vpop.f32.mrf.mxu0
    %v874 = vadd.f32 %v825, %v873
    %v875 = vpop.f32.mrf.mxu0
    %v876 = vpop.f32.mrf.mxu0
    %v877 = vadd.f32 %v825, %v876
    %v878 = vpop.f32.mrf.mxu0
    %879 = vdwg.mxu0
    %v880 = vmul.f32 %v742, 0.35355338
    %v881 = vmul.f32 %v745, 0.35355338
    %v882 = vpack.c.bf16 %v280, %v280
    %v883 = vpack.c.bf16 %v281, %v281
    %v884 = vpack.c.bf16 %v480, %v480
    %v885 = vpack.c.bf16 %v481, %v481
    %v886 = vpack.c.bf16 %v680, %v680
    %v887 = vpack.c.bf16 %v681, %v681
    %v888 = vpack.c.bf16 %v880, %v880
    %v889 = vpack.c.bf16 %v881, %v881
    %v890 = vpack.c.bf16 %v208, %v208
    %v891 = vpack.c.bf16 %v211, %v211
    %v892 = vpack.c.bf16 %v408, %v408
    %v893 = vpack.c.bf16 %v411, %v411
    %v894 = vpack.c.bf16 %v608, %v608
    %v895 = vpack.c.bf16 %v611, %v611
    %v896 = vpack.c.bf16 %v808, %v808
    %v897 = vpack.c.bf16 %v811, %v811
    %v898 = vpack.c.bf16 %v274, %v274
    %v899 = vpack.c.bf16 %v277, %v277
    %v900 = vpack.c.bf16 %v474, %v474
    %v901 = vpack.c.bf16 %v477, %v477
    %v902 = vpack.c.bf16 %v674, %v674
    %v903 = vpack.c.bf16 %v677, %v677
    %v904 = vpack.c.bf16 %v874, %v874
    %v905 = vpack.c.bf16 %v877, %v877
    %vm906 = vcmask 64512
    %v908 = vsel %vm906, %v882, 0
    %v911 = vsel %vm906, %v890, 0
    %913 = vmatprep.subr.bf16.mxu0 0
    %914 = vmatpush1.bf16.xpose.msra.mxu0 0
    %915 = vmatprep.subr.bf16.mxu0 0
    %916 = vmatpush1.bf16.xpose.msra.mxu0 0
    %917 = vmatprep.subr.bf16.mxu0 0
    %918 = vmatpush1.bf16.xpose.msra.mxu0 0
    %919 = vmatprep.subr.bf16.mxu0 0
    %920 = vmatpush1.bf16.xpose.msra.mxu0 0
    %921 = vmatprep.subr.bf16.mxu0 0
    %922 = vmatpush1.bf16.xpose.msra.mxu0 0
    %923 = vmatprep.subr.bf16.mxu0 0
    %924 = vmatpush1.bf16.xpose.msra.mxu0 0
    %925 = vmatprep.subr.bf16.mxu0 0
    %926 = vmatpush1.bf16.xpose.msra.mxu0 0
    %927 = vmatprep.subr.bf16.mxu0 0
    %928 = vmatpush1.bf16.xpose.msra.mxu0 %v911
    %929 = vmatprep.subr.bf16.mxu0 0
    %930 = vmatpush2.bf16.xpose.msra.mxu0 0
    %931 = vmatprep.subr.bf16.mxu0 0
    %932 = vmatpush2.bf16.xpose.msra.mxu0 0
    %933 = vmatprep.subr.bf16.mxu0 0
    %934 = vmatpush2.bf16.xpose.msra.mxu0 0
    %935 = vmatprep.subr.bf16.mxu0 0
    %936 = vmatpush2.bf16.xpose.msra.mxu0 0
    %937 = vmatprep.subr.bf16.mxu0 0
    %938 = vmatpush2.bf16.xpose.msra.mxu0 0
    %939 = vmatprep.subr.bf16.mxu0 0
    %940 = vmatpush2.bf16.xpose.msra.mxu0 0
    %941 = vmatprep.subr.bf16.mxu0 0
    %942 = vmatpush2.bf16.xpose.msra.mxu0 0
    %943 = vmatprep.subr.bf16.mxu0 0
    %944 = vmatpush2.bf16.xpose.msra.mxu0 0
    %945 = vmatprep.mubr.bf16.mxu0 0
    %946 = vmatmul.mubr.bf16.gmra.mxu0 %v908
    %v947 = vpop.f32.mrf.mxu0
    %v948 = vadd.f32 0.0, %v947
    %v949 = vpop.f32.mrf.mxu0
    %v950 = vpop.f32.mrf.mxu0
    %v951 = vpop.f32.mrf.mxu0
    %952 = vdwg.mxu0
    %v954 = vsel %vm906, %v883, 0
    %v957 = vsel %vm906, %v891, 0
    %959 = vmatprep.subr.bf16.mxu0 0
    %960 = vmatpush1.bf16.xpose.msra.mxu0 0
    %961 = vmatprep.subr.bf16.mxu0 0
    %962 = vmatpush1.bf16.xpose.msra.mxu0 0
    %963 = vmatprep.subr.bf16.mxu0 0
    %964 = vmatpush1.bf16.xpose.msra.mxu0 0
    %965 = vmatprep.subr.bf16.mxu0 0
    %966 = vmatpush1.bf16.xpose.msra.mxu0 0
    %967 = vmatprep.subr.bf16.mxu0 0
    %968 = vmatpush1.bf16.xpose.msra.mxu0 0
    %969 = vmatprep.subr.bf16.mxu0 0
    %970 = vmatpush1.bf16.xpose.msra.mxu0 0
    %971 = vmatprep.subr.bf16.mxu0 0
    %972 = vmatpush1.bf16.xpose.msra.mxu0 0
    %973 = vmatprep.subr.bf16.mxu0 0
    %974 = vmatpush1.bf16.xpose.msra.mxu0 %v957
    %975 = vmatprep.subr.bf16.mxu0 0
    %976 = vmatpush2.bf16.xpose.msra.mxu0 0
    %977 = vmatprep.subr.bf16.mxu0 0
    %978 = vmatpush2.bf16.xpose.msra.mxu0 0
    %979 = vmatprep.subr.bf16.mxu0 0
    %980 = vmatpush2.bf16.xpose.msra.mxu0 0
    %981 = vmatprep.subr.bf16.mxu0 0
    %982 = vmatpush2.bf16.xpose.msra.mxu0 0
    %983 = vmatprep.subr.bf16.mxu0 0
    %984 = vmatpush2.bf16.xpose.msra.mxu0 0
    %985 = vmatprep.subr.bf16.mxu0 0
    %986 = vmatpush2.bf16.xpose.msra.mxu0 0
    %987 = vmatprep.subr.bf16.mxu0 0
    %988 = vmatpush2.bf16.xpose.msra.mxu0 0
    %989 = vmatprep.subr.bf16.mxu0 0
    %990 = vmatpush2.bf16.xpose.msra.mxu0 0
    %991 = vmatprep.mubr.bf16.mxu0 0
    %992 = vmatmul.mubr.bf16.gmra.mxu0 %v954
    %v993 = vpop.f32.mrf.mxu0
    %v994 = vadd.f32 0.0, %v993
    %v995 = vpop.f32.mrf.mxu0
    %v996 = vpop.f32.mrf.mxu0
    %v997 = vpop.f32.mrf.mxu0
    %998 = vdwg.mxu0
    %v1000 = vsel %vm906, %v884, 0
    %v1003 = vsel %vm906, %v892, 0
    %1005 = vmatprep.subr.bf16.mxu0 0
    %1006 = vmatpush1.bf16.xpose.msra.mxu0 0
    %1007 = vmatprep.subr.bf16.mxu0 0
    %1008 = vmatpush1.bf16.xpose.msra.mxu0 0
    %1009 = vmatprep.subr.bf16.mxu0 0
    %1010 = vmatpush1.bf16.xpose.msra.mxu0 0
    %1011 = vmatprep.subr.bf16.mxu0 0
    %1012 = vmatpush1.bf16.xpose.msra.mxu0 0
    %1013 = vmatprep.subr.bf16.mxu0 0
    %1014 = vmatpush1.bf16.xpose.msra.mxu0 0
    %1015 = vmatprep.subr.bf16.mxu0 0
    %1016 = vmatpush1.bf16.xpose.msra.mxu0 0
    %1017 = vmatprep.subr.bf16.mxu0 0
    %1018 = vmatpush1.bf16.xpose.msra.mxu0 0
    %1019 = vmatprep.subr.bf16.mxu0 0
    %1020 = vmatpush1.bf16.xpose.msra.mxu0 %v1003
    %1021 = vmatprep.subr.bf16.mxu0 0
    %1022 = vmatpush2.bf16.xpose.msra.mxu0 0
    %1023 = vmatprep.subr.bf16.mxu0 0
    %1024 = vmatpush2.bf16.xpose.msra.mxu0 0
    %1025 = vmatprep.subr.bf16.mxu0 0
    %1026 = vmatpush2.bf16.xpose.msra.mxu0 0
    %1027 = vmatprep.subr.bf16.mxu0 0
    %1028 = vmatpush2.bf16.xpose.msra.mxu0 0
    %1029 = vmatprep.subr.bf16.mxu0 0
    %1030 = vmatpush2.bf16.xpose.msra.mxu0 0
    %1031 = vmatprep.subr.bf16.mxu0 0
    %1032 = vmatpush2.bf16.xpose.msra.mxu0 0
    %1033 = vmatprep.subr.bf16.mxu0 0
    %1034 = vmatpush2.bf16.xpose.msra.mxu0 0
    %1035 = vmatprep.subr.bf16.mxu0 0
    %1036 = vmatpush2.bf16.xpose.msra.mxu0 0
    %1037 = vmatprep.mubr.bf16.mxu0 0
    %1038 = vmatmul.mubr.bf16.gmra.mxu0 %v1000
    %v1039 = vpop.f32.mrf.mxu0
    %v1040 = vadd.f32 0.0, %v1039
    %v1041 = vpop.f32.mrf.mxu0
    %v1042 = vpop.f32.mrf.mxu0
    %v1043 = vpop.f32.mrf.mxu0
    %1044 = vdwg.mxu0
    %v1046 = vsel %vm906, %v885, 0
    %v1049 = vsel %vm906, %v893, 0
    %1051 = vmatprep.subr.bf16.mxu0 0
    %1052 = vmatpush1.bf16.xpose.msra.mxu0 0
    %1053 = vmatprep.subr.bf16.mxu0 0
    %1054 = vmatpush1.bf16.xpose.msra.mxu0 0
    %1055 = vmatprep.subr.bf16.mxu0 0
    %1056 = vmatpush1.bf16.xpose.msra.mxu0 0
    %1057 = vmatprep.subr.bf16.mxu0 0
    %1058 = vmatpush1.bf16.xpose.msra.mxu0 0
    %1059 = vmatprep.subr.bf16.mxu0 0
    %1060 = vmatpush1.bf16.xpose.msra.mxu0 0
    %1061 = vmatprep.subr.bf16.mxu0 0
    %1062 = vmatpush1.bf16.xpose.msra.mxu0 0
    %1063 = vmatprep.subr.bf16.mxu0 0
    %1064 = vmatpush1.bf16.xpose.msra.mxu0 0
    %1065 = vmatprep.subr.bf16.mxu0 0
    %1066 = vmatpush1.bf16.xpose.msra.mxu0 %v1049
    %1067 = vmatprep.subr.bf16.mxu0 0
    %1068 = vmatpush2.bf16.xpose.msra.mxu0 0
    %1069 = vmatprep.subr.bf16.mxu0 0
    %1070 = vmatpush2.bf16.xpose.msra.mxu0 0
    %1071 = vmatprep.subr.bf16.mxu0 0
    %1072 = vmatpush2.bf16.xpose.msra.mxu0 0
    %1073 = vmatprep.subr.bf16.mxu0 0
    %1074 = vmatpush2.bf16.xpose.msra.mxu0 0
    %1075 = vmatprep.subr.bf16.mxu0 0
    %1076 = vmatpush2.bf16.xpose.msra.mxu0 0
    %1077 = vmatprep.subr.bf16.mxu0 0
    %1078 = vmatpush2.bf16.xpose.msra.mxu0 0
    %1079 = vmatprep.subr.bf16.mxu0 0
    %1080 = vmatpush2.bf16.xpose.msra.mxu0 0
    %1081 = vmatprep.subr.bf16.mxu0 0
    %1082 = vmatpush2.bf16.xpose.msra.mxu0 0
    %1083 = vmatprep.mubr.bf16.mxu0 0
    %1084 = vmatmul.mubr.bf16.gmra.mxu0 %v1046
    %v1085 = vpop.f32.mrf.mxu0
    %v1086 = vadd.f32 0.0, %v1085
    %v1087 = vpop.f32.mrf.mxu0
    %v1088 = vpop.f32.mrf.mxu0
    %v1089 = vpop.f32.mrf.mxu0
    %1090 = vdwg.mxu0
    %v1092 = vsel %vm906, %v886, 0
    %v1095 = vsel %vm906, %v894, 0
    %1097 = vmatprep.subr.bf16.mxu0 0
    %1098 = vmatpush1.bf16.xpose.msra.mxu0 0
    %1099 = vmatprep.subr.bf16.mxu0 0
    %1100 = vmatpush1.bf16.xpose.msra.mxu0 0
    %1101 = vmatprep.subr.bf16.mxu0 0
    %1102 = vmatpush1.bf16.xpose.msra.mxu0 0
    %1103 = vmatprep.subr.bf16.mxu0 0
    %1104 = vmatpush1.bf16.xpose.msra.mxu0 0
    %1105 = vmatprep.subr.bf16.mxu0 0
    %1106 = vmatpush1.bf16.xpose.msra.mxu0 0
    %1107 = vmatprep.subr.bf16.mxu0 0
    %1108 = vmatpush1.bf16.xpose.msra.mxu0 0
    %1109 = vmatprep.subr.bf16.mxu0 0
    %1110 = vmatpush1.bf16.xpose.msra.mxu0 0
    %1111 = vmatprep.subr.bf16.mxu0 0
    %1112 = vmatpush1.bf16.xpose.msra.mxu0 %v1095
    %1113 = vmatprep.subr.bf16.mxu0 0
    %1114 = vmatpush2.bf16.xpose.msra.mxu0 0
    %1115 = vmatprep.subr.bf16.mxu0 0
    %1116 = vmatpush2.bf16.xpose.msra.mxu0 0
    %1117 = vmatprep.subr.bf16.mxu0 0
    %1118 = vmatpush2.bf16.xpose.msra.mxu0 0
    %1119 = vmatprep.subr.bf16.mxu0 0
    %1120 = vmatpush2.bf16.xpose.msra.mxu0 0
    %1121 = vmatprep.subr.bf16.mxu0 0
    %1122 = vmatpush2.bf16.xpose.msra.mxu0 0
    %1123 = vmatprep.subr.bf16.mxu0 0
    %1124 = vmatpush2.bf16.xpose.msra.mxu0 0
    %1125 = vmatprep.subr.bf16.mxu0 0
    %1126 = vmatpush2.bf16.xpose.msra.mxu0 0
    %1127 = vmatprep.subr.bf16.mxu0 0
    %1128 = vmatpush2.bf16.xpose.msra.mxu0 0
    %1129 = vmatprep.mubr.bf16.mxu0 0
    %1130 = vmatmul.mubr.bf16.gmra.mxu0 %v1092
    %v1131 = vpop.f32.mrf.mxu0
    %v1132 = vadd.f32 0.0, %v1131
    %v1133 = vpop.f32.mrf.mxu0
    %v1134 = vpop.f32.mrf.mxu0
    %v1135 = vpop.f32.mrf.mxu0
    %1136 = vdwg.mxu0
    %v1138 = vsel %vm906, %v887, 0
    %v1141 = vsel %vm906, %v895, 0
    %1143 = vmatprep.subr.bf16.mxu0 0
    %1144 = vmatpush1.bf16.xpose.msra.mxu0 0
    %1145 = vmatprep.subr.bf16.mxu0 0
    %1146 = vmatpush1.bf16.xpose.msra.mxu0 0
    %1147 = vmatprep.subr.bf16.mxu0 0
    %1148 = vmatpush1.bf16.xpose.msra.mxu0 0
    %1149 = vmatprep.subr.bf16.mxu0 0
    %1150 = vmatpush1.bf16.xpose.msra.mxu0 0
    %1151 = vmatprep.subr.bf16.mxu0 0
    %1152 = vmatpush1.bf16.xpose.msra.mxu0 0
    %1153 = vmatprep.subr.bf16.mxu0 0
    %1154 = vmatpush1.bf16.xpose.msra.mxu0 0
    %1155 = vmatprep.subr.bf16.mxu0 0
    %1156 = vmatpush1.bf16.xpose.msra.mxu0 0
    %1157 = vmatprep.subr.bf16.mxu0 0
    %1158 = vmatpush1.bf16.xpose.msra.mxu0 %v1141
    %1159 = vmatprep.subr.bf16.mxu0 0
    %1160 = vmatpush2.bf16.xpose.msra.mxu0 0
    %1161 = vmatprep.subr.bf16.mxu0 0
    %1162 = vmatpush2.bf16.xpose.msra.mxu0 0
    %1163 = vmatprep.subr.bf16.mxu0 0
    %1164 = vmatpush2.bf16.xpose.msra.mxu0 0
    %1165 = vmatprep.subr.bf16.mxu0 0
    %1166 = vmatpush2.bf16.xpose.msra.mxu0 0
    %1167 = vmatprep.subr.bf16.mxu0 0
    %1168 = vmatpush2.bf16.xpose.msra.mxu0 0
    %1169 = vmatprep.subr.bf16.mxu0 0
    %1170 = vmatpush2.bf16.xpose.msra.mxu0 0
    %1171 = vmatprep.subr.bf16.mxu0 0
    %1172 = vmatpush2.bf16.xpose.msra.mxu0 0
    %1173 = vmatprep.subr.bf16.mxu0 0
    %1174 = vmatpush2.bf16.xpose.msra.mxu0 0
    %1175 = vmatprep.mubr.bf16.mxu0 0
    %1176 = vmatmul.mubr.bf16.gmra.mxu0 %v1138
    %v1177 = vpop.f32.mrf.mxu0
    %v1178 = vadd.f32 0.0, %v1177
    %v1179 = vpop.f32.mrf.mxu0
    %v1180 = vpop.f32.mrf.mxu0
    %v1181 = vpop.f32.mrf.mxu0
    %1182 = vdwg.mxu0
    %v1184 = vsel %vm906, %v888, 0
    %v1187 = vsel %vm906, %v896, 0
    %1189 = vmatprep.subr.bf16.mxu0 0
    %1190 = vmatpush1.bf16.xpose.msra.mxu0 0
    %1191 = vmatprep.subr.bf16.mxu0 0
    %1192 = vmatpush1.bf16.xpose.msra.mxu0 0
    %1193 = vmatprep.subr.bf16.mxu0 0
    %1194 = vmatpush1.bf16.xpose.msra.mxu0 0
    %1195 = vmatprep.subr.bf16.mxu0 0
    %1196 = vmatpush1.bf16.xpose.msra.mxu0 0
    %1197 = vmatprep.subr.bf16.mxu0 0
    %1198 = vmatpush1.bf16.xpose.msra.mxu0 0
    %1199 = vmatprep.subr.bf16.mxu0 0
    %1200 = vmatpush1.bf16.xpose.msra.mxu0 0
    %1201 = vmatprep.subr.bf16.mxu0 0
    %1202 = vmatpush1.bf16.xpose.msra.mxu0 0
    %1203 = vmatprep.subr.bf16.mxu0 0
    %1204 = vmatpush1.bf16.xpose.msra.mxu0 %v1187
    %1205 = vmatprep.subr.bf16.mxu0 0
    %1206 = vmatpush2.bf16.xpose.msra.mxu0 0
    %1207 = vmatprep.subr.bf16.mxu0 0
    %1208 = vmatpush2.bf16.xpose.msra.mxu0 0
    %1209 = vmatprep.subr.bf16.mxu0 0
    %1210 = vmatpush2.bf16.xpose.msra.mxu0 0
    %1211 = vmatprep.subr.bf16.mxu0 0
    %1212 = vmatpush2.bf16.xpose.msra.mxu0 0
    %1213 = vmatprep.subr.bf16.mxu0 0
    %1214 = vmatpush2.bf16.xpose.msra.mxu0 0
    %1215 = vmatprep.subr.bf16.mxu0 0
    %1216 = vmatpush2.bf16.xpose.msra.mxu0 0
    %1217 = vmatprep.subr.bf16.mxu0 0
    %1218 = vmatpush2.bf16.xpose.msra.mxu0 0
    %1219 = vmatprep.subr.bf16.mxu0 0
    %1220 = vmatpush2.bf16.xpose.msra.mxu0 0
    %1221 = vmatprep.mubr.bf16.mxu0 0
    %1222 = vmatmul.mubr.bf16.gmra.mxu0 %v1184
    %v1223 = vpop.f32.mrf.mxu0
    %v1224 = vadd.f32 0.0, %v1223
    %v1225 = vpop.f32.mrf.mxu0
    %v1226 = vpop.f32.mrf.mxu0
    %v1227 = vpop.f32.mrf.mxu0
    %1228 = vdwg.mxu0
    %v1230 = vsel %vm906, %v889, 0
    %v1233 = vsel %vm906, %v897, 0
    %1235 = vmatprep.subr.bf16.mxu0 0
    %1236 = vmatpush1.bf16.xpose.msra.mxu0 0
    %1237 = vmatprep.subr.bf16.mxu0 0
    %1238 = vmatpush1.bf16.xpose.msra.mxu0 0
    %1239 = vmatprep.subr.bf16.mxu0 0
    %1240 = vmatpush1.bf16.xpose.msra.mxu0 0
    %1241 = vmatprep.subr.bf16.mxu0 0
    %1242 = vmatpush1.bf16.xpose.msra.mxu0 0
    %1243 = vmatprep.subr.bf16.mxu0 0
    %1244 = vmatpush1.bf16.xpose.msra.mxu0 0
    %1245 = vmatprep.subr.bf16.mxu0 0
    %1246 = vmatpush1.bf16.xpose.msra.mxu0 0
    %1247 = vmatprep.subr.bf16.mxu0 0
    %1248 = vmatpush1.bf16.xpose.msra.mxu0 0
    %1249 = vmatprep.subr.bf16.mxu0 0
    %1250 = vmatpush1.bf16.xpose.msra.mxu0 %v1233
    %1251 = vmatprep.subr.bf16.mxu0 0
    %1252 = vmatpush2.bf16.xpose.msra.mxu0 0
    %1253 = vmatprep.subr.bf16.mxu0 0
    %1254 = vmatpush2.bf16.xpose.msra.mxu0 0
    %1255 = vmatprep.subr.bf16.mxu0 0
    %1256 = vmatpush2.bf16.xpose.msra.mxu0 0
    %1257 = vmatprep.subr.bf16.mxu0 0
    %1258 = vmatpush2.bf16.xpose.msra.mxu0 0
    %1259 = vmatprep.subr.bf16.mxu0 0
    %1260 = vmatpush2.bf16.xpose.msra.mxu0 0
    %1261 = vmatprep.subr.bf16.mxu0 0
    %1262 = vmatpush2.bf16.xpose.msra.mxu0 0
    %1263 = vmatprep.subr.bf16.mxu0 0
    %1264 = vmatpush2.bf16.xpose.msra.mxu0 0
    %1265 = vmatprep.subr.bf16.mxu0 0
    %1266 = vmatpush2.bf16.xpose.msra.mxu0 0
    %1267 = vmatprep.mubr.bf16.mxu0 0
    %1268 = vmatmul.mubr.bf16.gmra.mxu0 %v1230
    %v1269 = vpop.f32.mrf.mxu0
    %v1270 = vadd.f32 0.0, %v1269
    %v1271 = vpop.f32.mrf.mxu0
    %v1272 = vpop.f32.mrf.mxu0
    %v1273 = vpop.f32.mrf.mxu0
    %1274 = vdwg.mxu0
    %v1275 = vsel %vm906, %v948, -inf
    %v1276 = vrot.slane %v1275, 4
    %v1277 = vmax.f32 %v1275, %v1276
    %v1278 = vrot.slane %v1277, 2
    %v1279 = vmax.f32 %v1277, %v1278
    %v1280 = vrot.slane %v1279, 1
    %v1281 = vmax.f32 %v1279, %v1280
    %v1282 = vsel %vm906, %v994, -inf
    %v1283 = vrot.slane %v1282, 4
    %v1284 = vmax.f32 %v1282, %v1283
    %v1285 = vrot.slane %v1284, 2
    %v1286 = vmax.f32 %v1284, %v1285
    %v1287 = vrot.slane %v1286, 1
    %v1288 = vmax.f32 %v1286, %v1287
    %v1289 = vsel %vm906, %v1040, -inf
    %v1290 = vrot.slane %v1289, 4
    %v1291 = vmax.f32 %v1289, %v1290
    %v1292 = vrot.slane %v1291, 2
    %v1293 = vmax.f32 %v1291, %v1292
    %v1294 = vrot.slane %v1293, 1
    %v1295 = vmax.f32 %v1293, %v1294
    %v1296 = vsel %vm906, %v1086, -inf
    %v1297 = vrot.slane %v1296, 4
    %v1298 = vmax.f32 %v1296, %v1297
    %v1299 = vrot.slane %v1298, 2
    %v1300 = vmax.f32 %v1298, %v1299
    %v1301 = vrot.slane %v1300, 1
    %v1302 = vmax.f32 %v1300, %v1301
    %v1303 = vsel %vm906, %v1132, -inf
    %v1304 = vrot.slane %v1303, 4
    %v1305 = vmax.f32 %v1303, %v1304
    %v1306 = vrot.slane %v1305, 2
    %v1307 = vmax.f32 %v1305, %v1306
    %v1308 = vrot.slane %v1307, 1
    %v1309 = vmax.f32 %v1307, %v1308
    %v1310 = vsel %vm906, %v1178, -inf
    %v1311 = vrot.slane %v1310, 4
    %v1312 = vmax.f32 %v1310, %v1311
    %v1313 = vrot.slane %v1312, 2
    %v1314 = vmax.f32 %v1312, %v1313
    %v1315 = vrot.slane %v1314, 1
    %v1316 = vmax.f32 %v1314, %v1315
    %v1317 = vsel %vm906, %v1224, -inf
    %v1318 = vrot.slane %v1317, 4
    %v1319 = vmax.f32 %v1317, %v1318
    %v1320 = vrot.slane %v1319, 2
    %v1321 = vmax.f32 %v1319, %v1320
    %v1322 = vrot.slane %v1321, 1
    %v1323 = vmax.f32 %v1321, %v1322
    %v1324 = vsel %vm906, %v1270, -inf
    %v1325 = vrot.slane %v1324, 4
    %v1326 = vmax.f32 %v1324, %v1325
    %v1327 = vrot.slane %v1326, 2
    %v1328 = vmax.f32 %v1326, %v1327
    %v1329 = vrot.slane %v1328, 1
    %v1330 = vmax.f32 %v1328, %v1329
    %v1331 = vsub.f32 %v948, %v1281
    %v1332 = vsub.f32 %v994, %v1288
    %v1333 = vsub.f32 %v1040, %v1295
    %v1334 = vsub.f32 %v1086, %v1302
    %v1335 = vsub.f32 %v1132, %v1309
    %v1336 = vsub.f32 %v1178, %v1316
    %v1337 = vsub.f32 %v1224, %v1323
    %v1338 = vsub.f32 %v1270, %v1330
    %v1339 = vmul.f32 %v1331, 1.442695
    %v1340 = vpow.pop %v1339
    %v1341 = vmul.f32 %v1332, 1.442695
    %v1342 = vpow.pop %v1341
    %v1343 = vmul.f32 %v1333, 1.442695
    %v1344 = vpow.pop %v1343
    %v1345 = vmul.f32 %v1334, 1.442695
    %v1346 = vpow.pop %v1345
    %v1347 = vmul.f32 %v1335, 1.442695
    %v1348 = vpow.pop %v1347
    %v1349 = vmul.f32 %v1336, 1.442695
    %v1350 = vpow.pop %v1349
    %v1351 = vmul.f32 %v1337, 1.442695
    %v1352 = vpow.pop %v1351
    %v1353 = vmul.f32 %v1338, 1.442695
    %v1354 = vpow.pop %v1353
    %v1355 = vsel %vm906, %v1340, 0.0
    %v1356 = vrot.slane %v1355, 4
    %v1357 = vadd.f32 %v1355, %v1356
    %v1358 = vrot.slane %v1357, 2
    %v1359 = vadd.f32 %v1357, %v1358
    %v1360 = vrot.slane %v1359, 1
    %v1361 = vadd.f32 %v1359, %v1360
    %v1362 = vsel %vm906, %v1342, 0.0
    %v1363 = vrot.slane %v1362, 4
    %v1364 = vadd.f32 %v1362, %v1363
    %v1365 = vrot.slane %v1364, 2
    %v1366 = vadd.f32 %v1364, %v1365
    %v1367 = vrot.slane %v1366, 1
    %v1368 = vadd.f32 %v1366, %v1367
    %v1369 = vsel %vm906, %v1344, 0.0
    %v1370 = vrot.slane %v1369, 4
    %v1371 = vadd.f32 %v1369, %v1370
    %v1372 = vrot.slane %v1371, 2
    %v1373 = vadd.f32 %v1371, %v1372
    %v1374 = vrot.slane %v1373, 1
    %v1375 = vadd.f32 %v1373, %v1374
    %v1376 = vsel %vm906, %v1346, 0.0
    %v1377 = vrot.slane %v1376, 4
    %v1378 = vadd.f32 %v1376, %v1377
    %v1379 = vrot.slane %v1378, 2
    %v1380 = vadd.f32 %v1378, %v1379
    %v1381 = vrot.slane %v1380, 1
    %v1382 = vadd.f32 %v1380, %v1381
    %v1383 = vsel %vm906, %v1348, 0.0
    %v1384 = vrot.slane %v1383, 4
    %v1385 = vadd.f32 %v1383, %v1384
    %v1386 = vrot.slane %v1385, 2
    %v1387 = vadd.f32 %v1385, %v1386
    %v1388 = vrot.slane %v1387, 1
    %v1389 = vadd.f32 %v1387, %v1388
    %v1390 = vsel %vm906, %v1350, 0.0
    %v1391 = vrot.slane %v1390, 4
    %v1392 = vadd.f32 %v1390, %v1391
    %v1393 = vrot.slane %v1392, 2
    %v1394 = vadd.f32 %v1392, %v1393
    %v1395 = vrot.slane %v1394, 1
    %v1396 = vadd.f32 %v1394, %v1395
    %v1397 = vsel %vm906, %v1352, 0.0
    %v1398 = vrot.slane %v1397, 4
    %v1399 = vadd.f32 %v1397, %v1398
    %v1400 = vrot.slane %v1399, 2
    %v1401 = vadd.f32 %v1399, %v1400
    %v1402 = vrot.slane %v1401, 1
    %v1403 = vadd.f32 %v1401, %v1402
    %v1404 = vsel %vm906, %v1354, 0.0
    %v1405 = vrot.slane %v1404, 4
    %v1406 = vadd.f32 %v1404, %v1405
    %v1407 = vrot.slane %v1406, 2
    %v1408 = vadd.f32 %v1406, %v1407
    %v1409 = vrot.slane %v1408, 1
    %v1410 = vadd.f32 %v1408, %v1409
    %v1411 = vrcp.pop %v1361
    %v1412 = vmul.f32 %v1340, %v1411
    %v1413 = vrcp.pop %v1368
    %v1414 = vmul.f32 %v1342, %v1413
    %v1415 = vrcp.pop %v1375
    %v1416 = vmul.f32 %v1344, %v1415
    %v1417 = vrcp.pop %v1382
    %v1418 = vmul.f32 %v1346, %v1417
    %v1419 = vrcp.pop %v1389
    %v1420 = vmul.f32 %v1348, %v1419
    %v1421 = vrcp.pop %v1396
    %v1422 = vmul.f32 %v1350, %v1421
    %v1423 = vrcp.pop %v1403
    %v1424 = vmul.f32 %v1352, %v1423
    %v1425 = vrcp.pop %v1410
    %v1426 = vmul.f32 %v1354, %v1425
    %v1427 = vpack.c.bf16 %v1412, %v1412
    %v1428 = vpack.c.bf16 %v1414, %v1414
    %v1429 = vpack.c.bf16 %v1416, %v1416
    %v1430 = vpack.c.bf16 %v1418, %v1418
    %v1431 = vpack.c.bf16 %v1420, %v1420
    %v1432 = vpack.c.bf16 %v1422, %v1422
    %v1433 = vpack.c.bf16 %v1424, %v1424
    %v1434 = vpack.c.bf16 %v1426, %v1426
    %v1436 = vsel %vm906, %v1427, 0
    %vm1438 = vcmask 1043456
    %v1440 = vsel %vm1438, %v898, 0
    %1442 = vmatprep.subr.bf16.mxu0 0
    %1443 = vmatpush1.bf16.msra.mxu0 0
    %1444 = vmatprep.subr.bf16.mxu0 0
    %1445 = vmatpush1.bf16.msra.mxu0 0
    %1446 = vmatprep.subr.bf16.mxu0 0
    %1447 = vmatpush1.bf16.msra.mxu0 0
    %1448 = vmatprep.subr.bf16.mxu0 0
    %1449 = vmatpush1.bf16.msra.mxu0 0
    %1450 = vmatprep.subr.bf16.mxu0 0
    %1451 = vmatpush1.bf16.msra.mxu0 0
    %1452 = vmatprep.subr.bf16.mxu0 0
    %1453 = vmatpush1.bf16.msra.mxu0 0
    %1454 = vmatprep.subr.bf16.mxu0 0
    %1455 = vmatpush1.bf16.msra.mxu0 0
    %1456 = vmatprep.subr.bf16.mxu0 0
    %1457 = vmatpush1.bf16.msra.mxu0 %v1440
    %1458 = vmatprep.subr.bf16.mxu0 0
    %1459 = vmatpush2.bf16.msra.mxu0 0
    %1460 = vmatprep.subr.bf16.mxu0 0
    %1461 = vmatpush2.bf16.msra.mxu0 0
    %1462 = vmatprep.subr.bf16.mxu0 0
    %1463 = vmatpush2.bf16.msra.mxu0 0
    %1464 = vmatprep.subr.bf16.mxu0 0
    %1465 = vmatpush2.bf16.msra.mxu0 0
    %1466 = vmatprep.subr.bf16.mxu0 0
    %1467 = vmatpush2.bf16.msra.mxu0 0
    %1468 = vmatprep.subr.bf16.mxu0 0
    %1469 = vmatpush2.bf16.msra.mxu0 0
    %1470 = vmatprep.subr.bf16.mxu0 0
    %1471 = vmatpush2.bf16.msra.mxu0 0
    %1472 = vmatprep.subr.bf16.mxu0 0
    %1473 = vmatpush2.bf16.msra.mxu0 0
    %1474 = vmatprep.mubr.bf16.mxu0 0
    %1475 = vmatmul.mubr.bf16.gmra.mxu0 %v1436
    %v1476 = vpop.f32.mrf.mxu0
    %v1477 = vadd.f32 0.0, %v1476
    %v1478 = vpop.f32.mrf.mxu0
    %v1479 = vpop.f32.mrf.mxu0
    %v1480 = vpop.f32.mrf.mxu0
    %1481 = vdwg.mxu0
    %v1483 = vsel %vm906, %v1428, 0
    %v1486 = vsel %vm1438, %v899, 0
    %1488 = vmatprep.subr.bf16.mxu0 0
    %1489 = vmatpush1.bf16.msra.mxu0 0
    %1490 = vmatprep.subr.bf16.mxu0 0
    %1491 = vmatpush1.bf16.msra.mxu0 0
    %1492 = vmatprep.subr.bf16.mxu0 0
    %1493 = vmatpush1.bf16.msra.mxu0 0
    %1494 = vmatprep.subr.bf16.mxu0 0
    %1495 = vmatpush1.bf16.msra.mxu0 0
    %1496 = vmatprep.subr.bf16.mxu0 0
    %1497 = vmatpush1.bf16.msra.mxu0 0
    %1498 = vmatprep.subr.bf16.mxu0 0
    %1499 = vmatpush1.bf16.msra.mxu0 0
    %1500 = vmatprep.subr.bf16.mxu0 0
    %1501 = vmatpush1.bf16.msra.mxu0 0
    %1502 = vmatprep.subr.bf16.mxu0 0
    %1503 = vmatpush1.bf16.msra.mxu0 %v1486
    %1504 = vmatprep.subr.bf16.mxu0 0
    %1505 = vmatpush2.bf16.msra.mxu0 0
    %1506 = vmatprep.subr.bf16.mxu0 0
    %1507 = vmatpush2.bf16.msra.mxu0 0
    %1508 = vmatprep.subr.bf16.mxu0 0
    %1509 = vmatpush2.bf16.msra.mxu0 0
    %1510 = vmatprep.subr.bf16.mxu0 0
    %1511 = vmatpush2.bf16.msra.mxu0 0
    %1512 = vmatprep.subr.bf16.mxu0 0
    %1513 = vmatpush2.bf16.msra.mxu0 0
    %1514 = vmatprep.subr.bf16.mxu0 0
    %1515 = vmatpush2.bf16.msra.mxu0 0
    %1516 = vmatprep.subr.bf16.mxu0 0
    %1517 = vmatpush2.bf16.msra.mxu0 0
    %1518 = vmatprep.subr.bf16.mxu0 0
    %1519 = vmatpush2.bf16.msra.mxu0 0
    %1520 = vmatprep.mubr.bf16.mxu0 0
    %1521 = vmatmul.mubr.bf16.gmra.mxu0 %v1483
    %v1522 = vpop.f32.mrf.mxu0
    %v1523 = vadd.f32 0.0, %v1522
    %v1524 = vpop.f32.mrf.mxu0
    %v1525 = vpop.f32.mrf.mxu0
    %v1526 = vpop.f32.mrf.mxu0
    %1527 = vdwg.mxu0
    %v1529 = vsel %vm906, %v1429, 0
    %v1532 = vsel %vm1438, %v900, 0
    %1534 = vmatprep.subr.bf16.mxu0 0
    %1535 = vmatpush1.bf16.msra.mxu0 0
    %1536 = vmatprep.subr.bf16.mxu0 0
    %1537 = vmatpush1.bf16.msra.mxu0 0
    %1538 = vmatprep.subr.bf16.mxu0 0
    %1539 = vmatpush1.bf16.msra.mxu0 0
    %1540 = vmatprep.subr.bf16.mxu0 0
    %1541 = vmatpush1.bf16.msra.mxu0 0
    %1542 = vmatprep.subr.bf16.mxu0 0
    %1543 = vmatpush1.bf16.msra.mxu0 0
    %1544 = vmatprep.subr.bf16.mxu0 0
    %1545 = vmatpush1.bf16.msra.mxu0 0
    %1546 = vmatprep.subr.bf16.mxu0 0
    %1547 = vmatpush1.bf16.msra.mxu0 0
    %1548 = vmatprep.subr.bf16.mxu0 0
    %1549 = vmatpush1.bf16.msra.mxu0 %v1532
    %1550 = vmatprep.subr.bf16.mxu0 0
    %1551 = vmatpush2.bf16.msra.mxu0 0
    %1552 = vmatprep.subr.bf16.mxu0 0
    %1553 = vmatpush2.bf16.msra.mxu0 0
    %1554 = vmatprep.subr.bf16.mxu0 0
    %1555 = vmatpush2.bf16.msra.mxu0 0
    %1556 = vmatprep.subr.bf16.mxu0 0
    %1557 = vmatpush2.bf16.msra.mxu0 0
    %1558 = vmatprep.subr.bf16.mxu0 0
    %1559 = vmatpush2.bf16.msra.mxu0 0
    %1560 = vmatprep.subr.bf16.mxu0 0
    %1561 = vmatpush2.bf16.msra.mxu0 0
    %1562 = vmatprep.subr.bf16.mxu0 0
    %1563 = vmatpush2.bf16.msra.mxu0 0
    %1564 = vmatprep.subr.bf16.mxu0 0
    %1565 = vmatpush2.bf16.msra.mxu0 0
    %1566 = vmatprep.mubr.bf16.mxu0 0
    %1567 = vmatmul.mubr.bf16.gmra.mxu0 %v1529
    %v1568 = vpop.f32.mrf.mxu0
    %v1569 = vadd.f32 0.0, %v1568
    %v1570 = vpop.f32.mrf.mxu0
    %v1571 = vpop.f32.mrf.mxu0
    %v1572 = vpop.f32.mrf.mxu0
    %1573 = vdwg.mxu0
    %v1575 = vsel %vm906, %v1430, 0
    %v1578 = vsel %vm1438, %v901, 0
    %1580 = vmatprep.subr.bf16.mxu0 0
    %1581 = vmatpush1.bf16.msra.mxu0 0
    %1582 = vmatprep.subr.bf16.mxu0 0
    %1583 = vmatpush1.bf16.msra.mxu0 0
    %1584 = vmatprep.subr.bf16.mxu0 0
    %1585 = vmatpush1.bf16.msra.mxu0 0
    %1586 = vmatprep.subr.bf16.mxu0 0
    %1587 = vmatpush1.bf16.msra.mxu0 0
    %1588 = vmatprep.subr.bf16.mxu0 0
    %1589 = vmatpush1.bf16.msra.mxu0 0
    %1590 = vmatprep.subr.bf16.mxu0 0
    %1591 = vmatpush1.bf16.msra.mxu0 0
    %1592 = vmatprep.subr.bf16.mxu0 0
    %1593 = vmatpush1.bf16.msra.mxu0 0
    %1594 = vmatprep.subr.bf16.mxu0 0
    %1595 = vmatpush1.bf16.msra.mxu0 %v1578
    %1596 = vmatprep.subr.bf16.mxu0 0
    %1597 = vmatpush2.bf16.msra.mxu0 0
    %1598 = vmatprep.subr.bf16.mxu0 0
    %1599 = vmatpush2.bf16.msra.mxu0 0
    %1600 = vmatprep.subr.bf16.mxu0 0
    %1601 = vmatpush2.bf16.msra.mxu0 0
    %1602 = vmatprep.subr.bf16.mxu0 0
    %1603 = vmatpush2.bf16.msra.mxu0 0
    %1604 = vmatprep.subr.bf16.mxu0 0
    %1605 = vmatpush2.bf16.msra.mxu0 0
    %1606 = vmatprep.subr.bf16.mxu0 0
    %1607 = vmatpush2.bf16.msra.mxu0 0
    %1608 = vmatprep.subr.bf16.mxu0 0
    %1609 = vmatpush2.bf16.msra.mxu0 0
    %1610 = vmatprep.subr.bf16.mxu0 0
    %1611 = vmatpush2.bf16.msra.mxu0 0
    %1612 = vmatprep.mubr.bf16.mxu0 0
    %1613 = vmatmul.mubr.bf16.gmra.mxu0 %v1575
    %v1614 = vpop.f32.mrf.mxu0
    %v1615 = vadd.f32 0.0, %v1614
    %v1616 = vpop.f32.mrf.mxu0
    %v1617 = vpop.f32.mrf.mxu0
    %v1618 = vpop.f32.mrf.mxu0
    %1619 = vdwg.mxu0
    %v1621 = vsel %vm906, %v1431, 0
    %v1624 = vsel %vm1438, %v902, 0
    %1626 = vmatprep.subr.bf16.mxu0 0
    %1627 = vmatpush1.bf16.msra.mxu0 0
    %1628 = vmatprep.subr.bf16.mxu0 0
    %1629 = vmatpush1.bf16.msra.mxu0 0
    %1630 = vmatprep.subr.bf16.mxu0 0
    %1631 = vmatpush1.bf16.msra.mxu0 0
    %1632 = vmatprep.subr.bf16.mxu0 0
    %1633 = vmatpush1.bf16.msra.mxu0 0
    %1634 = vmatprep.subr.bf16.mxu0 0
    %1635 = vmatpush1.bf16.msra.mxu0 0
    %1636 = vmatprep.subr.bf16.mxu0 0
    %1637 = vmatpush1.bf16.msra.mxu0 0
    %1638 = vmatprep.subr.bf16.mxu0 0
    %1639 = vmatpush1.bf16.msra.mxu0 0
    %1640 = vmatprep.subr.bf16.mxu0 0
    %1641 = vmatpush1.bf16.msra.mxu0 %v1624
    %1642 = vmatprep.subr.bf16.mxu0 0
    %1643 = vmatpush2.bf16.msra.mxu0 0
    %1644 = vmatprep.subr.bf16.mxu0 0
    %1645 = vmatpush2.bf16.msra.mxu0 0
    %1646 = vmatprep.subr.bf16.mxu0 0
    %1647 = vmatpush2.bf16.msra.mxu0 0
    %1648 = vmatprep.subr.bf16.mxu0 0
    %1649 = vmatpush2.bf16.msra.mxu0 0
    %1650 = vmatprep.subr.bf16.mxu0 0
    %1651 = vmatpush2.bf16.msra.mxu0 0
    %1652 = vmatprep.subr.bf16.mxu0 0
    %1653 = vmatpush2.bf16.msra.mxu0 0
    %1654 = vmatprep.subr.bf16.mxu0 0
    %1655 = vmatpush2.bf16.msra.mxu0 0
    %1656 = vmatprep.subr.bf16.mxu0 0
    %1657 = vmatpush2.bf16.msra.mxu0 0
    %1658 = vmatprep.mubr.bf16.mxu0 0
    %1659 = vmatmul.mubr.bf16.gmra.mxu0 %v1621
    %v1660 = vpop.f32.mrf.mxu0
    %v1661 = vadd.f32 0.0, %v1660
    %v1662 = vpop.f32.mrf.mxu0
    %v1663 = vpop.f32.mrf.mxu0
    %v1664 = vpop.f32.mrf.mxu0
    %1665 = vdwg.mxu0
    %v1667 = vsel %vm906, %v1432, 0
    %v1670 = vsel %vm1438, %v903, 0
    %1672 = vmatprep.subr.bf16.mxu0 0
    %1673 = vmatpush1.bf16.msra.mxu0 0
    %1674 = vmatprep.subr.bf16.mxu0 0
    %1675 = vmatpush1.bf16.msra.mxu0 0
    %1676 = vmatprep.subr.bf16.mxu0 0
    %1677 = vmatpush1.bf16.msra.mxu0 0
    %1678 = vmatprep.subr.bf16.mxu0 0
    %1679 = vmatpush1.bf16.msra.mxu0 0
    %1680 = vmatprep.subr.bf16.mxu0 0
    %1681 = vmatpush1.bf16.msra.mxu0 0
    %1682 = vmatprep.subr.bf16.mxu0 0
    %1683 = vmatpush1.bf16.msra.mxu0 0
    %1684 = vmatprep.subr.bf16.mxu0 0
    %1685 = vmatpush1.bf16.msra.mxu0 0
    %1686 = vmatprep.subr.bf16.mxu0 0
    %1687 = vmatpush1.bf16.msra.mxu0 %v1670
    %1688 = vmatprep.subr.bf16.mxu0 0
    %1689 = vmatpush2.bf16.msra.mxu0 0
    %1690 = vmatprep.subr.bf16.mxu0 0
    %1691 = vmatpush2.bf16.msra.mxu0 0
    %1692 = vmatprep.subr.bf16.mxu0 0
    %1693 = vmatpush2.bf16.msra.mxu0 0
    %1694 = vmatprep.subr.bf16.mxu0 0
    %1695 = vmatpush2.bf16.msra.mxu0 0
    %1696 = vmatprep.subr.bf16.mxu0 0
    %1697 = vmatpush2.bf16.msra.mxu0 0
    %1698 = vmatprep.subr.bf16.mxu0 0
    %1699 = vmatpush2.bf16.msra.mxu0 0
    %1700 = vmatprep.subr.bf16.mxu0 0
    %1701 = vmatpush2.bf16.msra.mxu0 0
    %1702 = vmatprep.subr.bf16.mxu0 0
    %1703 = vmatpush2.bf16.msra.mxu0 0
    %1704 = vmatprep.mubr.bf16.mxu0 0
    %1705 = vmatmul.mubr.bf16.gmra.mxu0 %v1667
    %v1706 = vpop.f32.mrf.mxu0
    %v1707 = vadd.f32 0.0, %v1706
    %v1708 = vpop.f32.mrf.mxu0
    %v1709 = vpop.f32.mrf.mxu0
    %v1710 = vpop.f32.mrf.mxu0
    %1711 = vdwg.mxu0
    %v1713 = vsel %vm906, %v1433, 0
    %v1716 = vsel %vm1438, %v904, 0
    %1718 = vmatprep.subr.bf16.mxu0 0
    %1719 = vmatpush1.bf16.msra.mxu0 0
    %1720 = vmatprep.subr.bf16.mxu0 0
    %1721 = vmatpush1.bf16.msra.mxu0 0
    %1722 = vmatprep.subr.bf16.mxu0 0
    %1723 = vmatpush1.bf16.msra.mxu0 0
    %1724 = vmatprep.subr.bf16.mxu0 0
    %1725 = vmatpush1.bf16.msra.mxu0 0
    %1726 = vmatprep.subr.bf16.mxu0 0
    %1727 = vmatpush1.bf16.msra.mxu0 0
    %1728 = vmatprep.subr.bf16.mxu0 0
    %1729 = vmatpush1.bf16.msra.mxu0 0
    %1730 = vmatprep.subr.bf16.mxu0 0
    %1731 = vmatpush1.bf16.msra.mxu0 0
    %1732 = vmatprep.subr.bf16.mxu0 0
    %1733 = vmatpush1.bf16.msra.mxu0 %v1716
    %1734 = vmatprep.subr.bf16.mxu0 0
    %1735 = vmatpush2.bf16.msra.mxu0 0
    %1736 = vmatprep.subr.bf16.mxu0 0
    %1737 = vmatpush2.bf16.msra.mxu0 0
    %1738 = vmatprep.subr.bf16.mxu0 0
    %1739 = vmatpush2.bf16.msra.mxu0 0
    %1740 = vmatprep.subr.bf16.mxu0 0
    %1741 = vmatpush2.bf16.msra.mxu0 0
    %1742 = vmatprep.subr.bf16.mxu0 0
    %1743 = vmatpush2.bf16.msra.mxu0 0
    %1744 = vmatprep.subr.bf16.mxu0 0
    %1745 = vmatpush2.bf16.msra.mxu0 0
    %1746 = vmatprep.subr.bf16.mxu0 0
    %1747 = vmatpush2.bf16.msra.mxu0 0
    %1748 = vmatprep.subr.bf16.mxu0 0
    %1749 = vmatpush2.bf16.msra.mxu0 0
    %1750 = vmatprep.mubr.bf16.mxu0 0
    %1751 = vmatmul.mubr.bf16.gmra.mxu0 %v1713
    %v1752 = vpop.f32.mrf.mxu0
    %v1753 = vadd.f32 0.0, %v1752
    %v1754 = vpop.f32.mrf.mxu0
    %v1755 = vpop.f32.mrf.mxu0
    %v1756 = vpop.f32.mrf.mxu0
    %1757 = vdwg.mxu0
    %v1759 = vsel %vm906, %v1434, 0
    %v1762 = vsel %vm1438, %v905, 0
    %1764 = vmatprep.subr.bf16.mxu0 0
    %1765 = vmatpush1.bf16.msra.mxu0 0
    %1766 = vmatprep.subr.bf16.mxu0 0
    %1767 = vmatpush1.bf16.msra.mxu0 0
    %1768 = vmatprep.subr.bf16.mxu0 0
    %1769 = vmatpush1.bf16.msra.mxu0 0
    %1770 = vmatprep.subr.bf16.mxu0 0
    %1771 = vmatpush1.bf16.msra.mxu0 0
    %1772 = vmatprep.subr.bf16.mxu0 0
    %1773 = vmatpush1.bf16.msra.mxu0 0
    %1774 = vmatprep.subr.bf16.mxu0 0
    %1775 = vmatpush1.bf16.msra.mxu0 0
    %1776 = vmatprep.subr.bf16.mxu0 0
    %1777 = vmatpush1.bf16.msra.mxu0 0
    %1778 = vmatprep.subr.bf16.mxu0 0
    %1779 = vmatpush1.bf16.msra.mxu0 %v1762
    %1780 = vmatprep.subr.bf16.mxu0 0
    %1781 = vmatpush2.bf16.msra.mxu0 0
    %1782 = vmatprep.subr.bf16.mxu0 0
    %1783 = vmatpush2.bf16.msra.mxu0 0
    %1784 = vmatprep.subr.bf16.mxu0 0
    %1785 = vmatpush2.bf16.msra.mxu0 0
    %1786 = vmatprep.subr.bf16.mxu0 0
    %1787 = vmatpush2.bf16.msra.mxu0 0
    %1788 = vmatprep.subr.bf16.mxu0 0
    %1789 = vmatpush2.bf16.msra.mxu0 0
    %1790 = vmatprep.subr.bf16.mxu0 0
    %1791 = vmatpush2.bf16.msra.mxu0 0
    %1792 = vmatprep.subr.bf16.mxu0 0
    %1793 = vmatpush2.bf16.msra.mxu0 0
    %1794 = vmatprep.subr.bf16.mxu0 0
    %1795 = vmatpush2.bf16.msra.mxu0 0
    %1796 = vmatprep.mubr.bf16.mxu0 0
    %1797 = vmatmul.mubr.bf16.gmra.mxu0 %v1759
    %v1798 = vpop.f32.mrf.mxu0
    %v1799 = vadd.f32 0.0, %v1798
    %v1800 = vpop.f32.mrf.mxu0
    %v1801 = vpop.f32.mrf.mxu0
    %v1802 = vpop.f32.mrf.mxu0
    %1803 = vdwg.mxu0
    %v1804 = vpack.c.bf16 %v1523, %v1477
    %v1805 = vld [vmem:[%s4] sm:$0xf]
    %v1807 = vsel %vm906, %v1804, 0
    %v1810 = vsel %vm1438, %v1805, 0
    %1812 = vmatprep.subr.bf16.mxu0 0
    %1813 = vmatpush1.bf16.msra.mxu0 0
    %1814 = vmatprep.subr.bf16.mxu0 0
    %1815 = vmatpush1.bf16.msra.mxu0 0
    %1816 = vmatprep.subr.bf16.mxu0 0
    %1817 = vmatpush1.bf16.msra.mxu0 0
    %1818 = vmatprep.subr.bf16.mxu0 0
    %1819 = vmatpush1.bf16.msra.mxu0 0
    %1820 = vmatprep.subr.bf16.mxu0 0
    %1821 = vmatpush1.bf16.msra.mxu0 0
    %1822 = vmatprep.subr.bf16.mxu0 0
    %1823 = vmatpush1.bf16.msra.mxu0 0
    %1824 = vmatprep.subr.bf16.mxu0 0
    %1825 = vmatpush1.bf16.msra.mxu0 0
    %1826 = vmatprep.subr.bf16.mxu0 0
    %1827 = vmatpush1.bf16.msra.mxu0 %v1810
    %1828 = vmatprep.subr.bf16.mxu0 0
    %1829 = vmatpush2.bf16.msra.mxu0 0
    %1830 = vmatprep.subr.bf16.mxu0 0
    %1831 = vmatpush2.bf16.msra.mxu0 0
    %1832 = vmatprep.subr.bf16.mxu0 0
    %1833 = vmatpush2.bf16.msra.mxu0 0
    %1834 = vmatprep.subr.bf16.mxu0 0
    %1835 = vmatpush2.bf16.msra.mxu0 0
    %1836 = vmatprep.subr.bf16.mxu0 0
    %1837 = vmatpush2.bf16.msra.mxu0 0
    %1838 = vmatprep.subr.bf16.mxu0 0
    %1839 = vmatpush2.bf16.msra.mxu0 0
    %1840 = vmatprep.subr.bf16.mxu0 0
    %1841 = vmatpush2.bf16.msra.mxu0 0
    %1842 = vmatprep.subr.bf16.mxu0 0
    %1843 = vmatpush2.bf16.msra.mxu0 0
    %1844 = vmatprep.mubr.bf16.mxu0 0
    %1845 = vmatmul.mubr.bf16.gmra.mxu0 %v1807
    %v1846 = vpop.f32.mrf.mxu0
    %v1847 = vadd.f32 0.0, %v1846
    %v1848 = vpop.f32.mrf.mxu0
    %v1849 = vpop.f32.mrf.mxu0
    %v1850 = vadd.f32 0.0, %v1849
    %v1851 = vpop.f32.mrf.mxu0
    %1852 = vdwg.mxu0
    %v1854 = vlaneseq
    %v1855 = vshrl.u32 %v1854, 7
    %v1856 = vsub.s32 0, %v1855
    %v1857 = vrot.slane %v63, %v1856
    %v1859 = vadd.f32 %v1857, %v1847
    %v1860 = vadd.f32 %v1857, %v1850
    %v1861 = vpack.c.bf16 %v1615, %v1569
    %s1862 = scalar_lea.vmem %s4, 4
    %v1863 = vld [vmem:[%s1862] sm:$0xf]
    %v1865 = vsel %vm906, %v1861, 0
    %v1868 = vsel %vm1438, %v1863, 0
    %1870 = vmatprep.subr.bf16.mxu0 0
    %1871 = vmatpush1.bf16.msra.mxu0 0
    %1872 = vmatprep.subr.bf16.mxu0 0
    %1873 = vmatpush1.bf16.msra.mxu0 0
    %1874 = vmatprep.subr.bf16.mxu0 0
    %1875 = vmatpush1.bf16.msra.mxu0 0
    %1876 = vmatprep.subr.bf16.mxu0 0
    %1877 = vmatpush1.bf16.msra.mxu0 0
    %1878 = vmatprep.subr.bf16.mxu0 0
    %1879 = vmatpush1.bf16.msra.mxu0 0
    %1880 = vmatprep.subr.bf16.mxu0 0
    %1881 = vmatpush1.bf16.msra.mxu0 0
    %1882 = vmatprep.subr.bf16.mxu0 0
    %1883 = vmatpush1.bf16.msra.mxu0 0
    %1884 = vmatprep.subr.bf16.mxu0 0
    %1885 = vmatpush1.bf16.msra.mxu0 %v1868
    %1886 = vmatprep.subr.bf16.mxu0 0
    %1887 = vmatpush2.bf16.msra.mxu0 0
    %1888 = vmatprep.subr.bf16.mxu0 0
    %1889 = vmatpush2.bf16.msra.mxu0 0
    %1890 = vmatprep.subr.bf16.mxu0 0
    %1891 = vmatpush2.bf16.msra.mxu0 0
    %1892 = vmatprep.subr.bf16.mxu0 0
    %1893 = vmatpush2.bf16.msra.mxu0 0
    %1894 = vmatprep.subr.bf16.mxu0 0
    %1895 = vmatpush2.bf16.msra.mxu0 0
    %1896 = vmatprep.subr.bf16.mxu0 0
    %1897 = vmatpush2.bf16.msra.mxu0 0
    %1898 = vmatprep.subr.bf16.mxu0 0
    %1899 = vmatpush2.bf16.msra.mxu0 0
    %1900 = vmatprep.subr.bf16.mxu0 0
    %1901 = vmatpush2.bf16.msra.mxu0 0
    %1902 = vmatprep.mubr.bf16.mxu0 0
    %1903 = vmatmul.mubr.bf16.gmra.mxu0 %v1865
    %v1904 = vpop.f32.mrf.mxu0
    %v1905 = vadd.f32 0.0, %v1904
    %v1906 = vpop.f32.mrf.mxu0
    %v1907 = vpop.f32.mrf.mxu0
    %v1908 = vadd.f32 0.0, %v1907
    %v1909 = vpop.f32.mrf.mxu0
    %1910 = vdwg.mxu0
    %v1911 = vadd.f32 %v1859, %v1905
    %v1912 = vadd.f32 %v1860, %v1908
    %v1913 = vpack.c.bf16 %v1707, %v1661
    %s1914 = scalar_lea.vmem %s4, 8
    %v1915 = vld [vmem:[%s1914] sm:$0xf]
    %v1917 = vsel %vm906, %v1913, 0
    %v1920 = vsel %vm1438, %v1915, 0
    %1922 = vmatprep.subr.bf16.mxu0 0
    %1923 = vmatpush1.bf16.msra.mxu0 0
    %1924 = vmatprep.subr.bf16.mxu0 0
    %1925 = vmatpush1.bf16.msra.mxu0 0
    %1926 = vmatprep.subr.bf16.mxu0 0
    %1927 = vmatpush1.bf16.msra.mxu0 0
    %1928 = vmatprep.subr.bf16.mxu0 0
    %1929 = vmatpush1.bf16.msra.mxu0 0
    %1930 = vmatprep.subr.bf16.mxu0 0
    %1931 = vmatpush1.bf16.msra.mxu0 0
    %1932 = vmatprep.subr.bf16.mxu0 0
    %1933 = vmatpush1.bf16.msra.mxu0 0
    %1934 = vmatprep.subr.bf16.mxu0 0
    %1935 = vmatpush1.bf16.msra.mxu0 0
    %1936 = vmatprep.subr.bf16.mxu0 0
    %1937 = vmatpush1.bf16.msra.mxu0 %v1920
    %1938 = vmatprep.subr.bf16.mxu0 0
    %1939 = vmatpush2.bf16.msra.mxu0 0
    %1940 = vmatprep.subr.bf16.mxu0 0
    %1941 = vmatpush2.bf16.msra.mxu0 0
    %1942 = vmatprep.subr.bf16.mxu0 0
    %1943 = vmatpush2.bf16.msra.mxu0 0
    %1944 = vmatprep.subr.bf16.mxu0 0
    %1945 = vmatpush2.bf16.msra.mxu0 0
    %1946 = vmatprep.subr.bf16.mxu0 0
    %1947 = vmatpush2.bf16.msra.mxu0 0
    %1948 = vmatprep.subr.bf16.mxu0 0
    %1949 = vmatpush2.bf16.msra.mxu0 0
    %1950 = vmatprep.subr.bf16.mxu0 0
    %1951 = vmatpush2.bf16.msra.mxu0 0
    %1952 = vmatprep.subr.bf16.mxu0 0
    %1953 = vmatpush2.bf16.msra.mxu0 0
    %1954 = vmatprep.mubr.bf16.mxu0 0
    %1955 = vmatmul.mubr.bf16.gmra.mxu0 %v1917
    %v1956 = vpop.f32.mrf.mxu0
    %v1957 = vadd.f32 0.0, %v1956
    %v1958 = vpop.f32.mrf.mxu0
    %v1959 = vpop.f32.mrf.mxu0
    %v1960 = vadd.f32 0.0, %v1959
    %v1961 = vpop.f32.mrf.mxu0
    %1962 = vdwg.mxu0
    %v1963 = vadd.f32 %v1911, %v1957
    %v1964 = vadd.f32 %v1912, %v1960
    %v1965 = vpack.c.bf16 %v1799, %v1753
    %s1966 = scalar_lea.vmem %s4, 12
    %v1967 = vld [vmem:[%s1966] sm:$0xf]
    %v1969 = vsel %vm906, %v1965, 0
    %v1972 = vsel %vm1438, %v1967, 0
    %1974 = vmatprep.subr.bf16.mxu0 0
    %1975 = vmatpush1.bf16.msra.mxu0 0
    %1976 = vmatprep.subr.bf16.mxu0 0
    %1977 = vmatpush1.bf16.msra.mxu0 0
    %1978 = vmatprep.subr.bf16.mxu0 0
    %1979 = vmatpush1.bf16.msra.mxu0 0
    %1980 = vmatprep.subr.bf16.mxu0 0
    %1981 = vmatpush1.bf16.msra.mxu0 0
    %1982 = vmatprep.subr.bf16.mxu0 0
    %1983 = vmatpush1.bf16.msra.mxu0 0
    %1984 = vmatprep.subr.bf16.mxu0 0
    %1985 = vmatpush1.bf16.msra.mxu0 0
    %1986 = vmatprep.subr.bf16.mxu0 0
    %1987 = vmatpush1.bf16.msra.mxu0 0
    %1988 = vmatprep.subr.bf16.mxu0 0
    %1989 = vmatpush1.bf16.msra.mxu0 %v1972
    %1990 = vmatprep.subr.bf16.mxu0 0
    %1991 = vmatpush2.bf16.msra.mxu0 0
    %1992 = vmatprep.subr.bf16.mxu0 0
    %1993 = vmatpush2.bf16.msra.mxu0 0
    %1994 = vmatprep.subr.bf16.mxu0 0
    %1995 = vmatpush2.bf16.msra.mxu0 0
    %1996 = vmatprep.subr.bf16.mxu0 0
    %1997 = vmatpush2.bf16.msra.mxu0 0
    %1998 = vmatprep.subr.bf16.mxu0 0
    %1999 = vmatpush2.bf16.msra.mxu0 0
    %2000 = vmatprep.subr.bf16.mxu0 0
    %2001 = vmatpush2.bf16.msra.mxu0 0
    %2002 = vmatprep.subr.bf16.mxu0 0
    %2003 = vmatpush2.bf16.msra.mxu0 0
    %2004 = vmatprep.subr.bf16.mxu0 0
    %2005 = vmatpush2.bf16.msra.mxu0 0
    %2006 = vmatprep.mubr.bf16.mxu0 0
    %2007 = vmatmul.mubr.bf16.gmra.mxu0 %v1969
    %v2008 = vpop.f32.mrf.mxu0
    %v2009 = vadd.f32 0.0, %v2008
    %v2010 = vpop.f32.mrf.mxu0
    %v2011 = vpop.f32.mrf.mxu0
    %v2012 = vadd.f32 0.0, %v2011
    %v2013 = vpop.f32.mrf.mxu0
    %2014 = vdwg.mxu0
    %v2015 = vadd.f32 %v1963, %v2009
    %v2016 = vadd.f32 %v1964, %v2012
    %v2017 = vadd.f32 %v75, %v2015
    %v2018 = vadd.f32 %v76, %v2016
    %v2019 = vsel %vm103, %v2017, 0.0
    %2020 = vadd.xlane.f32.xlu0 %v2019
    %v2021 = vpop.xlane.xlu0 %2020
    %v2022 = vsel %vm103, %v2018, 0.0
    %2023 = vadd.xlane.f32.xlu0 %v2022
    %v2024 = vpop.xlane.xlu0 %2023
    %v2025 = vrcp.pop 32.0
    %v2026 = vmul.f32 %v2021, %v2025
    %v2027 = vmul.f32 %v2024, %v2025
    %v2028 = vsub.f32 %v2017, %v2026
    %v2029 = vsub.f32 %v2018, %v2027
    %v2030 = vmul.f32 %v2028, %v2028
    %v2031 = vmul.f32 %v2029, %v2029
    %v2032 = vsel %vm103, %v2030, 0.0
    %2033 = vadd.xlane.f32.xlu0 %v2032
    %v2034 = vpop.xlane.xlu0 %2033
    %v2035 = vsel %vm103, %v2031, 0.0
    %2036 = vadd.xlane.f32.xlu0 %v2035
    %v2037 = vpop.xlane.xlu0 %2036
    %v2038 = vmul.f32 %v2034, %v2025
    %v2039 = vmul.f32 %v2037, %v2025
    %v2040 = vadd.f32 %v2038, 1e-05
    %v2041 = vadd.f32 %v2039, 1e-05
    %v2042 = vrsqrt.pop %v2040
    %v2043 = vrsqrt.pop %v2041
    %v2044 = vmul.f32 %v2028, %v2042
    %v2045 = vmul.f32 %v2029, %v2043
    %v2047 = vlaneseq
    %v2048 = vshrl.u32 %v2047, 7
    %v2049 = vsub.s32 0, %v2048
    %v2050 = vrot.slane %v52, %v2049
    %v2052 = vmul.f32 %v2044, %v2050
    %v2053 = vmul.f32 %v2045, %v2050
    %v2055 = vlaneseq
    %v2056 = vshrl.u32 %v2055, 7
    %v2057 = vsub.s32 0, %v2056
    %v2058 = vrot.slane %v54, %v2057
    %v2060 = vadd.f32 %v2052, %v2058
    %v2061 = vadd.f32 %v2053, %v2058
    %v2062 = vpack.c.bf16 %v2061, %v2060
    %v2063 = vld [vmem:[%s6] sm:$0xf]
    %v2064 = vld [vmem:[%s6 + $0x4] sm:$0xf]
    %v2065 = vld [vmem:[%s6 + $0x8] sm:$0xf]
    %v2066 = vld [vmem:[%s6 + $0xc] sm:$0xf]
    %v2067 = vld [vmem:[%s7] sm:$0x1]
    %v2069 = vlaneseq
    %v2070 = vshrl.u32 %v2069, 7
    %v2071 = vsub.s32 0, %v2070
    %v2072 = vrot.slane %v2067, %v2071
    %v2076 = vunpack.c.l.b16 %v77
    %v2077 = vunpack.c.l.b16 %v78
    %v2078 = vpack.c.b16 %v2077, %v2076
    %v2083 = vunpack.c.l.b16 %v2063
    %v2084 = vunpack.c.l.b16 %v2064
    %v2085 = vunpack.c.l.b16 %v2065
    %v2086 = vunpack.c.l.b16 %v2066
    %v2087 = vpack.c.b16 %v2084, %v2083
    %v2088 = vpack.c.b16 %v2086, %v2085
    %v2092 = vsel %vm103, %v2078, 0
    %2094 = vmatprep.subr.bf16.mxu0 0
    %2095 = vmatpush1.bf16.msra.mxu0 0
    %2096 = vmatprep.subr.bf16.mxu0 0
    %2097 = vmatpush1.bf16.msra.mxu0 0
    %2098 = vmatprep.subr.bf16.mxu0 0
    %2099 = vmatpush1.bf16.msra.mxu0 0
    %2100 = vmatprep.subr.bf16.mxu0 0
    %2101 = vmatpush1.bf16.msra.mxu0 0
    %2102 = vmatprep.subr.bf16.mxu0 0
    %2103 = vmatpush1.bf16.msra.mxu0 0
    %2104 = vmatprep.subr.bf16.mxu0 0
    %2105 = vmatpush1.bf16.msra.mxu0 0
    %2106 = vmatprep.subr.bf16.mxu0 0
    %2107 = vmatpush1.bf16.msra.mxu0 %v2088
    %2108 = vmatprep.subr.bf16.mxu0 0
    %2109 = vmatpush1.bf16.msra.mxu0 %v2087
    %2110 = vmatprep.subr.bf16.mxu0 0
    %2111 = vmatpush2.bf16.msra.mxu0 0
    %2112 = vmatprep.subr.bf16.mxu0 0
    %2113 = vmatpush2.bf16.msra.mxu0 0
    %2114 = vmatprep.subr.bf16.mxu0 0
    %2115 = vmatpush2.bf16.msra.mxu0 0
    %2116 = vmatprep.subr.bf16.mxu0 0
    %2117 = vmatpush2.bf16.msra.mxu0 0
    %2118 = vmatprep.subr.bf16.mxu0 0
    %2119 = vmatpush2.bf16.msra.mxu0 0
    %2120 = vmatprep.subr.bf16.mxu0 0
    %2121 = vmatpush2.bf16.msra.mxu0 0
    %2122 = vmatprep.subr.bf16.mxu0 0
    %2123 = vmatpush2.bf16.msra.mxu0 0
    %2124 = vmatprep.subr.bf16.mxu0 0
    %2125 = vmatpush2.bf16.msra.mxu0 0
    %2126 = vmatprep.mubr.bf16.mxu0 0
    %2127 = vmatmul.mubr.bf16.gmra.mxu0 %v2092
    %v2128 = vpop.f32.mrf.mxu0
    %v2129 = vadd.f32 %v2072, %v2128
    %v2130 = vpop.f32.mrf.mxu0
    %v2131 = vpop.f32.mrf.mxu0
    %v2132 = vadd.f32 %v2072, %v2131
    %v2133 = vpop.f32.mrf.mxu0
    %2134 = vdwg.mxu0
    %s2135 = scalar_lea.vmem %s6, 64
    %v2136 = vld [vmem:[%s2135] sm:$0xf]
    %v2137 = vld [vmem:[%s2135 + $0x4] sm:$0xf]
    %v2138 = vld [vmem:[%s2135 + $0x8] sm:$0xf]
    %v2139 = vld [vmem:[%s2135 + $0xc] sm:$0xf]
    %s2140 = scalar_lea.vmem %s7, 4
    %v2141 = vld [vmem:[%s2140] sm:$0x1]
    %v2143 = vlaneseq
    %v2144 = vshrl.u32 %v2143, 7
    %v2145 = vsub.s32 0, %v2144
    %v2146 = vrot.slane %v2141, %v2145
    %v2152 = vunpack.c.l.b16 %v2136
    %v2153 = vunpack.c.l.b16 %v2137
    %v2154 = vunpack.c.l.b16 %v2138
    %v2155 = vunpack.c.l.b16 %v2139
    %v2156 = vpack.c.b16 %v2153, %v2152
    %v2157 = vpack.c.b16 %v2155, %v2154
    %v2161 = vsel %vm103, %v2062, 0
    %2163 = vmatprep.subr.bf16.mxu0 0
    %2164 = vmatpush1.bf16.msra.mxu0 0
    %2165 = vmatprep.subr.bf16.mxu0 0
    %2166 = vmatpush1.bf16.msra.mxu0 0
    %2167 = vmatprep.subr.bf16.mxu0 0
    %2168 = vmatpush1.bf16.msra.mxu0 0
    %2169 = vmatprep.subr.bf16.mxu0 0
    %2170 = vmatpush1.bf16.msra.mxu0 0
    %2171 = vmatprep.subr.bf16.mxu0 0
    %2172 = vmatpush1.bf16.msra.mxu0 0
    %2173 = vmatprep.subr.bf16.mxu0 0
    %2174 = vmatpush1.bf16.msra.mxu0 0
    %2175 = vmatprep.subr.bf16.mxu0 0
    %2176 = vmatpush1.bf16.msra.mxu0 %v2157
    %2177 = vmatprep.subr.bf16.mxu0 0
    %2178 = vmatpush1.bf16.msra.mxu0 %v2156
    %2179 = vmatprep.subr.bf16.mxu0 0
    %2180 = vmatpush2.bf16.msra.mxu0 0
    %2181 = vmatprep.subr.bf16.mxu0 0
    %2182 = vmatpush2.bf16.msra.mxu0 0
    %2183 = vmatprep.subr.bf16.mxu0 0
    %2184 = vmatpush2.bf16.msra.mxu0 0
    %2185 = vmatprep.subr.bf16.mxu0 0
    %2186 = vmatpush2.bf16.msra.mxu0 0
    %2187 = vmatprep.subr.bf16.mxu0 0
    %2188 = vmatpush2.bf16.msra.mxu0 0
    %2189 = vmatprep.subr.bf16.mxu0 0
    %2190 = vmatpush2.bf16.msra.mxu0 0
    %2191 = vmatprep.subr.bf16.mxu0 0
    %2192 = vmatpush2.bf16.msra.mxu0 0
    %2193 = vmatprep.subr.bf16.mxu0 0
    %2194 = vmatpush2.bf16.msra.mxu0 0
    %2195 = vmatprep.mubr.bf16.mxu0 0
    %2196 = vmatmul.mubr.bf16.gmra.mxu0 %v2161
    %v2197 = vpop.f32.mrf.mxu0
    %v2198 = vadd.f32 %v2146, %v2197
    %v2199 = vpop.f32.mrf.mxu0
    %v2200 = vpop.f32.mrf.mxu0
    %v2201 = vadd.f32 %v2146, %v2200
    %v2202 = vpop.f32.mrf.mxu0
    %2203 = vdwg.mxu0
    %s2204 = scalar_lea.vmem %s6, 128
    %v2205 = vld [vmem:[%s2204] sm:$0xf]
    %v2206 = vld [vmem:[%s2204 + $0x4] sm:$0xf]
    %v2207 = vld [vmem:[%s2204 + $0x8] sm:$0xf]
    %v2208 = vld [vmem:[%s2204 + $0xc] sm:$0xf]
    %s2209 = scalar_lea.vmem %s7, 8
    %v2210 = vld [vmem:[%s2209] sm:$0x1]
    %v2212 = vlaneseq
    %v2213 = vshrl.u32 %v2212, 7
    %v2214 = vsub.s32 0, %v2213
    %v2215 = vrot.slane %v2210, %v2214
    %v2221 = vunpack.c.l.b16 %v2205
    %v2222 = vunpack.c.l.b16 %v2206
    %v2223 = vunpack.c.l.b16 %v2207
    %v2224 = vunpack.c.l.b16 %v2208
    %v2225 = vpack.c.b16 %v2222, %v2221
    %v2226 = vpack.c.b16 %v2224, %v2223
    %2229 = vmatprep.subr.bf16.mxu0 0
    %2230 = vmatpush1.bf16.msra.mxu0 0
    %2231 = vmatprep.subr.bf16.mxu0 0
    %2232 = vmatpush1.bf16.msra.mxu0 0
    %2233 = vmatprep.subr.bf16.mxu0 0
    %2234 = vmatpush1.bf16.msra.mxu0 0
    %2235 = vmatprep.subr.bf16.mxu0 0
    %2236 = vmatpush1.bf16.msra.mxu0 0
    %2237 = vmatprep.subr.bf16.mxu0 0
    %2238 = vmatpush1.bf16.msra.mxu0 0
    %2239 = vmatprep.subr.bf16.mxu0 0
    %2240 = vmatpush1.bf16.msra.mxu0 0
    %2241 = vmatprep.subr.bf16.mxu0 0
    %2242 = vmatpush1.bf16.msra.mxu0 %v2226
    %2243 = vmatprep.subr.bf16.mxu0 0
    %2244 = vmatpush1.bf16.msra.mxu0 %v2225
    %2245 = vmatprep.subr.bf16.mxu0 0
    %2246 = vmatpush2.bf16.msra.mxu0 0
    %2247 = vmatprep.subr.bf16.mxu0 0
    %2248 = vmatpush2.bf16.msra.mxu0 0
    %2249 = vmatprep.subr.bf16.mxu0 0
    %2250 = vmatpush2.bf16.msra.mxu0 0
    %2251 = vmatprep.subr.bf16.mxu0 0
    %2252 = vmatpush2.bf16.msra.mxu0 0
    %2253 = vmatprep.subr.bf16.mxu0 0
    %2254 = vmatpush2.bf16.msra.mxu0 0
    %2255 = vmatprep.subr.bf16.mxu0 0
    %2256 = vmatpush2.bf16.msra.mxu0 0
    %2257 = vmatprep.subr.bf16.mxu0 0
    %2258 = vmatpush2.bf16.msra.mxu0 0
    %2259 = vmatprep.subr.bf16.mxu0 0
    %2260 = vmatpush2.bf16.msra.mxu0 0
    %2261 = vmatprep.mubr.bf16.mxu0 0
    %2262 = vmatmul.mubr.bf16.gmra.mxu0 %v2161
    %v2263 = vpop.f32.mrf.mxu0
    %v2264 = vadd.f32 %v2215, %v2263
    %v2265 = vpop.f32.mrf.mxu0
    %v2266 = vpop.f32.mrf.mxu0
    %v2267 = vadd.f32 %v2215, %v2266
    %v2268 = vpop.f32.mrf.mxu0
    %2269 = vdwg.mxu0
    %v2270 = vmul.f32 %v2129, 0.35355338
    %v2271 = vmul.f32 %v2132, 0.35355338
    %s2272 = scalar_lea.vmem %s6, 16
    %v2273 = vld [vmem:[%s2272] sm:$0xf]
    %v2274 = vld [vmem:[%s2272 + $0x4] sm:$0xf]
    %v2275 = vld [vmem:[%s2272 + $0x8] sm:$0xf]
    %v2276 = vld [vmem:[%s2272 + $0xc] sm:$0xf]
    %s2277 = scalar_lea.vmem %s7, 1
    %v2278 = vld [vmem:[%s2277] sm:$0x1]
    %v2280 = vlaneseq
    %v2281 = vshrl.u32 %v2280, 7
    %v2282 = vsub.s32 0, %v2281
    %v2283 = vrot.slane %v2278, %v2282
    %v2289 = vunpack.c.l.b16 %v2273
    %v2290 = vunpack.c.l.b16 %v2274
    %v2291 = vunpack.c.l.b16 %v2275
    %v2292 = vunpack.c.l.b16 %v2276
    %v2293 = vpack.c.b16 %v2290, %v2289
    %v2294 = vpack.c.b16 %v2292, %v2291
    %2297 = vmatprep.subr.bf16.mxu0 0
    %2298 = vmatpush1.bf16.msra.mxu0 0
    %2299 = vmatprep.subr.bf16.mxu0 0
    %2300 = vmatpush1.bf16.msra.mxu0 0
    %2301 = vmatprep.subr.bf16.mxu0 0
    %2302 = vmatpush1.bf16.msra.mxu0 0
    %2303 = vmatprep.subr.bf16.mxu0 0
    %2304 = vmatpush1.bf16.msra.mxu0 0
    %2305 = vmatprep.subr.bf16.mxu0 0
    %2306 = vmatpush1.bf16.msra.mxu0 0
    %2307 = vmatprep.subr.bf16.mxu0 0
    %2308 = vmatpush1.bf16.msra.mxu0 0
    %2309 = vmatprep.subr.bf16.mxu0 0
    %2310 = vmatpush1.bf16.msra.mxu0 %v2294
    %2311 = vmatprep.subr.bf16.mxu0 0
    %2312 = vmatpush1.bf16.msra.mxu0 %v2293
    %2313 = vmatprep.subr.bf16.mxu0 0
    %2314 = vmatpush2.bf16.msra.mxu0 0
    %2315 = vmatprep.subr.bf16.mxu0 0
    %2316 = vmatpush2.bf16.msra.mxu0 0
    %2317 = vmatprep.subr.bf16.mxu0 0
    %2318 = vmatpush2.bf16.msra.mxu0 0
    %2319 = vmatprep.subr.bf16.mxu0 0
    %2320 = vmatpush2.bf16.msra.mxu0 0
    %2321 = vmatprep.subr.bf16.mxu0 0
    %2322 = vmatpush2.bf16.msra.mxu0 0
    %2323 = vmatprep.subr.bf16.mxu0 0
    %2324 = vmatpush2.bf16.msra.mxu0 0
    %2325 = vmatprep.subr.bf16.mxu0 0
    %2326 = vmatpush2.bf16.msra.mxu0 0
    %2327 = vmatprep.subr.bf16.mxu0 0
    %2328 = vmatpush2.bf16.msra.mxu0 0
    %2329 = vmatprep.mubr.bf16.mxu0 0
    %2330 = vmatmul.mubr.bf16.gmra.mxu0 %v2092
    %v2331 = vpop.f32.mrf.mxu0
    %v2332 = vadd.f32 %v2283, %v2331
    %v2333 = vpop.f32.mrf.mxu0
    %v2334 = vpop.f32.mrf.mxu0
    %v2335 = vadd.f32 %v2283, %v2334
    %v2336 = vpop.f32.mrf.mxu0
    %2337 = vdwg.mxu0
    %s2338 = scalar_lea.vmem %s6, 80
    %v2339 = vld [vmem:[%s2338] sm:$0xf]
    %v2340 = vld [vmem:[%s2338 + $0x4] sm:$0xf]
    %v2341 = vld [vmem:[%s2338 + $0x8] sm:$0xf]
    %v2342 = vld [vmem:[%s2338 + $0xc] sm:$0xf]
    %s2343 = scalar_lea.vmem %s7, 5
    %v2344 = vld [vmem:[%s2343] sm:$0x1]
    %v2346 = vlaneseq
    %v2347 = vshrl.u32 %v2346, 7
    %v2348 = vsub.s32 0, %v2347
    %v2349 = vrot.slane %v2344, %v2348
    %v2355 = vunpack.c.l.b16 %v2339
    %v2356 = vunpack.c.l.b16 %v2340
    %v2357 = vunpack.c.l.b16 %v2341
    %v2358 = vunpack.c.l.b16 %v2342
    %v2359 = vpack.c.b16 %v2356, %v2355
    %v2360 = vpack.c.b16 %v2358, %v2357
    %2363 = vmatprep.subr.bf16.mxu0 0
    %2364 = vmatpush1.bf16.msra.mxu0 0
    %2365 = vmatprep.subr.bf16.mxu0 0
    %2366 = vmatpush1.bf16.msra.mxu0 0
    %2367 = vmatprep.subr.bf16.mxu0 0
    %2368 = vmatpush1.bf16.msra.mxu0 0
    %2369 = vmatprep.subr.bf16.mxu0 0
    %2370 = vmatpush1.bf16.msra.mxu0 0
    %2371 = vmatprep.subr.bf16.mxu0 0
    %2372 = vmatpush1.bf16.msra.mxu0 0
    %2373 = vmatprep.subr.bf16.mxu0 0
    %2374 = vmatpush1.bf16.msra.mxu0 0
    %2375 = vmatprep.subr.bf16.mxu0 0
    %2376 = vmatpush1.bf16.msra.mxu0 %v2360
    %2377 = vmatprep.subr.bf16.mxu0 0
    %2378 = vmatpush1.bf16.msra.mxu0 %v2359
    %2379 = vmatprep.subr.bf16.mxu0 0
    %2380 = vmatpush2.bf16.msra.mxu0 0
    %2381 = vmatprep.subr.bf16.mxu0 0
    %2382 = vmatpush2.bf16.msra.mxu0 0
    %2383 = vmatprep.subr.bf16.mxu0 0
    %2384 = vmatpush2.bf16.msra.mxu0 0
    %2385 = vmatprep.subr.bf16.mxu0 0
    %2386 = vmatpush2.bf16.msra.mxu0 0
    %2387 = vmatprep.subr.bf16.mxu0 0
    %2388 = vmatpush2.bf16.msra.mxu0 0
    %2389 = vmatprep.subr.bf16.mxu0 0
    %2390 = vmatpush2.bf16.msra.mxu0 0
    %2391 = vmatprep.subr.bf16.mxu0 0
    %2392 = vmatpush2.bf16.msra.mxu0 0
    %2393 = vmatprep.subr.bf16.mxu0 0
    %2394 = vmatpush2.bf16.msra.mxu0 0
    %2395 = vmatprep.mubr.bf16.mxu0 0
    %2396 = vmatmul.mubr.bf16.gmra.mxu0 %v2161
    %v2397 = vpop.f32.mrf.mxu0
    %v2398 = vadd.f32 %v2349, %v2397
    %v2399 = vpop.f32.mrf.mxu0
    %v2400 = vpop.f32.mrf.mxu0
    %v2401 = vadd.f32 %v2349, %v2400
    %v2402 = vpop.f32.mrf.mxu0
    %2403 = vdwg.mxu0
    %s2404 = scalar_lea.vmem %s6, 144
    %v2405 = vld [vmem:[%s2404] sm:$0xf]
    %v2406 = vld [vmem:[%s2404 + $0x4] sm:$0xf]
    %v2407 = vld [vmem:[%s2404 + $0x8] sm:$0xf]
    %v2408 = vld [vmem:[%s2404 + $0xc] sm:$0xf]
    %s2409 = scalar_lea.vmem %s7, 9
    %v2410 = vld [vmem:[%s2409] sm:$0x1]
    %v2412 = vlaneseq
    %v2413 = vshrl.u32 %v2412, 7
    %v2414 = vsub.s32 0, %v2413
    %v2415 = vrot.slane %v2410, %v2414
    %v2421 = vunpack.c.l.b16 %v2405
    %v2422 = vunpack.c.l.b16 %v2406
    %v2423 = vunpack.c.l.b16 %v2407
    %v2424 = vunpack.c.l.b16 %v2408
    %v2425 = vpack.c.b16 %v2422, %v2421
    %v2426 = vpack.c.b16 %v2424, %v2423
    %2429 = vmatprep.subr.bf16.mxu0 0
    %2430 = vmatpush1.bf16.msra.mxu0 0
    %2431 = vmatprep.subr.bf16.mxu0 0
    %2432 = vmatpush1.bf16.msra.mxu0 0
    %2433 = vmatprep.subr.bf16.mxu0 0
    %2434 = vmatpush1.bf16.msra.mxu0 0
    %2435 = vmatprep.subr.bf16.mxu0 0
    %2436 = vmatpush1.bf16.msra.mxu0 0
    %2437 = vmatprep.subr.bf16.mxu0 0
    %2438 = vmatpush1.bf16.msra.mxu0 0
    %2439 = vmatprep.subr.bf16.mxu0 0
    %2440 = vmatpush1.bf16.msra.mxu0 0
    %2441 = vmatprep.subr.bf16.mxu0 0
    %2442 = vmatpush1.bf16.msra.mxu0 %v2426
    %2443 = vmatprep.subr.bf16.mxu0 0
    %2444 = vmatpush1.bf16.msra.mxu0 %v2425
    %2445 = vmatprep.subr.bf16.mxu0 0
    %2446 = vmatpush2.bf16.msra.mxu0 0
    %2447 = vmatprep.subr.bf16.mxu0 0
    %2448 = vmatpush2.bf16.msra.mxu0 0
    %2449 = vmatprep.subr.bf16.mxu0 0
    %2450 = vmatpush2.bf16.msra.mxu0 0
    %2451 = vmatprep.subr.bf16.mxu0 0
    %2452 = vmatpush2.bf16.msra.mxu0 0
    %2453 = vmatprep.subr.bf16.mxu0 0
    %2454 = vmatpush2.bf16.msra.mxu0 0
    %2455 = vmatprep.subr.bf16.mxu0 0
    %2456 = vmatpush2.bf16.msra.mxu0 0
    %2457 = vmatprep.subr.bf16.mxu0 0
    %2458 = vmatpush2.bf16.msra.mxu0 0
    %2459 = vmatprep.subr.bf16.mxu0 0
    %2460 = vmatpush2.bf16.msra.mxu0 0
    %2461 = vmatprep.mubr.bf16.mxu0 0
    %2462 = vmatmul.mubr.bf16.gmra.mxu0 %v2161
    %v2463 = vpop.f32.mrf.mxu0
    %v2464 = vadd.f32 %v2415, %v2463
    %v2465 = vpop.f32.mrf.mxu0
    %v2466 = vpop.f32.mrf.mxu0
    %v2467 = vadd.f32 %v2415, %v2466
    %v2468 = vpop.f32.mrf.mxu0
    %2469 = vdwg.mxu0
    %v2470 = vmul.f32 %v2332, 0.35355338
    %v2471 = vmul.f32 %v2335, 0.35355338
    %s2472 = scalar_lea.vmem %s6, 32
    %v2473 = vld [vmem:[%s2472] sm:$0xf]
    %v2474 = vld [vmem:[%s2472 + $0x4] sm:$0xf]
    %v2475 = vld [vmem:[%s2472 + $0x8] sm:$0xf]
    %v2476 = vld [vmem:[%s2472 + $0xc] sm:$0xf]
    %s2477 = scalar_lea.vmem %s7, 2
    %v2478 = vld [vmem:[%s2477] sm:$0x1]
    %v2480 = vlaneseq
    %v2481 = vshrl.u32 %v2480, 7
    %v2482 = vsub.s32 0, %v2481
    %v2483 = vrot.slane %v2478, %v2482
    %v2489 = vunpack.c.l.b16 %v2473
    %v2490 = vunpack.c.l.b16 %v2474
    %v2491 = vunpack.c.l.b16 %v2475
    %v2492 = vunpack.c.l.b16 %v2476
    %v2493 = vpack.c.b16 %v2490, %v2489
    %v2494 = vpack.c.b16 %v2492, %v2491
    %2497 = vmatprep.subr.bf16.mxu0 0
    %2498 = vmatpush1.bf16.msra.mxu0 0
    %2499 = vmatprep.subr.bf16.mxu0 0
    %2500 = vmatpush1.bf16.msra.mxu0 0
    %2501 = vmatprep.subr.bf16.mxu0 0
    %2502 = vmatpush1.bf16.msra.mxu0 0
    %2503 = vmatprep.subr.bf16.mxu0 0
    %2504 = vmatpush1.bf16.msra.mxu0 0
    %2505 = vmatprep.subr.bf16.mxu0 0
    %2506 = vmatpush1.bf16.msra.mxu0 0
    %2507 = vmatprep.subr.bf16.mxu0 0
    %2508 = vmatpush1.bf16.msra.mxu0 0
    %2509 = vmatprep.subr.bf16.mxu0 0
    %2510 = vmatpush1.bf16.msra.mxu0 %v2494
    %2511 = vmatprep.subr.bf16.mxu0 0
    %2512 = vmatpush1.bf16.msra.mxu0 %v2493
    %2513 = vmatprep.subr.bf16.mxu0 0
    %2514 = vmatpush2.bf16.msra.mxu0 0
    %2515 = vmatprep.subr.bf16.mxu0 0
    %2516 = vmatpush2.bf16.msra.mxu0 0
    %2517 = vmatprep.subr.bf16.mxu0 0
    %2518 = vmatpush2.bf16.msra.mxu0 0
    %2519 = vmatprep.subr.bf16.mxu0 0
    %2520 = vmatpush2.bf16.msra.mxu0 0
    %2521 = vmatprep.subr.bf16.mxu0 0
    %2522 = vmatpush2.bf16.msra.mxu0 0
    %2523 = vmatprep.subr.bf16.mxu0 0
    %2524 = vmatpush2.bf16.msra.mxu0 0
    %2525 = vmatprep.subr.bf16.mxu0 0
    %2526 = vmatpush2.bf16.msra.mxu0 0
    %2527 = vmatprep.subr.bf16.mxu0 0
    %2528 = vmatpush2.bf16.msra.mxu0 0
    %2529 = vmatprep.mubr.bf16.mxu0 0
    %2530 = vmatmul.mubr.bf16.gmra.mxu0 %v2092
    %v2531 = vpop.f32.mrf.mxu0
    %v2532 = vadd.f32 %v2483, %v2531
    %v2533 = vpop.f32.mrf.mxu0
    %v2534 = vpop.f32.mrf.mxu0
    %v2535 = vadd.f32 %v2483, %v2534
    %v2536 = vpop.f32.mrf.mxu0
    %2537 = vdwg.mxu0
    %s2538 = scalar_lea.vmem %s6, 96
    %v2539 = vld [vmem:[%s2538] sm:$0xf]
    %v2540 = vld [vmem:[%s2538 + $0x4] sm:$0xf]
    %v2541 = vld [vmem:[%s2538 + $0x8] sm:$0xf]
    %v2542 = vld [vmem:[%s2538 + $0xc] sm:$0xf]
    %s2543 = scalar_lea.vmem %s7, 6
    %v2544 = vld [vmem:[%s2543] sm:$0x1]
    %v2546 = vlaneseq
    %v2547 = vshrl.u32 %v2546, 7
    %v2548 = vsub.s32 0, %v2547
    %v2549 = vrot.slane %v2544, %v2548
    %v2555 = vunpack.c.l.b16 %v2539
    %v2556 = vunpack.c.l.b16 %v2540
    %v2557 = vunpack.c.l.b16 %v2541
    %v2558 = vunpack.c.l.b16 %v2542
    %v2559 = vpack.c.b16 %v2556, %v2555
    %v2560 = vpack.c.b16 %v2558, %v2557
    %2563 = vmatprep.subr.bf16.mxu0 0
    %2564 = vmatpush1.bf16.msra.mxu0 0
    %2565 = vmatprep.subr.bf16.mxu0 0
    %2566 = vmatpush1.bf16.msra.mxu0 0
    %2567 = vmatprep.subr.bf16.mxu0 0
    %2568 = vmatpush1.bf16.msra.mxu0 0
    %2569 = vmatprep.subr.bf16.mxu0 0
    %2570 = vmatpush1.bf16.msra.mxu0 0
    %2571 = vmatprep.subr.bf16.mxu0 0
    %2572 = vmatpush1.bf16.msra.mxu0 0
    %2573 = vmatprep.subr.bf16.mxu0 0
    %2574 = vmatpush1.bf16.msra.mxu0 0
    %2575 = vmatprep.subr.bf16.mxu0 0
    %2576 = vmatpush1.bf16.msra.mxu0 %v2560
    %2577 = vmatprep.subr.bf16.mxu0 0
    %2578 = vmatpush1.bf16.msra.mxu0 %v2559
    %2579 = vmatprep.subr.bf16.mxu0 0
    %2580 = vmatpush2.bf16.msra.mxu0 0
    %2581 = vmatprep.subr.bf16.mxu0 0
    %2582 = vmatpush2.bf16.msra.mxu0 0
    %2583 = vmatprep.subr.bf16.mxu0 0
    %2584 = vmatpush2.bf16.msra.mxu0 0
    %2585 = vmatprep.subr.bf16.mxu0 0
    %2586 = vmatpush2.bf16.msra.mxu0 0
    %2587 = vmatprep.subr.bf16.mxu0 0
    %2588 = vmatpush2.bf16.msra.mxu0 0
    %2589 = vmatprep.subr.bf16.mxu0 0
    %2590 = vmatpush2.bf16.msra.mxu0 0
    %2591 = vmatprep.subr.bf16.mxu0 0
    %2592 = vmatpush2.bf16.msra.mxu0 0
    %2593 = vmatprep.subr.bf16.mxu0 0
    %2594 = vmatpush2.bf16.msra.mxu0 0
    %2595 = vmatprep.mubr.bf16.mxu0 0
    %2596 = vmatmul.mubr.bf16.gmra.mxu0 %v2161
    %v2597 = vpop.f32.mrf.mxu0
    %v2598 = vadd.f32 %v2549, %v2597
    %v2599 = vpop.f32.mrf.mxu0
    %v2600 = vpop.f32.mrf.mxu0
    %v2601 = vadd.f32 %v2549, %v2600
    %v2602 = vpop.f32.mrf.mxu0
    %2603 = vdwg.mxu0
    %s2604 = scalar_lea.vmem %s6, 160
    %v2605 = vld [vmem:[%s2604] sm:$0xf]
    %v2606 = vld [vmem:[%s2604 + $0x4] sm:$0xf]
    %v2607 = vld [vmem:[%s2604 + $0x8] sm:$0xf]
    %v2608 = vld [vmem:[%s2604 + $0xc] sm:$0xf]
    %s2609 = scalar_lea.vmem %s7, 10
    %v2610 = vld [vmem:[%s2609] sm:$0x1]
    %v2612 = vlaneseq
    %v2613 = vshrl.u32 %v2612, 7
    %v2614 = vsub.s32 0, %v2613
    %v2615 = vrot.slane %v2610, %v2614
    %v2621 = vunpack.c.l.b16 %v2605
    %v2622 = vunpack.c.l.b16 %v2606
    %v2623 = vunpack.c.l.b16 %v2607
    %v2624 = vunpack.c.l.b16 %v2608
    %v2625 = vpack.c.b16 %v2622, %v2621
    %v2626 = vpack.c.b16 %v2624, %v2623
    %2629 = vmatprep.subr.bf16.mxu0 0
    %2630 = vmatpush1.bf16.msra.mxu0 0
    %2631 = vmatprep.subr.bf16.mxu0 0
    %2632 = vmatpush1.bf16.msra.mxu0 0
    %2633 = vmatprep.subr.bf16.mxu0 0
    %2634 = vmatpush1.bf16.msra.mxu0 0
    %2635 = vmatprep.subr.bf16.mxu0 0
    %2636 = vmatpush1.bf16.msra.mxu0 0
    %2637 = vmatprep.subr.bf16.mxu0 0
    %2638 = vmatpush1.bf16.msra.mxu0 0
    %2639 = vmatprep.subr.bf16.mxu0 0
    %2640 = vmatpush1.bf16.msra.mxu0 0
    %2641 = vmatprep.subr.bf16.mxu0 0
    %2642 = vmatpush1.bf16.msra.mxu0 %v2626
    %2643 = vmatprep.subr.bf16.mxu0 0
    %2644 = vmatpush1.bf16.msra.mxu0 %v2625
    %2645 = vmatprep.subr.bf16.mxu0 0
    %2646 = vmatpush2.bf16.msra.mxu0 0
    %2647 = vmatprep.subr.bf16.mxu0 0
    %2648 = vmatpush2.bf16.msra.mxu0 0
    %2649 = vmatprep.subr.bf16.mxu0 0
    %2650 = vmatpush2.bf16.msra.mxu0 0
    %2651 = vmatprep.subr.bf16.mxu0 0
    %2652 = vmatpush2.bf16.msra.mxu0 0
    %2653 = vmatprep.subr.bf16.mxu0 0
    %2654 = vmatpush2.bf16.msra.mxu0 0
    %2655 = vmatprep.subr.bf16.mxu0 0
    %2656 = vmatpush2.bf16.msra.mxu0 0
    %2657 = vmatprep.subr.bf16.mxu0 0
    %2658 = vmatpush2.bf16.msra.mxu0 0
    %2659 = vmatprep.subr.bf16.mxu0 0
    %2660 = vmatpush2.bf16.msra.mxu0 0
    %2661 = vmatprep.mubr.bf16.mxu0 0
    %2662 = vmatmul.mubr.bf16.gmra.mxu0 %v2161
    %v2663 = vpop.f32.mrf.mxu0
    %v2664 = vadd.f32 %v2615, %v2663
    %v2665 = vpop.f32.mrf.mxu0
    %v2666 = vpop.f32.mrf.mxu0
    %v2667 = vadd.f32 %v2615, %v2666
    %v2668 = vpop.f32.mrf.mxu0
    %2669 = vdwg.mxu0
    %v2670 = vmul.f32 %v2532, 0.35355338
    %v2671 = vmul.f32 %v2535, 0.35355338
    %s2672 = scalar_lea.vmem %s6, 48
    %v2673 = vld [vmem:[%s2672] sm:$0xf]
    %v2674 = vld [vmem:[%s2672 + $0x4] sm:$0xf]
    %v2675 = vld [vmem:[%s2672 + $0x8] sm:$0xf]
    %v2676 = vld [vmem:[%s2672 + $0xc] sm:$0xf]
    %s2677 = scalar_lea.vmem %s7, 3
    %v2678 = vld [vmem:[%s2677] sm:$0x1]
    %v2680 = vlaneseq
    %v2681 = vshrl.u32 %v2680, 7
    %v2682 = vsub.s32 0, %v2681
    %v2683 = vrot.slane %v2678, %v2682
    %v2689 = vunpack.c.l.b16 %v2673
    %v2690 = vunpack.c.l.b16 %v2674
    %v2691 = vunpack.c.l.b16 %v2675
    %v2692 = vunpack.c.l.b16 %v2676
    %v2693 = vpack.c.b16 %v2690, %v2689
    %v2694 = vpack.c.b16 %v2692, %v2691
    %2697 = vmatprep.subr.bf16.mxu0 0
    %2698 = vmatpush1.bf16.msra.mxu0 0
    %2699 = vmatprep.subr.bf16.mxu0 0
    %2700 = vmatpush1.bf16.msra.mxu0 0
    %2701 = vmatprep.subr.bf16.mxu0 0
    %2702 = vmatpush1.bf16.msra.mxu0 0
    %2703 = vmatprep.subr.bf16.mxu0 0
    %2704 = vmatpush1.bf16.msra.mxu0 0
    %2705 = vmatprep.subr.bf16.mxu0 0
    %2706 = vmatpush1.bf16.msra.mxu0 0
    %2707 = vmatprep.subr.bf16.mxu0 0
    %2708 = vmatpush1.bf16.msra.mxu0 0
    %2709 = vmatprep.subr.bf16.mxu0 0
    %2710 = vmatpush1.bf16.msra.mxu0 %v2694
    %2711 = vmatprep.subr.bf16.mxu0 0
    %2712 = vmatpush1.bf16.msra.mxu0 %v2693
    %2713 = vmatprep.subr.bf16.mxu0 0
    %2714 = vmatpush2.bf16.msra.mxu0 0
    %2715 = vmatprep.subr.bf16.mxu0 0
    %2716 = vmatpush2.bf16.msra.mxu0 0
    %2717 = vmatprep.subr.bf16.mxu0 0
    %2718 = vmatpush2.bf16.msra.mxu0 0
    %2719 = vmatprep.subr.bf16.mxu0 0
    %2720 = vmatpush2.bf16.msra.mxu0 0
    %2721 = vmatprep.subr.bf16.mxu0 0
    %2722 = vmatpush2.bf16.msra.mxu0 0
    %2723 = vmatprep.subr.bf16.mxu0 0
    %2724 = vmatpush2.bf16.msra.mxu0 0
    %2725 = vmatprep.subr.bf16.mxu0 0
    %2726 = vmatpush2.bf16.msra.mxu0 0
    %2727 = vmatprep.subr.bf16.mxu0 0
    %2728 = vmatpush2.bf16.msra.mxu0 0
    %2729 = vmatprep.mubr.bf16.mxu0 0
    %2730 = vmatmul.mubr.bf16.gmra.mxu0 %v2092
    %v2731 = vpop.f32.mrf.mxu0
    %v2732 = vadd.f32 %v2683, %v2731
    %v2733 = vpop.f32.mrf.mxu0
    %v2734 = vpop.f32.mrf.mxu0
    %v2735 = vadd.f32 %v2683, %v2734
    %v2736 = vpop.f32.mrf.mxu0
    %2737 = vdwg.mxu0
    %s2738 = scalar_lea.vmem %s6, 112
    %v2739 = vld [vmem:[%s2738] sm:$0xf]
    %v2740 = vld [vmem:[%s2738 + $0x4] sm:$0xf]
    %v2741 = vld [vmem:[%s2738 + $0x8] sm:$0xf]
    %v2742 = vld [vmem:[%s2738 + $0xc] sm:$0xf]
    %s2743 = scalar_lea.vmem %s7, 7
    %v2744 = vld [vmem:[%s2743] sm:$0x1]
    %v2746 = vlaneseq
    %v2747 = vshrl.u32 %v2746, 7
    %v2748 = vsub.s32 0, %v2747
    %v2749 = vrot.slane %v2744, %v2748
    %v2755 = vunpack.c.l.b16 %v2739
    %v2756 = vunpack.c.l.b16 %v2740
    %v2757 = vunpack.c.l.b16 %v2741
    %v2758 = vunpack.c.l.b16 %v2742
    %v2759 = vpack.c.b16 %v2756, %v2755
    %v2760 = vpack.c.b16 %v2758, %v2757
    %2763 = vmatprep.subr.bf16.mxu0 0
    %2764 = vmatpush1.bf16.msra.mxu0 0
    %2765 = vmatprep.subr.bf16.mxu0 0
    %2766 = vmatpush1.bf16.msra.mxu0 0
    %2767 = vmatprep.subr.bf16.mxu0 0
    %2768 = vmatpush1.bf16.msra.mxu0 0
    %2769 = vmatprep.subr.bf16.mxu0 0
    %2770 = vmatpush1.bf16.msra.mxu0 0
    %2771 = vmatprep.subr.bf16.mxu0 0
    %2772 = vmatpush1.bf16.msra.mxu0 0
    %2773 = vmatprep.subr.bf16.mxu0 0
    %2774 = vmatpush1.bf16.msra.mxu0 0
    %2775 = vmatprep.subr.bf16.mxu0 0
    %2776 = vmatpush1.bf16.msra.mxu0 %v2760
    %2777 = vmatprep.subr.bf16.mxu0 0
    %2778 = vmatpush1.bf16.msra.mxu0 %v2759
    %2779 = vmatprep.subr.bf16.mxu0 0
    %2780 = vmatpush2.bf16.msra.mxu0 0
    %2781 = vmatprep.subr.bf16.mxu0 0
    %2782 = vmatpush2.bf16.msra.mxu0 0
    %2783 = vmatprep.subr.bf16.mxu0 0
    %2784 = vmatpush2.bf16.msra.mxu0 0
    %2785 = vmatprep.subr.bf16.mxu0 0
    %2786 = vmatpush2.bf16.msra.mxu0 0
    %2787 = vmatprep.subr.bf16.mxu0 0
    %2788 = vmatpush2.bf16.msra.mxu0 0
    %2789 = vmatprep.subr.bf16.mxu0 0
    %2790 = vmatpush2.bf16.msra.mxu0 0
    %2791 = vmatprep.subr.bf16.mxu0 0
    %2792 = vmatpush2.bf16.msra.mxu0 0
    %2793 = vmatprep.subr.bf16.mxu0 0
    %2794 = vmatpush2.bf16.msra.mxu0 0
    %2795 = vmatprep.mubr.bf16.mxu0 0
    %2796 = vmatmul.mubr.bf16.gmra.mxu0 %v2161
    %v2797 = vpop.f32.mrf.mxu0
    %v2798 = vadd.f32 %v2749, %v2797
    %v2799 = vpop.f32.mrf.mxu0
    %v2800 = vpop.f32.mrf.mxu0
    %v2801 = vadd.f32 %v2749, %v2800
    %v2802 = vpop.f32.mrf.mxu0
    %2803 = vdwg.mxu0
    %s2804 = scalar_lea.vmem %s6, 176
    %v2805 = vld [vmem:[%s2804] sm:$0xf]
    %v2806 = vld [vmem:[%s2804 + $0x4] sm:$0xf]
    %v2807 = vld [vmem:[%s2804 + $0x8] sm:$0xf]
    %v2808 = vld [vmem:[%s2804 + $0xc] sm:$0xf]
    %s2809 = scalar_lea.vmem %s7, 11
    %v2810 = vld [vmem:[%s2809] sm:$0x1]
    %v2812 = vlaneseq
    %v2813 = vshrl.u32 %v2812, 7
    %v2814 = vsub.s32 0, %v2813
    %v2815 = vrot.slane %v2810, %v2814
    %v2821 = vunpack.c.l.b16 %v2805
    %v2822 = vunpack.c.l.b16 %v2806
    %v2823 = vunpack.c.l.b16 %v2807
    %v2824 = vunpack.c.l.b16 %v2808
    %v2825 = vpack.c.b16 %v2822, %v2821
    %v2826 = vpack.c.b16 %v2824, %v2823
    %2829 = vmatprep.subr.bf16.mxu0 0
    %2830 = vmatpush1.bf16.msra.mxu0 0
    %2831 = vmatprep.subr.bf16.mxu0 0
    %2832 = vmatpush1.bf16.msra.mxu0 0
    %2833 = vmatprep.subr.bf16.mxu0 0
    %2834 = vmatpush1.bf16.msra.mxu0 0
    %2835 = vmatprep.subr.bf16.mxu0 0
    %2836 = vmatpush1.bf16.msra.mxu0 0
    %2837 = vmatprep.subr.bf16.mxu0 0
    %2838 = vmatpush1.bf16.msra.mxu0 0
    %2839 = vmatprep.subr.bf16.mxu0 0
    %2840 = vmatpush1.bf16.msra.mxu0 0
    %2841 = vmatprep.subr.bf16.mxu0 0
    %2842 = vmatpush1.bf16.msra.mxu0 %v2826
    %2843 = vmatprep.subr.bf16.mxu0 0
    %2844 = vmatpush1.bf16.msra.mxu0 %v2825
    %2845 = vmatprep.subr.bf16.mxu0 0
    %2846 = vmatpush2.bf16.msra.mxu0 0
    %2847 = vmatprep.subr.bf16.mxu0 0
    %2848 = vmatpush2.bf16.msra.mxu0 0
    %2849 = vmatprep.subr.bf16.mxu0 0
    %2850 = vmatpush2.bf16.msra.mxu0 0
    %2851 = vmatprep.subr.bf16.mxu0 0
    %2852 = vmatpush2.bf16.msra.mxu0 0
    %2853 = vmatprep.subr.bf16.mxu0 0
    %2854 = vmatpush2.bf16.msra.mxu0 0
    %2855 = vmatprep.subr.bf16.mxu0 0
    %2856 = vmatpush2.bf16.msra.mxu0 0
    %2857 = vmatprep.subr.bf16.mxu0 0
    %2858 = vmatpush2.bf16.msra.mxu0 0
    %2859 = vmatprep.subr.bf16.mxu0 0
    %2860 = vmatpush2.bf16.msra.mxu0 0
    %2861 = vmatprep.mubr.bf16.mxu0 0
    %2862 = vmatmul.mubr.bf16.gmra.mxu0 %v2161
    %v2863 = vpop.f32.mrf.mxu0
    %v2864 = vadd.f32 %v2815, %v2863
    %v2865 = vpop.f32.mrf.mxu0
    %v2866 = vpop.f32.mrf.mxu0
    %v2867 = vadd.f32 %v2815, %v2866
    %v2868 = vpop.f32.mrf.mxu0
    %2869 = vdwg.mxu0
    %v2870 = vmul.f32 %v2732, 0.35355338
    %v2871 = vmul.f32 %v2735, 0.35355338
    %v2872 = vpack.c.bf16 %v2270, %v2270
    %v2873 = vpack.c.bf16 %v2271, %v2271
    %v2874 = vpack.c.bf16 %v2470, %v2470
    %v2875 = vpack.c.bf16 %v2471, %v2471
    %v2876 = vpack.c.bf16 %v2670, %v2670
    %v2877 = vpack.c.bf16 %v2671, %v2671
    %v2878 = vpack.c.bf16 %v2870, %v2870
    %v2879 = vpack.c.bf16 %v2871, %v2871
    %v2880 = vpack.c.bf16 %v2198, %v2198
    %v2881 = vpack.c.bf16 %v2201, %v2201
    %v2882 = vpack.c.bf16 %v2398, %v2398
    %v2883 = vpack.c.bf16 %v2401, %v2401
    %v2884 = vpack.c.bf16 %v2598, %v2598
    %v2885 = vpack.c.bf16 %v2601, %v2601
    %v2886 = vpack.c.bf16 %v2798, %v2798
    %v2887 = vpack.c.bf16 %v2801, %v2801
    %v2888 = vpack.c.bf16 %v2264, %v2264
    %v2889 = vpack.c.bf16 %v2267, %v2267
    %v2890 = vpack.c.bf16 %v2464, %v2464
    %v2891 = vpack.c.bf16 %v2467, %v2467
    %v2892 = vpack.c.bf16 %v2664, %v2664
    %v2893 = vpack.c.bf16 %v2667, %v2667
    %v2894 = vpack.c.bf16 %v2864, %v2864
    %v2895 = vpack.c.bf16 %v2867, %v2867
    %v2897 = vsel %vm906, %v2872, 0
    %v2900 = vsel %vm906, %v2880, 0
    %2902 = vmatprep.subr.bf16.mxu0 0
    %2903 = vmatpush1.bf16.xpose.msra.mxu0 0
    %2904 = vmatprep.subr.bf16.mxu0 0
    %2905 = vmatpush1.bf16.xpose.msra.mxu0 0
    %2906 = vmatprep.subr.bf16.mxu0 0
    %2907 = vmatpush1.bf16.xpose.msra.mxu0 0
    %2908 = vmatprep.subr.bf16.mxu0 0
    %2909 = vmatpush1.bf16.xpose.msra.mxu0 0
    %2910 = vmatprep.subr.bf16.mxu0 0
    %2911 = vmatpush1.bf16.xpose.msra.mxu0 0
    %2912 = vmatprep.subr.bf16.mxu0 0
    %2913 = vmatpush1.bf16.xpose.msra.mxu0 0
    %2914 = vmatprep.subr.bf16.mxu0 0
    %2915 = vmatpush1.bf16.xpose.msra.mxu0 0
    %2916 = vmatprep.subr.bf16.mxu0 0
    %2917 = vmatpush1.bf16.xpose.msra.mxu0 %v2900
    %2918 = vmatprep.subr.bf16.mxu0 0
    %2919 = vmatpush2.bf16.xpose.msra.mxu0 0
    %2920 = vmatprep.subr.bf16.mxu0 0
    %2921 = vmatpush2.bf16.xpose.msra.mxu0 0
    %2922 = vmatprep.subr.bf16.mxu0 0
    %2923 = vmatpush2.bf16.xpose.msra.mxu0 0
    %2924 = vmatprep.subr.bf16.mxu0 0
    %2925 = vmatpush2.bf16.xpose.msra.mxu0 0
    %2926 = vmatprep.subr.bf16.mxu0 0
    %2927 = vmatpush2.bf16.xpose.msra.mxu0 0
    %2928 = vmatprep.subr.bf16.mxu0 0
    %2929 = vmatpush2.bf16.xpose.msra.mxu0 0
    %2930 = vmatprep.subr.bf16.mxu0 0
    %2931 = vmatpush2.bf16.xpose.msra.mxu0 0
    %2932 = vmatprep.subr.bf16.mxu0 0
    %2933 = vmatpush2.bf16.xpose.msra.mxu0 0
    %2934 = vmatprep.mubr.bf16.mxu0 0
    %2935 = vmatmul.mubr.bf16.gmra.mxu0 %v2897
    %v2936 = vpop.f32.mrf.mxu0
    %v2937 = vadd.f32 0.0, %v2936
    %v2938 = vpop.f32.mrf.mxu0
    %v2939 = vpop.f32.mrf.mxu0
    %v2940 = vpop.f32.mrf.mxu0
    %2941 = vdwg.mxu0
    %v2943 = vsel %vm906, %v2873, 0
    %v2946 = vsel %vm906, %v2881, 0
    %2948 = vmatprep.subr.bf16.mxu0 0
    %2949 = vmatpush1.bf16.xpose.msra.mxu0 0
    %2950 = vmatprep.subr.bf16.mxu0 0
    %2951 = vmatpush1.bf16.xpose.msra.mxu0 0
    %2952 = vmatprep.subr.bf16.mxu0 0
    %2953 = vmatpush1.bf16.xpose.msra.mxu0 0
    %2954 = vmatprep.subr.bf16.mxu0 0
    %2955 = vmatpush1.bf16.xpose.msra.mxu0 0
    %2956 = vmatprep.subr.bf16.mxu0 0
    %2957 = vmatpush1.bf16.xpose.msra.mxu0 0
    %2958 = vmatprep.subr.bf16.mxu0 0
    %2959 = vmatpush1.bf16.xpose.msra.mxu0 0
    %2960 = vmatprep.subr.bf16.mxu0 0
    %2961 = vmatpush1.bf16.xpose.msra.mxu0 0
    %2962 = vmatprep.subr.bf16.mxu0 0
    %2963 = vmatpush1.bf16.xpose.msra.mxu0 %v2946
    %2964 = vmatprep.subr.bf16.mxu0 0
    %2965 = vmatpush2.bf16.xpose.msra.mxu0 0
    %2966 = vmatprep.subr.bf16.mxu0 0
    %2967 = vmatpush2.bf16.xpose.msra.mxu0 0
    %2968 = vmatprep.subr.bf16.mxu0 0
    %2969 = vmatpush2.bf16.xpose.msra.mxu0 0
    %2970 = vmatprep.subr.bf16.mxu0 0
    %2971 = vmatpush2.bf16.xpose.msra.mxu0 0
    %2972 = vmatprep.subr.bf16.mxu0 0
    %2973 = vmatpush2.bf16.xpose.msra.mxu0 0
    %2974 = vmatprep.subr.bf16.mxu0 0
    %2975 = vmatpush2.bf16.xpose.msra.mxu0 0
    %2976 = vmatprep.subr.bf16.mxu0 0
    %2977 = vmatpush2.bf16.xpose.msra.mxu0 0
    %2978 = vmatprep.subr.bf16.mxu0 0
    %2979 = vmatpush2.bf16.xpose.msra.mxu0 0
    %2980 = vmatprep.mubr.bf16.mxu0 0
    %2981 = vmatmul.mubr.bf16.gmra.mxu0 %v2943
    %v2982 = vpop.f32.mrf.mxu0
    %v2983 = vadd.f32 0.0, %v2982
    %v2984 = vpop.f32.mrf.mxu0
    %v2985 = vpop.f32.mrf.mxu0
    %v2986 = vpop.f32.mrf.mxu0
    %2987 = vdwg.mxu0
    %v2989 = vsel %vm906, %v2874, 0
    %v2992 = vsel %vm906, %v2882, 0
    %2994 = vmatprep.subr.bf16.mxu0 0
    %2995 = vmatpush1.bf16.xpose.msra.mxu0 0
    %2996 = vmatprep.subr.bf16.mxu0 0
    %2997 = vmatpush1.bf16.xpose.msra.mxu0 0
    %2998 = vmatprep.subr.bf16.mxu0 0
    %2999 = vmatpush1.bf16.xpose.msra.mxu0 0
    %3000 = vmatprep.subr.bf16.mxu0 0
    %3001 = vmatpush1.bf16.xpose.msra.mxu0 0
    %3002 = vmatprep.subr.bf16.mxu0 0
    %3003 = vmatpush1.bf16.xpose.msra.mxu0 0
    %3004 = vmatprep.subr.bf16.mxu0 0
    %3005 = vmatpush1.bf16.xpose.msra.mxu0 0
    %3006 = vmatprep.subr.bf16.mxu0 0
    %3007 = vmatpush1.bf16.xpose.msra.mxu0 0
    %3008 = vmatprep.subr.bf16.mxu0 0
    %3009 = vmatpush1.bf16.xpose.msra.mxu0 %v2992
    %3010 = vmatprep.subr.bf16.mxu0 0
    %3011 = vmatpush2.bf16.xpose.msra.mxu0 0
    %3012 = vmatprep.subr.bf16.mxu0 0
    %3013 = vmatpush2.bf16.xpose.msra.mxu0 0
    %3014 = vmatprep.subr.bf16.mxu0 0
    %3015 = vmatpush2.bf16.xpose.msra.mxu0 0
    %3016 = vmatprep.subr.bf16.mxu0 0
    %3017 = vmatpush2.bf16.xpose.msra.mxu0 0
    %3018 = vmatprep.subr.bf16.mxu0 0
    %3019 = vmatpush2.bf16.xpose.msra.mxu0 0
    %3020 = vmatprep.subr.bf16.mxu0 0
    %3021 = vmatpush2.bf16.xpose.msra.mxu0 0
    %3022 = vmatprep.subr.bf16.mxu0 0
    %3023 = vmatpush2.bf16.xpose.msra.mxu0 0
    %3024 = vmatprep.subr.bf16.mxu0 0
    %3025 = vmatpush2.bf16.xpose.msra.mxu0 0
    %3026 = vmatprep.mubr.bf16.mxu0 0
    %3027 = vmatmul.mubr.bf16.gmra.mxu0 %v2989
    %v3028 = vpop.f32.mrf.mxu0
    %v3029 = vadd.f32 0.0, %v3028
    %v3030 = vpop.f32.mrf.mxu0
    %v3031 = vpop.f32.mrf.mxu0
    %v3032 = vpop.f32.mrf.mxu0
    %3033 = vdwg.mxu0
    %v3035 = vsel %vm906, %v2875, 0
    %v3038 = vsel %vm906, %v2883, 0
    %3040 = vmatprep.subr.bf16.mxu0 0
    %3041 = vmatpush1.bf16.xpose.msra.mxu0 0
    %3042 = vmatprep.subr.bf16.mxu0 0
    %3043 = vmatpush1.bf16.xpose.msra.mxu0 0
    %3044 = vmatprep.subr.bf16.mxu0 0
    %3045 = vmatpush1.bf16.xpose.msra.mxu0 0
    %3046 = vmatprep.subr.bf16.mxu0 0
    %3047 = vmatpush1.bf16.xpose.msra.mxu0 0
    %3048 = vmatprep.subr.bf16.mxu0 0
    %3049 = vmatpush1.bf16.xpose.msra.mxu0 0
    %3050 = vmatprep.subr.bf16.mxu0 0
    %3051 = vmatpush1.bf16.xpose.msra.mxu0 0
    %3052 = vmatprep.subr.bf16.mxu0 0
    %3053 = vmatpush1.bf16.xpose.msra.mxu0 0
    %3054 = vmatprep.subr.bf16.mxu0 0
    %3055 = vmatpush1.bf16.xpose.msra.mxu0 %v3038
    %3056 = vmatprep.subr.bf16.mxu0 0
    %3057 = vmatpush2.bf16.xpose.msra.mxu0 0
    %3058 = vmatprep.subr.bf16.mxu0 0
    %3059 = vmatpush2.bf16.xpose.msra.mxu0 0
    %3060 = vmatprep.subr.bf16.mxu0 0
    %3061 = vmatpush2.bf16.xpose.msra.mxu0 0
    %3062 = vmatprep.subr.bf16.mxu0 0
    %3063 = vmatpush2.bf16.xpose.msra.mxu0 0
    %3064 = vmatprep.subr.bf16.mxu0 0
    %3065 = vmatpush2.bf16.xpose.msra.mxu0 0
    %3066 = vmatprep.subr.bf16.mxu0 0
    %3067 = vmatpush2.bf16.xpose.msra.mxu0 0
    %3068 = vmatprep.subr.bf16.mxu0 0
    %3069 = vmatpush2.bf16.xpose.msra.mxu0 0
    %3070 = vmatprep.subr.bf16.mxu0 0
    %3071 = vmatpush2.bf16.xpose.msra.mxu0 0
    %3072 = vmatprep.mubr.bf16.mxu0 0
    %3073 = vmatmul.mubr.bf16.gmra.mxu0 %v3035
    %v3074 = vpop.f32.mrf.mxu0
    %v3075 = vadd.f32 0.0, %v3074
    %v3076 = vpop.f32.mrf.mxu0
    %v3077 = vpop.f32.mrf.mxu0
    %v3078 = vpop.f32.mrf.mxu0
    %3079 = vdwg.mxu0
    %v3081 = vsel %vm906, %v2876, 0
    %v3084 = vsel %vm906, %v2884, 0
    %3086 = vmatprep.subr.bf16.mxu0 0
    %3087 = vmatpush1.bf16.xpose.msra.mxu0 0
    %3088 = vmatprep.subr.bf16.mxu0 0
    %3089 = vmatpush1.bf16.xpose.msra.mxu0 0
    %3090 = vmatprep.subr.bf16.mxu0 0
    %3091 = vmatpush1.bf16.xpose.msra.mxu0 0
    %3092 = vmatprep.subr.bf16.mxu0 0
    %3093 = vmatpush1.bf16.xpose.msra.mxu0 0
    %3094 = vmatprep.subr.bf16.mxu0 0
    %3095 = vmatpush1.bf16.xpose.msra.mxu0 0
    %3096 = vmatprep.subr.bf16.mxu0 0
    %3097 = vmatpush1.bf16.xpose.msra.mxu0 0
    %3098 = vmatprep.subr.bf16.mxu0 0
    %3099 = vmatpush1.bf16.xpose.msra.mxu0 0
    %3100 = vmatprep.subr.bf16.mxu0 0
    %3101 = vmatpush1.bf16.xpose.msra.mxu0 %v3084
    %3102 = vmatprep.subr.bf16.mxu0 0
    %3103 = vmatpush2.bf16.xpose.msra.mxu0 0
    %3104 = vmatprep.subr.bf16.mxu0 0
    %3105 = vmatpush2.bf16.xpose.msra.mxu0 0
    %3106 = vmatprep.subr.bf16.mxu0 0
    %3107 = vmatpush2.bf16.xpose.msra.mxu0 0
    %3108 = vmatprep.subr.bf16.mxu0 0
    %3109 = vmatpush2.bf16.xpose.msra.mxu0 0
    %3110 = vmatprep.subr.bf16.mxu0 0
    %3111 = vmatpush2.bf16.xpose.msra.mxu0 0
    %3112 = vmatprep.subr.bf16.mxu0 0
    %3113 = vmatpush2.bf16.xpose.msra.mxu0 0
    %3114 = vmatprep.subr.bf16.mxu0 0
    %3115 = vmatpush2.bf16.xpose.msra.mxu0 0
    %3116 = vmatprep.subr.bf16.mxu0 0
    %3117 = vmatpush2.bf16.xpose.msra.mxu0 0
    %3118 = vmatprep.mubr.bf16.mxu0 0
    %3119 = vmatmul.mubr.bf16.gmra.mxu0 %v3081
    %v3120 = vpop.f32.mrf.mxu0
    %v3121 = vadd.f32 0.0, %v3120
    %v3122 = vpop.f32.mrf.mxu0
    %v3123 = vpop.f32.mrf.mxu0
    %v3124 = vpop.f32.mrf.mxu0
    %3125 = vdwg.mxu0
    %v3127 = vsel %vm906, %v2877, 0
    %v3130 = vsel %vm906, %v2885, 0
    %3132 = vmatprep.subr.bf16.mxu0 0
    %3133 = vmatpush1.bf16.xpose.msra.mxu0 0
    %3134 = vmatprep.subr.bf16.mxu0 0
    %3135 = vmatpush1.bf16.xpose.msra.mxu0 0
    %3136 = vmatprep.subr.bf16.mxu0 0
    %3137 = vmatpush1.bf16.xpose.msra.mxu0 0
    %3138 = vmatprep.subr.bf16.mxu0 0
    %3139 = vmatpush1.bf16.xpose.msra.mxu0 0
    %3140 = vmatprep.subr.bf16.mxu0 0
    %3141 = vmatpush1.bf16.xpose.msra.mxu0 0
    %3142 = vmatprep.subr.bf16.mxu0 0
    %3143 = vmatpush1.bf16.xpose.msra.mxu0 0
    %3144 = vmatprep.subr.bf16.mxu0 0
    %3145 = vmatpush1.bf16.xpose.msra.mxu0 0
    %3146 = vmatprep.subr.bf16.mxu0 0
    %3147 = vmatpush1.bf16.xpose.msra.mxu0 %v3130
    %3148 = vmatprep.subr.bf16.mxu0 0
    %3149 = vmatpush2.bf16.xpose.msra.mxu0 0
    %3150 = vmatprep.subr.bf16.mxu0 0
    %3151 = vmatpush2.bf16.xpose.msra.mxu0 0
    %3152 = vmatprep.subr.bf16.mxu0 0
    %3153 = vmatpush2.bf16.xpose.msra.mxu0 0
    %3154 = vmatprep.subr.bf16.mxu0 0
    %3155 = vmatpush2.bf16.xpose.msra.mxu0 0
    %3156 = vmatprep.subr.bf16.mxu0 0
    %3157 = vmatpush2.bf16.xpose.msra.mxu0 0
    %3158 = vmatprep.subr.bf16.mxu0 0
    %3159 = vmatpush2.bf16.xpose.msra.mxu0 0
    %3160 = vmatprep.subr.bf16.mxu0 0
    %3161 = vmatpush2.bf16.xpose.msra.mxu0 0
    %3162 = vmatprep.subr.bf16.mxu0 0
    %3163 = vmatpush2.bf16.xpose.msra.mxu0 0
    %3164 = vmatprep.mubr.bf16.mxu0 0
    %3165 = vmatmul.mubr.bf16.gmra.mxu0 %v3127
    %v3166 = vpop.f32.mrf.mxu0
    %v3167 = vadd.f32 0.0, %v3166
    %v3168 = vpop.f32.mrf.mxu0
    %v3169 = vpop.f32.mrf.mxu0
    %v3170 = vpop.f32.mrf.mxu0
    %3171 = vdwg.mxu0
    %v3173 = vsel %vm906, %v2878, 0
    %v3176 = vsel %vm906, %v2886, 0
    %3178 = vmatprep.subr.bf16.mxu0 0
    %3179 = vmatpush1.bf16.xpose.msra.mxu0 0
    %3180 = vmatprep.subr.bf16.mxu0 0
    %3181 = vmatpush1.bf16.xpose.msra.mxu0 0
    %3182 = vmatprep.subr.bf16.mxu0 0
    %3183 = vmatpush1.bf16.xpose.msra.mxu0 0
    %3184 = vmatprep.subr.bf16.mxu0 0
    %3185 = vmatpush1.bf16.xpose.msra.mxu0 0
    %3186 = vmatprep.subr.bf16.mxu0 0
    %3187 = vmatpush1.bf16.xpose.msra.mxu0 0
    %3188 = vmatprep.subr.bf16.mxu0 0
    %3189 = vmatpush1.bf16.xpose.msra.mxu0 0
    %3190 = vmatprep.subr.bf16.mxu0 0
    %3191 = vmatpush1.bf16.xpose.msra.mxu0 0
    %3192 = vmatprep.subr.bf16.mxu0 0
    %3193 = vmatpush1.bf16.xpose.msra.mxu0 %v3176
    %3194 = vmatprep.subr.bf16.mxu0 0
    %3195 = vmatpush2.bf16.xpose.msra.mxu0 0
    %3196 = vmatprep.subr.bf16.mxu0 0
    %3197 = vmatpush2.bf16.xpose.msra.mxu0 0
    %3198 = vmatprep.subr.bf16.mxu0 0
    %3199 = vmatpush2.bf16.xpose.msra.mxu0 0
    %3200 = vmatprep.subr.bf16.mxu0 0
    %3201 = vmatpush2.bf16.xpose.msra.mxu0 0
    %3202 = vmatprep.subr.bf16.mxu0 0
    %3203 = vmatpush2.bf16.xpose.msra.mxu0 0
    %3204 = vmatprep.subr.bf16.mxu0 0
    %3205 = vmatpush2.bf16.xpose.msra.mxu0 0
    %3206 = vmatprep.subr.bf16.mxu0 0
    %3207 = vmatpush2.bf16.xpose.msra.mxu0 0
    %3208 = vmatprep.subr.bf16.mxu0 0
    %3209 = vmatpush2.bf16.xpose.msra.mxu0 0
    %3210 = vmatprep.mubr.bf16.mxu0 0
    %3211 = vmatmul.mubr.bf16.gmra.mxu0 %v3173
    %v3212 = vpop.f32.mrf.mxu0
    %v3213 = vadd.f32 0.0, %v3212
    %v3214 = vpop.f32.mrf.mxu0
    %v3215 = vpop.f32.mrf.mxu0
    %v3216 = vpop.f32.mrf.mxu0
    %3217 = vdwg.mxu0
    %v3219 = vsel %vm906, %v2879, 0
    %v3222 = vsel %vm906, %v2887, 0
    %3224 = vmatprep.subr.bf16.mxu0 0
    %3225 = vmatpush1.bf16.xpose.msra.mxu0 0
    %3226 = vmatprep.subr.bf16.mxu0 0
    %3227 = vmatpush1.bf16.xpose.msra.mxu0 0
    %3228 = vmatprep.subr.bf16.mxu0 0
    %3229 = vmatpush1.bf16.xpose.msra.mxu0 0
    %3230 = vmatprep.subr.bf16.mxu0 0
    %3231 = vmatpush1.bf16.xpose.msra.mxu0 0
    %3232 = vmatprep.subr.bf16.mxu0 0
    %3233 = vmatpush1.bf16.xpose.msra.mxu0 0
    %3234 = vmatprep.subr.bf16.mxu0 0
    %3235 = vmatpush1.bf16.xpose.msra.mxu0 0
    %3236 = vmatprep.subr.bf16.mxu0 0
    %3237 = vmatpush1.bf16.xpose.msra.mxu0 0
    %3238 = vmatprep.subr.bf16.mxu0 0
    %3239 = vmatpush1.bf16.xpose.msra.mxu0 %v3222
    %3240 = vmatprep.subr.bf16.mxu0 0
    %3241 = vmatpush2.bf16.xpose.msra.mxu0 0
    %3242 = vmatprep.subr.bf16.mxu0 0
    %3243 = vmatpush2.bf16.xpose.msra.mxu0 0
    %3244 = vmatprep.subr.bf16.mxu0 0
    %3245 = vmatpush2.bf16.xpose.msra.mxu0 0
    %3246 = vmatprep.subr.bf16.mxu0 0
    %3247 = vmatpush2.bf16.xpose.msra.mxu0 0
    %3248 = vmatprep.subr.bf16.mxu0 0
    %3249 = vmatpush2.bf16.xpose.msra.mxu0 0
    %3250 = vmatprep.subr.bf16.mxu0 0
    %3251 = vmatpush2.bf16.xpose.msra.mxu0 0
    %3252 = vmatprep.subr.bf16.mxu0 0
    %3253 = vmatpush2.bf16.xpose.msra.mxu0 0
    %3254 = vmatprep.subr.bf16.mxu0 0
    %3255 = vmatpush2.bf16.xpose.msra.mxu0 0
    %3256 = vmatprep.mubr.bf16.mxu0 0
    %3257 = vmatmul.mubr.bf16.gmra.mxu0 %v3219
    %v3258 = vpop.f32.mrf.mxu0
    %v3259 = vadd.f32 0.0, %v3258
    %v3260 = vpop.f32.mrf.mxu0
    %v3261 = vpop.f32.mrf.mxu0
    %v3262 = vpop.f32.mrf.mxu0
    %3263 = vdwg.mxu0
    %v3264 = vsel %vm906, %v2937, -inf
    %v3265 = vrot.slane %v3264, 4
    %v3266 = vmax.f32 %v3264, %v3265
    %v3267 = vrot.slane %v3266, 2
    %v3268 = vmax.f32 %v3266, %v3267
    %v3269 = vrot.slane %v3268, 1
    %v3270 = vmax.f32 %v3268, %v3269
    %v3271 = vsel %vm906, %v2983, -inf
    %v3272 = vrot.slane %v3271, 4
    %v3273 = vmax.f32 %v3271, %v3272
    %v3274 = vrot.slane %v3273, 2
    %v3275 = vmax.f32 %v3273, %v3274
    %v3276 = vrot.slane %v3275, 1
    %v3277 = vmax.f32 %v3275, %v3276
    %v3278 = vsel %vm906, %v3029, -inf
    %v3279 = vrot.slane %v3278, 4
    %v3280 = vmax.f32 %v3278, %v3279
    %v3281 = vrot.slane %v3280, 2
    %v3282 = vmax.f32 %v3280, %v3281
    %v3283 = vrot.slane %v3282, 1
    %v3284 = vmax.f32 %v3282, %v3283
    %v3285 = vsel %vm906, %v3075, -inf
    %v3286 = vrot.slane %v3285, 4
    %v3287 = vmax.f32 %v3285, %v3286
    %v3288 = vrot.slane %v3287, 2
    %v3289 = vmax.f32 %v3287, %v3288
    %v3290 = vrot.slane %v3289, 1
    %v3291 = vmax.f32 %v3289, %v3290
    %v3292 = vsel %vm906, %v3121, -inf
    %v3293 = vrot.slane %v3292, 4
    %v3294 = vmax.f32 %v3292, %v3293
    %v3295 = vrot.slane %v3294, 2
    %v3296 = vmax.f32 %v3294, %v3295
    %v3297 = vrot.slane %v3296, 1
    %v3298 = vmax.f32 %v3296, %v3297
    %v3299 = vsel %vm906, %v3167, -inf
    %v3300 = vrot.slane %v3299, 4
    %v3301 = vmax.f32 %v3299, %v3300
    %v3302 = vrot.slane %v3301, 2
    %v3303 = vmax.f32 %v3301, %v3302
    %v3304 = vrot.slane %v3303, 1
    %v3305 = vmax.f32 %v3303, %v3304
    %v3306 = vsel %vm906, %v3213, -inf
    %v3307 = vrot.slane %v3306, 4
    %v3308 = vmax.f32 %v3306, %v3307
    %v3309 = vrot.slane %v3308, 2
    %v3310 = vmax.f32 %v3308, %v3309
    %v3311 = vrot.slane %v3310, 1
    %v3312 = vmax.f32 %v3310, %v3311
    %v3313 = vsel %vm906, %v3259, -inf
    %v3314 = vrot.slane %v3313, 4
    %v3315 = vmax.f32 %v3313, %v3314
    %v3316 = vrot.slane %v3315, 2
    %v3317 = vmax.f32 %v3315, %v3316
    %v3318 = vrot.slane %v3317, 1
    %v3319 = vmax.f32 %v3317, %v3318
    %v3320 = vsub.f32 %v2937, %v3270
    %v3321 = vsub.f32 %v2983, %v3277
    %v3322 = vsub.f32 %v3029, %v3284
    %v3323 = vsub.f32 %v3075, %v3291
    %v3324 = vsub.f32 %v3121, %v3298
    %v3325 = vsub.f32 %v3167, %v3305
    %v3326 = vsub.f32 %v3213, %v3312
    %v3327 = vsub.f32 %v3259, %v3319
    %v3328 = vmul.f32 %v3320, 1.442695
    %v3329 = vpow.pop %v3328
    %v3330 = vmul.f32 %v3321, 1.442695
    %v3331 = vpow.pop %v3330
    %v3332 = vmul.f32 %v3322, 1.442695
    %v3333 = vpow.pop %v3332
    %v3334 = vmul.f32 %v3323, 1.442695
    %v3335 = vpow.pop %v3334
    %v3336 = vmul.f32 %v3324, 1.442695
    %v3337 = vpow.pop %v3336
    %v3338 = vmul.f32 %v3325, 1.442695
    %v3339 = vpow.pop %v3338
    %v3340 = vmul.f32 %v3326, 1.442695
    %v3341 = vpow.pop %v3340
    %v3342 = vmul.f32 %v3327, 1.442695
    %v3343 = vpow.pop %v3342
    %v3344 = vsel %vm906, %v3329, 0.0
    %v3345 = vrot.slane %v3344, 4
    %v3346 = vadd.f32 %v3344, %v3345
    %v3347 = vrot.slane %v3346, 2
    %v3348 = vadd.f32 %v3346, %v3347
    %v3349 = vrot.slane %v3348, 1
    %v3350 = vadd.f32 %v3348, %v3349
    %v3351 = vsel %vm906, %v3331, 0.0
    %v3352 = vrot.slane %v3351, 4
    %v3353 = vadd.f32 %v3351, %v3352
    %v3354 = vrot.slane %v3353, 2
    %v3355 = vadd.f32 %v3353, %v3354
    %v3356 = vrot.slane %v3355, 1
    %v3357 = vadd.f32 %v3355, %v3356
    %v3358 = vsel %vm906, %v3333, 0.0
    %v3359 = vrot.slane %v3358, 4
    %v3360 = vadd.f32 %v3358, %v3359
    %v3361 = vrot.slane %v3360, 2
    %v3362 = vadd.f32 %v3360, %v3361
    %v3363 = vrot.slane %v3362, 1
    %v3364 = vadd.f32 %v3362, %v3363
    %v3365 = vsel %vm906, %v3335, 0.0
    %v3366 = vrot.slane %v3365, 4
    %v3367 = vadd.f32 %v3365, %v3366
    %v3368 = vrot.slane %v3367, 2
    %v3369 = vadd.f32 %v3367, %v3368
    %v3370 = vrot.slane %v3369, 1
    %v3371 = vadd.f32 %v3369, %v3370
    %v3372 = vsel %vm906, %v3337, 0.0
    %v3373 = vrot.slane %v3372, 4
    %v3374 = vadd.f32 %v3372, %v3373
    %v3375 = vrot.slane %v3374, 2
    %v3376 = vadd.f32 %v3374, %v3375
    %v3377 = vrot.slane %v3376, 1
    %v3378 = vadd.f32 %v3376, %v3377
    %v3379 = vsel %vm906, %v3339, 0.0
    %v3380 = vrot.slane %v3379, 4
    %v3381 = vadd.f32 %v3379, %v3380
    %v3382 = vrot.slane %v3381, 2
    %v3383 = vadd.f32 %v3381, %v3382
    %v3384 = vrot.slane %v3383, 1
    %v3385 = vadd.f32 %v3383, %v3384
    %v3386 = vsel %vm906, %v3341, 0.0
    %v3387 = vrot.slane %v3386, 4
    %v3388 = vadd.f32 %v3386, %v3387
    %v3389 = vrot.slane %v3388, 2
    %v3390 = vadd.f32 %v3388, %v3389
    %v3391 = vrot.slane %v3390, 1
    %v3392 = vadd.f32 %v3390, %v3391
    %v3393 = vsel %vm906, %v3343, 0.0
    %v3394 = vrot.slane %v3393, 4
    %v3395 = vadd.f32 %v3393, %v3394
    %v3396 = vrot.slane %v3395, 2
    %v3397 = vadd.f32 %v3395, %v3396
    %v3398 = vrot.slane %v3397, 1
    %v3399 = vadd.f32 %v3397, %v3398
    %v3400 = vrcp.pop %v3350
    %v3401 = vmul.f32 %v3329, %v3400
    %v3402 = vrcp.pop %v3357
    %v3403 = vmul.f32 %v3331, %v3402
    %v3404 = vrcp.pop %v3364
    %v3405 = vmul.f32 %v3333, %v3404
    %v3406 = vrcp.pop %v3371
    %v3407 = vmul.f32 %v3335, %v3406
    %v3408 = vrcp.pop %v3378
    %v3409 = vmul.f32 %v3337, %v3408
    %v3410 = vrcp.pop %v3385
    %v3411 = vmul.f32 %v3339, %v3410
    %v3412 = vrcp.pop %v3392
    %v3413 = vmul.f32 %v3341, %v3412
    %v3414 = vrcp.pop %v3399
    %v3415 = vmul.f32 %v3343, %v3414
    %v3416 = vpack.c.bf16 %v3401, %v3401
    %v3417 = vpack.c.bf16 %v3403, %v3403
    %v3418 = vpack.c.bf16 %v3405, %v3405
    %v3419 = vpack.c.bf16 %v3407, %v3407
    %v3420 = vpack.c.bf16 %v3409, %v3409
    %v3421 = vpack.c.bf16 %v3411, %v3411
    %v3422 = vpack.c.bf16 %v3413, %v3413
    %v3423 = vpack.c.bf16 %v3415, %v3415
    %v3425 = vsel %vm906, %v3416, 0
    %v3428 = vsel %vm1438, %v2888, 0
    %3430 = vmatprep.subr.bf16.mxu0 0
    %3431 = vmatpush1.bf16.msra.mxu0 0
    %3432 = vmatprep.subr.bf16.mxu0 0
    %3433 = vmatpush1.bf16.msra.mxu0 0
    %3434 = vmatprep.subr.bf16.mxu0 0
    %3435 = vmatpush1.bf16.msra.mxu0 0
    %3436 = vmatprep.subr.bf16.mxu0 0
    %3437 = vmatpush1.bf16.msra.mxu0 0
    %3438 = vmatprep.subr.bf16.mxu0 0
    %3439 = vmatpush1.bf16.msra.mxu0 0
    %3440 = vmatprep.subr.bf16.mxu0 0
    %3441 = vmatpush1.bf16.msra.mxu0 0
    %3442 = vmatprep.subr.bf16.mxu0 0
    %3443 = vmatpush1.bf16.msra.mxu0 0
    %3444 = vmatprep.subr.bf16.mxu0 0
    %3445 = vmatpush1.bf16.msra.mxu0 %v3428
    %3446 = vmatprep.subr.bf16.mxu0 0
    %3447 = vmatpush2.bf16.msra.mxu0 0
    %3448 = vmatprep.subr.bf16.mxu0 0
    %3449 = vmatpush2.bf16.msra.mxu0 0
    %3450 = vmatprep.subr.bf16.mxu0 0
    %3451 = vmatpush2.bf16.msra.mxu0 0
    %3452 = vmatprep.subr.bf16.mxu0 0
    %3453 = vmatpush2.bf16.msra.mxu0 0
    %3454 = vmatprep.subr.bf16.mxu0 0
    %3455 = vmatpush2.bf16.msra.mxu0 0
    %3456 = vmatprep.subr.bf16.mxu0 0
    %3457 = vmatpush2.bf16.msra.mxu0 0
    %3458 = vmatprep.subr.bf16.mxu0 0
    %3459 = vmatpush2.bf16.msra.mxu0 0
    %3460 = vmatprep.subr.bf16.mxu0 0
    %3461 = vmatpush2.bf16.msra.mxu0 0
    %3462 = vmatprep.mubr.bf16.mxu0 0
    %3463 = vmatmul.mubr.bf16.gmra.mxu0 %v3425
    %v3464 = vpop.f32.mrf.mxu0
    %v3465 = vadd.f32 0.0, %v3464
    %v3466 = vpop.f32.mrf.mxu0
    %v3467 = vpop.f32.mrf.mxu0
    %v3468 = vpop.f32.mrf.mxu0
    %3469 = vdwg.mxu0
    %v3471 = vsel %vm906, %v3417, 0
    %v3474 = vsel %vm1438, %v2889, 0
    %3476 = vmatprep.subr.bf16.mxu0 0
    %3477 = vmatpush1.bf16.msra.mxu0 0
    %3478 = vmatprep.subr.bf16.mxu0 0
    %3479 = vmatpush1.bf16.msra.mxu0 0
    %3480 = vmatprep.subr.bf16.mxu0 0
    %3481 = vmatpush1.bf16.msra.mxu0 0
    %3482 = vmatprep.subr.bf16.mxu0 0
    %3483 = vmatpush1.bf16.msra.mxu0 0
    %3484 = vmatprep.subr.bf16.mxu0 0
    %3485 = vmatpush1.bf16.msra.mxu0 0
    %3486 = vmatprep.subr.bf16.mxu0 0
    %3487 = vmatpush1.bf16.msra.mxu0 0
    %3488 = vmatprep.subr.bf16.mxu0 0
    %3489 = vmatpush1.bf16.msra.mxu0 0
    %3490 = vmatprep.subr.bf16.mxu0 0
    %3491 = vmatpush1.bf16.msra.mxu0 %v3474
    %3492 = vmatprep.subr.bf16.mxu0 0
    %3493 = vmatpush2.bf16.msra.mxu0 0
    %3494 = vmatprep.subr.bf16.mxu0 0
    %3495 = vmatpush2.bf16.msra.mxu0 0
    %3496 = vmatprep.subr.bf16.mxu0 0
    %3497 = vmatpush2.bf16.msra.mxu0 0
    %3498 = vmatprep.subr.bf16.mxu0 0
    %3499 = vmatpush2.bf16.msra.mxu0 0
    %3500 = vmatprep.subr.bf16.mxu0 0
    %3501 = vmatpush2.bf16.msra.mxu0 0
    %3502 = vmatprep.subr.bf16.mxu0 0
    %3503 = vmatpush2.bf16.msra.mxu0 0
    %3504 = vmatprep.subr.bf16.mxu0 0
    %3505 = vmatpush2.bf16.msra.mxu0 0
    %3506 = vmatprep.subr.bf16.mxu0 0
    %3507 = vmatpush2.bf16.msra.mxu0 0
    %3508 = vmatprep.mubr.bf16.mxu0 0
    %3509 = vmatmul.mubr.bf16.gmra.mxu0 %v3471
    %v3510 = vpop.f32.mrf.mxu0
    %v3511 = vadd.f32 0.0, %v3510
    %v3512 = vpop.f32.mrf.mxu0
    %v3513 = vpop.f32.mrf.mxu0
    %v3514 = vpop.f32.mrf.mxu0
    %3515 = vdwg.mxu0
    %v3517 = vsel %vm906, %v3418, 0
    %v3520 = vsel %vm1438, %v2890, 0
    %3522 = vmatprep.subr.bf16.mxu0 0
    %3523 = vmatpush1.bf16.msra.mxu0 0
    %3524 = vmatprep.subr.bf16.mxu0 0
    %3525 = vmatpush1.bf16.msra.mxu0 0
    %3526 = vmatprep.subr.bf16.mxu0 0
    %3527 = vmatpush1.bf16.msra.mxu0 0
    %3528 = vmatprep.subr.bf16.mxu0 0
    %3529 = vmatpush1.bf16.msra.mxu0 0
    %3530 = vmatprep.subr.bf16.mxu0 0
    %3531 = vmatpush1.bf16.msra.mxu0 0
    %3532 = vmatprep.subr.bf16.mxu0 0
    %3533 = vmatpush1.bf16.msra.mxu0 0
    %3534 = vmatprep.subr.bf16.mxu0 0
    %3535 = vmatpush1.bf16.msra.mxu0 0
    %3536 = vmatprep.subr.bf16.mxu0 0
    %3537 = vmatpush1.bf16.msra.mxu0 %v3520
    %3538 = vmatprep.subr.bf16.mxu0 0
    %3539 = vmatpush2.bf16.msra.mxu0 0
    %3540 = vmatprep.subr.bf16.mxu0 0
    %3541 = vmatpush2.bf16.msra.mxu0 0
    %3542 = vmatprep.subr.bf16.mxu0 0
    %3543 = vmatpush2.bf16.msra.mxu0 0
    %3544 = vmatprep.subr.bf16.mxu0 0
    %3545 = vmatpush2.bf16.msra.mxu0 0
    %3546 = vmatprep.subr.bf16.mxu0 0
    %3547 = vmatpush2.bf16.msra.mxu0 0
    %3548 = vmatprep.subr.bf16.mxu0 0
    %3549 = vmatpush2.bf16.msra.mxu0 0
    %3550 = vmatprep.subr.bf16.mxu0 0
    %3551 = vmatpush2.bf16.msra.mxu0 0
    %3552 = vmatprep.subr.bf16.mxu0 0
    %3553 = vmatpush2.bf16.msra.mxu0 0
    %3554 = vmatprep.mubr.bf16.mxu0 0
    %3555 = vmatmul.mubr.bf16.gmra.mxu0 %v3517
    %v3556 = vpop.f32.mrf.mxu0
    %v3557 = vadd.f32 0.0, %v3556
    %v3558 = vpop.f32.mrf.mxu0
    %v3559 = vpop.f32.mrf.mxu0
    %v3560 = vpop.f32.mrf.mxu0
    %3561 = vdwg.mxu0
    %v3563 = vsel %vm906, %v3419, 0
    %v3566 = vsel %vm1438, %v2891, 0
    %3568 = vmatprep.subr.bf16.mxu0 0
    %3569 = vmatpush1.bf16.msra.mxu0 0
    %3570 = vmatprep.subr.bf16.mxu0 0
    %3571 = vmatpush1.bf16.msra.mxu0 0
    %3572 = vmatprep.subr.bf16.mxu0 0
    %3573 = vmatpush1.bf16.msra.mxu0 0
    %3574 = vmatprep.subr.bf16.mxu0 0
    %3575 = vmatpush1.bf16.msra.mxu0 0
    %3576 = vmatprep.subr.bf16.mxu0 0
    %3577 = vmatpush1.bf16.msra.mxu0 0
    %3578 = vmatprep.subr.bf16.mxu0 0
    %3579 = vmatpush1.bf16.msra.mxu0 0
    %3580 = vmatprep.subr.bf16.mxu0 0
    %3581 = vmatpush1.bf16.msra.mxu0 0
    %3582 = vmatprep.subr.bf16.mxu0 0
    %3583 = vmatpush1.bf16.msra.mxu0 %v3566
    %3584 = vmatprep.subr.bf16.mxu0 0
    %3585 = vmatpush2.bf16.msra.mxu0 0
    %3586 = vmatprep.subr.bf16.mxu0 0
    %3587 = vmatpush2.bf16.msra.mxu0 0
    %3588 = vmatprep.subr.bf16.mxu0 0
    %3589 = vmatpush2.bf16.msra.mxu0 0
    %3590 = vmatprep.subr.bf16.mxu0 0
    %3591 = vmatpush2.bf16.msra.mxu0 0
    %3592 = vmatprep.subr.bf16.mxu0 0
    %3593 = vmatpush2.bf16.msra.mxu0 0
    %3594 = vmatprep.subr.bf16.mxu0 0
    %3595 = vmatpush2.bf16.msra.mxu0 0
    %3596 = vmatprep.subr.bf16.mxu0 0
    %3597 = vmatpush2.bf16.msra.mxu0 0
    %3598 = vmatprep.subr.bf16.mxu0 0
    %3599 = vmatpush2.bf16.msra.mxu0 0
    %3600 = vmatprep.mubr.bf16.mxu0 0
    %3601 = vmatmul.mubr.bf16.gmra.mxu0 %v3563
    %v3602 = vpop.f32.mrf.mxu0
    %v3603 = vadd.f32 0.0, %v3602
    %v3604 = vpop.f32.mrf.mxu0
    %v3605 = vpop.f32.mrf.mxu0
    %v3606 = vpop.f32.mrf.mxu0
    %3607 = vdwg.mxu0
    %v3609 = vsel %vm906, %v3420, 0
    %v3612 = vsel %vm1438, %v2892, 0
    %3614 = vmatprep.subr.bf16.mxu0 0
    %3615 = vmatpush1.bf16.msra.mxu0 0
    %3616 = vmatprep.subr.bf16.mxu0 0
    %3617 = vmatpush1.bf16.msra.mxu0 0
    %3618 = vmatprep.subr.bf16.mxu0 0
    %3619 = vmatpush1.bf16.msra.mxu0 0
    %3620 = vmatprep.subr.bf16.mxu0 0
    %3621 = vmatpush1.bf16.msra.mxu0 0
    %3622 = vmatprep.subr.bf16.mxu0 0
    %3623 = vmatpush1.bf16.msra.mxu0 0
    %3624 = vmatprep.subr.bf16.mxu0 0
    %3625 = vmatpush1.bf16.msra.mxu0 0
    %3626 = vmatprep.subr.bf16.mxu0 0
    %3627 = vmatpush1.bf16.msra.mxu0 0
    %3628 = vmatprep.subr.bf16.mxu0 0
    %3629 = vmatpush1.bf16.msra.mxu0 %v3612
    %3630 = vmatprep.subr.bf16.mxu0 0
    %3631 = vmatpush2.bf16.msra.mxu0 0
    %3632 = vmatprep.subr.bf16.mxu0 0
    %3633 = vmatpush2.bf16.msra.mxu0 0
    %3634 = vmatprep.subr.bf16.mxu0 0
    %3635 = vmatpush2.bf16.msra.mxu0 0
    %3636 = vmatprep.subr.bf16.mxu0 0
    %3637 = vmatpush2.bf16.msra.mxu0 0
    %3638 = vmatprep.subr.bf16.mxu0 0
    %3639 = vmatpush2.bf16.msra.mxu0 0
    %3640 = vmatprep.subr.bf16.mxu0 0
    %3641 = vmatpush2.bf16.msra.mxu0 0
    %3642 = vmatprep.subr.bf16.mxu0 0
    %3643 = vmatpush2.bf16.msra.mxu0 0
    %3644 = vmatprep.subr.bf16.mxu0 0
    %3645 = vmatpush2.bf16.msra.mxu0 0
    %3646 = vmatprep.mubr.bf16.mxu0 0
    %3647 = vmatmul.mubr.bf16.gmra.mxu0 %v3609
    %v3648 = vpop.f32.mrf.mxu0
    %v3649 = vadd.f32 0.0, %v3648
    %v3650 = vpop.f32.mrf.mxu0
    %v3651 = vpop.f32.mrf.mxu0
    %v3652 = vpop.f32.mrf.mxu0
    %3653 = vdwg.mxu0
    %v3655 = vsel %vm906, %v3421, 0
    %v3658 = vsel %vm1438, %v2893, 0
    %3660 = vmatprep.subr.bf16.mxu0 0
    %3661 = vmatpush1.bf16.msra.mxu0 0
    %3662 = vmatprep.subr.bf16.mxu0 0
    %3663 = vmatpush1.bf16.msra.mxu0 0
    %3664 = vmatprep.subr.bf16.mxu0 0
    %3665 = vmatpush1.bf16.msra.mxu0 0
    %3666 = vmatprep.subr.bf16.mxu0 0
    %3667 = vmatpush1.bf16.msra.mxu0 0
    %3668 = vmatprep.subr.bf16.mxu0 0
    %3669 = vmatpush1.bf16.msra.mxu0 0
    %3670 = vmatprep.subr.bf16.mxu0 0
    %3671 = vmatpush1.bf16.msra.mxu0 0
    %3672 = vmatprep.subr.bf16.mxu0 0
    %3673 = vmatpush1.bf16.msra.mxu0 0
    %3674 = vmatprep.subr.bf16.mxu0 0
    %3675 = vmatpush1.bf16.msra.mxu0 %v3658
    %3676 = vmatprep.subr.bf16.mxu0 0
    %3677 = vmatpush2.bf16.msra.mxu0 0
    %3678 = vmatprep.subr.bf16.mxu0 0
    %3679 = vmatpush2.bf16.msra.mxu0 0
    %3680 = vmatprep.subr.bf16.mxu0 0
    %3681 = vmatpush2.bf16.msra.mxu0 0
    %3682 = vmatprep.subr.bf16.mxu0 0
    %3683 = vmatpush2.bf16.msra.mxu0 0
    %3684 = vmatprep.subr.bf16.mxu0 0
    %3685 = vmatpush2.bf16.msra.mxu0 0
    %3686 = vmatprep.subr.bf16.mxu0 0
    %3687 = vmatpush2.bf16.msra.mxu0 0
    %3688 = vmatprep.subr.bf16.mxu0 0
    %3689 = vmatpush2.bf16.msra.mxu0 0
    %3690 = vmatprep.subr.bf16.mxu0 0
    %3691 = vmatpush2.bf16.msra.mxu0 0
    %3692 = vmatprep.mubr.bf16.mxu0 0
    %3693 = vmatmul.mubr.bf16.gmra.mxu0 %v3655
    %v3694 = vpop.f32.mrf.mxu0
    %v3695 = vadd.f32 0.0, %v3694
    %v3696 = vpop.f32.mrf.mxu0
    %v3697 = vpop.f32.mrf.mxu0
    %v3698 = vpop.f32.mrf.mxu0
    %3699 = vdwg.mxu0
    %v3701 = vsel %vm906, %v3422, 0
    %v3704 = vsel %vm1438, %v2894, 0
    %3706 = vmatprep.subr.bf16.mxu0 0
    %3707 = vmatpush1.bf16.msra.mxu0 0
    %3708 = vmatprep.subr.bf16.mxu0 0
    %3709 = vmatpush1.bf16.msra.mxu0 0
    %3710 = vmatprep.subr.bf16.mxu0 0
    %3711 = vmatpush1.bf16.msra.mxu0 0
    %3712 = vmatprep.subr.bf16.mxu0 0
    %3713 = vmatpush1.bf16.msra.mxu0 0
    %3714 = vmatprep.subr.bf16.mxu0 0
    %3715 = vmatpush1.bf16.msra.mxu0 0
    %3716 = vmatprep.subr.bf16.mxu0 0
    %3717 = vmatpush1.bf16.msra.mxu0 0
    %3718 = vmatprep.subr.bf16.mxu0 0
    %3719 = vmatpush1.bf16.msra.mxu0 0
    %3720 = vmatprep.subr.bf16.mxu0 0
    %3721 = vmatpush1.bf16.msra.mxu0 %v3704
    %3722 = vmatprep.subr.bf16.mxu0 0
    %3723 = vmatpush2.bf16.msra.mxu0 0
    %3724 = vmatprep.subr.bf16.mxu0 0
    %3725 = vmatpush2.bf16.msra.mxu0 0
    %3726 = vmatprep.subr.bf16.mxu0 0
    %3727 = vmatpush2.bf16.msra.mxu0 0
    %3728 = vmatprep.subr.bf16.mxu0 0
    %3729 = vmatpush2.bf16.msra.mxu0 0
    %3730 = vmatprep.subr.bf16.mxu0 0
    %3731 = vmatpush2.bf16.msra.mxu0 0
    %3732 = vmatprep.subr.bf16.mxu0 0
    %3733 = vmatpush2.bf16.msra.mxu0 0
    %3734 = vmatprep.subr.bf16.mxu0 0
    %3735 = vmatpush2.bf16.msra.mxu0 0
    %3736 = vmatprep.subr.bf16.mxu0 0
    %3737 = vmatpush2.bf16.msra.mxu0 0
    %3738 = vmatprep.mubr.bf16.mxu0 0
    %3739 = vmatmul.mubr.bf16.gmra.mxu0 %v3701
    %v3740 = vpop.f32.mrf.mxu0
    %v3741 = vadd.f32 0.0, %v3740
    %v3742 = vpop.f32.mrf.mxu0
    %v3743 = vpop.f32.mrf.mxu0
    %v3744 = vpop.f32.mrf.mxu0
    %3745 = vdwg.mxu0
    %v3747 = vsel %vm906, %v3423, 0
    %v3750 = vsel %vm1438, %v2895, 0
    %3752 = vmatprep.subr.bf16.mxu0 0
    %3753 = vmatpush1.bf16.msra.mxu0 0
    %3754 = vmatprep.subr.bf16.mxu0 0
    %3755 = vmatpush1.bf16.msra.mxu0 0
    %3756 = vmatprep.subr.bf16.mxu0 0
    %3757 = vmatpush1.bf16.msra.mxu0 0
    %3758 = vmatprep.subr.bf16.mxu0 0
    %3759 = vmatpush1.bf16.msra.mxu0 0
    %3760 = vmatprep.subr.bf16.mxu0 0
    %3761 = vmatpush1.bf16.msra.mxu0 0
    %3762 = vmatprep.subr.bf16.mxu0 0
    %3763 = vmatpush1.bf16.msra.mxu0 0
    %3764 = vmatprep.subr.bf16.mxu0 0
    %3765 = vmatpush1.bf16.msra.mxu0 0
    %3766 = vmatprep.subr.bf16.mxu0 0
    %3767 = vmatpush1.bf16.msra.mxu0 %v3750
    %3768 = vmatprep.subr.bf16.mxu0 0
    %3769 = vmatpush2.bf16.msra.mxu0 0
    %3770 = vmatprep.subr.bf16.mxu0 0
    %3771 = vmatpush2.bf16.msra.mxu0 0
    %3772 = vmatprep.subr.bf16.mxu0 0
    %3773 = vmatpush2.bf16.msra.mxu0 0
    %3774 = vmatprep.subr.bf16.mxu0 0
    %3775 = vmatpush2.bf16.msra.mxu0 0
    %3776 = vmatprep.subr.bf16.mxu0 0
    %3777 = vmatpush2.bf16.msra.mxu0 0
    %3778 = vmatprep.subr.bf16.mxu0 0
    %3779 = vmatpush2.bf16.msra.mxu0 0
    %3780 = vmatprep.subr.bf16.mxu0 0
    %3781 = vmatpush2.bf16.msra.mxu0 0
    %3782 = vmatprep.subr.bf16.mxu0 0
    %3783 = vmatpush2.bf16.msra.mxu0 0
    %3784 = vmatprep.mubr.bf16.mxu0 0
    %3785 = vmatmul.mubr.bf16.gmra.mxu0 %v3747
    %v3786 = vpop.f32.mrf.mxu0
    %v3787 = vadd.f32 0.0, %v3786
    %v3788 = vpop.f32.mrf.mxu0
    %v3789 = vpop.f32.mrf.mxu0
    %v3790 = vpop.f32.mrf.mxu0
    %3791 = vdwg.mxu0
    %v3792 = vpack.c.bf16 %v3511, %v3465
    %v3793 = vld [vmem:[%s8] sm:$0xf]
    %v3795 = vsel %vm906, %v3792, 0
    %v3798 = vsel %vm1438, %v3793, 0
    %3800 = vmatprep.subr.bf16.mxu0 0
    %3801 = vmatpush1.bf16.msra.mxu0 0
    %3802 = vmatprep.subr.bf16.mxu0 0
    %3803 = vmatpush1.bf16.msra.mxu0 0
    %3804 = vmatprep.subr.bf16.mxu0 0
    %3805 = vmatpush1.bf16.msra.mxu0 0
    %3806 = vmatprep.subr.bf16.mxu0 0
    %3807 = vmatpush1.bf16.msra.mxu0 0
    %3808 = vmatprep.subr.bf16.mxu0 0
    %3809 = vmatpush1.bf16.msra.mxu0 0
    %3810 = vmatprep.subr.bf16.mxu0 0
    %3811 = vmatpush1.bf16.msra.mxu0 0
    %3812 = vmatprep.subr.bf16.mxu0 0
    %3813 = vmatpush1.bf16.msra.mxu0 0
    %3814 = vmatprep.subr.bf16.mxu0 0
    %3815 = vmatpush1.bf16.msra.mxu0 %v3798
    %3816 = vmatprep.subr.bf16.mxu0 0
    %3817 = vmatpush2.bf16.msra.mxu0 0
    %3818 = vmatprep.subr.bf16.mxu0 0
    %3819 = vmatpush2.bf16.msra.mxu0 0
    %3820 = vmatprep.subr.bf16.mxu0 0
    %3821 = vmatpush2.bf16.msra.mxu0 0
    %3822 = vmatprep.subr.bf16.mxu0 0
    %3823 = vmatpush2.bf16.msra.mxu0 0
    %3824 = vmatprep.subr.bf16.mxu0 0
    %3825 = vmatpush2.bf16.msra.mxu0 0
    %3826 = vmatprep.subr.bf16.mxu0 0
    %3827 = vmatpush2.bf16.msra.mxu0 0
    %3828 = vmatprep.subr.bf16.mxu0 0
    %3829 = vmatpush2.bf16.msra.mxu0 0
    %3830 = vmatprep.subr.bf16.mxu0 0
    %3831 = vmatpush2.bf16.msra.mxu0 0
    %3832 = vmatprep.mubr.bf16.mxu0 0
    %3833 = vmatmul.mubr.bf16.gmra.mxu0 %v3795
    %v3834 = vpop.f32.mrf.mxu0
    %v3835 = vadd.f32 0.0, %v3834
    %v3836 = vpop.f32.mrf.mxu0
    %v3837 = vpop.f32.mrf.mxu0
    %v3838 = vadd.f32 0.0, %v3837
    %v3839 = vpop.f32.mrf.mxu0
    %3840 = vdwg.mxu0
    %v3842 = vlaneseq
    %v3843 = vshrl.u32 %v3842, 7
    %v3844 = vsub.s32 0, %v3843
    %v3845 = vrot.slane %v64, %v3844
    %v3847 = vadd.f32 %v3845, %v3835
    %v3848 = vadd.f32 %v3845, %v3838
    %v3849 = vpack.c.bf16 %v3603, %v3557
    %s3850 = scalar_lea.vmem %s8, 4
    %v3851 = vld [vmem:[%s3850] sm:$0xf]
    %v3853 = vsel %vm906, %v3849, 0
    %v3856 = vsel %vm1438, %v3851, 0
    %3858 = vmatprep.subr.bf16.mxu0 0
    %3859 = vmatpush1.bf16.msra.mxu0 0
    %3860 = vmatprep.subr.bf16.mxu0 0
    %3861 = vmatpush1.bf16.msra.mxu0 0
    %3862 = vmatprep.subr.bf16.mxu0 0
    %3863 = vmatpush1.bf16.msra.mxu0 0
    %3864 = vmatprep.subr.bf16.mxu0 0
    %3865 = vmatpush1.bf16.msra.mxu0 0
    %3866 = vmatprep.subr.bf16.mxu0 0
    %3867 = vmatpush1.bf16.msra.mxu0 0
    %3868 = vmatprep.subr.bf16.mxu0 0
    %3869 = vmatpush1.bf16.msra.mxu0 0
    %3870 = vmatprep.subr.bf16.mxu0 0
    %3871 = vmatpush1.bf16.msra.mxu0 0
    %3872 = vmatprep.subr.bf16.mxu0 0
    %3873 = vmatpush1.bf16.msra.mxu0 %v3856
    %3874 = vmatprep.subr.bf16.mxu0 0
    %3875 = vmatpush2.bf16.msra.mxu0 0
    %3876 = vmatprep.subr.bf16.mxu0 0
    %3877 = vmatpush2.bf16.msra.mxu0 0
    %3878 = vmatprep.subr.bf16.mxu0 0
    %3879 = vmatpush2.bf16.msra.mxu0 0
    %3880 = vmatprep.subr.bf16.mxu0 0
    %3881 = vmatpush2.bf16.msra.mxu0 0
    %3882 = vmatprep.subr.bf16.mxu0 0
    %3883 = vmatpush2.bf16.msra.mxu0 0
    %3884 = vmatprep.subr.bf16.mxu0 0
    %3885 = vmatpush2.bf16.msra.mxu0 0
    %3886 = vmatprep.subr.bf16.mxu0 0
    %3887 = vmatpush2.bf16.msra.mxu0 0
    %3888 = vmatprep.subr.bf16.mxu0 0
    %3889 = vmatpush2.bf16.msra.mxu0 0
    %3890 = vmatprep.mubr.bf16.mxu0 0
    %3891 = vmatmul.mubr.bf16.gmra.mxu0 %v3853
    %v3892 = vpop.f32.mrf.mxu0
    %v3893 = vadd.f32 0.0, %v3892
    %v3894 = vpop.f32.mrf.mxu0
    %v3895 = vpop.f32.mrf.mxu0
    %v3896 = vadd.f32 0.0, %v3895
    %v3897 = vpop.f32.mrf.mxu0
    %3898 = vdwg.mxu0
    %v3899 = vadd.f32 %v3847, %v3893
    %v3900 = vadd.f32 %v3848, %v3896
    %v3901 = vpack.c.bf16 %v3695, %v3649
    %s3902 = scalar_lea.vmem %s8, 8
    %v3903 = vld [vmem:[%s3902] sm:$0xf]
    %v3905 = vsel %vm906, %v3901, 0
    %v3908 = vsel %vm1438, %v3903, 0
    %3910 = vmatprep.subr.bf16.mxu0 0
    %3911 = vmatpush1.bf16.msra.mxu0 0
    %3912 = vmatprep.subr.bf16.mxu0 0
    %3913 = vmatpush1.bf16.msra.mxu0 0
    %3914 = vmatprep.subr.bf16.mxu0 0
    %3915 = vmatpush1.bf16.msra.mxu0 0
    %3916 = vmatprep.subr.bf16.mxu0 0
    %3917 = vmatpush1.bf16.msra.mxu0 0
    %3918 = vmatprep.subr.bf16.mxu0 0
    %3919 = vmatpush1.bf16.msra.mxu0 0
    %3920 = vmatprep.subr.bf16.mxu0 0
    %3921 = vmatpush1.bf16.msra.mxu0 0
    %3922 = vmatprep.subr.bf16.mxu0 0
    %3923 = vmatpush1.bf16.msra.mxu0 0
    %3924 = vmatprep.subr.bf16.mxu0 0
    %3925 = vmatpush1.bf16.msra.mxu0 %v3908
    %3926 = vmatprep.subr.bf16.mxu0 0
    %3927 = vmatpush2.bf16.msra.mxu0 0
    %3928 = vmatprep.subr.bf16.mxu0 0
    %3929 = vmatpush2.bf16.msra.mxu0 0
    %3930 = vmatprep.subr.bf16.mxu0 0
    %3931 = vmatpush2.bf16.msra.mxu0 0
    %3932 = vmatprep.subr.bf16.mxu0 0
    %3933 = vmatpush2.bf16.msra.mxu0 0
    %3934 = vmatprep.subr.bf16.mxu0 0
    %3935 = vmatpush2.bf16.msra.mxu0 0
    %3936 = vmatprep.subr.bf16.mxu0 0
    %3937 = vmatpush2.bf16.msra.mxu0 0
    %3938 = vmatprep.subr.bf16.mxu0 0
    %3939 = vmatpush2.bf16.msra.mxu0 0
    %3940 = vmatprep.subr.bf16.mxu0 0
    %3941 = vmatpush2.bf16.msra.mxu0 0
    %3942 = vmatprep.mubr.bf16.mxu0 0
    %3943 = vmatmul.mubr.bf16.gmra.mxu0 %v3905
    %v3944 = vpop.f32.mrf.mxu0
    %v3945 = vadd.f32 0.0, %v3944
    %v3946 = vpop.f32.mrf.mxu0
    %v3947 = vpop.f32.mrf.mxu0
    %v3948 = vadd.f32 0.0, %v3947
    %v3949 = vpop.f32.mrf.mxu0
    %3950 = vdwg.mxu0
    %v3951 = vadd.f32 %v3899, %v3945
    %v3952 = vadd.f32 %v3900, %v3948
    %v3953 = vpack.c.bf16 %v3787, %v3741
    %s3954 = scalar_lea.vmem %s8, 12
    %v3955 = vld [vmem:[%s3954] sm:$0xf]
    %v3957 = vsel %vm906, %v3953, 0
    %v3960 = vsel %vm1438, %v3955, 0
    %3962 = vmatprep.subr.bf16.mxu0 0
    %3963 = vmatpush1.bf16.msra.mxu0 0
    %3964 = vmatprep.subr.bf16.mxu0 0
    %3965 = vmatpush1.bf16.msra.mxu0 0
    %3966 = vmatprep.subr.bf16.mxu0 0
    %3967 = vmatpush1.bf16.msra.mxu0 0
    %3968 = vmatprep.subr.bf16.mxu0 0
    %3969 = vmatpush1.bf16.msra.mxu0 0
    %3970 = vmatprep.subr.bf16.mxu0 0
    %3971 = vmatpush1.bf16.msra.mxu0 0
    %3972 = vmatprep.subr.bf16.mxu0 0
    %3973 = vmatpush1.bf16.msra.mxu0 0
    %3974 = vmatprep.subr.bf16.mxu0 0
    %3975 = vmatpush1.bf16.msra.mxu0 0
    %3976 = vmatprep.subr.bf16.mxu0 0
    %3977 = vmatpush1.bf16.msra.mxu0 %v3960
    %3978 = vmatprep.subr.bf16.mxu0 0
    %3979 = vmatpush2.bf16.msra.mxu0 0
    %3980 = vmatprep.subr.bf16.mxu0 0
    %3981 = vmatpush2.bf16.msra.mxu0 0
    %3982 = vmatprep.subr.bf16.mxu0 0
    %3983 = vmatpush2.bf16.msra.mxu0 0
    %3984 = vmatprep.subr.bf16.mxu0 0
    %3985 = vmatpush2.bf16.msra.mxu0 0
    %3986 = vmatprep.subr.bf16.mxu0 0
    %3987 = vmatpush2.bf16.msra.mxu0 0
    %3988 = vmatprep.subr.bf16.mxu0 0
    %3989 = vmatpush2.bf16.msra.mxu0 0
    %3990 = vmatprep.subr.bf16.mxu0 0
    %3991 = vmatpush2.bf16.msra.mxu0 0
    %3992 = vmatprep.subr.bf16.mxu0 0
    %3993 = vmatpush2.bf16.msra.mxu0 0
    %3994 = vmatprep.mubr.bf16.mxu0 0
    %3995 = vmatmul.mubr.bf16.gmra.mxu0 %v3957
    %v3996 = vpop.f32.mrf.mxu0
    %v3997 = vadd.f32 0.0, %v3996
    %v3998 = vpop.f32.mrf.mxu0
    %v3999 = vpop.f32.mrf.mxu0
    %v4000 = vadd.f32 0.0, %v3999
    %v4001 = vpop.f32.mrf.mxu0
    %4002 = vdwg.mxu0
    %v4003 = vadd.f32 %v3951, %v3997
    %v4004 = vadd.f32 %v3952, %v4000
    %v4005 = vadd.f32 %v2060, %v4003
    %v4006 = vadd.f32 %v2061, %v4004
    %v4007 = vsel %vm103, %v4005, 0.0
    %4008 = vadd.xlane.f32.xlu0 %v4007
    %v4009 = vpop.xlane.xlu0 %4008
    %v4010 = vsel %vm103, %v4006, 0.0
    %4011 = vadd.xlane.f32.xlu0 %v4010
    %v4012 = vpop.xlane.xlu0 %4011
    %v4013 = vmul.f32 %v4009, %v2025
    %v4014 = vmul.f32 %v4012, %v2025
    %v4015 = vsub.f32 %v4005, %v4013
    %v4016 = vsub.f32 %v4006, %v4014
    %v4017 = vmul.f32 %v4015, %v4015
    %v4018 = vmul.f32 %v4016, %v4016
    %v4019 = vsel %vm103, %v4017, 0.0
    %4020 = vadd.xlane.f32.xlu0 %v4019
    %v4021 = vpop.xlane.xlu0 %4020
    %v4022 = vsel %vm103, %v4018, 0.0
    %4023 = vadd.xlane.f32.xlu0 %v4022
    %v4024 = vpop.xlane.xlu0 %4023
    %v4025 = vmul.f32 %v4021, %v2025
    %v4026 = vmul.f32 %v4024, %v2025
    %v4027 = vadd.f32 %v4025, 1e-05
    %v4028 = vadd.f32 %v4026, 1e-05
    %v4029 = vrsqrt.pop %v4027
    %v4030 = vrsqrt.pop %v4028
    %v4031 = vmul.f32 %v4015, %v4029
    %v4032 = vmul.f32 %v4016, %v4030
    %v4034 = vlaneseq
    %v4035 = vshrl.u32 %v4034, 7
    %v4036 = vsub.s32 0, %v4035
    %v4037 = vrot.slane %v56, %v4036
    %v4039 = vmul.f32 %v4031, %v4037
    %v4040 = vmul.f32 %v4032, %v4037
    %v4042 = vlaneseq
    %v4043 = vshrl.u32 %v4042, 7
    %v4044 = vsub.s32 0, %v4043
    %v4045 = vrot.slane %v58, %v4044
    %v4047 = vadd.f32 %v4039, %v4045
    %v4048 = vadd.f32 %v4040, %v4045
    %v4049 = vpack.c.bf16 %v4048, %v4047
    %v4051 = vlaneseq
    %v4052 = vshrl.u32 %v4051, 7
    %v4053 = vsub.s32 0, %v4052
    %v4054 = vrot.slane %v69, %v4053
    %v4060 = vunpack.c.l.b16 %v65
    %v4061 = vunpack.c.l.b16 %v66
    %v4062 = vunpack.c.l.b16 %v67
    %v4063 = vunpack.c.l.b16 %v68
    %v4064 = vpack.c.b16 %v4061, %v4060
    %v4065 = vpack.c.b16 %v4063, %v4062
    %v4069 = vsel %vm103, %v4049, 0
    %4071 = vmatprep.subr.bf16.mxu0 0
    %4072 = vmatpush1.bf16.msra.mxu0 0
    %4073 = vmatprep.subr.bf16.mxu0 0
    %4074 = vmatpush1.bf16.msra.mxu0 0
    %4075 = vmatprep.subr.bf16.mxu0 0
    %4076 = vmatpush1.bf16.msra.mxu0 0
    %4077 = vmatprep.subr.bf16.mxu0 0
    %4078 = vmatpush1.bf16.msra.mxu0 0
    %4079 = vmatprep.subr.bf16.mxu0 0
    %4080 = vmatpush1.bf16.msra.mxu0 0
    %4081 = vmatprep.subr.bf16.mxu0 0
    %4082 = vmatpush1.bf16.msra.mxu0 0
    %4083 = vmatprep.subr.bf16.mxu0 0
    %4084 = vmatpush1.bf16.msra.mxu0 %v4065
    %4085 = vmatprep.subr.bf16.mxu0 0
    %4086 = vmatpush1.bf16.msra.mxu0 %v4064
    %4087 = vmatprep.subr.bf16.mxu0 0
    %4088 = vmatpush2.bf16.msra.mxu0 0
    %4089 = vmatprep.subr.bf16.mxu0 0
    %4090 = vmatpush2.bf16.msra.mxu0 0
    %4091 = vmatprep.subr.bf16.mxu0 0
    %4092 = vmatpush2.bf16.msra.mxu0 0
    %4093 = vmatprep.subr.bf16.mxu0 0
    %4094 = vmatpush2.bf16.msra.mxu0 0
    %4095 = vmatprep.subr.bf16.mxu0 0
    %4096 = vmatpush2.bf16.msra.mxu0 0
    %4097 = vmatprep.subr.bf16.mxu0 0
    %4098 = vmatpush2.bf16.msra.mxu0 0
    %4099 = vmatprep.subr.bf16.mxu0 0
    %4100 = vmatpush2.bf16.msra.mxu0 0
    %4101 = vmatprep.subr.bf16.mxu0 0
    %4102 = vmatpush2.bf16.msra.mxu0 0
    %4103 = vmatprep.mubr.bf16.mxu0 0
    %4104 = vmatmul.mubr.bf16.gmra.mxu0 %v4069
    %v4105 = vpop.f32.mrf.mxu0
    %v4106 = vadd.f32 %v4054, %v4105
    %v4107 = vpop.f32.mrf.mxu0
    %v4108 = vpop.f32.mrf.mxu0
    %v4109 = vadd.f32 %v4054, %v4108
    %v4110 = vpop.f32.mrf.mxu0
    %4111 = vdwg.mxu0
    %v4112 = vmax.f32 %v4106, 0.0
    %v4113 = vmax.f32 %v4109, 0.0
    %v4114 = vpack.c.bf16 %v4113, %v4112
    %v4116 = vlaneseq
    %v4117 = vshrl.u32 %v4116, 7
    %v4118 = vsub.s32 0, %v4117
    %v4119 = vrot.slane %v74, %v4118
    %v4125 = vunpack.c.l.b16 %v70
    %v4126 = vunpack.c.l.b16 %v71
    %v4127 = vunpack.c.l.b16 %v72
    %v4128 = vunpack.c.l.b16 %v73
    %v4129 = vpack.c.b16 %v4126, %v4125
    %v4130 = vpack.c.b16 %v4128, %v4127
    %v4134 = vsel %vm103, %v4114, 0
    %4136 = vmatprep.subr.bf16.mxu0 0
    %4137 = vmatpush1.bf16.msra.mxu0 0
    %4138 = vmatprep.subr.bf16.mxu0 0
    %4139 = vmatpush1.bf16.msra.mxu0 0
    %4140 = vmatprep.subr.bf16.mxu0 0
    %4141 = vmatpush1.bf16.msra.mxu0 0
    %4142 = vmatprep.subr.bf16.mxu0 0
    %4143 = vmatpush1.bf16.msra.mxu0 0
    %4144 = vmatprep.subr.bf16.mxu0 0
    %4145 = vmatpush1.bf16.msra.mxu0 0
    %4146 = vmatprep.subr.bf16.mxu0 0
    %4147 = vmatpush1.bf16.msra.mxu0 0
    %4148 = vmatprep.subr.bf16.mxu0 0
    %4149 = vmatpush1.bf16.msra.mxu0 %v4130
    %4150 = vmatprep.subr.bf16.mxu0 0
    %4151 = vmatpush1.bf16.msra.mxu0 %v4129
    %4152 = vmatprep.subr.bf16.mxu0 0
    %4153 = vmatpush2.bf16.msra.mxu0 0
    %4154 = vmatprep.subr.bf16.mxu0 0
    %4155 = vmatpush2.bf16.msra.mxu0 0
    %4156 = vmatprep.subr.bf16.mxu0 0
    %4157 = vmatpush2.bf16.msra.mxu0 0
    %4158 = vmatprep.subr.bf16.mxu0 0
    %4159 = vmatpush2.bf16.msra.mxu0 0
    %4160 = vmatprep.subr.bf16.mxu0 0
    %4161 = vmatpush2.bf16.msra.mxu0 0
    %4162 = vmatprep.subr.bf16.mxu0 0
    %4163 = vmatpush2.bf16.msra.mxu0 0
    %4164 = vmatprep.subr.bf16.mxu0 0
    %4165 = vmatpush2.bf16.msra.mxu0 0
    %4166 = vmatprep.subr.bf16.mxu0 0
    %4167 = vmatpush2.bf16.msra.mxu0 0
    %4168 = vmatprep.mubr.bf16.mxu0 0
    %4169 = vmatmul.mubr.bf16.gmra.mxu0 %v4134
    %v4170 = vpop.f32.mrf.mxu0
    %v4171 = vadd.f32 %v4119, %v4170
    %v4172 = vpop.f32.mrf.mxu0
    %v4173 = vpop.f32.mrf.mxu0
    %v4174 = vadd.f32 %v4119, %v4173
    %v4175 = vpop.f32.mrf.mxu0
    %4176 = vdwg.mxu0
    %v4177 = vadd.f32 %v4047, %v4171
    %v4178 = vadd.f32 %v4048, %v4174
    %v4179 = vsel %vm103, %v4177, 0.0
    %4180 = vadd.xlane.f32.xlu0 %v4179
    %v4181 = vpop.xlane.xlu0 %4180
    %v4182 = vsel %vm103, %v4178, 0.0
    %4183 = vadd.xlane.f32.xlu0 %v4182
    %v4184 = vpop.xlane.xlu0 %4183
    %v4185 = vmul.f32 %v4181, %v2025
    %v4186 = vmul.f32 %v4184, %v2025
    %v4187 = vsub.f32 %v4177, %v4185
    %v4188 = vsub.f32 %v4178, %v4186
    %v4189 = vmul.f32 %v4187, %v4187
    %v4190 = vmul.f32 %v4188, %v4188
    %v4191 = vsel %vm103, %v4189, 0.0
    %4192 = vadd.xlane.f32.xlu0 %v4191
    %v4193 = vpop.xlane.xlu0 %4192
    %v4194 = vsel %vm103, %v4190, 0.0
    %4195 = vadd.xlane.f32.xlu0 %v4194
    %v4196 = vpop.xlane.xlu0 %4195
    %v4197 = vmul.f32 %v4193, %v2025
    %v4198 = vmul.f32 %v4196, %v2025
    %v4199 = vadd.f32 %v4197, 1e-05
    %v4200 = vadd.f32 %v4198, 1e-05
    %v4201 = vrsqrt.pop %v4199
    %v4202 = vrsqrt.pop %v4200
    %v4203 = vmul.f32 %v4187, %v4201
    %v4204 = vmul.f32 %v4188, %v4202
    %v4206 = vlaneseq
    %v4207 = vshrl.u32 %v4206, 7
    %v4208 = vsub.s32 0, %v4207
    %v4209 = vrot.slane %v60, %v4208
    %v4211 = vmul.f32 %v4203, %v4209
    %v4212 = vmul.f32 %v4204, %v4209
    %v4214 = vlaneseq
    %v4215 = vshrl.u32 %v4214, 7
    %v4216 = vsub.s32 0, %v4215
    %v4217 = vrot.slane %v62, %v4216
    %v4219 = vadd.f32 %v4211, %v4217
    %v4220 = vadd.f32 %v4212, %v4217
    %4221 = vst.msk [vmem:[#allocation2] sm:$0xff] %vm103, %v4219
    %4222 = vst.msk [vmem:[#allocation2 + $0x8] sm:$0xff] %vm103, %v4220
    // Predicated region
    $region62: #{tpu_custom_call.1} parent=1 // pred_check
      _
    $region63: #{tpu_custom_call.1} parent=1 // pred_check_branch
      %4224 = sbr.rel (0) target = $region65
    $region64: #{tpu_custom_call.1} parent=1 // pred_region
      %s4226 = ssub.s32 256, 256
      %4227 = vsyncadd [#allocation3], %s4226
      %s4228 = sshll.u32 [#allocation2], 4
      %s4229 = int_to_ptr.vmem [resolvable:$true] %s4228
      %4234 = dma.vmem_to_hbm [thread:$0]  %s4229, 256, %s15, [#allocation3], 128, 128, 8
    $region65: #{tpu_custom_call.1} parent=1 // pred_fallthru
      _
    // Predicated region
    $region66: #{tpu_custom_call.1} parent=1 // pred_check
      _
    $region67: #{tpu_custom_call.1} parent=1 // pred_check_branch
      %4236 = sbr.rel (0) target = $region69
    $region68: #{tpu_custom_call.1} parent=1 // pred_region
      %4237 = dma.done [#allocation3], 256
    $region69: #{tpu_custom_call.1} parent=1 // pred_fallthru
      _
    %4238 = vsyncpa [#allocation3], 1

</llo_original>
